<compile_context>
chip_gen: v6e
topology: v6e:2x2x1
jax: 0.10.0
libtpu: 0.0.40
codegen_flags: <defaults>
</compile_context>

<pallas_src>
import numpy as np

import jax
import jax.numpy as jnp
from jax.experimental import pallas as pl
from jax.experimental.pallas import tpu as pltpu  # noqa: F401  (kept for TPU backend)


# ----------------------------------------------------------------------------
# Single fused Pallas kernel
# ----------------------------------------------------------------------------
def _convnet_kernel(*refs):
    """Full ConvNet forward.

    refs = [stem_pat, stem_w, stem_t,
            (sel1, wm, tm, sel2, w2, t2) per block,
            cls_w, cls_b, out_ref]

    stem_pat : (M0, 147)        bf16  im2col patches of the input (7x7, s2, p3)
    stem_w   : (147, 32)        bf16  BN-folded stem weight
    stem_t   : (1, 32)          f32   stem shift
    sel1     : (9, Mo, Mi)      bf16  0/1 stride-2 patch-selection matrices
    wm       : (9*Cin, 2*Cout)  bf16  [conv1 | downsample] BN-folded weights
    tm       : (1, 2*Cout)      f32   [shift1 | shift_ds]
    sel2     : (9, Mo, Mo)      bf16  0/1 stride-1 patch-selection matrices
    w2       : (9*Cout, Cout)   bf16  conv2 BN-folded weight
    t2       : (1, Cout)        f32   conv2 shift
    cls_w    : (1, C)           f32   classifier weight
    cls_b    : (1, 1)           f32   classifier bias
    out_ref  : (N, 1)           f32   logits
    """
    stem_pat, stem_w, stem_t = refs[:3]
    cls_w, cls_b, out_ref = refs[-3:]
    block_refs = refs[3:-3]
    n_blocks = len(block_refs) // 6
    n_img = out_ref.shape[0]

    # --- stem: relu(BN(conv7x7, s2)) as one matmul on pre-built patches ------
    y0 = jnp.dot(stem_pat[...], stem_w[...], preferred_element_type=jnp.float32)
    a = jnp.maximum(y0 + stem_t[...], 0.0).astype(jnp.bfloat16)     # (M0, 32)

    x_out = None
    for b in range(n_blocks):
        sel1, wm, tm, sel2, w2, t2 = block_refs[6 * b:6 * b + 6]
        cout = tm.shape[1] // 2

        # conv1 (3x3,s2,p1) + downsample (1x1,s2) on shared stride-2 patches.
        # In-kernel im2col: 9 tiny 0/1 selection matmuls (padding == all-zero
        # rows), lane-concatenated, then ONE big-K matmul against the fused
        # [conv1 | downsample] BN-folded weight.
        p1 = jnp.concatenate(
            [jnp.dot(sel1[t], a, preferred_element_type=jnp.float32)
                 .astype(jnp.bfloat16) for t in range(9)], axis=-1)  # (Mo, 9*Cin)
        y = jnp.dot(p1, wm[...], preferred_element_type=jnp.float32) + tm[...]
        a1 = jnp.maximum(y[:, :cout], 0.0).astype(jnp.bfloat16)     # relu(bn1(conv1))
        identity = y[:, cout:]                                      # bn_ds(ds(x))

        # conv2 (3x3,s1,p1): same selection-matmul im2col + one big-K matmul.
        p2 = jnp.concatenate(
            [jnp.dot(sel2[t], a1, preferred_element_type=jnp.float32)
                 .astype(jnp.bfloat16) for t in range(9)], axis=-1)  # (Mo, 9*Cout)
        z = jnp.dot(p2, w2[...], preferred_element_type=jnp.float32) + t2[...]

        # Residual added AFTER the second ReLU: net(x) + identity (as in spec).
        x_out = jnp.maximum(z, 0.0) + identity                      # f32
        a = x_out.astype(jnp.bfloat16)

    # --- classifier head: global spatial mean + Linear(C, 1) on VPU/XLU ------
    m, c = x_out.shape
    hw = m // n_img
    zf = x_out if hw == 1 else jnp.mean(x_out.reshape(n_img, hw, c), axis=1)
    logit = jnp.sum(zf * cls_w[...], axis=-1, keepdims=True) + cls_b[...]
    out_ref[...] = logit.astype(out_ref.dtype)


# ----------------------------------------------------------------------------
# Host-side (run-once) preparation helpers
# ----------------------------------------------------------------------------
def _sel_matrices(n, hi, wi, ho, wo, stride, k=3, pad=1):
    """0/1 selection matrices: out_row <- in_row per kernel tap; padding = 0-row."""
    m_in, m_out = n * hi * wi, n * ho * wo
    sel = np.zeros((k * k, m_out, m_in), np.float32)
    for t in range(k * k):
        kh, kw = t // k, t % k
        for i in range(n):
            for r in range(ho):
                for c in range(wo):
                    rs, cs = r * stride + kh - pad, c * stride + kw - pad
                    if 0 <= rs < hi and 0 <= cs < wi:
                        sel[t, (i * ho + r) * wo + c, (i * hi + rs) * wi + cs] = 1.0
    return sel


def _fold(p, eps=1e-5):
    """Fold conv bias + inference BN into weight columns and a shift vector."""
    cout = p["w"].shape[0]
    s = p["gamma"] / jnp.sqrt(p["var"] + eps)
    wk = jnp.transpose(p["w"], (2, 3, 1, 0)).reshape(-1, cout) * s[None, :]
    t = (p["b"] - p["mean"]) * s + p["beta"]
    return wk, t.reshape(1, cout)


def prepare_params(params, batch, height, width, eps=1e-5):
    """Run ONCE outside jit: fold BN, build fused weights & selection matrices."""
    sw, st = _fold(params["stem"], eps)
    prep = dict(stem_w=sw.astype(jnp.bfloat16), stem_t=st, blocks=[])
    cin = sw.shape[1]
    h = (height + 2 * 3 - 7) // 2 + 1
    w = (width + 2 * 3 - 7) // 2 + 1
    for blk in params["blocks"]:
        cout = blk["conv1"]["w"].shape[0]
        ho = (h + 2 * 1 - 3) // 2 + 1
        wo = (w + 2 * 1 - 3) // 2 + 1
        w1, t1 = _fold(blk["conv1"], eps)                 # (9*cin, cout)
        wds, tds = _fold(blk["ds"], eps)                  # (cin, cout)
        # 1x1/s2 downsample == centre tap (kh=kw=1) of the 3x3/s2 patches.
        wds_full = jnp.zeros((9 * cin, cout), jnp.float32)
        wds_full = wds_full.at[4 * cin:5 * cin, :].set(wds)
        wm = jnp.concatenate([w1, wds_full], axis=1)      # (9*cin, 2*cout)
        tm = jnp.concatenate([t1, tds], axis=1)           # (1, 2*cout)
        w2, t2 = _fold(blk["conv2"], eps)                 # (9*cout, cout)
        prep["blocks"].append(dict(
            sel1=jnp.asarray(_sel_matrices(batch, h, w, ho, wo, stride=2),
                             jnp.bfloat16),
            wm=wm.astype(jnp.bfloat16), tm=tm,
            sel2=jnp.asarray(_sel_matrices(batch, ho, wo, ho, wo, stride=1),
                             jnp.bfloat16),
            w2=w2.astype(jnp.bfloat16), t2=t2))
        cin, h, w = cout, ho, wo
    prep["cls_w"] = params["cls_w"]                       # (1, C)
    prep["cls_b"] = params["cls_b"].reshape(1, 1)         # (1, 1)
    return prep


# ----------------------------------------------------------------------------
# Wrapper (jitted forward): one tiny XLA im2col for the stem + one pallas_call
# ----------------------------------------------------------------------------
def _im2col(x, k, stride, padding):
    """x: (N, H, W, C) -> ((N*Ho*Wo, k*k*C), Ho, Wo); K-order = (kh, kw, Cin)."""
    n, h, w, c = x.shape
    ho = (h + 2 * padding - k) // stride + 1
    wo = (w + 2 * padding - k) // stride + 1
    xp = jnp.pad(x, ((0, 0), (padding, padding), (padding, padding), (0, 0)))
    taps = []
    for kh in range(k):
        for kw in range(k):
            taps.append(jax.lax.slice(
                xp,
                (0, kh, kw, 0),
                (n, kh + (ho - 1) * stride + 1, kw + (wo - 1) * stride + 1, c),
                (1, stride, stride, 1)))
    pat = jnp.concatenate(taps, axis=-1)                  # (N, Ho, Wo, k*k*C)
    return pat.reshape(n * ho * wo, k * k * c), ho, wo


def convnet_forward(x_nchw, prep):
    """x_nchw: (N, 3, H, W) float32 -> (N,) float32 logits."""
    n = x_nchw.shape[0]
    x = jnp.transpose(x_nchw, (0, 2, 3, 1)).astype(jnp.bfloat16)   # NHWC, bf16 once
    pat, _, _ = _im2col(x, 7, 2, 3)                                # (N*H1*W1, 147)
    # Trace-time guard: prep must have been built for this batch / input size.
    assert pat.shape[0] == prep["blocks"][0]["sel1"].shape[2], (
        "prepare_params was built for a different input shape / batch size")

    args = [pat, prep["stem_w"], prep["stem_t"]]
    for bp in prep["blocks"]:
        args += [bp["sel1"], bp["wm"], bp["tm"], bp["sel2"], bp["w2"], bp["t2"]]
    args += [prep["cls_w"], prep["cls_b"]]

    out = pl.pallas_call(
        _convnet_kernel,
        out_shape=jax.ShapeDtypeStruct((n, 1), jnp.float32),
    )(*args)
    return out[:, 0]


# ----------------------------------------------------------------------------
# Parameters (deterministic synthetic init, shapes from ConvNet.__init__)
# ----------------------------------------------------------------------------
def init_params(key, layers=(32, 64, 128), n_input_channels=3):
    keys = iter(jax.random.split(key, 64))

    def conv_bn(cin, cout, k):
        return dict(
            w=0.1 * jax.random.normal(next(keys), (cout, cin, k, k), jnp.float32),
            b=0.1 * jax.random.normal(next(keys), (cout,), jnp.float32),
            gamma=1.0 + 0.1 * jax.random.normal(next(keys), (cout,), jnp.float32),
            beta=0.1 * jax.random.normal(next(keys), (cout,), jnp.float32),
            mean=0.1 * jax.random.normal(next(keys), (cout,), jnp.float32),
            var=1.0 + 0.1 * jnp.abs(jax.random.normal(next(keys), (cout,), jnp.float32)),
        )

    params = {"stem": conv_bn(n_input_channels, 32, 7), "blocks": []}
    c = 32
    for l in layers:
        params["blocks"].append(dict(
            conv1=conv_bn(c, l, 3),
            conv2=conv_bn(l, l, 3),
            ds=conv_bn(c, l, 1),     # stride=2 => downsample always present
        ))
        c = l
    params["cls_w"] = 0.1 * jax.random.normal(next(keys), (1, c), jnp.float32)
    params["cls_b"] = 0.1 * jax.random.normal(next(keys), (1,), jnp.float32)
    return params


if __name__ == "__main__":
    key = jax.random.PRNGKey(0)
    k_x, k_p = jax.random.split(key)
    # Input matches the PyTorch module's NCHW convention: (batch=2, C=3, 16, 16)
    x = jax.random.normal(k_x, (2, 3, 16, 16), jnp.float32)
    params = init_params(k_p)

    # Weight preparation (BN folding, bf16 casts, selection matrices): once.
    prep = prepare_params(params, batch=x.shape[0],
                          height=x.shape[2], width=x.shape[3])

    fwd = jax.jit(convnet_forward)
    out = fwd(x, prep)
    jax.block_until_ready(out)
    assert out.shape == (2,) and out.dtype == jnp.float32
    print("KERNEL_OK")
</pallas_src>

<mosaic_0001>
module attributes {stable_mosaic.version = 11 : i64} {
  func.func @_convnet_kernel(%arg0: memref<128x147xbf16, #tpu.memory_space<vmem>>, %arg1: memref<147x32xbf16, #tpu.memory_space<vmem>>, %arg2: memref<1x32xf32, #tpu.memory_space<vmem>>, %arg3: memref<9x32x128xbf16, #tpu.memory_space<vmem>>, %arg4: memref<288x64xbf16, #tpu.memory_space<vmem>>, %arg5: memref<1x64xf32, #tpu.memory_space<vmem>>, %arg6: memref<9x32x32xbf16, #tpu.memory_space<vmem>>, %arg7: memref<288x32xbf16, #tpu.memory_space<vmem>>, %arg8: memref<1x32xf32, #tpu.memory_space<vmem>>, %arg9: memref<9x8x32xbf16, #tpu.memory_space<vmem>>, %arg10: memref<288x128xbf16, #tpu.memory_space<vmem>>, %arg11: memref<1x128xf32, #tpu.memory_space<vmem>>, %arg12: memref<9x8x8xbf16, #tpu.memory_space<vmem>>, %arg13: memref<576x64xbf16, #tpu.memory_space<vmem>>, %arg14: memref<1x64xf32, #tpu.memory_space<vmem>>, %arg15: memref<9x2x8xbf16, #tpu.memory_space<vmem>>, %arg16: memref<576x256xbf16, #tpu.memory_space<vmem>>, %arg17: memref<1x256xf32, #tpu.memory_space<vmem>>, %arg18: memref<9x2x2xbf16, #tpu.memory_space<vmem>>, %arg19: memref<1152x128xbf16, #tpu.memory_space<vmem>>, %arg20: memref<1x128xf32, #tpu.memory_space<vmem>>, %arg21: memref<1x128xf32, #tpu.memory_space<vmem>>, %arg22: memref<1x1xf32, #tpu.memory_space<vmem>>, %arg23: memref<2x1xf32, #tpu.memory_space<vmem>>) attributes {dimension_semantics = [], scalar_prefetch = 0 : i64, scratch_operands = 0 : i64, tpu.core_type = #tpu.core_type<tc>} {
    %c0 = arith.constant 0 : index
    %c0_0 = arith.constant 0 : index
    %0 = vector.load %arg0[%c0, %c0_0] : memref<128x147xbf16, #tpu.memory_space<vmem>>, vector<128x147xbf16>
    %c0_1 = arith.constant 0 : index
    %c0_2 = arith.constant 0 : index
    %1 = vector.load %arg1[%c0_1, %c0_2] : memref<147x32xbf16, #tpu.memory_space<vmem>>, vector<147x32xbf16>
    %cst = arith.constant dense<0.000000e+00> : vector<128x32xf32>
    %2 = tpu.matmul %0, %1, %cst {dimension_numbers = #tpu.dot_dimension_numbers<[1], [0], [0], [1], [0, 0, 1, 1], [], []>} : vector<128x147xbf16>, vector<147x32xbf16>, vector<128x32xf32> -> vector<128x32xf32>
    %c0_3 = arith.constant 0 : index
    %c0_4 = arith.constant 0 : index
    %3 = vector.load %arg2[%c0_3, %c0_4] : memref<1x32xf32, #tpu.memory_space<vmem>>, vector<1x32xf32>
    %4 = vector.broadcast %3 : vector<1x32xf32> to vector<128x32xf32>
    %5 = arith.addf %2, %4 : vector<128x32xf32>
    %cst_5 = arith.constant 0.000000e+00 : f32
    %6 = vector.broadcast %cst_5 : f32 to vector<128x32xf32>
    %7 = arith.maximumf %5, %6 : vector<128x32xf32>
    %8 = arith.truncf %7 : vector<128x32xf32> to vector<128x32xbf16>
    %c0_6 = arith.constant 0 : index
    %c0_7 = arith.constant 0 : index
    %c0_8 = arith.constant 0 : index
    %9 = vector.load %arg3[%c0_6, %c0_7, %c0_8] : memref<9x32x128xbf16, #tpu.memory_space<vmem>>, vector<1x32x128xbf16>
    %10 = vector.shape_cast %9 : vector<1x32x128xbf16> to vector<32x128xbf16>
    %cst_9 = arith.constant dense<0.000000e+00> : vector<32x32xf32>
    %11 = tpu.matmul %10, %8, %cst_9 {dimension_numbers = #tpu.dot_dimension_numbers<[1], [0], [0], [1], [0, 0, 1, 1], [], []>} : vector<32x128xbf16>, vector<128x32xbf16>, vector<32x32xf32> -> vector<32x32xf32>
    %12 = arith.truncf %11 : vector<32x32xf32> to vector<32x32xbf16>
    %c1 = arith.constant 1 : index
    %c0_10 = arith.constant 0 : index
    %c0_11 = arith.constant 0 : index
    %13 = vector.load %arg3[%c1, %c0_10, %c0_11] : memref<9x32x128xbf16, #tpu.memory_space<vmem>>, vector<1x32x128xbf16>
    %14 = vector.shape_cast %13 : vector<1x32x128xbf16> to vector<32x128xbf16>
    %cst_12 = arith.constant dense<0.000000e+00> : vector<32x32xf32>
    %15 = tpu.matmul %14, %8, %cst_12 {dimension_numbers = #tpu.dot_dimension_numbers<[1], [0], [0], [1], [0, 0, 1, 1], [], []>} : vector<32x128xbf16>, vector<128x32xbf16>, vector<32x32xf32> -> vector<32x32xf32>
    %16 = arith.truncf %15 : vector<32x32xf32> to vector<32x32xbf16>
    %c2 = arith.constant 2 : index
    %c0_13 = arith.constant 0 : index
    %c0_14 = arith.constant 0 : index
    %17 = vector.load %arg3[%c2, %c0_13, %c0_14] : memref<9x32x128xbf16, #tpu.memory_space<vmem>>, vector<1x32x128xbf16>
    %18 = vector.shape_cast %17 : vector<1x32x128xbf16> to vector<32x128xbf16>
    %cst_15 = arith.constant dense<0.000000e+00> : vector<32x32xf32>
    %19 = tpu.matmul %18, %8, %cst_15 {dimension_numbers = #tpu.dot_dimension_numbers<[1], [0], [0], [1], [0, 0, 1, 1], [], []>} : vector<32x128xbf16>, vector<128x32xbf16>, vector<32x32xf32> -> vector<32x32xf32>
    %20 = arith.truncf %19 : vector<32x32xf32> to vector<32x32xbf16>
    %c3 = arith.constant 3 : index
    %c0_16 = arith.constant 0 : index
    %c0_17 = arith.constant 0 : index
    %21 = vector.load %arg3[%c3, %c0_16, %c0_17] : memref<9x32x128xbf16, #tpu.memory_space<vmem>>, vector<1x32x128xbf16>
    %22 = vector.shape_cast %21 : vector<1x32x128xbf16> to vector<32x128xbf16>
    %cst_18 = arith.constant dense<0.000000e+00> : vector<32x32xf32>
    %23 = tpu.matmul %22, %8, %cst_18 {dimension_numbers = #tpu.dot_dimension_numbers<[1], [0], [0], [1], [0, 0, 1, 1], [], []>} : vector<32x128xbf16>, vector<128x32xbf16>, vector<32x32xf32> -> vector<32x32xf32>
    %24 = arith.truncf %23 : vector<32x32xf32> to vector<32x32xbf16>
    %c4 = arith.constant 4 : index
    %c0_19 = arith.constant 0 : index
    %c0_20 = arith.constant 0 : index
    %25 = vector.load %arg3[%c4, %c0_19, %c0_20] : memref<9x32x128xbf16, #tpu.memory_space<vmem>>, vector<1x32x128xbf16>
    %26 = vector.shape_cast %25 : vector<1x32x128xbf16> to vector<32x128xbf16>
    %cst_21 = arith.constant dense<0.000000e+00> : vector<32x32xf32>
    %27 = tpu.matmul %26, %8, %cst_21 {dimension_numbers = #tpu.dot_dimension_numbers<[1], [0], [0], [1], [0, 0, 1, 1], [], []>} : vector<32x128xbf16>, vector<128x32xbf16>, vector<32x32xf32> -> vector<32x32xf32>
    %28 = arith.truncf %27 : vector<32x32xf32> to vector<32x32xbf16>
    %c5 = arith.constant 5 : index
    %c0_22 = arith.constant 0 : index
    %c0_23 = arith.constant 0 : index
    %29 = vector.load %arg3[%c5, %c0_22, %c0_23] : memref<9x32x128xbf16, #tpu.memory_space<vmem>>, vector<1x32x128xbf16>
    %30 = vector.shape_cast %29 : vector<1x32x128xbf16> to vector<32x128xbf16>
    %cst_24 = arith.constant dense<0.000000e+00> : vector<32x32xf32>
    %31 = tpu.matmul %30, %8, %cst_24 {dimension_numbers = #tpu.dot_dimension_numbers<[1], [0], [0], [1], [0, 0, 1, 1], [], []>} : vector<32x128xbf16>, vector<128x32xbf16>, vector<32x32xf32> -> vector<32x32xf32>
    %32 = arith.truncf %31 : vector<32x32xf32> to vector<32x32xbf16>
    %c6 = arith.constant 6 : index
    %c0_25 = arith.constant 0 : index
    %c0_26 = arith.constant 0 : index
    %33 = vector.load %arg3[%c6, %c0_25, %c0_26] : memref<9x32x128xbf16, #tpu.memory_space<vmem>>, vector<1x32x128xbf16>
    %34 = vector.shape_cast %33 : vector<1x32x128xbf16> to vector<32x128xbf16>
    %cst_27 = arith.constant dense<0.000000e+00> : vector<32x32xf32>
    %35 = tpu.matmul %34, %8, %cst_27 {dimension_numbers = #tpu.dot_dimension_numbers<[1], [0], [0], [1], [0, 0, 1, 1], [], []>} : vector<32x128xbf16>, vector<128x32xbf16>, vector<32x32xf32> -> vector<32x32xf32>
    %36 = arith.truncf %35 : vector<32x32xf32> to vector<32x32xbf16>
    %c7 = arith.constant 7 : index
    %c0_28 = arith.constant 0 : index
    %c0_29 = arith.constant 0 : index
    %37 = vector.load %arg3[%c7, %c0_28, %c0_29] : memref<9x32x128xbf16, #tpu.memory_space<vmem>>, vector<1x32x128xbf16>
    %38 = vector.shape_cast %37 : vector<1x32x128xbf16> to vector<32x128xbf16>
    %cst_30 = arith.constant dense<0.000000e+00> : vector<32x32xf32>
    %39 = tpu.matmul %38, %8, %cst_30 {dimension_numbers = #tpu.dot_dimension_numbers<[1], [0], [0], [1], [0, 0, 1, 1], [], []>} : vector<32x128xbf16>, vector<128x32xbf16>, vector<32x32xf32> -> vector<32x32xf32>
    %40 = arith.truncf %39 : vector<32x32xf32> to vector<32x32xbf16>
    %c8 = arith.constant 8 : index
    %c0_31 = arith.constant 0 : index
    %c0_32 = arith.constant 0 : index
    %41 = vector.load %arg3[%c8, %c0_31, %c0_32] : memref<9x32x128xbf16, #tpu.memory_space<vmem>>, vector<1x32x128xbf16>
    %42 = vector.shape_cast %41 : vector<1x32x128xbf16> to vector<32x128xbf16>
    %cst_33 = arith.constant dense<0.000000e+00> : vector<32x32xf32>
    %43 = tpu.matmul %42, %8, %cst_33 {dimension_numbers = #tpu.dot_dimension_numbers<[1], [0], [0], [1], [0, 0, 1, 1], [], []>} : vector<32x128xbf16>, vector<128x32xbf16>, vector<32x32xf32> -> vector<32x32xf32>
    %44 = arith.truncf %43 : vector<32x32xf32> to vector<32x32xbf16>
    %45 = tpu.concatenate %12, %16, %20, %24, %28, %32, %36, %40, %44 in 1 : vector<32x32xbf16>, vector<32x32xbf16>, vector<32x32xbf16>, vector<32x32xbf16>, vector<32x32xbf16>, vector<32x32xbf16>, vector<32x32xbf16>, vector<32x32xbf16>, vector<32x32xbf16> -> vector<32x288xbf16>
    %c0_34 = arith.constant 0 : index
    %c0_35 = arith.constant 0 : index
    %46 = vector.load %arg4[%c0_34, %c0_35] : memref<288x64xbf16, #tpu.memory_space<vmem>>, vector<288x64xbf16>
    %cst_36 = arith.constant dense<0.000000e+00> : vector<32x64xf32>
    %47 = tpu.matmul %45, %46, %cst_36 {dimension_numbers = #tpu.dot_dimension_numbers<[1], [0], [0], [1], [0, 0, 1, 1], [], []>} : vector<32x288xbf16>, vector<288x64xbf16>, vector<32x64xf32> -> vector<32x64xf32>
    %c0_37 = arith.constant 0 : index
    %c0_38 = arith.constant 0 : index
    %48 = vector.load %arg5[%c0_37, %c0_38] : memref<1x64xf32, #tpu.memory_space<vmem>>, vector<1x64xf32>
    %49 = vector.broadcast %48 : vector<1x64xf32> to vector<32x64xf32>
    %50 = arith.addf %47, %49 : vector<32x64xf32>
    %51 = vector.extract_strided_slice %50 {offsets = [0, 0], sizes = [32, 32], strides = [1, 1]} : vector<32x64xf32> to vector<32x32xf32>
    %cst_39 = arith.constant 0.000000e+00 : f32
    %52 = vector.broadcast %cst_39 : f32 to vector<32x32xf32>
    %53 = arith.maximumf %51, %52 : vector<32x32xf32>
    %54 = arith.truncf %53 : vector<32x32xf32> to vector<32x32xbf16>
    %55 = vector.extract_strided_slice %50 {offsets = [0, 32], sizes = [32, 32], strides = [1, 1]} : vector<32x64xf32> to vector<32x32xf32>
    %c0_40 = arith.constant 0 : index
    %c0_41 = arith.constant 0 : index
    %c0_42 = arith.constant 0 : index
    %56 = vector.load %arg6[%c0_40, %c0_41, %c0_42] : memref<9x32x32xbf16, #tpu.memory_space<vmem>>, vector<1x32x32xbf16>
    %57 = vector.shape_cast %56 : vector<1x32x32xbf16> to vector<32x32xbf16>
    %cst_43 = arith.constant dense<0.000000e+00> : vector<32x32xf32>
    %58 = tpu.matmul %57, %54, %cst_43 {dimension_numbers = #tpu.dot_dimension_numbers<[1], [0], [0], [1], [0, 0, 1, 1], [], []>} : vector<32x32xbf16>, vector<32x32xbf16>, vector<32x32xf32> -> vector<32x32xf32>
    %59 = arith.truncf %58 : vector<32x32xf32> to vector<32x32xbf16>
    %c1_44 = arith.constant 1 : index
    %c0_45 = arith.constant 0 : index
    %c0_46 = arith.constant 0 : index
    %60 = vector.load %arg6[%c1_44, %c0_45, %c0_46] : memref<9x32x32xbf16, #tpu.memory_space<vmem>>, vector<1x32x32xbf16>
    %61 = vector.shape_cast %60 : vector<1x32x32xbf16> to vector<32x32xbf16>
    %cst_47 = arith.constant dense<0.000000e+00> : vector<32x32xf32>
    %62 = tpu.matmul %61, %54, %cst_47 {dimension_numbers = #tpu.dot_dimension_numbers<[1], [0], [0], [1], [0, 0, 1, 1], [], []>} : vector<32x32xbf16>, vector<32x32xbf16>, vector<32x32xf32> -> vector<32x32xf32>
    %63 = arith.truncf %62 : vector<32x32xf32> to vector<32x32xbf16>
    %c2_48 = arith.constant 2 : index
    %c0_49 = arith.constant 0 : index
    %c0_50 = arith.constant 0 : index
    %64 = vector.load %arg6[%c2_48, %c0_49, %c0_50] : memref<9x32x32xbf16, #tpu.memory_space<vmem>>, vector<1x32x32xbf16>
    %65 = vector.shape_cast %64 : vector<1x32x32xbf16> to vector<32x32xbf16>
    %cst_51 = arith.constant dense<0.000000e+00> : vector<32x32xf32>
    %66 = tpu.matmul %65, %54, %cst_51 {dimension_numbers = #tpu.dot_dimension_numbers<[1], [0], [0], [1], [0, 0, 1, 1], [], []>} : vector<32x32xbf16>, vector<32x32xbf16>, vector<32x32xf32> -> vector<32x32xf32>
    %67 = arith.truncf %66 : vector<32x32xf32> to vector<32x32xbf16>
    %c3_52 = arith.constant 3 : index
    %c0_53 = arith.constant 0 : index
    %c0_54 = arith.constant 0 : index
    %68 = vector.load %arg6[%c3_52, %c0_53, %c0_54] : memref<9x32x32xbf16, #tpu.memory_space<vmem>>, vector<1x32x32xbf16>
    %69 = vector.shape_cast %68 : vector<1x32x32xbf16> to vector<32x32xbf16>
    %cst_55 = arith.constant dense<0.000000e+00> : vector<32x32xf32>
    %70 = tpu.matmul %69, %54, %cst_55 {dimension_numbers = #tpu.dot_dimension_numbers<[1], [0], [0], [1], [0, 0, 1, 1], [], []>} : vector<32x32xbf16>, vector<32x32xbf16>, vector<32x32xf32> -> vector<32x32xf32>
    %71 = arith.truncf %70 : vector<32x32xf32> to vector<32x32xbf16>
    %c4_56 = arith.constant 4 : index
    %c0_57 = arith.constant 0 : index
    %c0_58 = arith.constant 0 : index
    %72 = vector.load %arg6[%c4_56, %c0_57, %c0_58] : memref<9x32x32xbf16, #tpu.memory_space<vmem>>, vector<1x32x32xbf16>
    %73 = vector.shape_cast %72 : vector<1x32x32xbf16> to vector<32x32xbf16>
    %cst_59 = arith.constant dense<0.000000e+00> : vector<32x32xf32>
    %74 = tpu.matmul %73, %54, %cst_59 {dimension_numbers = #tpu.dot_dimension_numbers<[1], [0], [0], [1], [0, 0, 1, 1], [], []>} : vector<32x32xbf16>, vector<32x32xbf16>, vector<32x32xf32> -> vector<32x32xf32>
    %75 = arith.truncf %74 : vector<32x32xf32> to vector<32x32xbf16>
    %c5_60 = arith.constant 5 : index
    %c0_61 = arith.constant 0 : index
    %c0_62 = arith.constant 0 : index
    %76 = vector.load %arg6[%c5_60, %c0_61, %c0_62] : memref<9x32x32xbf16, #tpu.memory_space<vmem>>, vector<1x32x32xbf16>
    %77 = vector.shape_cast %76 : vector<1x32x32xbf16> to vector<32x32xbf16>
    %cst_63 = arith.constant dense<0.000000e+00> : vector<32x32xf32>
    %78 = tpu.matmul %77, %54, %cst_63 {dimension_numbers = #tpu.dot_dimension_numbers<[1], [0], [0], [1], [0, 0, 1, 1], [], []>} : vector<32x32xbf16>, vector<32x32xbf16>, vector<32x32xf32> -> vector<32x32xf32>
    %79 = arith.truncf %78 : vector<32x32xf32> to vector<32x32xbf16>
    %c6_64 = arith.constant 6 : index
    %c0_65 = arith.constant 0 : index
    %c0_66 = arith.constant 0 : index
    %80 = vector.load %arg6[%c6_64, %c0_65, %c0_66] : memref<9x32x32xbf16, #tpu.memory_space<vmem>>, vector<1x32x32xbf16>
    %81 = vector.shape_cast %80 : vector<1x32x32xbf16> to vector<32x32xbf16>
    %cst_67 = arith.constant dense<0.000000e+00> : vector<32x32xf32>
    %82 = tpu.matmul %81, %54, %cst_67 {dimension_numbers = #tpu.dot_dimension_numbers<[1], [0], [0], [1], [0, 0, 1, 1], [], []>} : vector<32x32xbf16>, vector<32x32xbf16>, vector<32x32xf32> -> vector<32x32xf32>
    %83 = arith.truncf %82 : vector<32x32xf32> to vector<32x32xbf16>
    %c7_68 = arith.constant 7 : index
    %c0_69 = arith.constant 0 : index
    %c0_70 = arith.constant 0 : index
    %84 = vector.load %arg6[%c7_68, %c0_69, %c0_70] : memref<9x32x32xbf16, #tpu.memory_space<vmem>>, vector<1x32x32xbf16>
    %85 = vector.shape_cast %84 : vector<1x32x32xbf16> to vector<32x32xbf16>
    %cst_71 = arith.constant dense<0.000000e+00> : vector<32x32xf32>
    %86 = tpu.matmul %85, %54, %cst_71 {dimension_numbers = #tpu.dot_dimension_numbers<[1], [0], [0], [1], [0, 0, 1, 1], [], []>} : vector<32x32xbf16>, vector<32x32xbf16>, vector<32x32xf32> -> vector<32x32xf32>
    %87 = arith.truncf %86 : vector<32x32xf32> to vector<32x32xbf16>
    %c8_72 = arith.constant 8 : index
    %c0_73 = arith.constant 0 : index
    %c0_74 = arith.constant 0 : index
    %88 = vector.load %arg6[%c8_72, %c0_73, %c0_74] : memref<9x32x32xbf16, #tpu.memory_space<vmem>>, vector<1x32x32xbf16>
    %89 = vector.shape_cast %88 : vector<1x32x32xbf16> to vector<32x32xbf16>
    %cst_75 = arith.constant dense<0.000000e+00> : vector<32x32xf32>
    %90 = tpu.matmul %89, %54, %cst_75 {dimension_numbers = #tpu.dot_dimension_numbers<[1], [0], [0], [1], [0, 0, 1, 1], [], []>} : vector<32x32xbf16>, vector<32x32xbf16>, vector<32x32xf32> -> vector<32x32xf32>
    %91 = arith.truncf %90 : vector<32x32xf32> to vector<32x32xbf16>
    %92 = tpu.concatenate %59, %63, %67, %71, %75, %79, %83, %87, %91 in 1 : vector<32x32xbf16>, vector<32x32xbf16>, vector<32x32xbf16>, vector<32x32xbf16>, vector<32x32xbf16>, vector<32x32xbf16>, vector<32x32xbf16>, vector<32x32xbf16>, vector<32x32xbf16> -> vector<32x288xbf16>
    %c0_76 = arith.constant 0 : index
    %c0_77 = arith.constant 0 : index
    %93 = vector.load %arg7[%c0_76, %c0_77] : memref<288x32xbf16, #tpu.memory_space<vmem>>, vector<288x32xbf16>
    %cst_78 = arith.constant dense<0.000000e+00> : vector<32x32xf32>
    %94 = tpu.matmul %92, %93, %cst_78 {dimension_numbers = #tpu.dot_dimension_numbers<[1], [0], [0], [1], [0, 0, 1, 1], [], []>} : vector<32x288xbf16>, vector<288x32xbf16>, vector<32x32xf32> -> vector<32x32xf32>
    %c0_79 = arith.constant 0 : index
    %c0_80 = arith.constant 0 : index
    %95 = vector.load %arg8[%c0_79, %c0_80] : memref<1x32xf32, #tpu.memory_space<vmem>>, vector<1x32xf32>
    %96 = vector.broadcast %95 : vector<1x32xf32> to vector<32x32xf32>
    %97 = arith.addf %94, %96 : vector<32x32xf32>
    %cst_81 = arith.constant 0.000000e+00 : f32
    %98 = vector.broadcast %cst_81 : f32 to vector<32x32xf32>
    %99 = arith.maximumf %97, %98 : vector<32x32xf32>
    %100 = arith.addf %99, %55 : vector<32x32xf32>
    %101 = arith.truncf %100 : vector<32x32xf32> to vector<32x32xbf16>
    %c0_82 = arith.constant 0 : index
    %c0_83 = arith.constant 0 : index
    %c0_84 = arith.constant 0 : index
    %102 = vector.load %arg9[%c0_82, %c0_83, %c0_84] : memref<9x8x32xbf16, #tpu.memory_space<vmem>>, vector<1x8x32xbf16>
    %103 = vector.shape_cast %102 : vector<1x8x32xbf16> to vector<8x32xbf16>
    %cst_85 = arith.constant dense<0.000000e+00> : vector<8x32xf32>
    %104 = tpu.matmul %103, %101, %cst_85 {dimension_numbers = #tpu.dot_dimension_numbers<[1], [0], [0], [1], [0, 0, 1, 1], [], []>} : vector<8x32xbf16>, vector<32x32xbf16>, vector<8x32xf32> -> vector<8x32xf32>
    %105 = arith.truncf %104 : vector<8x32xf32> to vector<8x32xbf16>
    %c1_86 = arith.constant 1 : index
    %c0_87 = arith.constant 0 : index
    %c0_88 = arith.constant 0 : index
    %106 = vector.load %arg9[%c1_86, %c0_87, %c0_88] : memref<9x8x32xbf16, #tpu.memory_space<vmem>>, vector<1x8x32xbf16>
    %107 = vector.shape_cast %106 : vector<1x8x32xbf16> to vector<8x32xbf16>
    %cst_89 = arith.constant dense<0.000000e+00> : vector<8x32xf32>
    %108 = tpu.matmul %107, %101, %cst_89 {dimension_numbers = #tpu.dot_dimension_numbers<[1], [0], [0], [1], [0, 0, 1, 1], [], []>} : vector<8x32xbf16>, vector<32x32xbf16>, vector<8x32xf32> -> vector<8x32xf32>
    %109 = arith.truncf %108 : vector<8x32xf32> to vector<8x32xbf16>
    %c2_90 = arith.constant 2 : index
    %c0_91 = arith.constant 0 : index
    %c0_92 = arith.constant 0 : index
    %110 = vector.load %arg9[%c2_90, %c0_91, %c0_92] : memref<9x8x32xbf16, #tpu.memory_space<vmem>>, vector<1x8x32xbf16>
    %111 = vector.shape_cast %110 : vector<1x8x32xbf16> to vector<8x32xbf16>
    %cst_93 = arith.constant dense<0.000000e+00> : vector<8x32xf32>
    %112 = tpu.matmul %111, %101, %cst_93 {dimension_numbers = #tpu.dot_dimension_numbers<[1], [0], [0], [1], [0, 0, 1, 1], [], []>} : vector<8x32xbf16>, vector<32x32xbf16>, vector<8x32xf32> -> vector<8x32xf32>
    %113 = arith.truncf %112 : vector<8x32xf32> to vector<8x32xbf16>
    %c3_94 = arith.constant 3 : index
    %c0_95 = arith.constant 0 : index
    %c0_96 = arith.constant 0 : index
    %114 = vector.load %arg9[%c3_94, %c0_95, %c0_96] : memref<9x8x32xbf16, #tpu.memory_space<vmem>>, vector<1x8x32xbf16>
    %115 = vector.shape_cast %114 : vector<1x8x32xbf16> to vector<8x32xbf16>
    %cst_97 = arith.constant dense<0.000000e+00> : vector<8x32xf32>
    %116 = tpu.matmul %115, %101, %cst_97 {dimension_numbers = #tpu.dot_dimension_numbers<[1], [0], [0], [1], [0, 0, 1, 1], [], []>} : vector<8x32xbf16>, vector<32x32xbf16>, vector<8x32xf32> -> vector<8x32xf32>
    %117 = arith.truncf %116 : vector<8x32xf32> to vector<8x32xbf16>
    %c4_98 = arith.constant 4 : index
    %c0_99 = arith.constant 0 : index
    %c0_100 = arith.constant 0 : index
    %118 = vector.load %arg9[%c4_98, %c0_99, %c0_100] : memref<9x8x32xbf16, #tpu.memory_space<vmem>>, vector<1x8x32xbf16>
    %119 = vector.shape_cast %118 : vector<1x8x32xbf16> to vector<8x32xbf16>
    %cst_101 = arith.constant dense<0.000000e+00> : vector<8x32xf32>
    %120 = tpu.matmul %119, %101, %cst_101 {dimension_numbers = #tpu.dot_dimension_numbers<[1], [0], [0], [1], [0, 0, 1, 1], [], []>} : vector<8x32xbf16>, vector<32x32xbf16>, vector<8x32xf32> -> vector<8x32xf32>
    %121 = arith.truncf %120 : vector<8x32xf32> to vector<8x32xbf16>
    %c5_102 = arith.constant 5 : index
    %c0_103 = arith.constant 0 : index
    %c0_104 = arith.constant 0 : index
    %122 = vector.load %arg9[%c5_102, %c0_103, %c0_104] : memref<9x8x32xbf16, #tpu.memory_space<vmem>>, vector<1x8x32xbf16>
    %123 = vector.shape_cast %122 : vector<1x8x32xbf16> to vector<8x32xbf16>
    %cst_105 = arith.constant dense<0.000000e+00> : vector<8x32xf32>
    %124 = tpu.matmul %123, %101, %cst_105 {dimension_numbers = #tpu.dot_dimension_numbers<[1], [0], [0], [1], [0, 0, 1, 1], [], []>} : vector<8x32xbf16>, vector<32x32xbf16>, vector<8x32xf32> -> vector<8x32xf32>
    %125 = arith.truncf %124 : vector<8x32xf32> to vector<8x32xbf16>
    %c6_106 = arith.constant 6 : index
    %c0_107 = arith.constant 0 : index
    %c0_108 = arith.constant 0 : index
    %126 = vector.load %arg9[%c6_106, %c0_107, %c0_108] : memref<9x8x32xbf16, #tpu.memory_space<vmem>>, vector<1x8x32xbf16>
    %127 = vector.shape_cast %126 : vector<1x8x32xbf16> to vector<8x32xbf16>
    %cst_109 = arith.constant dense<0.000000e+00> : vector<8x32xf32>
    %128 = tpu.matmul %127, %101, %cst_109 {dimension_numbers = #tpu.dot_dimension_numbers<[1], [0], [0], [1], [0, 0, 1, 1], [], []>} : vector<8x32xbf16>, vector<32x32xbf16>, vector<8x32xf32> -> vector<8x32xf32>
    %129 = arith.truncf %128 : vector<8x32xf32> to vector<8x32xbf16>
    %c7_110 = arith.constant 7 : index
    %c0_111 = arith.constant 0 : index
    %c0_112 = arith.constant 0 : index
    %130 = vector.load %arg9[%c7_110, %c0_111, %c0_112] : memref<9x8x32xbf16, #tpu.memory_space<vmem>>, vector<1x8x32xbf16>
    %131 = vector.shape_cast %130 : vector<1x8x32xbf16> to vector<8x32xbf16>
    %cst_113 = arith.constant dense<0.000000e+00> : vector<8x32xf32>
    %132 = tpu.matmul %131, %101, %cst_113 {dimension_numbers = #tpu.dot_dimension_numbers<[1], [0], [0], [1], [0, 0, 1, 1], [], []>} : vector<8x32xbf16>, vector<32x32xbf16>, vector<8x32xf32> -> vector<8x32xf32>
    %133 = arith.truncf %132 : vector<8x32xf32> to vector<8x32xbf16>
    %c8_114 = arith.constant 8 : index
    %c0_115 = arith.constant 0 : index
    %c0_116 = arith.constant 0 : index
    %134 = vector.load %arg9[%c8_114, %c0_115, %c0_116] : memref<9x8x32xbf16, #tpu.memory_space<vmem>>, vector<1x8x32xbf16>
    %135 = vector.shape_cast %134 : vector<1x8x32xbf16> to vector<8x32xbf16>
    %cst_117 = arith.constant dense<0.000000e+00> : vector<8x32xf32>
    %136 = tpu.matmul %135, %101, %cst_117 {dimension_numbers = #tpu.dot_dimension_numbers<[1], [0], [0], [1], [0, 0, 1, 1], [], []>} : vector<8x32xbf16>, vector<32x32xbf16>, vector<8x32xf32> -> vector<8x32xf32>
    %137 = arith.truncf %136 : vector<8x32xf32> to vector<8x32xbf16>
    %138 = tpu.concatenate %105, %109, %113, %117, %121, %125, %129, %133, %137 in 1 : vector<8x32xbf16>, vector<8x32xbf16>, vector<8x32xbf16>, vector<8x32xbf16>, vector<8x32xbf16>, vector<8x32xbf16>, vector<8x32xbf16>, vector<8x32xbf16>, vector<8x32xbf16> -> vector<8x288xbf16>
    %c0_118 = arith.constant 0 : index
    %c0_119 = arith.constant 0 : index
    %139 = vector.load %arg10[%c0_118, %c0_119] : memref<288x128xbf16, #tpu.memory_space<vmem>>, vector<288x128xbf16>
    %cst_120 = arith.constant dense<0.000000e+00> : vector<8x128xf32>
    %140 = tpu.matmul %138, %139, %cst_120 {dimension_numbers = #tpu.dot_dimension_numbers<[1], [0], [0], [1], [0, 0, 1, 1], [], []>} : vector<8x288xbf16>, vector<288x128xbf16>, vector<8x128xf32> -> vector<8x128xf32>
    %c0_121 = arith.constant 0 : index
    %c0_122 = arith.constant 0 : index
    %141 = vector.load %arg11[%c0_121, %c0_122] : memref<1x128xf32, #tpu.memory_space<vmem>>, vector<1x128xf32>
    %142 = vector.broadcast %141 : vector<1x128xf32> to vector<8x128xf32>
    %143 = arith.addf %140, %142 : vector<8x128xf32>
    %144 = vector.extract_strided_slice %143 {offsets = [0, 0], sizes = [8, 64], strides = [1, 1]} : vector<8x128xf32> to vector<8x64xf32>
    %cst_123 = arith.constant 0.000000e+00 : f32
    %145 = vector.broadcast %cst_123 : f32 to vector<8x64xf32>
    %146 = arith.maximumf %144, %145 : vector<8x64xf32>
    %147 = arith.truncf %146 : vector<8x64xf32> to vector<8x64xbf16>
    %148 = vector.extract_strided_slice %143 {offsets = [0, 64], sizes = [8, 64], strides = [1, 1]} : vector<8x128xf32> to vector<8x64xf32>
    %c0_124 = arith.constant 0 : index
    %c0_125 = arith.constant 0 : index
    %c0_126 = arith.constant 0 : index
    %149 = vector.load %arg12[%c0_124, %c0_125, %c0_126] : memref<9x8x8xbf16, #tpu.memory_space<vmem>>, vector<1x8x8xbf16>
    %150 = vector.shape_cast %149 : vector<1x8x8xbf16> to vector<8x8xbf16>
    %cst_127 = arith.constant dense<0.000000e+00> : vector<8x64xf32>
    %151 = tpu.matmul %150, %147, %cst_127 {dimension_numbers = #tpu.dot_dimension_numbers<[1], [0], [0], [1], [0, 0, 1, 1], [], []>} : vector<8x8xbf16>, vector<8x64xbf16>, vector<8x64xf32> -> vector<8x64xf32>
    %152 = arith.truncf %151 : vector<8x64xf32> to vector<8x64xbf16>
    %c1_128 = arith.constant 1 : index
    %c0_129 = arith.constant 0 : index
    %c0_130 = arith.constant 0 : index
    %153 = vector.load %arg12[%c1_128, %c0_129, %c0_130] : memref<9x8x8xbf16, #tpu.memory_space<vmem>>, vector<1x8x8xbf16>
    %154 = vector.shape_cast %153 : vector<1x8x8xbf16> to vector<8x8xbf16>
    %cst_131 = arith.constant dense<0.000000e+00> : vector<8x64xf32>
    %155 = tpu.matmul %154, %147, %cst_131 {dimension_numbers = #tpu.dot_dimension_numbers<[1], [0], [0], [1], [0, 0, 1, 1], [], []>} : vector<8x8xbf16>, vector<8x64xbf16>, vector<8x64xf32> -> vector<8x64xf32>
    %156 = arith.truncf %155 : vector<8x64xf32> to vector<8x64xbf16>
    %c2_132 = arith.constant 2 : index
    %c0_133 = arith.constant 0 : index
    %c0_134 = arith.constant 0 : index
    %157 = vector.load %arg12[%c2_132, %c0_133, %c0_134] : memref<9x8x8xbf16, #tpu.memory_space<vmem>>, vector<1x8x8xbf16>
    %158 = vector.shape_cast %157 : vector<1x8x8xbf16> to vector<8x8xbf16>
    %cst_135 = arith.constant dense<0.000000e+00> : vector<8x64xf32>
    %159 = tpu.matmul %158, %147, %cst_135 {dimension_numbers = #tpu.dot_dimension_numbers<[1], [0], [0], [1], [0, 0, 1, 1], [], []>} : vector<8x8xbf16>, vector<8x64xbf16>, vector<8x64xf32> -> vector<8x64xf32>
    %160 = arith.truncf %159 : vector<8x64xf32> to vector<8x64xbf16>
    %c3_136 = arith.constant 3 : index
    %c0_137 = arith.constant 0 : index
    %c0_138 = arith.constant 0 : index
    %161 = vector.load %arg12[%c3_136, %c0_137, %c0_138] : memref<9x8x8xbf16, #tpu.memory_space<vmem>>, vector<1x8x8xbf16>
    %162 = vector.shape_cast %161 : vector<1x8x8xbf16> to vector<8x8xbf16>
    %cst_139 = arith.constant dense<0.000000e+00> : vector<8x64xf32>
    %163 = tpu.matmul %162, %147, %cst_139 {dimension_numbers = #tpu.dot_dimension_numbers<[1], [0], [0], [1], [0, 0, 1, 1], [], []>} : vector<8x8xbf16>, vector<8x64xbf16>, vector<8x64xf32> -> vector<8x64xf32>
    %164 = arith.truncf %163 : vector<8x64xf32> to vector<8x64xbf16>
    %c4_140 = arith.constant 4 : index
    %c0_141 = arith.constant 0 : index
    %c0_142 = arith.constant 0 : index
    %165 = vector.load %arg12[%c4_140, %c0_141, %c0_142] : memref<9x8x8xbf16, #tpu.memory_space<vmem>>, vector<1x8x8xbf16>
    %166 = vector.shape_cast %165 : vector<1x8x8xbf16> to vector<8x8xbf16>
    %cst_143 = arith.constant dense<0.000000e+00> : vector<8x64xf32>
    %167 = tpu.matmul %166, %147, %cst_143 {dimension_numbers = #tpu.dot_dimension_numbers<[1], [0], [0], [1], [0, 0, 1, 1], [], []>} : vector<8x8xbf16>, vector<8x64xbf16>, vector<8x64xf32> -> vector<8x64xf32>
    %168 = arith.truncf %167 : vector<8x64xf32> to vector<8x64xbf16>
    %c5_144 = arith.constant 5 : index
    %c0_145 = arith.constant 0 : index
    %c0_146 = arith.constant 0 : index
    %169 = vector.load %arg12[%c5_144, %c0_145, %c0_146] : memref<9x8x8xbf16, #tpu.memory_space<vmem>>, vector<1x8x8xbf16>
    %170 = vector.shape_cast %169 : vector<1x8x8xbf16> to vector<8x8xbf16>
    %cst_147 = arith.constant dense<0.000000e+00> : vector<8x64xf32>
    %171 = tpu.matmul %170, %147, %cst_147 {dimension_numbers = #tpu.dot_dimension_numbers<[1], [0], [0], [1], [0, 0, 1, 1], [], []>} : vector<8x8xbf16>, vector<8x64xbf16>, vector<8x64xf32> -> vector<8x64xf32>
    %172 = arith.truncf %171 : vector<8x64xf32> to vector<8x64xbf16>
    %c6_148 = arith.constant 6 : index
    %c0_149 = arith.constant 0 : index
    %c0_150 = arith.constant 0 : index
    %173 = vector.load %arg12[%c6_148, %c0_149, %c0_150] : memref<9x8x8xbf16, #tpu.memory_space<vmem>>, vector<1x8x8xbf16>
    %174 = vector.shape_cast %173 : vector<1x8x8xbf16> to vector<8x8xbf16>
    %cst_151 = arith.constant dense<0.000000e+00> : vector<8x64xf32>
    %175 = tpu.matmul %174, %147, %cst_151 {dimension_numbers = #tpu.dot_dimension_numbers<[1], [0], [0], [1], [0, 0, 1, 1], [], []>} : vector<8x8xbf16>, vector<8x64xbf16>, vector<8x64xf32> -> vector<8x64xf32>
    %176 = arith.truncf %175 : vector<8x64xf32> to vector<8x64xbf16>
    %c7_152 = arith.constant 7 : index
    %c0_153 = arith.constant 0 : index
    %c0_154 = arith.constant 0 : index
    %177 = vector.load %arg12[%c7_152, %c0_153, %c0_154] : memref<9x8x8xbf16, #tpu.memory_space<vmem>>, vector<1x8x8xbf16>
    %178 = vector.shape_cast %177 : vector<1x8x8xbf16> to vector<8x8xbf16>
    %cst_155 = arith.constant dense<0.000000e+00> : vector<8x64xf32>
    %179 = tpu.matmul %178, %147, %cst_155 {dimension_numbers = #tpu.dot_dimension_numbers<[1], [0], [0], [1], [0, 0, 1, 1], [], []>} : vector<8x8xbf16>, vector<8x64xbf16>, vector<8x64xf32> -> vector<8x64xf32>
    %180 = arith.truncf %179 : vector<8x64xf32> to vector<8x64xbf16>
    %c8_156 = arith.constant 8 : index
    %c0_157 = arith.constant 0 : index
    %c0_158 = arith.constant 0 : index
    %181 = vector.load %arg12[%c8_156, %c0_157, %c0_158] : memref<9x8x8xbf16, #tpu.memory_space<vmem>>, vector<1x8x8xbf16>
    %182 = vector.shape_cast %181 : vector<1x8x8xbf16> to vector<8x8xbf16>
    %cst_159 = arith.constant dense<0.000000e+00> : vector<8x64xf32>
    %183 = tpu.matmul %182, %147, %cst_159 {dimension_numbers = #tpu.dot_dimension_numbers<[1], [0], [0], [1], [0, 0, 1, 1], [], []>} : vector<8x8xbf16>, vector<8x64xbf16>, vector<8x64xf32> -> vector<8x64xf32>
    %184 = arith.truncf %183 : vector<8x64xf32> to vector<8x64xbf16>
    %185 = tpu.concatenate %152, %156, %160, %164, %168, %172, %176, %180, %184 in 1 : vector<8x64xbf16>, vector<8x64xbf16>, vector<8x64xbf16>, vector<8x64xbf16>, vector<8x64xbf16>, vector<8x64xbf16>, vector<8x64xbf16>, vector<8x64xbf16>, vector<8x64xbf16> -> vector<8x576xbf16>
    %c0_160 = arith.constant 0 : index
    %c0_161 = arith.constant 0 : index
    %186 = vector.load %arg13[%c0_160, %c0_161] : memref<576x64xbf16, #tpu.memory_space<vmem>>, vector<576x64xbf16>
    %cst_162 = arith.constant dense<0.000000e+00> : vector<8x64xf32>
    %187 = tpu.matmul %185, %186, %cst_162 {dimension_numbers = #tpu.dot_dimension_numbers<[1], [0], [0], [1], [0, 0, 1, 1], [], []>} : vector<8x576xbf16>, vector<576x64xbf16>, vector<8x64xf32> -> vector<8x64xf32>
    %c0_163 = arith.constant 0 : index
    %c0_164 = arith.constant 0 : index
    %188 = vector.load %arg14[%c0_163, %c0_164] : memref<1x64xf32, #tpu.memory_space<vmem>>, vector<1x64xf32>
    %189 = vector.broadcast %188 : vector<1x64xf32> to vector<8x64xf32>
    %190 = arith.addf %187, %189 : vector<8x64xf32>
    %cst_165 = arith.constant 0.000000e+00 : f32
    %191 = vector.broadcast %cst_165 : f32 to vector<8x64xf32>
    %192 = arith.maximumf %190, %191 : vector<8x64xf32>
    %193 = arith.addf %192, %148 : vector<8x64xf32>
    %194 = arith.truncf %193 : vector<8x64xf32> to vector<8x64xbf16>
    %c0_166 = arith.constant 0 : index
    %c0_167 = arith.constant 0 : index
    %c0_168 = arith.constant 0 : index
    %195 = vector.load %arg15[%c0_166, %c0_167, %c0_168] : memref<9x2x8xbf16, #tpu.memory_space<vmem>>, vector<1x2x8xbf16>
    %196 = vector.shape_cast %195 : vector<1x2x8xbf16> to vector<2x8xbf16>
    %cst_169 = arith.constant dense<0.000000e+00> : vector<2x64xf32>
    %197 = tpu.matmul %196, %194, %cst_169 {dimension_numbers = #tpu.dot_dimension_numbers<[1], [0], [0], [1], [0, 0, 1, 1], [], []>} : vector<2x8xbf16>, vector<8x64xbf16>, vector<2x64xf32> -> vector<2x64xf32>
    %198 = arith.truncf %197 : vector<2x64xf32> to vector<2x64xbf16>
    %c1_170 = arith.constant 1 : index
    %c0_171 = arith.constant 0 : index
    %c0_172 = arith.constant 0 : index
    %199 = vector.load %arg15[%c1_170, %c0_171, %c0_172] : memref<9x2x8xbf16, #tpu.memory_space<vmem>>, vector<1x2x8xbf16>
    %200 = vector.shape_cast %199 : vector<1x2x8xbf16> to vector<2x8xbf16>
    %cst_173 = arith.constant dense<0.000000e+00> : vector<2x64xf32>
    %201 = tpu.matmul %200, %194, %cst_173 {dimension_numbers = #tpu.dot_dimension_numbers<[1], [0], [0], [1], [0, 0, 1, 1], [], []>} : vector<2x8xbf16>, vector<8x64xbf16>, vector<2x64xf32> -> vector<2x64xf32>
    %202 = arith.truncf %201 : vector<2x64xf32> to vector<2x64xbf16>
    %c2_174 = arith.constant 2 : index
    %c0_175 = arith.constant 0 : index
    %c0_176 = arith.constant 0 : index
    %203 = vector.load %arg15[%c2_174, %c0_175, %c0_176] : memref<9x2x8xbf16, #tpu.memory_space<vmem>>, vector<1x2x8xbf16>
    %204 = vector.shape_cast %203 : vector<1x2x8xbf16> to vector<2x8xbf16>
    %cst_177 = arith.constant dense<0.000000e+00> : vector<2x64xf32>
    %205 = tpu.matmul %204, %194, %cst_177 {dimension_numbers = #tpu.dot_dimension_numbers<[1], [0], [0], [1], [0, 0, 1, 1], [], []>} : vector<2x8xbf16>, vector<8x64xbf16>, vector<2x64xf32> -> vector<2x64xf32>
    %206 = arith.truncf %205 : vector<2x64xf32> to vector<2x64xbf16>
    %c3_178 = arith.constant 3 : index
    %c0_179 = arith.constant 0 : index
    %c0_180 = arith.constant 0 : index
    %207 = vector.load %arg15[%c3_178, %c0_179, %c0_180] : memref<9x2x8xbf16, #tpu.memory_space<vmem>>, vector<1x2x8xbf16>
    %208 = vector.shape_cast %207 : vector<1x2x8xbf16> to vector<2x8xbf16>
    %cst_181 = arith.constant dense<0.000000e+00> : vector<2x64xf32>
    %209 = tpu.matmul %208, %194, %cst_181 {dimension_numbers = #tpu.dot_dimension_numbers<[1], [0], [0], [1], [0, 0, 1, 1], [], []>} : vector<2x8xbf16>, vector<8x64xbf16>, vector<2x64xf32> -> vector<2x64xf32>
    %210 = arith.truncf %209 : vector<2x64xf32> to vector<2x64xbf16>
    %c4_182 = arith.constant 4 : index
    %c0_183 = arith.constant 0 : index
    %c0_184 = arith.constant 0 : index
    %211 = vector.load %arg15[%c4_182, %c0_183, %c0_184] : memref<9x2x8xbf16, #tpu.memory_space<vmem>>, vector<1x2x8xbf16>
    %212 = vector.shape_cast %211 : vector<1x2x8xbf16> to vector<2x8xbf16>
    %cst_185 = arith.constant dense<0.000000e+00> : vector<2x64xf32>
    %213 = tpu.matmul %212, %194, %cst_185 {dimension_numbers = #tpu.dot_dimension_numbers<[1], [0], [0], [1], [0, 0, 1, 1], [], []>} : vector<2x8xbf16>, vector<8x64xbf16>, vector<2x64xf32> -> vector<2x64xf32>
    %214 = arith.truncf %213 : vector<2x64xf32> to vector<2x64xbf16>
    %c5_186 = arith.constant 5 : index
    %c0_187 = arith.constant 0 : index
    %c0_188 = arith.constant 0 : index
    %215 = vector.load %arg15[%c5_186, %c0_187, %c0_188] : memref<9x2x8xbf16, #tpu.memory_space<vmem>>, vector<1x2x8xbf16>
    %216 = vector.shape_cast %215 : vector<1x2x8xbf16> to vector<2x8xbf16>
    %cst_189 = arith.constant dense<0.000000e+00> : vector<2x64xf32>
    %217 = tpu.matmul %216, %194, %cst_189 {dimension_numbers = #tpu.dot_dimension_numbers<[1], [0], [0], [1], [0, 0, 1, 1], [], []>} : vector<2x8xbf16>, vector<8x64xbf16>, vector<2x64xf32> -> vector<2x64xf32>
    %218 = arith.truncf %217 : vector<2x64xf32> to vector<2x64xbf16>
    %c6_190 = arith.constant 6 : index
    %c0_191 = arith.constant 0 : index
    %c0_192 = arith.constant 0 : index
    %219 = vector.load %arg15[%c6_190, %c0_191, %c0_192] : memref<9x2x8xbf16, #tpu.memory_space<vmem>>, vector<1x2x8xbf16>
    %220 = vector.shape_cast %219 : vector<1x2x8xbf16> to vector<2x8xbf16>
    %cst_193 = arith.constant dense<0.000000e+00> : vector<2x64xf32>
    %221 = tpu.matmul %220, %194, %cst_193 {dimension_numbers = #tpu.dot_dimension_numbers<[1], [0], [0], [1], [0, 0, 1, 1], [], []>} : vector<2x8xbf16>, vector<8x64xbf16>, vector<2x64xf32> -> vector<2x64xf32>
    %222 = arith.truncf %221 : vector<2x64xf32> to vector<2x64xbf16>
    %c7_194 = arith.constant 7 : index
    %c0_195 = arith.constant 0 : index
    %c0_196 = arith.constant 0 : index
    %223 = vector.load %arg15[%c7_194, %c0_195, %c0_196] : memref<9x2x8xbf16, #tpu.memory_space<vmem>>, vector<1x2x8xbf16>
    %224 = vector.shape_cast %223 : vector<1x2x8xbf16> to vector<2x8xbf16>
    %cst_197 = arith.constant dense<0.000000e+00> : vector<2x64xf32>
    %225 = tpu.matmul %224, %194, %cst_197 {dimension_numbers = #tpu.dot_dimension_numbers<[1], [0], [0], [1], [0, 0, 1, 1], [], []>} : vector<2x8xbf16>, vector<8x64xbf16>, vector<2x64xf32> -> vector<2x64xf32>
    %226 = arith.truncf %225 : vector<2x64xf32> to vector<2x64xbf16>
    %c8_198 = arith.constant 8 : index
    %c0_199 = arith.constant 0 : index
    %c0_200 = arith.constant 0 : index
    %227 = vector.load %arg15[%c8_198, %c0_199, %c0_200] : memref<9x2x8xbf16, #tpu.memory_space<vmem>>, vector<1x2x8xbf16>
    %228 = vector.shape_cast %227 : vector<1x2x8xbf16> to vector<2x8xbf16>
    %cst_201 = arith.constant dense<0.000000e+00> : vector<2x64xf32>
    %229 = tpu.matmul %228, %194, %cst_201 {dimension_numbers = #tpu.dot_dimension_numbers<[1], [0], [0], [1], [0, 0, 1, 1], [], []>} : vector<2x8xbf16>, vector<8x64xbf16>, vector<2x64xf32> -> vector<2x64xf32>
    %230 = arith.truncf %229 : vector<2x64xf32> to vector<2x64xbf16>
    %231 = tpu.concatenate %198, %202, %206, %210, %214, %218, %222, %226, %230 in 1 : vector<2x64xbf16>, vector<2x64xbf16>, vector<2x64xbf16>, vector<2x64xbf16>, vector<2x64xbf16>, vector<2x64xbf16>, vector<2x64xbf16>, vector<2x64xbf16>, vector<2x64xbf16> -> vector<2x576xbf16>
    %c0_202 = arith.constant 0 : index
    %c0_203 = arith.constant 0 : index
    %232 = vector.load %arg16[%c0_202, %c0_203] : memref<576x256xbf16, #tpu.memory_space<vmem>>, vector<576x256xbf16>
    %cst_204 = arith.constant dense<0.000000e+00> : vector<2x256xf32>
    %233 = tpu.matmul %231, %232, %cst_204 {dimension_numbers = #tpu.dot_dimension_numbers<[1], [0], [0], [1], [0, 0, 1, 1], [], []>} : vector<2x576xbf16>, vector<576x256xbf16>, vector<2x256xf32> -> vector<2x256xf32>
    %c0_205 = arith.constant 0 : index
    %c0_206 = arith.constant 0 : index
    %234 = vector.load %arg17[%c0_205, %c0_206] : memref<1x256xf32, #tpu.memory_space<vmem>>, vector<1x256xf32>
    %235 = vector.broadcast %234 : vector<1x256xf32> to vector<2x256xf32>
    %236 = arith.addf %233, %235 : vector<2x256xf32>
    %237 = vector.extract_strided_slice %236 {offsets = [0, 0], sizes = [2, 128], strides = [1, 1]} : vector<2x256xf32> to vector<2x128xf32>
    %cst_207 = arith.constant 0.000000e+00 : f32
    %238 = vector.broadcast %cst_207 : f32 to vector<2x128xf32>
    %239 = arith.maximumf %237, %238 : vector<2x128xf32>
    %240 = arith.truncf %239 : vector<2x128xf32> to vector<2x128xbf16>
    %241 = vector.extract_strided_slice %236 {offsets = [0, 128], sizes = [2, 128], strides = [1, 1]} : vector<2x256xf32> to vector<2x128xf32>
    %c0_208 = arith.constant 0 : index
    %c0_209 = arith.constant 0 : index
    %c0_210 = arith.constant 0 : index
    %242 = vector.load %arg18[%c0_208, %c0_209, %c0_210] : memref<9x2x2xbf16, #tpu.memory_space<vmem>>, vector<1x2x2xbf16>
    %243 = vector.shape_cast %242 : vector<1x2x2xbf16> to vector<2x2xbf16>
    %cst_211 = arith.constant dense<0.000000e+00> : vector<2x128xf32>
    %244 = tpu.matmul %243, %240, %cst_211 {dimension_numbers = #tpu.dot_dimension_numbers<[1], [0], [0], [1], [0, 0, 1, 1], [], []>} : vector<2x2xbf16>, vector<2x128xbf16>, vector<2x128xf32> -> vector<2x128xf32>
    %245 = arith.truncf %244 : vector<2x128xf32> to vector<2x128xbf16>
    %c1_212 = arith.constant 1 : index
    %c0_213 = arith.constant 0 : index
    %c0_214 = arith.constant 0 : index
    %246 = vector.load %arg18[%c1_212, %c0_213, %c0_214] : memref<9x2x2xbf16, #tpu.memory_space<vmem>>, vector<1x2x2xbf16>
    %247 = vector.shape_cast %246 : vector<1x2x2xbf16> to vector<2x2xbf16>
    %cst_215 = arith.constant dense<0.000000e+00> : vector<2x128xf32>
    %248 = tpu.matmul %247, %240, %cst_215 {dimension_numbers = #tpu.dot_dimension_numbers<[1], [0], [0], [1], [0, 0, 1, 1], [], []>} : vector<2x2xbf16>, vector<2x128xbf16>, vector<2x128xf32> -> vector<2x128xf32>
    %249 = arith.truncf %248 : vector<2x128xf32> to vector<2x128xbf16>
    %c2_216 = arith.constant 2 : index
    %c0_217 = arith.constant 0 : index
    %c0_218 = arith.constant 0 : index
    %250 = vector.load %arg18[%c2_216, %c0_217, %c0_218] : memref<9x2x2xbf16, #tpu.memory_space<vmem>>, vector<1x2x2xbf16>
    %251 = vector.shape_cast %250 : vector<1x2x2xbf16> to vector<2x2xbf16>
    %cst_219 = arith.constant dense<0.000000e+00> : vector<2x128xf32>
    %252 = tpu.matmul %251, %240, %cst_219 {dimension_numbers = #tpu.dot_dimension_numbers<[1], [0], [0], [1], [0, 0, 1, 1], [], []>} : vector<2x2xbf16>, vector<2x128xbf16>, vector<2x128xf32> -> vector<2x128xf32>
    %253 = arith.truncf %252 : vector<2x128xf32> to vector<2x128xbf16>
    %c3_220 = arith.constant 3 : index
    %c0_221 = arith.constant 0 : index
    %c0_222 = arith.constant 0 : index
    %254 = vector.load %arg18[%c3_220, %c0_221, %c0_222] : memref<9x2x2xbf16, #tpu.memory_space<vmem>>, vector<1x2x2xbf16>
    %255 = vector.shape_cast %254 : vector<1x2x2xbf16> to vector<2x2xbf16>
    %cst_223 = arith.constant dense<0.000000e+00> : vector<2x128xf32>
    %256 = tpu.matmul %255, %240, %cst_223 {dimension_numbers = #tpu.dot_dimension_numbers<[1], [0], [0], [1], [0, 0, 1, 1], [], []>} : vector<2x2xbf16>, vector<2x128xbf16>, vector<2x128xf32> -> vector<2x128xf32>
    %257 = arith.truncf %256 : vector<2x128xf32> to vector<2x128xbf16>
    %c4_224 = arith.constant 4 : index
    %c0_225 = arith.constant 0 : index
    %c0_226 = arith.constant 0 : index
    %258 = vector.load %arg18[%c4_224, %c0_225, %c0_226] : memref<9x2x2xbf16, #tpu.memory_space<vmem>>, vector<1x2x2xbf16>
    %259 = vector.shape_cast %258 : vector<1x2x2xbf16> to vector<2x2xbf16>
    %cst_227 = arith.constant dense<0.000000e+00> : vector<2x128xf32>
    %260 = tpu.matmul %259, %240, %cst_227 {dimension_numbers = #tpu.dot_dimension_numbers<[1], [0], [0], [1], [0, 0, 1, 1], [], []>} : vector<2x2xbf16>, vector<2x128xbf16>, vector<2x128xf32> -> vector<2x128xf32>
    %261 = arith.truncf %260 : vector<2x128xf32> to vector<2x128xbf16>
    %c5_228 = arith.constant 5 : index
    %c0_229 = arith.constant 0 : index
    %c0_230 = arith.constant 0 : index
    %262 = vector.load %arg18[%c5_228, %c0_229, %c0_230] : memref<9x2x2xbf16, #tpu.memory_space<vmem>>, vector<1x2x2xbf16>
    %263 = vector.shape_cast %262 : vector<1x2x2xbf16> to vector<2x2xbf16>
    %cst_231 = arith.constant dense<0.000000e+00> : vector<2x128xf32>
    %264 = tpu.matmul %263, %240, %cst_231 {dimension_numbers = #tpu.dot_dimension_numbers<[1], [0], [0], [1], [0, 0, 1, 1], [], []>} : vector<2x2xbf16>, vector<2x128xbf16>, vector<2x128xf32> -> vector<2x128xf32>
    %265 = arith.truncf %264 : vector<2x128xf32> to vector<2x128xbf16>
    %c6_232 = arith.constant 6 : index
    %c0_233 = arith.constant 0 : index
    %c0_234 = arith.constant 0 : index
    %266 = vector.load %arg18[%c6_232, %c0_233, %c0_234] : memref<9x2x2xbf16, #tpu.memory_space<vmem>>, vector<1x2x2xbf16>
    %267 = vector.shape_cast %266 : vector<1x2x2xbf16> to vector<2x2xbf16>
    %cst_235 = arith.constant dense<0.000000e+00> : vector<2x128xf32>
    %268 = tpu.matmul %267, %240, %cst_235 {dimension_numbers = #tpu.dot_dimension_numbers<[1], [0], [0], [1], [0, 0, 1, 1], [], []>} : vector<2x2xbf16>, vector<2x128xbf16>, vector<2x128xf32> -> vector<2x128xf32>
    %269 = arith.truncf %268 : vector<2x128xf32> to vector<2x128xbf16>
    %c7_236 = arith.constant 7 : index
    %c0_237 = arith.constant 0 : index
    %c0_238 = arith.constant 0 : index
    %270 = vector.load %arg18[%c7_236, %c0_237, %c0_238] : memref<9x2x2xbf16, #tpu.memory_space<vmem>>, vector<1x2x2xbf16>
    %271 = vector.shape_cast %270 : vector<1x2x2xbf16> to vector<2x2xbf16>
    %cst_239 = arith.constant dense<0.000000e+00> : vector<2x128xf32>
    %272 = tpu.matmul %271, %240, %cst_239 {dimension_numbers = #tpu.dot_dimension_numbers<[1], [0], [0], [1], [0, 0, 1, 1], [], []>} : vector<2x2xbf16>, vector<2x128xbf16>, vector<2x128xf32> -> vector<2x128xf32>
    %273 = arith.truncf %272 : vector<2x128xf32> to vector<2x128xbf16>
    %c8_240 = arith.constant 8 : index
    %c0_241 = arith.constant 0 : index
    %c0_242 = arith.constant 0 : index
    %274 = vector.load %arg18[%c8_240, %c0_241, %c0_242] : memref<9x2x2xbf16, #tpu.memory_space<vmem>>, vector<1x2x2xbf16>
    %275 = vector.shape_cast %274 : vector<1x2x2xbf16> to vector<2x2xbf16>
    %cst_243 = arith.constant dense<0.000000e+00> : vector<2x128xf32>
    %276 = tpu.matmul %275, %240, %cst_243 {dimension_numbers = #tpu.dot_dimension_numbers<[1], [0], [0], [1], [0, 0, 1, 1], [], []>} : vector<2x2xbf16>, vector<2x128xbf16>, vector<2x128xf32> -> vector<2x128xf32>
    %277 = arith.truncf %276 : vector<2x128xf32> to vector<2x128xbf16>
    %278 = tpu.concatenate %245, %249, %253, %257, %261, %265, %269, %273, %277 in 1 : vector<2x128xbf16>, vector<2x128xbf16>, vector<2x128xbf16>, vector<2x128xbf16>, vector<2x128xbf16>, vector<2x128xbf16>, vector<2x128xbf16>, vector<2x128xbf16>, vector<2x128xbf16> -> vector<2x1152xbf16>
    %c0_244 = arith.constant 0 : index
    %c0_245 = arith.constant 0 : index
    %279 = vector.load %arg19[%c0_244, %c0_245] : memref<1152x128xbf16, #tpu.memory_space<vmem>>, vector<1152x128xbf16>
    %cst_246 = arith.constant dense<0.000000e+00> : vector<2x128xf32>
    %280 = tpu.matmul %278, %279, %cst_246 {dimension_numbers = #tpu.dot_dimension_numbers<[1], [0], [0], [1], [0, 0, 1, 1], [], []>} : vector<2x1152xbf16>, vector<1152x128xbf16>, vector<2x128xf32> -> vector<2x128xf32>
    %c0_247 = arith.constant 0 : index
    %c0_248 = arith.constant 0 : index
    %281 = vector.load %arg20[%c0_247, %c0_248] : memref<1x128xf32, #tpu.memory_space<vmem>>, vector<1x128xf32>
    %282 = vector.broadcast %281 : vector<1x128xf32> to vector<2x128xf32>
    %283 = arith.addf %280, %282 : vector<2x128xf32>
    %cst_249 = arith.constant 0.000000e+00 : f32
    %284 = vector.broadcast %cst_249 : f32 to vector<2x128xf32>
    %285 = arith.maximumf %283, %284 : vector<2x128xf32>
    %286 = arith.addf %285, %241 : vector<2x128xf32>
    %c0_250 = arith.constant 0 : index
    %c0_251 = arith.constant 0 : index
    %287 = vector.load %arg21[%c0_250, %c0_251] : memref<1x128xf32, #tpu.memory_space<vmem>>, vector<1x128xf32>
    %288 = vector.broadcast %287 : vector<1x128xf32> to vector<2x128xf32>
    %289 = arith.mulf %286, %288 : vector<2x128xf32>
    %cst_252 = arith.constant dense<0.000000e+00> : vector<2xf32>
    %290 = vector.multi_reduction <add>, %289, %cst_252 [1] : vector<2x128xf32> to vector<2xf32>
    %291 = vector.shape_cast %290 : vector<2xf32> to vector<2x1xf32>
    %c0_253 = arith.constant 0 : index
    %c0_254 = arith.constant 0 : index
    %292 = vector.load %arg22[%c0_253, %c0_254] : memref<1x1xf32, #tpu.memory_space<vmem>>, vector<1x1xf32>
    %293 = vector.broadcast %292 : vector<1x1xf32> to vector<2x1xf32>
    %294 = arith.addf %291, %293 : vector<2x1xf32>
    %c0_255 = arith.constant 0 : index
    %c0_256 = arith.constant 0 : index
    %295 = vector.load %arg23[%c0_255, %c0_256] : memref<2x1xf32, #tpu.memory_space<vmem>>, vector<2x1xf32>
    tpu.vector_store %arg23[%c0_255, %c0_256], %294 {strides = array<i32>} : memref<2x1xf32, #tpu.memory_space<vmem>>, vector<2x1xf32>,
    return
  }
}

</mosaic_0001>

<llo_original>
// kernel: convnet_forward.1
$region0: #{convnet_forward.1}
  #allocation0 [shape = 'u32[]', space=smem, size = 0x4, offset = 0x4, fixed_abs, tag = 'smem constant byte address 0x4 - core index']
  #allocation1 [shape = 'u32[144,128]{1,0:T(1,128)}', space=vmem, size = 0x12000, scoped, tag = 'internal scratch']
  #allocation2 [shape = 'f32[1,1]{1,0:T(1,128)S(1)}', space=vmem, size = 0x200, scoped, tag = 'scoped memory for convnet_forward.1']
  %s0 = inlined_call_operand.vmem [shape: bf16[128,147], index: 0, kind: input, shape index: {}]
  %s1 = inlined_call_operand.vmem [shape: bf16[147,32], index: 1, kind: input, shape index: {}]
  %s2 = inlined_call_operand.vmem [shape: f32[1,32], index: 2, kind: input, shape index: {}]
  %s3 = inlined_call_operand.vmem [shape: bf16[9,32,128], index: 3, kind: input, shape index: {}]
  %s4 = inlined_call_operand.vmem [shape: bf16[288,64], index: 4, kind: input, shape index: {}]
  %s5 = inlined_call_operand.vmem [shape: f32[1,64], index: 5, kind: input, shape index: {}]
  %s6 = inlined_call_operand.vmem [shape: bf16[9,32,32], index: 6, kind: input, shape index: {}]
  %s7 = inlined_call_operand.vmem [shape: bf16[288,32], index: 7, kind: input, shape index: {}]
  %s8 = inlined_call_operand.vmem [shape: f32[1,32], index: 8, kind: input, shape index: {}]
  %s9 = inlined_call_operand.vmem [shape: bf16[9,8,32], index: 9, kind: input, shape index: {}]
  %s10 = inlined_call_operand.vmem [shape: bf16[288,128], index: 10, kind: input, shape index: {}]
  %s11 = inlined_call_operand.vmem [shape: f32[1,128], index: 11, kind: input, shape index: {}]
  %s12 = inlined_call_operand.vmem [shape: bf16[9,8,8], index: 12, kind: input, shape index: {}]
  %s13 = inlined_call_operand.vmem [shape: bf16[576,64], index: 13, kind: input, shape index: {}]
  %s14 = inlined_call_operand.vmem [shape: f32[1,64], index: 14, kind: input, shape index: {}]
  %s15 = inlined_call_operand.vmem [shape: bf16[9,2,8], index: 15, kind: input, shape index: {}]
  %s16 = inlined_call_operand.vmem [shape: bf16[576,256], index: 16, kind: input, shape index: {}]
  %s17 = inlined_call_operand.vmem [shape: f32[1,256], index: 17, kind: input, shape index: {}]
  %s18 = inlined_call_operand.vmem [shape: bf16[9,2,2], index: 18, kind: input, shape index: {}]
  %s19 = inlined_call_operand.vmem [shape: bf16[1152,128], index: 19, kind: input, shape index: {}]
  %s20 = inlined_call_operand.vmem [shape: f32[1,128], index: 20, kind: input, shape index: {}]
  %s21 = inlined_call_operand.vmem [shape: f32[1,128], index: 21, kind: input, shape index: {}]
  %s22 = inlined_call_operand.<no memory space> [shape: f32[1,1], index: 22, kind: input, shape index: {}]
  %s23 = inlined_call_operand.vmem [shape: f32[2,1], index: 23, kind: output, shape index: {}]
  %s24 = sld [smem:[#allocation0]]
  $region102: #{convnet_forward.1} parent=0
    _
  %s26 = ssub.s32 1, %s24
  %s27 = scalar_select 0, %s26, %s24
  %v28 = vstv %s22
  %29 = vst [vmem:[#allocation2] sm:$0x1] %v28
  // Predicated region
  $region2: #{convnet_forward.1} parent=0 // pred_check
    _
  $region3: #{convnet_forward.1} parent=0 // pred_check_branch
    %31 = sbr.rel (0) target = $region5
  $region4: #{convnet_forward.1} parent=0 // pred_region
    _
  $region5: #{convnet_forward.1} parent=0 // pred_fallthru
    _
  // Predicated region
  $region6: #{convnet_forward.1} parent=0 // pred_check
    _
  $region7: #{convnet_forward.1} parent=0 // pred_check_branch
    %33 = sbr.rel (0) target = $region9
  $region8: #{convnet_forward.1} parent=0 // pred_region
    _
  $region9: #{convnet_forward.1} parent=0 // pred_fallthru
    _
  // Predicated region
  $region10: #{convnet_forward.1} parent=0 // pred_check
    _
  $region11: #{convnet_forward.1} parent=0 // pred_check_branch
    %35 = sbr.rel (0) target = $region13
  $region12: #{convnet_forward.1} parent=0 // pred_region
    _
  $region13: #{convnet_forward.1} parent=0 // pred_fallthru
    _
  // Predicated region
  $region14: #{convnet_forward.1} parent=0 // pred_check
    _
  $region15: #{convnet_forward.1} parent=0 // pred_check_branch
    %37 = sbr.rel (0) target = $region17
  $region16: #{convnet_forward.1} parent=0 // pred_region
    _
  $region17: #{convnet_forward.1} parent=0 // pred_fallthru
    _
  // Predicated region
  $region18: #{convnet_forward.1} parent=0 // pred_check
    _
  $region19: #{convnet_forward.1} parent=0 // pred_check_branch
    %39 = sbr.rel (0) target = $region21
  $region20: #{convnet_forward.1} parent=0 // pred_region
    _
  $region21: #{convnet_forward.1} parent=0 // pred_fallthru
    _
  // Predicated region
  $region22: #{convnet_forward.1} parent=0 // pred_check
    _
  $region23: #{convnet_forward.1} parent=0 // pred_check_branch
    %41 = sbr.rel (0) target = $region25
  $region24: #{convnet_forward.1} parent=0 // pred_region
    _
  $region25: #{convnet_forward.1} parent=0 // pred_fallthru
    _
  // Predicated region
  $region26: #{convnet_forward.1} parent=0 // pred_check
    _
  $region27: #{convnet_forward.1} parent=0 // pred_check_branch
    %43 = sbr.rel (0) target = $region29
  $region28: #{convnet_forward.1} parent=0 // pred_region
    _
  $region29: #{convnet_forward.1} parent=0 // pred_fallthru
    _
  // Predicated region
  $region30: #{convnet_forward.1} parent=0 // pred_check
    _
  $region31: #{convnet_forward.1} parent=0 // pred_check_branch
    %45 = sbr.rel (0) target = $region33
  $region32: #{convnet_forward.1} parent=0 // pred_region
    _
  $region33: #{convnet_forward.1} parent=0 // pred_fallthru
    _
  // Predicated region
  $region34: #{convnet_forward.1} parent=0 // pred_check
    _
  $region35: #{convnet_forward.1} parent=0 // pred_check_branch
    %47 = sbr.rel (0) target = $region37
  $region36: #{convnet_forward.1} parent=0 // pred_region
    _
  $region37: #{convnet_forward.1} parent=0 // pred_fallthru
    _
  // Predicated region
  $region38: #{convnet_forward.1} parent=0 // pred_check
    _
  $region39: #{convnet_forward.1} parent=0 // pred_check_branch
    %49 = sbr.rel (0) target = $region41
  $region40: #{convnet_forward.1} parent=0 // pred_region
    _
  $region41: #{convnet_forward.1} parent=0 // pred_fallthru
    _
  // Predicated region
  $region42: #{convnet_forward.1} parent=0 // pred_check
    _
  $region43: #{convnet_forward.1} parent=0 // pred_check_branch
    %51 = sbr.rel (0) target = $region45
  $region44: #{convnet_forward.1} parent=0 // pred_region
    _
  $region45: #{convnet_forward.1} parent=0 // pred_fallthru
    _
  // Predicated region
  $region46: #{convnet_forward.1} parent=0 // pred_check
    _
  $region47: #{convnet_forward.1} parent=0 // pred_check_branch
    %53 = sbr.rel (0) target = $region49
  $region48: #{convnet_forward.1} parent=0 // pred_region
    _
  $region49: #{convnet_forward.1} parent=0 // pred_fallthru
    _
  // Predicated region
  $region50: #{convnet_forward.1} parent=0 // pred_check
    _
  $region51: #{convnet_forward.1} parent=0 // pred_check_branch
    %55 = sbr.rel (0) target = $region53
  $region52: #{convnet_forward.1} parent=0 // pred_region
    _
  $region53: #{convnet_forward.1} parent=0 // pred_fallthru
    _
  // Predicated region
  $region54: #{convnet_forward.1} parent=0 // pred_check
    _
  $region55: #{convnet_forward.1} parent=0 // pred_check_branch
    %57 = sbr.rel (0) target = $region57
  $region56: #{convnet_forward.1} parent=0 // pred_region
    _
  $region57: #{convnet_forward.1} parent=0 // pred_fallthru
    _
  // Predicated region
  $region58: #{convnet_forward.1} parent=0 // pred_check
    _
  $region59: #{convnet_forward.1} parent=0 // pred_check_branch
    %59 = sbr.rel (0) target = $region61
  $region60: #{convnet_forward.1} parent=0 // pred_region
    _
  $region61: #{convnet_forward.1} parent=0 // pred_fallthru
    _
  // Predicated region
  $region62: #{convnet_forward.1} parent=0 // pred_check
    _
  $region63: #{convnet_forward.1} parent=0 // pred_check_branch
    %61 = sbr.rel (0) target = $region65
  $region64: #{convnet_forward.1} parent=0 // pred_region
    _
  $region65: #{convnet_forward.1} parent=0 // pred_fallthru
    _
  // Predicated region
  $region66: #{convnet_forward.1} parent=0 // pred_check
    _
  $region67: #{convnet_forward.1} parent=0 // pred_check_branch
    %63 = sbr.rel (0) target = $region69
  $region68: #{convnet_forward.1} parent=0 // pred_region
    _
  $region69: #{convnet_forward.1} parent=0 // pred_fallthru
    _
  // Predicated region
  $region70: #{convnet_forward.1} parent=0 // pred_check
    _
  $region71: #{convnet_forward.1} parent=0 // pred_check_branch
    %65 = sbr.rel (0) target = $region73
  $region72: #{convnet_forward.1} parent=0 // pred_region
    _
  $region73: #{convnet_forward.1} parent=0 // pred_fallthru
    _
  // Predicated region
  $region74: #{convnet_forward.1} parent=0 // pred_check
    _
  $region75: #{convnet_forward.1} parent=0 // pred_check_branch
    %67 = sbr.rel (0) target = $region77
  $region76: #{convnet_forward.1} parent=0 // pred_region
    _
  $region77: #{convnet_forward.1} parent=0 // pred_fallthru
    _
  // Predicated region
  $region78: #{convnet_forward.1} parent=0 // pred_check
    _
  $region79: #{convnet_forward.1} parent=0 // pred_check_branch
    %69 = sbr.rel (0) target = $region81
  $region80: #{convnet_forward.1} parent=0 // pred_region
    _
  $region81: #{convnet_forward.1} parent=0 // pred_fallthru
    _
  // Predicated region
  $region82: #{convnet_forward.1} parent=0 // pred_check
    _
  $region83: #{convnet_forward.1} parent=0 // pred_check_branch
    %71 = sbr.rel (0) target = $region85
  $region84: #{convnet_forward.1} parent=0 // pred_region
    _
  $region85: #{convnet_forward.1} parent=0 // pred_fallthru
    _
  // Predicated region
  $region86: #{convnet_forward.1} parent=0 // pred_check
    _
  $region87: #{convnet_forward.1} parent=0 // pred_check_branch
    %73 = sbr.rel (0) target = $region89
  $region88: #{convnet_forward.1} parent=0 // pred_region
    _
  $region89: #{convnet_forward.1} parent=0 // pred_fallthru
    _
  // Predicated region
  $region90: #{convnet_forward.1} parent=0 // pred_check
    _
  $region91: #{convnet_forward.1} parent=0 // pred_check_branch
    %75 = sbr.rel (0) target = $region93
  $region92: #{convnet_forward.1} parent=0 // pred_region
    _
  $region93: #{convnet_forward.1} parent=0 // pred_fallthru
    _
  %v77 = vld [vmem:[%s0] sm:$0xff]
  %v78 = vld [vmem:[%s0 + $0x8] sm:$0xff]
  %v79 = vld [vmem:[%s0 + $0x10] sm:$0xff]
  %v80 = vld [vmem:[%s0 + $0x18] sm:$0xff]
  %v81 = vld [vmem:[%s0 + $0x20] sm:$0xff]
  %v82 = vld [vmem:[%s0 + $0x28] sm:$0xff]
  %v83 = vld [vmem:[%s0 + $0x30] sm:$0xff]
  %v84 = vld [vmem:[%s0 + $0x38] sm:$0xff]
  %v85 = vld [vmem:[%s0 + $0x40] sm:$0xff]
  %v86 = vld [vmem:[%s0 + $0x48] sm:$0xff]
  %v87 = vld [vmem:[%s0 + $0x50] sm:$0xff]
  %v88 = vld [vmem:[%s0 + $0x58] sm:$0xff]
  %v89 = vld [vmem:[%s0 + $0x60] sm:$0xff]
  %v90 = vld [vmem:[%s0 + $0x68] sm:$0xff]
  %v91 = vld [vmem:[%s0 + $0x70] sm:$0xff]
  %v92 = vld [vmem:[%s0 + $0x78] sm:$0xff]
  %v93 = vld [vmem:[%s1] sm:$0xf]
  %v94 = vld [vmem:[%s1 + $0x4] sm:$0xf]
  %v95 = vld [vmem:[%s1 + $0x8] sm:$0xf]
  %v96 = vld [vmem:[%s1 + $0xc] sm:$0xf]
  %v97 = vld [vmem:[%s1 + $0x10] sm:$0xf]
  %v98 = vld [vmem:[%s1 + $0x14] sm:$0xf]
  %v99 = vld [vmem:[%s1 + $0x18] sm:$0xf]
  %v100 = vld [vmem:[%s1 + $0x1c] sm:$0xf]
  %v101 = vld [vmem:[%s1 + $0x20] sm:$0xf]
  %v102 = vld [vmem:[%s1 + $0x24] sm:$0xf]
  %v103 = vld [vmem:[%s1 + $0x28] sm:$0xf]
  %v104 = vld [vmem:[%s1 + $0x2c] sm:$0xf]
  %v105 = vld [vmem:[%s1 + $0x30] sm:$0xf]
  %v106 = vld [vmem:[%s1 + $0x34] sm:$0xf]
  %v107 = vld [vmem:[%s1 + $0x38] sm:$0xf]
  %v108 = vld [vmem:[%s1 + $0x3c] sm:$0xf]
  %v109 = vld [vmem:[%s1 + $0x40] sm:$0xf]
  %v110 = vld [vmem:[%s1 + $0x44] sm:$0xf]
  %v111 = vld [vmem:[%s1 + $0x48] sm:$0x3]
  %v112 = vld [vmem:[%s2] sm:$0x1]
  %v114 = vlaneseq
  %v115 = vshrl.u32 %v114, 7
  %v116 = vsub.s32 0, %v115
  %v117 = vrot.slane %v112, %v116
  %v135 = vunpack.c.l.b16 %v77
  %v136 = vunpack.c.h.b16 %v77
  %v137 = vunpack.c.l.b16 %v78
  %v138 = vunpack.c.h.b16 %v78
  %v139 = vunpack.c.l.b16 %v79
  %v140 = vunpack.c.h.b16 %v79
  %v141 = vunpack.c.l.b16 %v80
  %v142 = vunpack.c.h.b16 %v80
  %v143 = vunpack.c.l.b16 %v81
  %v144 = vunpack.c.h.b16 %v81
  %v145 = vunpack.c.l.b16 %v82
  %v146 = vunpack.c.h.b16 %v82
  %v147 = vunpack.c.l.b16 %v83
  %v148 = vunpack.c.h.b16 %v83
  %v149 = vunpack.c.l.b16 %v84
  %v150 = vunpack.c.h.b16 %v84
  %v151 = vunpack.c.l.b16 %v85
  %v152 = vunpack.c.h.b16 %v85
  %v153 = vunpack.c.l.b16 %v86
  %v154 = vunpack.c.h.b16 %v86
  %v155 = vunpack.c.l.b16 %v87
  %v156 = vunpack.c.h.b16 %v87
  %v157 = vunpack.c.l.b16 %v88
  %v158 = vunpack.c.h.b16 %v88
  %v159 = vunpack.c.l.b16 %v89
  %v160 = vunpack.c.h.b16 %v89
  %v161 = vunpack.c.l.b16 %v90
  %v162 = vunpack.c.h.b16 %v90
  %v163 = vunpack.c.l.b16 %v91
  %v164 = vunpack.c.h.b16 %v91
  %v165 = vunpack.c.l.b16 %v92
  %v166 = vunpack.c.h.b16 %v92
  %v167 = vpack.c.b16 %v137, %v135
  %v168 = vpack.c.b16 %v138, %v136
  %v169 = vpack.c.b16 %v141, %v139
  %v170 = vpack.c.b16 %v142, %v140
  %v171 = vpack.c.b16 %v145, %v143
  %v172 = vpack.c.b16 %v146, %v144
  %v173 = vpack.c.b16 %v149, %v147
  %v174 = vpack.c.b16 %v150, %v148
  %v175 = vpack.c.b16 %v153, %v151
  %v176 = vpack.c.b16 %v154, %v152
  %v177 = vpack.c.b16 %v157, %v155
  %v178 = vpack.c.b16 %v158, %v156
  %v179 = vpack.c.b16 %v161, %v159
  %v180 = vpack.c.b16 %v162, %v160
  %v181 = vpack.c.b16 %v165, %v163
  %v182 = vpack.c.b16 %v166, %v164
  %v210 = vunpack.c.l.b16 %v93
  %v211 = vunpack.c.l.b16 %v94
  %v212 = vunpack.c.l.b16 %v95
  %v213 = vunpack.c.l.b16 %v96
  %v214 = vunpack.c.l.b16 %v97
  %v215 = vunpack.c.l.b16 %v98
  %v216 = vunpack.c.l.b16 %v99
  %v217 = vunpack.c.l.b16 %v100
  %v218 = vunpack.c.l.b16 %v101
  %v219 = vunpack.c.l.b16 %v102
  %v220 = vunpack.c.l.b16 %v103
  %v221 = vunpack.c.l.b16 %v104
  %v222 = vunpack.c.l.b16 %v105
  %v223 = vunpack.c.l.b16 %v106
  %v224 = vunpack.c.l.b16 %v107
  %v225 = vunpack.c.l.b16 %v108
  %v226 = vunpack.c.l.b16 %v109
  %v227 = vunpack.c.l.b16 %v110
  %v228 = vunpack.c.l.b16 %v111
  %v229 = vpack.c.b16 %v211, %v210
  %v230 = vpack.c.b16 %v213, %v212
  %v231 = vpack.c.b16 %v215, %v214
  %v232 = vpack.c.b16 %v217, %v216
  %v233 = vpack.c.b16 %v219, %v218
  %v234 = vpack.c.b16 %v221, %v220
  %v235 = vpack.c.b16 %v223, %v222
  %v236 = vpack.c.b16 %v225, %v224
  %v237 = vpack.c.b16 %v227, %v226
  %v238 = vpack.c.b16 %v228, %v228
  %vm248 = vcmask 154624
  %v250 = vsel %vm248, %v168, 0
  %v253 = vsel %vm248, %v170, 0
  %v256 = vsel %vm248, %v172, 0
  %v259 = vsel %vm248, %v174, 0
  %v262 = vsel %vm248, %v176, 0
  %v265 = vsel %vm248, %v178, 0
  %v268 = vsel %vm248, %v180, 0
  %v271 = vsel %vm248, %v182, 0
  %vm273 = vcmask 1040384
  %vm274 = vcmask 1041408
  %v275 = vsel %vm273, 4294967295, 65535
  %v276 = vsel %vm274, %v275, 0
  %v278 = vand.u32 %v238, %v276
  %280 = vmatprep.subr.bf16.mxu0 0
  %281 = vmatpush1.bf16.msra.mxu0 %v236
  %282 = vmatprep.subr.bf16.mxu0 0
  %283 = vmatpush1.bf16.msra.mxu0 %v235
  %284 = vmatprep.subr.bf16.mxu0 0
  %285 = vmatpush1.bf16.msra.mxu0 %v234
  %286 = vmatprep.subr.bf16.mxu0 0
  %287 = vmatpush1.bf16.msra.mxu0 %v233
  %288 = vmatprep.subr.bf16.mxu0 0
  %289 = vmatpush1.bf16.msra.mxu0 %v232
  %290 = vmatprep.subr.bf16.mxu0 0
  %291 = vmatpush1.bf16.msra.mxu0 %v231
  %292 = vmatprep.subr.bf16.mxu0 0
  %293 = vmatpush1.bf16.msra.mxu0 %v230
  %294 = vmatprep.subr.bf16.mxu0 0
  %295 = vmatpush1.bf16.msra.mxu0 %v229
  %296 = vmatprep.subr.bf16.mxu0 0
  %297 = vmatpush2.bf16.msra.mxu0 0
  %298 = vmatprep.subr.bf16.mxu0 0
  %299 = vmatpush2.bf16.msra.mxu0 0
  %300 = vmatprep.subr.bf16.mxu0 0
  %301 = vmatpush2.bf16.msra.mxu0 0
  %302 = vmatprep.subr.bf16.mxu0 0
  %303 = vmatpush2.bf16.msra.mxu0 0
  %304 = vmatprep.subr.bf16.mxu0 0
  %305 = vmatpush2.bf16.msra.mxu0 0
  %306 = vmatprep.subr.bf16.mxu0 0
  %307 = vmatpush2.bf16.msra.mxu0 0
  %308 = vmatprep.subr.bf16.mxu0 0
  %309 = vmatpush2.bf16.msra.mxu0 %v278
  %310 = vmatprep.subr.bf16.mxu0 0
  %311 = vmatpush2.bf16.msra.mxu0 %v237
  %312 = vmatprep.mubr.bf16.mxu0 %v250
  %313 = vmatmul.mubr.bf16.gmra.mxu0 %v167
  %v314 = vpop.f32.mrf.mxu0
  %v315 = vadd.f32 %v117, %v314
  %v316 = vpop.f32.mrf.mxu0
  %v317 = vpop.f32.mrf.mxu0
  %v318 = vadd.f32 %v117, %v317
  %v319 = vpop.f32.mrf.mxu0
  %320 = vmatprep.mubr.bf16.mxu0 %v253
  %321 = vmatmul.mubr.bf16.gmra.mxu0 %v169
  %v322 = vpop.f32.mrf.mxu0
  %v323 = vadd.f32 %v117, %v322
  %v324 = vpop.f32.mrf.mxu0
  %v325 = vpop.f32.mrf.mxu0
  %v326 = vadd.f32 %v117, %v325
  %v327 = vpop.f32.mrf.mxu0
  %328 = vmatprep.mubr.bf16.mxu0 %v256
  %329 = vmatmul.mubr.bf16.gmra.mxu0 %v171
  %v330 = vpop.f32.mrf.mxu0
  %v331 = vadd.f32 %v117, %v330
  %v332 = vpop.f32.mrf.mxu0
  %v333 = vpop.f32.mrf.mxu0
  %v334 = vadd.f32 %v117, %v333
  %v335 = vpop.f32.mrf.mxu0
  %336 = vmatprep.mubr.bf16.mxu0 %v259
  %337 = vmatmul.mubr.bf16.gmra.mxu0 %v173
  %v338 = vpop.f32.mrf.mxu0
  %v339 = vadd.f32 %v117, %v338
  %v340 = vpop.f32.mrf.mxu0
  %v341 = vpop.f32.mrf.mxu0
  %v342 = vadd.f32 %v117, %v341
  %v343 = vpop.f32.mrf.mxu0
  %344 = vmatprep.mubr.bf16.mxu0 %v262
  %345 = vmatmul.mubr.bf16.gmra.mxu0 %v175
  %v346 = vpop.f32.mrf.mxu0
  %v347 = vadd.f32 %v117, %v346
  %v348 = vpop.f32.mrf.mxu0
  %v349 = vpop.f32.mrf.mxu0
  %v350 = vadd.f32 %v117, %v349
  %v351 = vpop.f32.mrf.mxu0
  %352 = vmatprep.mubr.bf16.mxu0 %v265
  %353 = vmatmul.mubr.bf16.gmra.mxu0 %v177
  %v354 = vpop.f32.mrf.mxu0
  %v355 = vadd.f32 %v117, %v354
  %v356 = vpop.f32.mrf.mxu0
  %v357 = vpop.f32.mrf.mxu0
  %v358 = vadd.f32 %v117, %v357
  %v359 = vpop.f32.mrf.mxu0
  %360 = vmatprep.mubr.bf16.mxu0 %v268
  %361 = vmatmul.mubr.bf16.gmra.mxu0 %v179
  %v362 = vpop.f32.mrf.mxu0
  %v363 = vadd.f32 %v117, %v362
  %v364 = vpop.f32.mrf.mxu0
  %v365 = vpop.f32.mrf.mxu0
  %v366 = vadd.f32 %v117, %v365
  %v367 = vpop.f32.mrf.mxu0
  %368 = vmatprep.mubr.bf16.mxu0 %v271
  %369 = vmatmul.mubr.bf16.gmra.mxu0 %v181
  %v370 = vpop.f32.mrf.mxu0
  %v371 = vadd.f32 %v117, %v370
  %v372 = vpop.f32.mrf.mxu0
  %v373 = vpop.f32.mrf.mxu0
  %v374 = vadd.f32 %v117, %v373
  %v375 = vpop.f32.mrf.mxu0
  %376 = vdwg.mxu0
  %v377 = vmax.f32 %v315, 0.0
  %v378 = vmax.f32 %v318, 0.0
  %v379 = vmax.f32 %v323, 0.0
  %v380 = vmax.f32 %v326, 0.0
  %v381 = vmax.f32 %v331, 0.0
  %v382 = vmax.f32 %v334, 0.0
  %v383 = vmax.f32 %v339, 0.0
  %v384 = vmax.f32 %v342, 0.0
  %v385 = vmax.f32 %v347, 0.0
  %v386 = vmax.f32 %v350, 0.0
  %v387 = vmax.f32 %v355, 0.0
  %v388 = vmax.f32 %v358, 0.0
  %v389 = vmax.f32 %v363, 0.0
  %v390 = vmax.f32 %v366, 0.0
  %v391 = vmax.f32 %v371, 0.0
  %v392 = vmax.f32 %v374, 0.0
  %v393 = vpack.c.bf16 %v378, %v377
  %v394 = vpack.c.bf16 %v380, %v379
  %v395 = vpack.c.bf16 %v382, %v381
  %v396 = vpack.c.bf16 %v384, %v383
  %v397 = vpack.c.bf16 %v386, %v385
  %v398 = vpack.c.bf16 %v388, %v387
  %v399 = vpack.c.bf16 %v390, %v389
  %v400 = vpack.c.bf16 %v392, %v391
  %v401 = vld [vmem:[%s3] sm:$0xf]
  %v402 = vld [vmem:[%s3 + $0x4] sm:$0xf]
  %v403 = vld [vmem:[%s3 + $0x8] sm:$0xf]
  %v404 = vld [vmem:[%s3 + $0xc] sm:$0xf]
  %v409 = vunpack.c.l.b16 %v401
  %v410 = vunpack.c.l.b16 %v402
  %v411 = vunpack.c.l.b16 %v403
  %v412 = vunpack.c.l.b16 %v404
  %v413 = vpack.c.b16 %v410, %v409
  %v414 = vpack.c.b16 %v412, %v411
  %417 = vmatprep.subr.bf16.mxu0 0
  %418 = vmatpush1.bf16.msra.mxu0 %v400
  %419 = vmatprep.subr.bf16.mxu0 0
  %420 = vmatpush1.bf16.msra.mxu0 %v399
  %421 = vmatprep.subr.bf16.mxu0 0
  %422 = vmatpush1.bf16.msra.mxu0 %v398
  %423 = vmatprep.subr.bf16.mxu0 0
  %424 = vmatpush1.bf16.msra.mxu0 %v397
  %425 = vmatprep.subr.bf16.mxu0 0
  %426 = vmatpush1.bf16.msra.mxu0 %v396
  %427 = vmatprep.subr.bf16.mxu0 0
  %428 = vmatpush1.bf16.msra.mxu0 %v395
  %429 = vmatprep.subr.bf16.mxu0 0
  %430 = vmatpush1.bf16.msra.mxu0 %v394
  %431 = vmatprep.subr.bf16.mxu0 0
  %432 = vmatpush1.bf16.msra.mxu0 %v393
  %433 = vmatprep.subr.bf16.mxu0 0
  %434 = vmatpush2.bf16.msra.mxu0 0
  %435 = vmatprep.subr.bf16.mxu0 0
  %436 = vmatpush2.bf16.msra.mxu0 0
  %437 = vmatprep.subr.bf16.mxu0 0
  %438 = vmatpush2.bf16.msra.mxu0 0
  %439 = vmatprep.subr.bf16.mxu0 0
  %440 = vmatpush2.bf16.msra.mxu0 0
  %441 = vmatprep.subr.bf16.mxu0 0
  %442 = vmatpush2.bf16.msra.mxu0 0
  %443 = vmatprep.subr.bf16.mxu0 0
  %444 = vmatpush2.bf16.msra.mxu0 0
  %445 = vmatprep.subr.bf16.mxu0 0
  %446 = vmatpush2.bf16.msra.mxu0 0
  %447 = vmatprep.subr.bf16.mxu0 0
  %448 = vmatpush2.bf16.msra.mxu0 0
  %449 = vmatprep.mubr.bf16.mxu0 0
  %450 = vmatmul.mubr.bf16.gmra.mxu0 %v413
  %v451 = vpop.f32.mrf.mxu0
  %v452 = vadd.f32 0.0, %v451
  %v453 = vpop.f32.mrf.mxu0
  %v454 = vpop.f32.mrf.mxu0
  %v455 = vadd.f32 0.0, %v454
  %v456 = vpop.f32.mrf.mxu0
  %457 = vmatprep.mubr.bf16.mxu0 0
  %458 = vmatmul.mubr.bf16.gmra.mxu0 %v414
  %v459 = vpop.f32.mrf.mxu0
  %v460 = vadd.f32 0.0, %v459
  %v461 = vpop.f32.mrf.mxu0
  %v462 = vpop.f32.mrf.mxu0
  %v463 = vadd.f32 0.0, %v462
  %v464 = vpop.f32.mrf.mxu0
  %465 = vdwg.mxu0
  %v466 = vpack.c.bf16 %v455, %v452
  %v467 = vpack.c.bf16 %v463, %v460
  %s468 = scalar_lea.vmem %s3, 16
  %v469 = vld [vmem:[%s468] sm:$0xf]
  %v470 = vld [vmem:[%s468 + $0x4] sm:$0xf]
  %v471 = vld [vmem:[%s468 + $0x8] sm:$0xf]
  %v472 = vld [vmem:[%s468 + $0xc] sm:$0xf]
  %v477 = vunpack.c.l.b16 %v469
  %v478 = vunpack.c.l.b16 %v470
  %v479 = vunpack.c.l.b16 %v471
  %v480 = vunpack.c.l.b16 %v472
  %v481 = vpack.c.b16 %v478, %v477
  %v482 = vpack.c.b16 %v480, %v479
  %485 = vmatprep.subr.bf16.mxu0 0
  %486 = vmatpush1.bf16.msra.mxu0 %v400
  %487 = vmatprep.subr.bf16.mxu0 0
  %488 = vmatpush1.bf16.msra.mxu0 %v399
  %489 = vmatprep.subr.bf16.mxu0 0
  %490 = vmatpush1.bf16.msra.mxu0 %v398
  %491 = vmatprep.subr.bf16.mxu0 0
  %492 = vmatpush1.bf16.msra.mxu0 %v397
  %493 = vmatprep.subr.bf16.mxu0 0
  %494 = vmatpush1.bf16.msra.mxu0 %v396
  %495 = vmatprep.subr.bf16.mxu0 0
  %496 = vmatpush1.bf16.msra.mxu0 %v395
  %497 = vmatprep.subr.bf16.mxu0 0
  %498 = vmatpush1.bf16.msra.mxu0 %v394
  %499 = vmatprep.subr.bf16.mxu0 0
  %500 = vmatpush1.bf16.msra.mxu0 %v393
  %501 = vmatprep.subr.bf16.mxu0 0
  %502 = vmatpush2.bf16.msra.mxu0 0
  %503 = vmatprep.subr.bf16.mxu0 0
  %504 = vmatpush2.bf16.msra.mxu0 0
  %505 = vmatprep.subr.bf16.mxu0 0
  %506 = vmatpush2.bf16.msra.mxu0 0
  %507 = vmatprep.subr.bf16.mxu0 0
  %508 = vmatpush2.bf16.msra.mxu0 0
  %509 = vmatprep.subr.bf16.mxu0 0
  %510 = vmatpush2.bf16.msra.mxu0 0
  %511 = vmatprep.subr.bf16.mxu0 0
  %512 = vmatpush2.bf16.msra.mxu0 0
  %513 = vmatprep.subr.bf16.mxu0 0
  %514 = vmatpush2.bf16.msra.mxu0 0
  %515 = vmatprep.subr.bf16.mxu0 0
  %516 = vmatpush2.bf16.msra.mxu0 0
  %517 = vmatprep.mubr.bf16.mxu0 0
  %518 = vmatmul.mubr.bf16.gmra.mxu0 %v481
  %v519 = vpop.f32.mrf.mxu0
  %v520 = vadd.f32 0.0, %v519
  %v521 = vpop.f32.mrf.mxu0
  %v522 = vpop.f32.mrf.mxu0
  %v523 = vadd.f32 0.0, %v522
  %v524 = vpop.f32.mrf.mxu0
  %525 = vmatprep.mubr.bf16.mxu0 0
  %526 = vmatmul.mubr.bf16.gmra.mxu0 %v482
  %v527 = vpop.f32.mrf.mxu0
  %v528 = vadd.f32 0.0, %v527
  %v529 = vpop.f32.mrf.mxu0
  %v530 = vpop.f32.mrf.mxu0
  %v531 = vadd.f32 0.0, %v530
  %v532 = vpop.f32.mrf.mxu0
  %533 = vdwg.mxu0
  %v534 = vpack.c.bf16 %v523, %v520
  %v535 = vpack.c.bf16 %v531, %v528
  %s536 = scalar_lea.vmem %s3, 32
  %v537 = vld [vmem:[%s536] sm:$0xf]
  %v538 = vld [vmem:[%s536 + $0x4] sm:$0xf]
  %v539 = vld [vmem:[%s536 + $0x8] sm:$0xf]
  %v540 = vld [vmem:[%s536 + $0xc] sm:$0xf]
  %v545 = vunpack.c.l.b16 %v537
  %v546 = vunpack.c.l.b16 %v538
  %v547 = vunpack.c.l.b16 %v539
  %v548 = vunpack.c.l.b16 %v540
  %v549 = vpack.c.b16 %v546, %v545
  %v550 = vpack.c.b16 %v548, %v547
  %553 = vmatprep.subr.bf16.mxu0 0
  %554 = vmatpush1.bf16.msra.mxu0 %v400
  %555 = vmatprep.subr.bf16.mxu0 0
  %556 = vmatpush1.bf16.msra.mxu0 %v399
  %557 = vmatprep.subr.bf16.mxu0 0
  %558 = vmatpush1.bf16.msra.mxu0 %v398
  %559 = vmatprep.subr.bf16.mxu0 0
  %560 = vmatpush1.bf16.msra.mxu0 %v397
  %561 = vmatprep.subr.bf16.mxu0 0
  %562 = vmatpush1.bf16.msra.mxu0 %v396
  %563 = vmatprep.subr.bf16.mxu0 0
  %564 = vmatpush1.bf16.msra.mxu0 %v395
  %565 = vmatprep.subr.bf16.mxu0 0
  %566 = vmatpush1.bf16.msra.mxu0 %v394
  %567 = vmatprep.subr.bf16.mxu0 0
  %568 = vmatpush1.bf16.msra.mxu0 %v393
  %569 = vmatprep.subr.bf16.mxu0 0
  %570 = vmatpush2.bf16.msra.mxu0 0
  %571 = vmatprep.subr.bf16.mxu0 0
  %572 = vmatpush2.bf16.msra.mxu0 0
  %573 = vmatprep.subr.bf16.mxu0 0
  %574 = vmatpush2.bf16.msra.mxu0 0
  %575 = vmatprep.subr.bf16.mxu0 0
  %576 = vmatpush2.bf16.msra.mxu0 0
  %577 = vmatprep.subr.bf16.mxu0 0
  %578 = vmatpush2.bf16.msra.mxu0 0
  %579 = vmatprep.subr.bf16.mxu0 0
  %580 = vmatpush2.bf16.msra.mxu0 0
  %581 = vmatprep.subr.bf16.mxu0 0
  %582 = vmatpush2.bf16.msra.mxu0 0
  %583 = vmatprep.subr.bf16.mxu0 0
  %584 = vmatpush2.bf16.msra.mxu0 0
  %585 = vmatprep.mubr.bf16.mxu0 0
  %586 = vmatmul.mubr.bf16.gmra.mxu0 %v549
  %v587 = vpop.f32.mrf.mxu0
  %v588 = vadd.f32 0.0, %v587
  %v589 = vpop.f32.mrf.mxu0
  %v590 = vpop.f32.mrf.mxu0
  %v591 = vadd.f32 0.0, %v590
  %v592 = vpop.f32.mrf.mxu0
  %593 = vmatprep.mubr.bf16.mxu0 0
  %594 = vmatmul.mubr.bf16.gmra.mxu0 %v550
  %v595 = vpop.f32.mrf.mxu0
  %v596 = vadd.f32 0.0, %v595
  %v597 = vpop.f32.mrf.mxu0
  %v598 = vpop.f32.mrf.mxu0
  %v599 = vadd.f32 0.0, %v598
  %v600 = vpop.f32.mrf.mxu0
  %601 = vdwg.mxu0
  %v602 = vpack.c.bf16 %v591, %v588
  %v603 = vpack.c.bf16 %v599, %v596
  %s604 = scalar_lea.vmem %s3, 48
  %v605 = vld [vmem:[%s604] sm:$0xf]
  %v606 = vld [vmem:[%s604 + $0x4] sm:$0xf]
  %v607 = vld [vmem:[%s604 + $0x8] sm:$0xf]
  %v608 = vld [vmem:[%s604 + $0xc] sm:$0xf]
  %v613 = vunpack.c.l.b16 %v605
  %v614 = vunpack.c.l.b16 %v606
  %v615 = vunpack.c.l.b16 %v607
  %v616 = vunpack.c.l.b16 %v608
  %v617 = vpack.c.b16 %v614, %v613
  %v618 = vpack.c.b16 %v616, %v615
  %621 = vmatprep.subr.bf16.mxu0 0
  %622 = vmatpush1.bf16.msra.mxu0 %v400
  %623 = vmatprep.subr.bf16.mxu0 0
  %624 = vmatpush1.bf16.msra.mxu0 %v399
  %625 = vmatprep.subr.bf16.mxu0 0
  %626 = vmatpush1.bf16.msra.mxu0 %v398
  %627 = vmatprep.subr.bf16.mxu0 0
  %628 = vmatpush1.bf16.msra.mxu0 %v397
  %629 = vmatprep.subr.bf16.mxu0 0
  %630 = vmatpush1.bf16.msra.mxu0 %v396
  %631 = vmatprep.subr.bf16.mxu0 0
  %632 = vmatpush1.bf16.msra.mxu0 %v395
  %633 = vmatprep.subr.bf16.mxu0 0
  %634 = vmatpush1.bf16.msra.mxu0 %v394
  %635 = vmatprep.subr.bf16.mxu0 0
  %636 = vmatpush1.bf16.msra.mxu0 %v393
  %637 = vmatprep.subr.bf16.mxu0 0
  %638 = vmatpush2.bf16.msra.mxu0 0
  %639 = vmatprep.subr.bf16.mxu0 0
  %640 = vmatpush2.bf16.msra.mxu0 0
  %641 = vmatprep.subr.bf16.mxu0 0
  %642 = vmatpush2.bf16.msra.mxu0 0
  %643 = vmatprep.subr.bf16.mxu0 0
  %644 = vmatpush2.bf16.msra.mxu0 0
  %645 = vmatprep.subr.bf16.mxu0 0
  %646 = vmatpush2.bf16.msra.mxu0 0
  %647 = vmatprep.subr.bf16.mxu0 0
  %648 = vmatpush2.bf16.msra.mxu0 0
  %649 = vmatprep.subr.bf16.mxu0 0
  %650 = vmatpush2.bf16.msra.mxu0 0
  %651 = vmatprep.subr.bf16.mxu0 0
  %652 = vmatpush2.bf16.msra.mxu0 0
  %653 = vmatprep.mubr.bf16.mxu0 0
  %654 = vmatmul.mubr.bf16.gmra.mxu0 %v617
  %v655 = vpop.f32.mrf.mxu0
  %v656 = vadd.f32 0.0, %v655
  %v657 = vpop.f32.mrf.mxu0
  %v658 = vpop.f32.mrf.mxu0
  %v659 = vadd.f32 0.0, %v658
  %v660 = vpop.f32.mrf.mxu0
  %661 = vmatprep.mubr.bf16.mxu0 0
  %662 = vmatmul.mubr.bf16.gmra.mxu0 %v618
  %v663 = vpop.f32.mrf.mxu0
  %v664 = vadd.f32 0.0, %v663
  %v665 = vpop.f32.mrf.mxu0
  %v666 = vpop.f32.mrf.mxu0
  %v667 = vadd.f32 0.0, %v666
  %v668 = vpop.f32.mrf.mxu0
  %669 = vdwg.mxu0
  %v670 = vpack.c.bf16 %v659, %v656
  %v671 = vpack.c.bf16 %v667, %v664
  %s672 = scalar_lea.vmem %s3, 64
  %v673 = vld [vmem:[%s672] sm:$0xf]
  %v674 = vld [vmem:[%s672 + $0x4] sm:$0xf]
  %v675 = vld [vmem:[%s672 + $0x8] sm:$0xf]
  %v676 = vld [vmem:[%s672 + $0xc] sm:$0xf]
  %v681 = vunpack.c.l.b16 %v673
  %v682 = vunpack.c.l.b16 %v674
  %v683 = vunpack.c.l.b16 %v675
  %v684 = vunpack.c.l.b16 %v676
  %v685 = vpack.c.b16 %v682, %v681
  %v686 = vpack.c.b16 %v684, %v683
  %689 = vmatprep.subr.bf16.mxu0 0
  %690 = vmatpush1.bf16.msra.mxu0 %v400
  %691 = vmatprep.subr.bf16.mxu0 0
  %692 = vmatpush1.bf16.msra.mxu0 %v399
  %693 = vmatprep.subr.bf16.mxu0 0
  %694 = vmatpush1.bf16.msra.mxu0 %v398
  %695 = vmatprep.subr.bf16.mxu0 0
  %696 = vmatpush1.bf16.msra.mxu0 %v397
  %697 = vmatprep.subr.bf16.mxu0 0
  %698 = vmatpush1.bf16.msra.mxu0 %v396
  %699 = vmatprep.subr.bf16.mxu0 0
  %700 = vmatpush1.bf16.msra.mxu0 %v395
  %701 = vmatprep.subr.bf16.mxu0 0
  %702 = vmatpush1.bf16.msra.mxu0 %v394
  %703 = vmatprep.subr.bf16.mxu0 0
  %704 = vmatpush1.bf16.msra.mxu0 %v393
  %705 = vmatprep.subr.bf16.mxu0 0
  %706 = vmatpush2.bf16.msra.mxu0 0
  %707 = vmatprep.subr.bf16.mxu0 0
  %708 = vmatpush2.bf16.msra.mxu0 0
  %709 = vmatprep.subr.bf16.mxu0 0
  %710 = vmatpush2.bf16.msra.mxu0 0
  %711 = vmatprep.subr.bf16.mxu0 0
  %712 = vmatpush2.bf16.msra.mxu0 0
  %713 = vmatprep.subr.bf16.mxu0 0
  %714 = vmatpush2.bf16.msra.mxu0 0
  %715 = vmatprep.subr.bf16.mxu0 0
  %716 = vmatpush2.bf16.msra.mxu0 0
  %717 = vmatprep.subr.bf16.mxu0 0
  %718 = vmatpush2.bf16.msra.mxu0 0
  %719 = vmatprep.subr.bf16.mxu0 0
  %720 = vmatpush2.bf16.msra.mxu0 0
  %721 = vmatprep.mubr.bf16.mxu0 0
  %722 = vmatmul.mubr.bf16.gmra.mxu0 %v685
  %v723 = vpop.f32.mrf.mxu0
  %v724 = vadd.f32 0.0, %v723
  %v725 = vpop.f32.mrf.mxu0
  %v726 = vpop.f32.mrf.mxu0
  %v727 = vadd.f32 0.0, %v726
  %v728 = vpop.f32.mrf.mxu0
  %729 = vmatprep.mubr.bf16.mxu0 0
  %730 = vmatmul.mubr.bf16.gmra.mxu0 %v686
  %v731 = vpop.f32.mrf.mxu0
  %v732 = vadd.f32 0.0, %v731
  %v733 = vpop.f32.mrf.mxu0
  %v734 = vpop.f32.mrf.mxu0
  %v735 = vadd.f32 0.0, %v734
  %v736 = vpop.f32.mrf.mxu0
  %737 = vdwg.mxu0
  %v738 = vpack.c.bf16 %v727, %v724
  %v739 = vpack.c.bf16 %v735, %v732
  %s740 = scalar_lea.vmem %s3, 80
  %v741 = vld [vmem:[%s740] sm:$0xf]
  %v742 = vld [vmem:[%s740 + $0x4] sm:$0xf]
  %v743 = vld [vmem:[%s740 + $0x8] sm:$0xf]
  %v744 = vld [vmem:[%s740 + $0xc] sm:$0xf]
  %v749 = vunpack.c.l.b16 %v741
  %v750 = vunpack.c.l.b16 %v742
  %v751 = vunpack.c.l.b16 %v743
  %v752 = vunpack.c.l.b16 %v744
  %v753 = vpack.c.b16 %v750, %v749
  %v754 = vpack.c.b16 %v752, %v751
  %757 = vmatprep.subr.bf16.mxu0 0
  %758 = vmatpush1.bf16.msra.mxu0 %v400
  %759 = vmatprep.subr.bf16.mxu0 0
  %760 = vmatpush1.bf16.msra.mxu0 %v399
  %761 = vmatprep.subr.bf16.mxu0 0
  %762 = vmatpush1.bf16.msra.mxu0 %v398
  %763 = vmatprep.subr.bf16.mxu0 0
  %764 = vmatpush1.bf16.msra.mxu0 %v397
  %765 = vmatprep.subr.bf16.mxu0 0
  %766 = vmatpush1.bf16.msra.mxu0 %v396
  %767 = vmatprep.subr.bf16.mxu0 0
  %768 = vmatpush1.bf16.msra.mxu0 %v395
  %769 = vmatprep.subr.bf16.mxu0 0
  %770 = vmatpush1.bf16.msra.mxu0 %v394
  %771 = vmatprep.subr.bf16.mxu0 0
  %772 = vmatpush1.bf16.msra.mxu0 %v393
  %773 = vmatprep.subr.bf16.mxu0 0
  %774 = vmatpush2.bf16.msra.mxu0 0
  %775 = vmatprep.subr.bf16.mxu0 0
  %776 = vmatpush2.bf16.msra.mxu0 0
  %777 = vmatprep.subr.bf16.mxu0 0
  %778 = vmatpush2.bf16.msra.mxu0 0
  %779 = vmatprep.subr.bf16.mxu0 0
  %780 = vmatpush2.bf16.msra.mxu0 0
  %781 = vmatprep.subr.bf16.mxu0 0
  %782 = vmatpush2.bf16.msra.mxu0 0
  %783 = vmatprep.subr.bf16.mxu0 0
  %784 = vmatpush2.bf16.msra.mxu0 0
  %785 = vmatprep.subr.bf16.mxu0 0
  %786 = vmatpush2.bf16.msra.mxu0 0
  %787 = vmatprep.subr.bf16.mxu0 0
  %788 = vmatpush2.bf16.msra.mxu0 0
  %789 = vmatprep.mubr.bf16.mxu0 0
  %790 = vmatmul.mubr.bf16.gmra.mxu0 %v753
  %v791 = vpop.f32.mrf.mxu0
  %v792 = vadd.f32 0.0, %v791
  %v793 = vpop.f32.mrf.mxu0
  %v794 = vpop.f32.mrf.mxu0
  %v795 = vadd.f32 0.0, %v794
  %v796 = vpop.f32.mrf.mxu0
  %797 = vmatprep.mubr.bf16.mxu0 0
  %798 = vmatmul.mubr.bf16.gmra.mxu0 %v754
  %v799 = vpop.f32.mrf.mxu0
  %v800 = vadd.f32 0.0, %v799
  %v801 = vpop.f32.mrf.mxu0
  %v802 = vpop.f32.mrf.mxu0
  %v803 = vadd.f32 0.0, %v802
  %v804 = vpop.f32.mrf.mxu0
  %805 = vdwg.mxu0
  %v806 = vpack.c.bf16 %v795, %v792
  %v807 = vpack.c.bf16 %v803, %v800
  %s808 = scalar_lea.vmem %s3, 96
  %v809 = vld [vmem:[%s808] sm:$0xf]
  %v810 = vld [vmem:[%s808 + $0x4] sm:$0xf]
  %v811 = vld [vmem:[%s808 + $0x8] sm:$0xf]
  %v812 = vld [vmem:[%s808 + $0xc] sm:$0xf]
  %v817 = vunpack.c.l.b16 %v809
  %v818 = vunpack.c.l.b16 %v810
  %v819 = vunpack.c.l.b16 %v811
  %v820 = vunpack.c.l.b16 %v812
  %v821 = vpack.c.b16 %v818, %v817
  %v822 = vpack.c.b16 %v820, %v819
  %825 = vmatprep.subr.bf16.mxu0 0
  %826 = vmatpush1.bf16.msra.mxu0 %v400
  %827 = vmatprep.subr.bf16.mxu0 0
  %828 = vmatpush1.bf16.msra.mxu0 %v399
  %829 = vmatprep.subr.bf16.mxu0 0
  %830 = vmatpush1.bf16.msra.mxu0 %v398
  %831 = vmatprep.subr.bf16.mxu0 0
  %832 = vmatpush1.bf16.msra.mxu0 %v397
  %833 = vmatprep.subr.bf16.mxu0 0
  %834 = vmatpush1.bf16.msra.mxu0 %v396
  %835 = vmatprep.subr.bf16.mxu0 0
  %836 = vmatpush1.bf16.msra.mxu0 %v395
  %837 = vmatprep.subr.bf16.mxu0 0
  %838 = vmatpush1.bf16.msra.mxu0 %v394
  %839 = vmatprep.subr.bf16.mxu0 0
  %840 = vmatpush1.bf16.msra.mxu0 %v393
  %841 = vmatprep.subr.bf16.mxu0 0
  %842 = vmatpush2.bf16.msra.mxu0 0
  %843 = vmatprep.subr.bf16.mxu0 0
  %844 = vmatpush2.bf16.msra.mxu0 0
  %845 = vmatprep.subr.bf16.mxu0 0
  %846 = vmatpush2.bf16.msra.mxu0 0
  %847 = vmatprep.subr.bf16.mxu0 0
  %848 = vmatpush2.bf16.msra.mxu0 0
  %849 = vmatprep.subr.bf16.mxu0 0
  %850 = vmatpush2.bf16.msra.mxu0 0
  %851 = vmatprep.subr.bf16.mxu0 0
  %852 = vmatpush2.bf16.msra.mxu0 0
  %853 = vmatprep.subr.bf16.mxu0 0
  %854 = vmatpush2.bf16.msra.mxu0 0
  %855 = vmatprep.subr.bf16.mxu0 0
  %856 = vmatpush2.bf16.msra.mxu0 0
  %857 = vmatprep.mubr.bf16.mxu0 0
  %858 = vmatmul.mubr.bf16.gmra.mxu0 %v821
  %v859 = vpop.f32.mrf.mxu0
  %v860 = vadd.f32 0.0, %v859
  %v861 = vpop.f32.mrf.mxu0
  %v862 = vpop.f32.mrf.mxu0
  %v863 = vadd.f32 0.0, %v862
  %v864 = vpop.f32.mrf.mxu0
  %865 = vmatprep.mubr.bf16.mxu0 0
  %866 = vmatmul.mubr.bf16.gmra.mxu0 %v822
  %v867 = vpop.f32.mrf.mxu0
  %v868 = vadd.f32 0.0, %v867
  %v869 = vpop.f32.mrf.mxu0
  %v870 = vpop.f32.mrf.mxu0
  %v871 = vadd.f32 0.0, %v870
  %v872 = vpop.f32.mrf.mxu0
  %873 = vdwg.mxu0
  %v874 = vpack.c.bf16 %v863, %v860
  %v875 = vpack.c.bf16 %v871, %v868
  %s876 = scalar_lea.vmem %s3, 112
  %v877 = vld [vmem:[%s876] sm:$0xf]
  %v878 = vld [vmem:[%s876 + $0x4] sm:$0xf]
  %v879 = vld [vmem:[%s876 + $0x8] sm:$0xf]
  %v880 = vld [vmem:[%s876 + $0xc] sm:$0xf]
  %v885 = vunpack.c.l.b16 %v877
  %v886 = vunpack.c.l.b16 %v878
  %v887 = vunpack.c.l.b16 %v879
  %v888 = vunpack.c.l.b16 %v880
  %v889 = vpack.c.b16 %v886, %v885
  %v890 = vpack.c.b16 %v888, %v887
  %893 = vmatprep.subr.bf16.mxu0 0
  %894 = vmatpush1.bf16.msra.mxu0 %v400
  %895 = vmatprep.subr.bf16.mxu0 0
  %896 = vmatpush1.bf16.msra.mxu0 %v399
  %897 = vmatprep.subr.bf16.mxu0 0
  %898 = vmatpush1.bf16.msra.mxu0 %v398
  %899 = vmatprep.subr.bf16.mxu0 0
  %900 = vmatpush1.bf16.msra.mxu0 %v397
  %901 = vmatprep.subr.bf16.mxu0 0
  %902 = vmatpush1.bf16.msra.mxu0 %v396
  %903 = vmatprep.subr.bf16.mxu0 0
  %904 = vmatpush1.bf16.msra.mxu0 %v395
  %905 = vmatprep.subr.bf16.mxu0 0
  %906 = vmatpush1.bf16.msra.mxu0 %v394
  %907 = vmatprep.subr.bf16.mxu0 0
  %908 = vmatpush1.bf16.msra.mxu0 %v393
  %909 = vmatprep.subr.bf16.mxu0 0
  %910 = vmatpush2.bf16.msra.mxu0 0
  %911 = vmatprep.subr.bf16.mxu0 0
  %912 = vmatpush2.bf16.msra.mxu0 0
  %913 = vmatprep.subr.bf16.mxu0 0
  %914 = vmatpush2.bf16.msra.mxu0 0
  %915 = vmatprep.subr.bf16.mxu0 0
  %916 = vmatpush2.bf16.msra.mxu0 0
  %917 = vmatprep.subr.bf16.mxu0 0
  %918 = vmatpush2.bf16.msra.mxu0 0
  %919 = vmatprep.subr.bf16.mxu0 0
  %920 = vmatpush2.bf16.msra.mxu0 0
  %921 = vmatprep.subr.bf16.mxu0 0
  %922 = vmatpush2.bf16.msra.mxu0 0
  %923 = vmatprep.subr.bf16.mxu0 0
  %924 = vmatpush2.bf16.msra.mxu0 0
  %925 = vmatprep.mubr.bf16.mxu0 0
  %926 = vmatmul.mubr.bf16.gmra.mxu0 %v889
  %v927 = vpop.f32.mrf.mxu0
  %v928 = vadd.f32 0.0, %v927
  %v929 = vpop.f32.mrf.mxu0
  %v930 = vpop.f32.mrf.mxu0
  %v931 = vadd.f32 0.0, %v930
  %v932 = vpop.f32.mrf.mxu0
  %933 = vmatprep.mubr.bf16.mxu0 0
  %934 = vmatmul.mubr.bf16.gmra.mxu0 %v890
  %v935 = vpop.f32.mrf.mxu0
  %v936 = vadd.f32 0.0, %v935
  %v937 = vpop.f32.mrf.mxu0
  %v938 = vpop.f32.mrf.mxu0
  %v939 = vadd.f32 0.0, %v938
  %v940 = vpop.f32.mrf.mxu0
  %941 = vdwg.mxu0
  %v942 = vpack.c.bf16 %v931, %v928
  %v943 = vpack.c.bf16 %v939, %v936
  %s944 = scalar_lea.vmem %s3, 128
  %v945 = vld [vmem:[%s944] sm:$0xf]
  %v946 = vld [vmem:[%s944 + $0x4] sm:$0xf]
  %v947 = vld [vmem:[%s944 + $0x8] sm:$0xf]
  %v948 = vld [vmem:[%s944 + $0xc] sm:$0xf]
  %v953 = vunpack.c.l.b16 %v945
  %v954 = vunpack.c.l.b16 %v946
  %v955 = vunpack.c.l.b16 %v947
  %v956 = vunpack.c.l.b16 %v948
  %v957 = vpack.c.b16 %v954, %v953
  %v958 = vpack.c.b16 %v956, %v955
  %961 = vmatprep.subr.bf16.mxu0 0
  %962 = vmatpush1.bf16.msra.mxu0 %v400
  %963 = vmatprep.subr.bf16.mxu0 0
  %964 = vmatpush1.bf16.msra.mxu0 %v399
  %965 = vmatprep.subr.bf16.mxu0 0
  %966 = vmatpush1.bf16.msra.mxu0 %v398
  %967 = vmatprep.subr.bf16.mxu0 0
  %968 = vmatpush1.bf16.msra.mxu0 %v397
  %969 = vmatprep.subr.bf16.mxu0 0
  %970 = vmatpush1.bf16.msra.mxu0 %v396
  %971 = vmatprep.subr.bf16.mxu0 0
  %972 = vmatpush1.bf16.msra.mxu0 %v395
  %973 = vmatprep.subr.bf16.mxu0 0
  %974 = vmatpush1.bf16.msra.mxu0 %v394
  %975 = vmatprep.subr.bf16.mxu0 0
  %976 = vmatpush1.bf16.msra.mxu0 %v393
  %977 = vmatprep.subr.bf16.mxu0 0
  %978 = vmatpush2.bf16.msra.mxu0 0
  %979 = vmatprep.subr.bf16.mxu0 0
  %980 = vmatpush2.bf16.msra.mxu0 0
  %981 = vmatprep.subr.bf16.mxu0 0
  %982 = vmatpush2.bf16.msra.mxu0 0
  %983 = vmatprep.subr.bf16.mxu0 0
  %984 = vmatpush2.bf16.msra.mxu0 0
  %985 = vmatprep.subr.bf16.mxu0 0
  %986 = vmatpush2.bf16.msra.mxu0 0
  %987 = vmatprep.subr.bf16.mxu0 0
  %988 = vmatpush2.bf16.msra.mxu0 0
  %989 = vmatprep.subr.bf16.mxu0 0
  %990 = vmatpush2.bf16.msra.mxu0 0
  %991 = vmatprep.subr.bf16.mxu0 0
  %992 = vmatpush2.bf16.msra.mxu0 0
  %993 = vmatprep.mubr.bf16.mxu0 0
  %994 = vmatmul.mubr.bf16.gmra.mxu0 %v957
  %v995 = vpop.f32.mrf.mxu0
  %v996 = vadd.f32 0.0, %v995
  %v997 = vpop.f32.mrf.mxu0
  %v998 = vpop.f32.mrf.mxu0
  %v999 = vadd.f32 0.0, %v998
  %v1000 = vpop.f32.mrf.mxu0
  %1001 = vmatprep.mubr.bf16.mxu0 0
  %1002 = vmatmul.mubr.bf16.gmra.mxu0 %v958
  %v1003 = vpop.f32.mrf.mxu0
  %v1004 = vadd.f32 0.0, %v1003
  %v1005 = vpop.f32.mrf.mxu0
  %v1006 = vpop.f32.mrf.mxu0
  %v1007 = vadd.f32 0.0, %v1006
  %v1008 = vpop.f32.mrf.mxu0
  %1009 = vdwg.mxu0
  %v1010 = vpack.c.bf16 %v999, %v996
  %v1011 = vpack.c.bf16 %v1007, %v1004
  %1014 = vrot.lane.b32.xlu0 %v534, 32
  %v1015 = vpop.permute.xlu0 %1014
  %1016 = vrot.lane.b32.xlu0 %v535, 32
  %v1017 = vpop.permute.xlu0 %1016
  %1020 = vrot.lane.b32.xlu0 %v602, 64
  %v1021 = vpop.permute.xlu0 %1020
  %1022 = vrot.lane.b32.xlu0 %v603, 64
  %v1023 = vpop.permute.xlu0 %1022
  %1026 = vrot.lane.b32.xlu0 %v670, 96
  %v1027 = vpop.permute.xlu0 %1026
  %1028 = vrot.lane.b32.xlu0 %v671, 96
  %v1029 = vpop.permute.xlu0 %1028
  %1032 = vrot.lane.b32.xlu0 %v806, 32
  %v1033 = vpop.permute.xlu0 %1032
  %1034 = vrot.lane.b32.xlu0 %v807, 32
  %v1035 = vpop.permute.xlu0 %1034
  %1038 = vrot.lane.b32.xlu0 %v874, 64
  %v1039 = vpop.permute.xlu0 %1038
  %1040 = vrot.lane.b32.xlu0 %v875, 64
  %v1041 = vpop.permute.xlu0 %1040
  %1044 = vrot.lane.b32.xlu0 %v942, 96
  %v1045 = vpop.permute.xlu0 %1044
  %1046 = vrot.lane.b32.xlu0 %v943, 96
  %v1047 = vpop.permute.xlu0 %1046
  %vm1048 = vcmask 261120
  %v1051 = vsel %vm1048, %v466, %v1015
  %v1054 = vsel %vm1048, %v467, %v1017
  %vm1055 = vcmask 523264
  %v1057 = vsel %vm1055, %v1051, %v1021
  %v1059 = vsel %vm1055, %v1054, %v1023
  %vm1060 = vcmask 785408
  %v1062 = vsel %vm1060, %v1057, %v1027
  %v1065 = vsel %vm1060, %v1059, %v1029
  %v1069 = vsel %vm1048, %v738, %v1033
  %v1072 = vsel %vm1048, %v739, %v1035
  %v1074 = vsel %vm1055, %v1069, %v1039
  %v1076 = vsel %vm1055, %v1072, %v1041
  %v1078 = vsel %vm1060, %v1074, %v1045
  %v1081 = vsel %vm1060, %v1076, %v1047
  %v1083 = vld [vmem:[%s4] sm:$0xf]
  %v1084 = vld [vmem:[%s4 + $0x4] sm:$0xf]
  %v1085 = vld [vmem:[%s4 + $0x8] sm:$0xf]
  %v1086 = vld [vmem:[%s4 + $0xc] sm:$0xf]
  %v1087 = vld [vmem:[%s4 + $0x10] sm:$0xf]
  %v1088 = vld [vmem:[%s4 + $0x14] sm:$0xf]
  %v1089 = vld [vmem:[%s4 + $0x18] sm:$0xf]
  %v1090 = vld [vmem:[%s4 + $0x1c] sm:$0xf]
  %v1091 = vld [vmem:[%s4 + $0x20] sm:$0xf]
  %v1092 = vld [vmem:[%s4 + $0x24] sm:$0xf]
  %v1093 = vld [vmem:[%s4 + $0x28] sm:$0xf]
  %v1094 = vld [vmem:[%s4 + $0x2c] sm:$0xf]
  %v1095 = vld [vmem:[%s4 + $0x30] sm:$0xf]
  %v1096 = vld [vmem:[%s4 + $0x34] sm:$0xf]
  %v1097 = vld [vmem:[%s4 + $0x38] sm:$0xf]
  %v1098 = vld [vmem:[%s4 + $0x3c] sm:$0xf]
  %v1099 = vld [vmem:[%s4 + $0x40] sm:$0xf]
  %v1100 = vld [vmem:[%s4 + $0x44] sm:$0xf]
  %v1101 = vld [vmem:[%s4 + $0x48] sm:$0xf]
  %v1102 = vld [vmem:[%s4 + $0x4c] sm:$0xf]
  %v1103 = vld [vmem:[%s4 + $0x50] sm:$0xf]
  %v1104 = vld [vmem:[%s4 + $0x54] sm:$0xf]
  %v1105 = vld [vmem:[%s4 + $0x58] sm:$0xf]
  %v1106 = vld [vmem:[%s4 + $0x5c] sm:$0xf]
  %v1107 = vld [vmem:[%s4 + $0x60] sm:$0xf]
  %v1108 = vld [vmem:[%s4 + $0x64] sm:$0xf]
  %v1109 = vld [vmem:[%s4 + $0x68] sm:$0xf]
  %v1110 = vld [vmem:[%s4 + $0x6c] sm:$0xf]
  %v1111 = vld [vmem:[%s4 + $0x70] sm:$0xf]
  %v1112 = vld [vmem:[%s4 + $0x74] sm:$0xf]
  %v1113 = vld [vmem:[%s4 + $0x78] sm:$0xf]
  %v1114 = vld [vmem:[%s4 + $0x7c] sm:$0xf]
  %v1115 = vld [vmem:[%s4 + $0x80] sm:$0xf]
  %v1116 = vld [vmem:[%s4 + $0x84] sm:$0xf]
  %v1117 = vld [vmem:[%s4 + $0x88] sm:$0xf]
  %v1118 = vld [vmem:[%s4 + $0x8c] sm:$0xf]
  %v1119 = vld [vmem:[%s5] sm:$0x1]
  %v1121 = vlaneseq
  %v1122 = vshrl.u32 %v1121, 7
  %v1123 = vsub.s32 0, %v1122
  %v1124 = vrot.slane %v1119, %v1123
  %v1162 = vunpack.c.l.b16 %v1083
  %v1163 = vunpack.c.l.b16 %v1084
  %v1164 = vunpack.c.l.b16 %v1085
  %v1165 = vunpack.c.l.b16 %v1086
  %v1166 = vunpack.c.l.b16 %v1087
  %v1167 = vunpack.c.l.b16 %v1088
  %v1168 = vunpack.c.l.b16 %v1089
  %v1169 = vunpack.c.l.b16 %v1090
  %v1170 = vunpack.c.l.b16 %v1091
  %v1171 = vunpack.c.l.b16 %v1092
  %v1172 = vunpack.c.l.b16 %v1093
  %v1173 = vunpack.c.l.b16 %v1094
  %v1174 = vunpack.c.l.b16 %v1095
  %v1175 = vunpack.c.l.b16 %v1096
  %v1176 = vunpack.c.l.b16 %v1097
  %v1177 = vunpack.c.l.b16 %v1098
  %v1178 = vunpack.c.l.b16 %v1099
  %v1179 = vunpack.c.l.b16 %v1100
  %v1180 = vunpack.c.l.b16 %v1101
  %v1181 = vunpack.c.l.b16 %v1102
  %v1182 = vunpack.c.l.b16 %v1103
  %v1183 = vunpack.c.l.b16 %v1104
  %v1184 = vunpack.c.l.b16 %v1105
  %v1185 = vunpack.c.l.b16 %v1106
  %v1186 = vunpack.c.l.b16 %v1107
  %v1187 = vunpack.c.l.b16 %v1108
  %v1188 = vunpack.c.l.b16 %v1109
  %v1189 = vunpack.c.l.b16 %v1110
  %v1190 = vunpack.c.l.b16 %v1111
  %v1191 = vunpack.c.l.b16 %v1112
  %v1192 = vunpack.c.l.b16 %v1113
  %v1193 = vunpack.c.l.b16 %v1114
  %v1194 = vunpack.c.l.b16 %v1115
  %v1195 = vunpack.c.l.b16 %v1116
  %v1196 = vunpack.c.l.b16 %v1117
  %v1197 = vunpack.c.l.b16 %v1118
  %v1198 = vpack.c.b16 %v1163, %v1162
  %v1199 = vpack.c.b16 %v1165, %v1164
  %v1200 = vpack.c.b16 %v1167, %v1166
  %v1201 = vpack.c.b16 %v1169, %v1168
  %v1202 = vpack.c.b16 %v1171, %v1170
  %v1203 = vpack.c.b16 %v1173, %v1172
  %v1204 = vpack.c.b16 %v1175, %v1174
  %v1205 = vpack.c.b16 %v1177, %v1176
  %v1206 = vpack.c.b16 %v1179, %v1178
  %v1207 = vpack.c.b16 %v1181, %v1180
  %v1208 = vpack.c.b16 %v1183, %v1182
  %v1209 = vpack.c.b16 %v1185, %v1184
  %v1210 = vpack.c.b16 %v1187, %v1186
  %v1211 = vpack.c.b16 %v1189, %v1188
  %v1212 = vpack.c.b16 %v1191, %v1190
  %v1213 = vpack.c.b16 %v1193, %v1192
  %v1214 = vpack.c.b16 %v1195, %v1194
  %v1215 = vpack.c.b16 %v1197, %v1196
  %v1235 = vsel %vm1048, %v1010, 0
  %v1238 = vsel %vm1048, %v1011, 0
  %1240 = vmatprep.subr.bf16.mxu0 0
  %1241 = vmatpush1.bf16.msra.mxu0 %v1205
  %1242 = vmatprep.subr.bf16.mxu0 0
  %1243 = vmatpush1.bf16.msra.mxu0 %v1204
  %1244 = vmatprep.subr.bf16.mxu0 0
  %1245 = vmatpush1.bf16.msra.mxu0 %v1203
  %1246 = vmatprep.subr.bf16.mxu0 0
  %1247 = vmatpush1.bf16.msra.mxu0 %v1202
  %1248 = vmatprep.subr.bf16.mxu0 0
  %1249 = vmatpush1.bf16.msra.mxu0 %v1201
  %1250 = vmatprep.subr.bf16.mxu0 0
  %1251 = vmatpush1.bf16.msra.mxu0 %v1200
  %1252 = vmatprep.subr.bf16.mxu0 0
  %1253 = vmatpush1.bf16.msra.mxu0 %v1199
  %1254 = vmatprep.subr.bf16.mxu0 0
  %1255 = vmatpush1.bf16.msra.mxu0 %v1198
  %1256 = vmatprep.subr.bf16.mxu0 0
  %1257 = vmatpush2.bf16.msra.mxu0 %v1213
  %1258 = vmatprep.subr.bf16.mxu0 0
  %1259 = vmatpush2.bf16.msra.mxu0 %v1212
  %1260 = vmatprep.subr.bf16.mxu0 0
  %1261 = vmatpush2.bf16.msra.mxu0 %v1211
  %1262 = vmatprep.subr.bf16.mxu0 0
  %1263 = vmatpush2.bf16.msra.mxu0 %v1210
  %1264 = vmatprep.subr.bf16.mxu0 0
  %1265 = vmatpush2.bf16.msra.mxu0 %v1209
  %1266 = vmatprep.subr.bf16.mxu0 0
  %1267 = vmatpush2.bf16.msra.mxu0 %v1208
  %1268 = vmatprep.subr.bf16.mxu0 0
  %1269 = vmatpush2.bf16.msra.mxu0 %v1207
  %1270 = vmatprep.subr.bf16.mxu0 0
  %1271 = vmatpush2.bf16.msra.mxu0 %v1206
  %1272 = vmatprep.mubr.bf16.mxu0 %v1078
  %1273 = vmatmul.mubr.bf16.gmra.mxu0 %v1062
  %v1274 = vpop.f32.mrf.mxu0
  %v1275 = vadd.f32 %v1124, %v1274
  %v1276 = vpop.f32.mrf.mxu0
  %v1277 = vpop.f32.mrf.mxu0
  %v1278 = vadd.f32 %v1124, %v1277
  %v1279 = vpop.f32.mrf.mxu0
  %1280 = vmatprep.mubr.bf16.mxu0 %v1081
  %1281 = vmatmul.mubr.bf16.gmra.mxu0 %v1065
  %v1282 = vpop.f32.mrf.mxu0
  %v1283 = vadd.f32 %v1124, %v1282
  %v1284 = vpop.f32.mrf.mxu0
  %v1285 = vpop.f32.mrf.mxu0
  %v1286 = vadd.f32 %v1124, %v1285
  %v1287 = vpop.f32.mrf.mxu0
  %1288 = vdwg.mxu0
  %1289 = vmatprep.subr.bf16.mxu0 0
  %1290 = vmatpush1.bf16.msra.mxu0 0
  %1291 = vmatprep.subr.bf16.mxu0 0
  %1292 = vmatpush1.bf16.msra.mxu0 0
  %1293 = vmatprep.subr.bf16.mxu0 0
  %1294 = vmatpush1.bf16.msra.mxu0 0
  %1295 = vmatprep.subr.bf16.mxu0 0
  %1296 = vmatpush1.bf16.msra.mxu0 0
  %1297 = vmatprep.subr.bf16.mxu0 0
  %1298 = vmatpush1.bf16.msra.mxu0 0
  %1299 = vmatprep.subr.bf16.mxu0 0
  %1300 = vmatpush1.bf16.msra.mxu0 0
  %1301 = vmatprep.subr.bf16.mxu0 0
  %1302 = vmatpush1.bf16.msra.mxu0 %v1215
  %1303 = vmatprep.subr.bf16.mxu0 0
  %1304 = vmatpush1.bf16.msra.mxu0 %v1214
  %1305 = vmatprep.subr.bf16.mxu0 0
  %1306 = vmatpush2.bf16.msra.mxu0 0
  %1307 = vmatprep.subr.bf16.mxu0 0
  %1308 = vmatpush2.bf16.msra.mxu0 0
  %1309 = vmatprep.subr.bf16.mxu0 0
  %1310 = vmatpush2.bf16.msra.mxu0 0
  %1311 = vmatprep.subr.bf16.mxu0 0
  %1312 = vmatpush2.bf16.msra.mxu0 0
  %1313 = vmatprep.subr.bf16.mxu0 0
  %1314 = vmatpush2.bf16.msra.mxu0 0
  %1315 = vmatprep.subr.bf16.mxu0 0
  %1316 = vmatpush2.bf16.msra.mxu0 0
  %1317 = vmatprep.subr.bf16.mxu0 0
  %1318 = vmatpush2.bf16.msra.mxu0 0
  %1319 = vmatprep.subr.bf16.mxu0 0
  %1320 = vmatpush2.bf16.msra.mxu0 0
  %1321 = vmatprep.mubr.bf16.mxu0 0
  %1322 = vmatmul.mubr.bf16.gmra.mxu0 %v1235
  %v1323 = vpop.f32.mrf.mxu0
  %v1324 = vadd.f32 %v1275, %v1323
  %v1325 = vpop.f32.mrf.mxu0
  %v1326 = vpop.f32.mrf.mxu0
  %v1327 = vadd.f32 %v1278, %v1326
  %v1328 = vpop.f32.mrf.mxu0
  %1329 = vmatprep.mubr.bf16.mxu0 0
  %1330 = vmatmul.mubr.bf16.gmra.mxu0 %v1238
  %v1331 = vpop.f32.mrf.mxu0
  %v1332 = vadd.f32 %v1283, %v1331
  %v1333 = vpop.f32.mrf.mxu0
  %v1334 = vpop.f32.mrf.mxu0
  %v1335 = vadd.f32 %v1286, %v1334
  %v1336 = vpop.f32.mrf.mxu0
  %1337 = vdwg.mxu0
  %v1338 = vmax.f32 %v1324, 0.0
  %v1339 = vmax.f32 %v1327, 0.0
  %v1340 = vmax.f32 %v1332, 0.0
  %v1341 = vmax.f32 %v1335, 0.0
  %v1342 = vpack.c.bf16 %v1339, %v1338
  %v1343 = vpack.c.bf16 %v1341, %v1340
  %v1344 = vld [vmem:[%s6] sm:$0xf]
  %v1345 = vld [vmem:[%s6 + $0x4] sm:$0xf]
  %v1346 = vld [vmem:[%s6 + $0x8] sm:$0xf]
  %v1347 = vld [vmem:[%s6 + $0xc] sm:$0xf]
  %v1352 = vunpack.c.l.b16 %v1344
  %v1353 = vunpack.c.l.b16 %v1345
  %v1354 = vunpack.c.l.b16 %v1346
  %v1355 = vunpack.c.l.b16 %v1347
  %v1356 = vpack.c.b16 %v1353, %v1352
  %v1357 = vpack.c.b16 %v1355, %v1354
  %v1359 = vsel %vm1048, %v1356, 0
  %v1362 = vsel %vm1048, %v1357, 0
  %1364 = vmatprep.subr.bf16.mxu0 0
  %1365 = vmatpush1.bf16.msra.mxu0 0
  %1366 = vmatprep.subr.bf16.mxu0 0
  %1367 = vmatpush1.bf16.msra.mxu0 0
  %1368 = vmatprep.subr.bf16.mxu0 0
  %1369 = vmatpush1.bf16.msra.mxu0 0
  %1370 = vmatprep.subr.bf16.mxu0 0
  %1371 = vmatpush1.bf16.msra.mxu0 0
  %1372 = vmatprep.subr.bf16.mxu0 0
  %1373 = vmatpush1.bf16.msra.mxu0 0
  %1374 = vmatprep.subr.bf16.mxu0 0
  %1375 = vmatpush1.bf16.msra.mxu0 0
  %1376 = vmatprep.subr.bf16.mxu0 0
  %1377 = vmatpush1.bf16.msra.mxu0 %v1343
  %1378 = vmatprep.subr.bf16.mxu0 0
  %1379 = vmatpush1.bf16.msra.mxu0 %v1342
  %1380 = vmatprep.subr.bf16.mxu0 0
  %1381 = vmatpush2.bf16.msra.mxu0 0
  %1382 = vmatprep.subr.bf16.mxu0 0
  %1383 = vmatpush2.bf16.msra.mxu0 0
  %1384 = vmatprep.subr.bf16.mxu0 0
  %1385 = vmatpush2.bf16.msra.mxu0 0
  %1386 = vmatprep.subr.bf16.mxu0 0
  %1387 = vmatpush2.bf16.msra.mxu0 0
  %1388 = vmatprep.subr.bf16.mxu0 0
  %1389 = vmatpush2.bf16.msra.mxu0 0
  %1390 = vmatprep.subr.bf16.mxu0 0
  %1391 = vmatpush2.bf16.msra.mxu0 0
  %1392 = vmatprep.subr.bf16.mxu0 0
  %1393 = vmatpush2.bf16.msra.mxu0 0
  %1394 = vmatprep.subr.bf16.mxu0 0
  %1395 = vmatpush2.bf16.msra.mxu0 0
  %1396 = vmatprep.mubr.bf16.mxu0 0
  %1397 = vmatmul.mubr.bf16.gmra.mxu0 %v1359
  %v1398 = vpop.f32.mrf.mxu0
  %v1399 = vadd.f32 0.0, %v1398
  %v1400 = vpop.f32.mrf.mxu0
  %v1401 = vpop.f32.mrf.mxu0
  %v1402 = vadd.f32 0.0, %v1401
  %v1403 = vpop.f32.mrf.mxu0
  %1404 = vmatprep.mubr.bf16.mxu0 0
  %1405 = vmatmul.mubr.bf16.gmra.mxu0 %v1362
  %v1406 = vpop.f32.mrf.mxu0
  %v1407 = vadd.f32 0.0, %v1406
  %v1408 = vpop.f32.mrf.mxu0
  %v1409 = vpop.f32.mrf.mxu0
  %v1410 = vadd.f32 0.0, %v1409
  %v1411 = vpop.f32.mrf.mxu0
  %1412 = vdwg.mxu0
  %v1413 = vpack.c.bf16 %v1402, %v1399
  %v1414 = vpack.c.bf16 %v1410, %v1407
  %s1415 = scalar_lea.vmem %s6, 16
  %v1416 = vld [vmem:[%s1415] sm:$0xf]
  %v1417 = vld [vmem:[%s1415 + $0x4] sm:$0xf]
  %v1418 = vld [vmem:[%s1415 + $0x8] sm:$0xf]
  %v1419 = vld [vmem:[%s1415 + $0xc] sm:$0xf]
  %v1424 = vunpack.c.l.b16 %v1416
  %v1425 = vunpack.c.l.b16 %v1417
  %v1426 = vunpack.c.l.b16 %v1418
  %v1427 = vunpack.c.l.b16 %v1419
  %v1428 = vpack.c.b16 %v1425, %v1424
  %v1429 = vpack.c.b16 %v1427, %v1426
  %v1431 = vsel %vm1048, %v1428, 0
  %v1434 = vsel %vm1048, %v1429, 0
  %1436 = vmatprep.subr.bf16.mxu0 0
  %1437 = vmatpush1.bf16.msra.mxu0 0
  %1438 = vmatprep.subr.bf16.mxu0 0
  %1439 = vmatpush1.bf16.msra.mxu0 0
  %1440 = vmatprep.subr.bf16.mxu0 0
  %1441 = vmatpush1.bf16.msra.mxu0 0
  %1442 = vmatprep.subr.bf16.mxu0 0
  %1443 = vmatpush1.bf16.msra.mxu0 0
  %1444 = vmatprep.subr.bf16.mxu0 0
  %1445 = vmatpush1.bf16.msra.mxu0 0
  %1446 = vmatprep.subr.bf16.mxu0 0
  %1447 = vmatpush1.bf16.msra.mxu0 0
  %1448 = vmatprep.subr.bf16.mxu0 0
  %1449 = vmatpush1.bf16.msra.mxu0 %v1343
  %1450 = vmatprep.subr.bf16.mxu0 0
  %1451 = vmatpush1.bf16.msra.mxu0 %v1342
  %1452 = vmatprep.subr.bf16.mxu0 0
  %1453 = vmatpush2.bf16.msra.mxu0 0
  %1454 = vmatprep.subr.bf16.mxu0 0
  %1455 = vmatpush2.bf16.msra.mxu0 0
  %1456 = vmatprep.subr.bf16.mxu0 0
  %1457 = vmatpush2.bf16.msra.mxu0 0
  %1458 = vmatprep.subr.bf16.mxu0 0
  %1459 = vmatpush2.bf16.msra.mxu0 0
  %1460 = vmatprep.subr.bf16.mxu0 0
  %1461 = vmatpush2.bf16.msra.mxu0 0
  %1462 = vmatprep.subr.bf16.mxu0 0
  %1463 = vmatpush2.bf16.msra.mxu0 0
  %1464 = vmatprep.subr.bf16.mxu0 0
  %1465 = vmatpush2.bf16.msra.mxu0 0
  %1466 = vmatprep.subr.bf16.mxu0 0
  %1467 = vmatpush2.bf16.msra.mxu0 0
  %1468 = vmatprep.mubr.bf16.mxu0 0
  %1469 = vmatmul.mubr.bf16.gmra.mxu0 %v1431
  %v1470 = vpop.f32.mrf.mxu0
  %v1471 = vadd.f32 0.0, %v1470
  %v1472 = vpop.f32.mrf.mxu0
  %v1473 = vpop.f32.mrf.mxu0
  %v1474 = vadd.f32 0.0, %v1473
  %v1475 = vpop.f32.mrf.mxu0
  %1476 = vmatprep.mubr.bf16.mxu0 0
  %1477 = vmatmul.mubr.bf16.gmra.mxu0 %v1434
  %v1478 = vpop.f32.mrf.mxu0
  %v1479 = vadd.f32 0.0, %v1478
  %v1480 = vpop.f32.mrf.mxu0
  %v1481 = vpop.f32.mrf.mxu0
  %v1482 = vadd.f32 0.0, %v1481
  %v1483 = vpop.f32.mrf.mxu0
  %1484 = vdwg.mxu0
  %v1485 = vpack.c.bf16 %v1474, %v1471
  %v1486 = vpack.c.bf16 %v1482, %v1479
  %s1487 = scalar_lea.vmem %s6, 32
  %v1488 = vld [vmem:[%s1487] sm:$0xf]
  %v1489 = vld [vmem:[%s1487 + $0x4] sm:$0xf]
  %v1490 = vld [vmem:[%s1487 + $0x8] sm:$0xf]
  %v1491 = vld [vmem:[%s1487 + $0xc] sm:$0xf]
  %v1496 = vunpack.c.l.b16 %v1488
  %v1497 = vunpack.c.l.b16 %v1489
  %v1498 = vunpack.c.l.b16 %v1490
  %v1499 = vunpack.c.l.b16 %v1491
  %v1500 = vpack.c.b16 %v1497, %v1496
  %v1501 = vpack.c.b16 %v1499, %v1498
  %v1503 = vsel %vm1048, %v1500, 0
  %v1506 = vsel %vm1048, %v1501, 0
  %1508 = vmatprep.subr.bf16.mxu0 0
  %1509 = vmatpush1.bf16.msra.mxu0 0
  %1510 = vmatprep.subr.bf16.mxu0 0
  %1511 = vmatpush1.bf16.msra.mxu0 0
  %1512 = vmatprep.subr.bf16.mxu0 0
  %1513 = vmatpush1.bf16.msra.mxu0 0
  %1514 = vmatprep.subr.bf16.mxu0 0
  %1515 = vmatpush1.bf16.msra.mxu0 0
  %1516 = vmatprep.subr.bf16.mxu0 0
  %1517 = vmatpush1.bf16.msra.mxu0 0
  %1518 = vmatprep.subr.bf16.mxu0 0
  %1519 = vmatpush1.bf16.msra.mxu0 0
  %1520 = vmatprep.subr.bf16.mxu0 0
  %1521 = vmatpush1.bf16.msra.mxu0 %v1343
  %1522 = vmatprep.subr.bf16.mxu0 0
  %1523 = vmatpush1.bf16.msra.mxu0 %v1342
  %1524 = vmatprep.subr.bf16.mxu0 0
  %1525 = vmatpush2.bf16.msra.mxu0 0
  %1526 = vmatprep.subr.bf16.mxu0 0
  %1527 = vmatpush2.bf16.msra.mxu0 0
  %1528 = vmatprep.subr.bf16.mxu0 0
  %1529 = vmatpush2.bf16.msra.mxu0 0
  %1530 = vmatprep.subr.bf16.mxu0 0
  %1531 = vmatpush2.bf16.msra.mxu0 0
  %1532 = vmatprep.subr.bf16.mxu0 0
  %1533 = vmatpush2.bf16.msra.mxu0 0
  %1534 = vmatprep.subr.bf16.mxu0 0
  %1535 = vmatpush2.bf16.msra.mxu0 0
  %1536 = vmatprep.subr.bf16.mxu0 0
  %1537 = vmatpush2.bf16.msra.mxu0 0
  %1538 = vmatprep.subr.bf16.mxu0 0
  %1539 = vmatpush2.bf16.msra.mxu0 0
  %1540 = vmatprep.mubr.bf16.mxu0 0
  %1541 = vmatmul.mubr.bf16.gmra.mxu0 %v1503
  %v1542 = vpop.f32.mrf.mxu0
  %v1543 = vadd.f32 0.0, %v1542
  %v1544 = vpop.f32.mrf.mxu0
  %v1545 = vpop.f32.mrf.mxu0
  %v1546 = vadd.f32 0.0, %v1545
  %v1547 = vpop.f32.mrf.mxu0
  %1548 = vmatprep.mubr.bf16.mxu0 0
  %1549 = vmatmul.mubr.bf16.gmra.mxu0 %v1506
  %v1550 = vpop.f32.mrf.mxu0
  %v1551 = vadd.f32 0.0, %v1550
  %v1552 = vpop.f32.mrf.mxu0
  %v1553 = vpop.f32.mrf.mxu0
  %v1554 = vadd.f32 0.0, %v1553
  %v1555 = vpop.f32.mrf.mxu0
  %1556 = vdwg.mxu0
  %v1557 = vpack.c.bf16 %v1546, %v1543
  %v1558 = vpack.c.bf16 %v1554, %v1551
  %s1559 = scalar_lea.vmem %s6, 48
  %v1560 = vld [vmem:[%s1559] sm:$0xf]
  %v1561 = vld [vmem:[%s1559 + $0x4] sm:$0xf]
  %v1562 = vld [vmem:[%s1559 + $0x8] sm:$0xf]
  %v1563 = vld [vmem:[%s1559 + $0xc] sm:$0xf]
  %v1568 = vunpack.c.l.b16 %v1560
  %v1569 = vunpack.c.l.b16 %v1561
  %v1570 = vunpack.c.l.b16 %v1562
  %v1571 = vunpack.c.l.b16 %v1563
  %v1572 = vpack.c.b16 %v1569, %v1568
  %v1573 = vpack.c.b16 %v1571, %v1570
  %v1575 = vsel %vm1048, %v1572, 0
  %v1578 = vsel %vm1048, %v1573, 0
  %1580 = vmatprep.subr.bf16.mxu0 0
  %1581 = vmatpush1.bf16.msra.mxu0 0
  %1582 = vmatprep.subr.bf16.mxu0 0
  %1583 = vmatpush1.bf16.msra.mxu0 0
  %1584 = vmatprep.subr.bf16.mxu0 0
  %1585 = vmatpush1.bf16.msra.mxu0 0
  %1586 = vmatprep.subr.bf16.mxu0 0
  %1587 = vmatpush1.bf16.msra.mxu0 0
  %1588 = vmatprep.subr.bf16.mxu0 0
  %1589 = vmatpush1.bf16.msra.mxu0 0
  %1590 = vmatprep.subr.bf16.mxu0 0
  %1591 = vmatpush1.bf16.msra.mxu0 0
  %1592 = vmatprep.subr.bf16.mxu0 0
  %1593 = vmatpush1.bf16.msra.mxu0 %v1343
  %1594 = vmatprep.subr.bf16.mxu0 0
  %1595 = vmatpush1.bf16.msra.mxu0 %v1342
  %1596 = vmatprep.subr.bf16.mxu0 0
  %1597 = vmatpush2.bf16.msra.mxu0 0
  %1598 = vmatprep.subr.bf16.mxu0 0
  %1599 = vmatpush2.bf16.msra.mxu0 0
  %1600 = vmatprep.subr.bf16.mxu0 0
  %1601 = vmatpush2.bf16.msra.mxu0 0
  %1602 = vmatprep.subr.bf16.mxu0 0
  %1603 = vmatpush2.bf16.msra.mxu0 0
  %1604 = vmatprep.subr.bf16.mxu0 0
  %1605 = vmatpush2.bf16.msra.mxu0 0
  %1606 = vmatprep.subr.bf16.mxu0 0
  %1607 = vmatpush2.bf16.msra.mxu0 0
  %1608 = vmatprep.subr.bf16.mxu0 0
  %1609 = vmatpush2.bf16.msra.mxu0 0
  %1610 = vmatprep.subr.bf16.mxu0 0
  %1611 = vmatpush2.bf16.msra.mxu0 0
  %1612 = vmatprep.mubr.bf16.mxu0 0
  %1613 = vmatmul.mubr.bf16.gmra.mxu0 %v1575
  %v1614 = vpop.f32.mrf.mxu0
  %v1615 = vadd.f32 0.0, %v1614
  %v1616 = vpop.f32.mrf.mxu0
  %v1617 = vpop.f32.mrf.mxu0
  %v1618 = vadd.f32 0.0, %v1617
  %v1619 = vpop.f32.mrf.mxu0
  %1620 = vmatprep.mubr.bf16.mxu0 0
  %1621 = vmatmul.mubr.bf16.gmra.mxu0 %v1578
  %v1622 = vpop.f32.mrf.mxu0
  %v1623 = vadd.f32 0.0, %v1622
  %v1624 = vpop.f32.mrf.mxu0
  %v1625 = vpop.f32.mrf.mxu0
  %v1626 = vadd.f32 0.0, %v1625
  %v1627 = vpop.f32.mrf.mxu0
  %1628 = vdwg.mxu0
  %v1629 = vpack.c.bf16 %v1618, %v1615
  %v1630 = vpack.c.bf16 %v1626, %v1623
  %s1631 = scalar_lea.vmem %s6, 64
  %v1632 = vld [vmem:[%s1631] sm:$0xf]
  %v1633 = vld [vmem:[%s1631 + $0x4] sm:$0xf]
  %v1634 = vld [vmem:[%s1631 + $0x8] sm:$0xf]
  %v1635 = vld [vmem:[%s1631 + $0xc] sm:$0xf]
  %v1640 = vunpack.c.l.b16 %v1632
  %v1641 = vunpack.c.l.b16 %v1633
  %v1642 = vunpack.c.l.b16 %v1634
  %v1643 = vunpack.c.l.b16 %v1635
  %v1644 = vpack.c.b16 %v1641, %v1640
  %v1645 = vpack.c.b16 %v1643, %v1642
  %v1647 = vsel %vm1048, %v1644, 0
  %v1650 = vsel %vm1048, %v1645, 0
  %1652 = vmatprep.subr.bf16.mxu0 0
  %1653 = vmatpush1.bf16.msra.mxu0 0
  %1654 = vmatprep.subr.bf16.mxu0 0
  %1655 = vmatpush1.bf16.msra.mxu0 0
  %1656 = vmatprep.subr.bf16.mxu0 0
  %1657 = vmatpush1.bf16.msra.mxu0 0
  %1658 = vmatprep.subr.bf16.mxu0 0
  %1659 = vmatpush1.bf16.msra.mxu0 0
  %1660 = vmatprep.subr.bf16.mxu0 0
  %1661 = vmatpush1.bf16.msra.mxu0 0
  %1662 = vmatprep.subr.bf16.mxu0 0
  %1663 = vmatpush1.bf16.msra.mxu0 0
  %1664 = vmatprep.subr.bf16.mxu0 0
  %1665 = vmatpush1.bf16.msra.mxu0 %v1343
  %1666 = vmatprep.subr.bf16.mxu0 0
  %1667 = vmatpush1.bf16.msra.mxu0 %v1342
  %1668 = vmatprep.subr.bf16.mxu0 0
  %1669 = vmatpush2.bf16.msra.mxu0 0
  %1670 = vmatprep.subr.bf16.mxu0 0
  %1671 = vmatpush2.bf16.msra.mxu0 0
  %1672 = vmatprep.subr.bf16.mxu0 0
  %1673 = vmatpush2.bf16.msra.mxu0 0
  %1674 = vmatprep.subr.bf16.mxu0 0
  %1675 = vmatpush2.bf16.msra.mxu0 0
  %1676 = vmatprep.subr.bf16.mxu0 0
  %1677 = vmatpush2.bf16.msra.mxu0 0
  %1678 = vmatprep.subr.bf16.mxu0 0
  %1679 = vmatpush2.bf16.msra.mxu0 0
  %1680 = vmatprep.subr.bf16.mxu0 0
  %1681 = vmatpush2.bf16.msra.mxu0 0
  %1682 = vmatprep.subr.bf16.mxu0 0
  %1683 = vmatpush2.bf16.msra.mxu0 0
  %1684 = vmatprep.mubr.bf16.mxu0 0
  %1685 = vmatmul.mubr.bf16.gmra.mxu0 %v1647
  %v1686 = vpop.f32.mrf.mxu0
  %v1687 = vadd.f32 0.0, %v1686
  %v1688 = vpop.f32.mrf.mxu0
  %v1689 = vpop.f32.mrf.mxu0
  %v1690 = vadd.f32 0.0, %v1689
  %v1691 = vpop.f32.mrf.mxu0
  %1692 = vmatprep.mubr.bf16.mxu0 0
  %1693 = vmatmul.mubr.bf16.gmra.mxu0 %v1650
  %v1694 = vpop.f32.mrf.mxu0
  %v1695 = vadd.f32 0.0, %v1694
  %v1696 = vpop.f32.mrf.mxu0
  %v1697 = vpop.f32.mrf.mxu0
  %v1698 = vadd.f32 0.0, %v1697
  %v1699 = vpop.f32.mrf.mxu0
  %1700 = vdwg.mxu0
  %v1701 = vpack.c.bf16 %v1690, %v1687
  %v1702 = vpack.c.bf16 %v1698, %v1695
  %s1703 = scalar_lea.vmem %s6, 80
  %v1704 = vld [vmem:[%s1703] sm:$0xf]
  %v1705 = vld [vmem:[%s1703 + $0x4] sm:$0xf]
  %v1706 = vld [vmem:[%s1703 + $0x8] sm:$0xf]
  %v1707 = vld [vmem:[%s1703 + $0xc] sm:$0xf]
  %v1712 = vunpack.c.l.b16 %v1704
  %v1713 = vunpack.c.l.b16 %v1705
  %v1714 = vunpack.c.l.b16 %v1706
  %v1715 = vunpack.c.l.b16 %v1707
  %v1716 = vpack.c.b16 %v1713, %v1712
  %v1717 = vpack.c.b16 %v1715, %v1714
  %v1719 = vsel %vm1048, %v1716, 0
  %v1722 = vsel %vm1048, %v1717, 0
  %1724 = vmatprep.subr.bf16.mxu0 0
  %1725 = vmatpush1.bf16.msra.mxu0 0
  %1726 = vmatprep.subr.bf16.mxu0 0
  %1727 = vmatpush1.bf16.msra.mxu0 0
  %1728 = vmatprep.subr.bf16.mxu0 0
  %1729 = vmatpush1.bf16.msra.mxu0 0
  %1730 = vmatprep.subr.bf16.mxu0 0
  %1731 = vmatpush1.bf16.msra.mxu0 0
  %1732 = vmatprep.subr.bf16.mxu0 0
  %1733 = vmatpush1.bf16.msra.mxu0 0
  %1734 = vmatprep.subr.bf16.mxu0 0
  %1735 = vmatpush1.bf16.msra.mxu0 0
  %1736 = vmatprep.subr.bf16.mxu0 0
  %1737 = vmatpush1.bf16.msra.mxu0 %v1343
  %1738 = vmatprep.subr.bf16.mxu0 0
  %1739 = vmatpush1.bf16.msra.mxu0 %v1342
  %1740 = vmatprep.subr.bf16.mxu0 0
  %1741 = vmatpush2.bf16.msra.mxu0 0
  %1742 = vmatprep.subr.bf16.mxu0 0
  %1743 = vmatpush2.bf16.msra.mxu0 0
  %1744 = vmatprep.subr.bf16.mxu0 0
  %1745 = vmatpush2.bf16.msra.mxu0 0
  %1746 = vmatprep.subr.bf16.mxu0 0
  %1747 = vmatpush2.bf16.msra.mxu0 0
  %1748 = vmatprep.subr.bf16.mxu0 0
  %1749 = vmatpush2.bf16.msra.mxu0 0
  %1750 = vmatprep.subr.bf16.mxu0 0
  %1751 = vmatpush2.bf16.msra.mxu0 0
  %1752 = vmatprep.subr.bf16.mxu0 0
  %1753 = vmatpush2.bf16.msra.mxu0 0
  %1754 = vmatprep.subr.bf16.mxu0 0
  %1755 = vmatpush2.bf16.msra.mxu0 0
  %1756 = vmatprep.mubr.bf16.mxu0 0
  %1757 = vmatmul.mubr.bf16.gmra.mxu0 %v1719
  %v1758 = vpop.f32.mrf.mxu0
  %v1759 = vadd.f32 0.0, %v1758
  %v1760 = vpop.f32.mrf.mxu0
  %v1761 = vpop.f32.mrf.mxu0
  %v1762 = vadd.f32 0.0, %v1761
  %v1763 = vpop.f32.mrf.mxu0
  %1764 = vmatprep.mubr.bf16.mxu0 0
  %1765 = vmatmul.mubr.bf16.gmra.mxu0 %v1722
  %v1766 = vpop.f32.mrf.mxu0
  %v1767 = vadd.f32 0.0, %v1766
  %v1768 = vpop.f32.mrf.mxu0
  %v1769 = vpop.f32.mrf.mxu0
  %v1770 = vadd.f32 0.0, %v1769
  %v1771 = vpop.f32.mrf.mxu0
  %1772 = vdwg.mxu0
  %v1773 = vpack.c.bf16 %v1762, %v1759
  %v1774 = vpack.c.bf16 %v1770, %v1767
  %s1775 = scalar_lea.vmem %s6, 96
  %v1776 = vld [vmem:[%s1775] sm:$0xf]
  %v1777 = vld [vmem:[%s1775 + $0x4] sm:$0xf]
  %v1778 = vld [vmem:[%s1775 + $0x8] sm:$0xf]
  %v1779 = vld [vmem:[%s1775 + $0xc] sm:$0xf]
  %v1784 = vunpack.c.l.b16 %v1776
  %v1785 = vunpack.c.l.b16 %v1777
  %v1786 = vunpack.c.l.b16 %v1778
  %v1787 = vunpack.c.l.b16 %v1779
  %v1788 = vpack.c.b16 %v1785, %v1784
  %v1789 = vpack.c.b16 %v1787, %v1786
  %v1791 = vsel %vm1048, %v1788, 0
  %v1794 = vsel %vm1048, %v1789, 0
  %1796 = vmatprep.subr.bf16.mxu0 0
  %1797 = vmatpush1.bf16.msra.mxu0 0
  %1798 = vmatprep.subr.bf16.mxu0 0
  %1799 = vmatpush1.bf16.msra.mxu0 0
  %1800 = vmatprep.subr.bf16.mxu0 0
  %1801 = vmatpush1.bf16.msra.mxu0 0
  %1802 = vmatprep.subr.bf16.mxu0 0
  %1803 = vmatpush1.bf16.msra.mxu0 0
  %1804 = vmatprep.subr.bf16.mxu0 0
  %1805 = vmatpush1.bf16.msra.mxu0 0
  %1806 = vmatprep.subr.bf16.mxu0 0
  %1807 = vmatpush1.bf16.msra.mxu0 0
  %1808 = vmatprep.subr.bf16.mxu0 0
  %1809 = vmatpush1.bf16.msra.mxu0 %v1343
  %1810 = vmatprep.subr.bf16.mxu0 0
  %1811 = vmatpush1.bf16.msra.mxu0 %v1342
  %1812 = vmatprep.subr.bf16.mxu0 0
  %1813 = vmatpush2.bf16.msra.mxu0 0
  %1814 = vmatprep.subr.bf16.mxu0 0
  %1815 = vmatpush2.bf16.msra.mxu0 0
  %1816 = vmatprep.subr.bf16.mxu0 0
  %1817 = vmatpush2.bf16.msra.mxu0 0
  %1818 = vmatprep.subr.bf16.mxu0 0
  %1819 = vmatpush2.bf16.msra.mxu0 0
  %1820 = vmatprep.subr.bf16.mxu0 0
  %1821 = vmatpush2.bf16.msra.mxu0 0
  %1822 = vmatprep.subr.bf16.mxu0 0
  %1823 = vmatpush2.bf16.msra.mxu0 0
  %1824 = vmatprep.subr.bf16.mxu0 0
  %1825 = vmatpush2.bf16.msra.mxu0 0
  %1826 = vmatprep.subr.bf16.mxu0 0
  %1827 = vmatpush2.bf16.msra.mxu0 0
  %1828 = vmatprep.mubr.bf16.mxu0 0
  %1829 = vmatmul.mubr.bf16.gmra.mxu0 %v1791
  %v1830 = vpop.f32.mrf.mxu0
  %v1831 = vadd.f32 0.0, %v1830
  %v1832 = vpop.f32.mrf.mxu0
  %v1833 = vpop.f32.mrf.mxu0
  %v1834 = vadd.f32 0.0, %v1833
  %v1835 = vpop.f32.mrf.mxu0
  %1836 = vmatprep.mubr.bf16.mxu0 0
  %1837 = vmatmul.mubr.bf16.gmra.mxu0 %v1794
  %v1838 = vpop.f32.mrf.mxu0
  %v1839 = vadd.f32 0.0, %v1838
  %v1840 = vpop.f32.mrf.mxu0
  %v1841 = vpop.f32.mrf.mxu0
  %v1842 = vadd.f32 0.0, %v1841
  %v1843 = vpop.f32.mrf.mxu0
  %1844 = vdwg.mxu0
  %v1845 = vpack.c.bf16 %v1834, %v1831
  %v1846 = vpack.c.bf16 %v1842, %v1839
  %s1847 = scalar_lea.vmem %s6, 112
  %v1848 = vld [vmem:[%s1847] sm:$0xf]
  %v1849 = vld [vmem:[%s1847 + $0x4] sm:$0xf]
  %v1850 = vld [vmem:[%s1847 + $0x8] sm:$0xf]
  %v1851 = vld [vmem:[%s1847 + $0xc] sm:$0xf]
  %v1856 = vunpack.c.l.b16 %v1848
  %v1857 = vunpack.c.l.b16 %v1849
  %v1858 = vunpack.c.l.b16 %v1850
  %v1859 = vunpack.c.l.b16 %v1851
  %v1860 = vpack.c.b16 %v1857, %v1856
  %v1861 = vpack.c.b16 %v1859, %v1858
  %v1863 = vsel %vm1048, %v1860, 0
  %v1866 = vsel %vm1048, %v1861, 0
  %1868 = vmatprep.subr.bf16.mxu0 0
  %1869 = vmatpush1.bf16.msra.mxu0 0
  %1870 = vmatprep.subr.bf16.mxu0 0
  %1871 = vmatpush1.bf16.msra.mxu0 0
  %1872 = vmatprep.subr.bf16.mxu0 0
  %1873 = vmatpush1.bf16.msra.mxu0 0
  %1874 = vmatprep.subr.bf16.mxu0 0
  %1875 = vmatpush1.bf16.msra.mxu0 0
  %1876 = vmatprep.subr.bf16.mxu0 0
  %1877 = vmatpush1.bf16.msra.mxu0 0
  %1878 = vmatprep.subr.bf16.mxu0 0
  %1879 = vmatpush1.bf16.msra.mxu0 0
  %1880 = vmatprep.subr.bf16.mxu0 0
  %1881 = vmatpush1.bf16.msra.mxu0 %v1343
  %1882 = vmatprep.subr.bf16.mxu0 0
  %1883 = vmatpush1.bf16.msra.mxu0 %v1342
  %1884 = vmatprep.subr.bf16.mxu0 0
  %1885 = vmatpush2.bf16.msra.mxu0 0
  %1886 = vmatprep.subr.bf16.mxu0 0
  %1887 = vmatpush2.bf16.msra.mxu0 0
  %1888 = vmatprep.subr.bf16.mxu0 0
  %1889 = vmatpush2.bf16.msra.mxu0 0
  %1890 = vmatprep.subr.bf16.mxu0 0
  %1891 = vmatpush2.bf16.msra.mxu0 0
  %1892 = vmatprep.subr.bf16.mxu0 0
  %1893 = vmatpush2.bf16.msra.mxu0 0
  %1894 = vmatprep.subr.bf16.mxu0 0
  %1895 = vmatpush2.bf16.msra.mxu0 0
  %1896 = vmatprep.subr.bf16.mxu0 0
  %1897 = vmatpush2.bf16.msra.mxu0 0
  %1898 = vmatprep.subr.bf16.mxu0 0
  %1899 = vmatpush2.bf16.msra.mxu0 0
  %1900 = vmatprep.mubr.bf16.mxu0 0
  %1901 = vmatmul.mubr.bf16.gmra.mxu0 %v1863
  %v1902 = vpop.f32.mrf.mxu0
  %v1903 = vadd.f32 0.0, %v1902
  %v1904 = vpop.f32.mrf.mxu0
  %v1905 = vpop.f32.mrf.mxu0
  %v1906 = vadd.f32 0.0, %v1905
  %v1907 = vpop.f32.mrf.mxu0
  %1908 = vmatprep.mubr.bf16.mxu0 0
  %1909 = vmatmul.mubr.bf16.gmra.mxu0 %v1866
  %v1910 = vpop.f32.mrf.mxu0
  %v1911 = vadd.f32 0.0, %v1910
  %v1912 = vpop.f32.mrf.mxu0
  %v1913 = vpop.f32.mrf.mxu0
  %v1914 = vadd.f32 0.0, %v1913
  %v1915 = vpop.f32.mrf.mxu0
  %1916 = vdwg.mxu0
  %v1917 = vpack.c.bf16 %v1906, %v1903
  %v1918 = vpack.c.bf16 %v1914, %v1911
  %s1919 = scalar_lea.vmem %s6, 128
  %v1920 = vld [vmem:[%s1919] sm:$0xf]
  %v1921 = vld [vmem:[%s1919 + $0x4] sm:$0xf]
  %v1922 = vld [vmem:[%s1919 + $0x8] sm:$0xf]
  %v1923 = vld [vmem:[%s1919 + $0xc] sm:$0xf]
  %v1928 = vunpack.c.l.b16 %v1920
  %v1929 = vunpack.c.l.b16 %v1921
  %v1930 = vunpack.c.l.b16 %v1922
  %v1931 = vunpack.c.l.b16 %v1923
  %v1932 = vpack.c.b16 %v1929, %v1928
  %v1933 = vpack.c.b16 %v1931, %v1930
  %v1935 = vsel %vm1048, %v1932, 0
  %v1938 = vsel %vm1048, %v1933, 0
  %1940 = vmatprep.subr.bf16.mxu0 0
  %1941 = vmatpush1.bf16.msra.mxu0 0
  %1942 = vmatprep.subr.bf16.mxu0 0
  %1943 = vmatpush1.bf16.msra.mxu0 0
  %1944 = vmatprep.subr.bf16.mxu0 0
  %1945 = vmatpush1.bf16.msra.mxu0 0
  %1946 = vmatprep.subr.bf16.mxu0 0
  %1947 = vmatpush1.bf16.msra.mxu0 0
  %1948 = vmatprep.subr.bf16.mxu0 0
  %1949 = vmatpush1.bf16.msra.mxu0 0
  %1950 = vmatprep.subr.bf16.mxu0 0
  %1951 = vmatpush1.bf16.msra.mxu0 0
  %1952 = vmatprep.subr.bf16.mxu0 0
  %1953 = vmatpush1.bf16.msra.mxu0 %v1343
  %1954 = vmatprep.subr.bf16.mxu0 0
  %1955 = vmatpush1.bf16.msra.mxu0 %v1342
  %1956 = vmatprep.subr.bf16.mxu0 0
  %1957 = vmatpush2.bf16.msra.mxu0 0
  %1958 = vmatprep.subr.bf16.mxu0 0
  %1959 = vmatpush2.bf16.msra.mxu0 0
  %1960 = vmatprep.subr.bf16.mxu0 0
  %1961 = vmatpush2.bf16.msra.mxu0 0
  %1962 = vmatprep.subr.bf16.mxu0 0
  %1963 = vmatpush2.bf16.msra.mxu0 0
  %1964 = vmatprep.subr.bf16.mxu0 0
  %1965 = vmatpush2.bf16.msra.mxu0 0
  %1966 = vmatprep.subr.bf16.mxu0 0
  %1967 = vmatpush2.bf16.msra.mxu0 0
  %1968 = vmatprep.subr.bf16.mxu0 0
  %1969 = vmatpush2.bf16.msra.mxu0 0
  %1970 = vmatprep.subr.bf16.mxu0 0
  %1971 = vmatpush2.bf16.msra.mxu0 0
  %1972 = vmatprep.mubr.bf16.mxu0 0
  %1973 = vmatmul.mubr.bf16.gmra.mxu0 %v1935
  %v1974 = vpop.f32.mrf.mxu0
  %v1975 = vadd.f32 0.0, %v1974
  %v1976 = vpop.f32.mrf.mxu0
  %v1977 = vpop.f32.mrf.mxu0
  %v1978 = vadd.f32 0.0, %v1977
  %v1979 = vpop.f32.mrf.mxu0
  %1980 = vmatprep.mubr.bf16.mxu0 0
  %1981 = vmatmul.mubr.bf16.gmra.mxu0 %v1938
  %v1982 = vpop.f32.mrf.mxu0
  %v1983 = vadd.f32 0.0, %v1982
  %v1984 = vpop.f32.mrf.mxu0
  %v1985 = vpop.f32.mrf.mxu0
  %v1986 = vadd.f32 0.0, %v1985
  %v1987 = vpop.f32.mrf.mxu0
  %1988 = vdwg.mxu0
  %v1989 = vpack.c.bf16 %v1978, %v1975
  %v1990 = vpack.c.bf16 %v1986, %v1983
  %1993 = vrot.lane.b32.xlu0 %v1485, 32
  %v1994 = vpop.permute.xlu0 %1993
  %1995 = vrot.lane.b32.xlu0 %v1486, 32
  %v1996 = vpop.permute.xlu0 %1995
  %1999 = vrot.lane.b32.xlu0 %v1557, 64
  %v2000 = vpop.permute.xlu0 %1999
  %2001 = vrot.lane.b32.xlu0 %v1558, 64
  %v2002 = vpop.permute.xlu0 %2001
  %2005 = vrot.lane.b32.xlu0 %v1629, 96
  %v2006 = vpop.permute.xlu0 %2005
  %2007 = vrot.lane.b32.xlu0 %v1630, 96
  %v2008 = vpop.permute.xlu0 %2007
  %2011 = vrot.lane.b32.xlu0 %v1773, 32
  %v2012 = vpop.permute.xlu0 %2011
  %2013 = vrot.lane.b32.xlu0 %v1774, 32
  %v2014 = vpop.permute.xlu0 %2013
  %2017 = vrot.lane.b32.xlu0 %v1845, 64
  %v2018 = vpop.permute.xlu0 %2017
  %2019 = vrot.lane.b32.xlu0 %v1846, 64
  %v2020 = vpop.permute.xlu0 %2019
  %2023 = vrot.lane.b32.xlu0 %v1917, 96
  %v2024 = vpop.permute.xlu0 %2023
  %2025 = vrot.lane.b32.xlu0 %v1918, 96
  %v2026 = vpop.permute.xlu0 %2025
  %v2029 = vsel %vm1048, %v1413, %v1994
  %v2032 = vsel %vm1048, %v1414, %v1996
  %v2034 = vsel %vm1055, %v2029, %v2000
  %v2036 = vsel %vm1055, %v2032, %v2002
  %v2038 = vsel %vm1060, %v2034, %v2006
  %v2041 = vsel %vm1060, %v2036, %v2008
  %v2045 = vsel %vm1048, %v1701, %v2012
  %v2048 = vsel %vm1048, %v1702, %v2014
  %v2050 = vsel %vm1055, %v2045, %v2018
  %v2052 = vsel %vm1055, %v2048, %v2020
  %v2054 = vsel %vm1060, %v2050, %v2024
  %v2057 = vsel %vm1060, %v2052, %v2026
  %v2059 = vld [vmem:[%s7] sm:$0xf]
  %v2060 = vld [vmem:[%s7 + $0x4] sm:$0xf]
  %v2061 = vld [vmem:[%s7 + $0x8] sm:$0xf]
  %v2062 = vld [vmem:[%s7 + $0xc] sm:$0xf]
  %v2063 = vld [vmem:[%s7 + $0x10] sm:$0xf]
  %v2064 = vld [vmem:[%s7 + $0x14] sm:$0xf]
  %v2065 = vld [vmem:[%s7 + $0x18] sm:$0xf]
  %v2066 = vld [vmem:[%s7 + $0x1c] sm:$0xf]
  %v2067 = vld [vmem:[%s7 + $0x20] sm:$0xf]
  %v2068 = vld [vmem:[%s7 + $0x24] sm:$0xf]
  %v2069 = vld [vmem:[%s7 + $0x28] sm:$0xf]
  %v2070 = vld [vmem:[%s7 + $0x2c] sm:$0xf]
  %v2071 = vld [vmem:[%s7 + $0x30] sm:$0xf]
  %v2072 = vld [vmem:[%s7 + $0x34] sm:$0xf]
  %v2073 = vld [vmem:[%s7 + $0x38] sm:$0xf]
  %v2074 = vld [vmem:[%s7 + $0x3c] sm:$0xf]
  %v2075 = vld [vmem:[%s7 + $0x40] sm:$0xf]
  %v2076 = vld [vmem:[%s7 + $0x44] sm:$0xf]
  %v2077 = vld [vmem:[%s7 + $0x48] sm:$0xf]
  %v2078 = vld [vmem:[%s7 + $0x4c] sm:$0xf]
  %v2079 = vld [vmem:[%s7 + $0x50] sm:$0xf]
  %v2080 = vld [vmem:[%s7 + $0x54] sm:$0xf]
  %v2081 = vld [vmem:[%s7 + $0x58] sm:$0xf]
  %v2082 = vld [vmem:[%s7 + $0x5c] sm:$0xf]
  %v2083 = vld [vmem:[%s7 + $0x60] sm:$0xf]
  %v2084 = vld [vmem:[%s7 + $0x64] sm:$0xf]
  %v2085 = vld [vmem:[%s7 + $0x68] sm:$0xf]
  %v2086 = vld [vmem:[%s7 + $0x6c] sm:$0xf]
  %v2087 = vld [vmem:[%s7 + $0x70] sm:$0xf]
  %v2088 = vld [vmem:[%s7 + $0x74] sm:$0xf]
  %v2089 = vld [vmem:[%s7 + $0x78] sm:$0xf]
  %v2090 = vld [vmem:[%s7 + $0x7c] sm:$0xf]
  %v2091 = vld [vmem:[%s7 + $0x80] sm:$0xf]
  %v2092 = vld [vmem:[%s7 + $0x84] sm:$0xf]
  %v2093 = vld [vmem:[%s7 + $0x88] sm:$0xf]
  %v2094 = vld [vmem:[%s7 + $0x8c] sm:$0xf]
  %v2095 = vld [vmem:[%s8] sm:$0x1]
  %v2097 = vlaneseq
  %v2098 = vshrl.u32 %v2097, 7
  %v2099 = vsub.s32 0, %v2098
  %v2100 = vrot.slane %v2095, %v2099
  %v2138 = vunpack.c.l.b16 %v2059
  %v2139 = vunpack.c.l.b16 %v2060
  %v2140 = vunpack.c.l.b16 %v2061
  %v2141 = vunpack.c.l.b16 %v2062
  %v2142 = vunpack.c.l.b16 %v2063
  %v2143 = vunpack.c.l.b16 %v2064
  %v2144 = vunpack.c.l.b16 %v2065
  %v2145 = vunpack.c.l.b16 %v2066
  %v2146 = vunpack.c.l.b16 %v2067
  %v2147 = vunpack.c.l.b16 %v2068
  %v2148 = vunpack.c.l.b16 %v2069
  %v2149 = vunpack.c.l.b16 %v2070
  %v2150 = vunpack.c.l.b16 %v2071
  %v2151 = vunpack.c.l.b16 %v2072
  %v2152 = vunpack.c.l.b16 %v2073
  %v2153 = vunpack.c.l.b16 %v2074
  %v2154 = vunpack.c.l.b16 %v2075
  %v2155 = vunpack.c.l.b16 %v2076
  %v2156 = vunpack.c.l.b16 %v2077
  %v2157 = vunpack.c.l.b16 %v2078
  %v2158 = vunpack.c.l.b16 %v2079
  %v2159 = vunpack.c.l.b16 %v2080
  %v2160 = vunpack.c.l.b16 %v2081
  %v2161 = vunpack.c.l.b16 %v2082
  %v2162 = vunpack.c.l.b16 %v2083
  %v2163 = vunpack.c.l.b16 %v2084
  %v2164 = vunpack.c.l.b16 %v2085
  %v2165 = vunpack.c.l.b16 %v2086
  %v2166 = vunpack.c.l.b16 %v2087
  %v2167 = vunpack.c.l.b16 %v2088
  %v2168 = vunpack.c.l.b16 %v2089
  %v2169 = vunpack.c.l.b16 %v2090
  %v2170 = vunpack.c.l.b16 %v2091
  %v2171 = vunpack.c.l.b16 %v2092
  %v2172 = vunpack.c.l.b16 %v2093
  %v2173 = vunpack.c.l.b16 %v2094
  %v2174 = vpack.c.b16 %v2139, %v2138
  %v2175 = vpack.c.b16 %v2141, %v2140
  %v2176 = vpack.c.b16 %v2143, %v2142
  %v2177 = vpack.c.b16 %v2145, %v2144
  %v2178 = vpack.c.b16 %v2147, %v2146
  %v2179 = vpack.c.b16 %v2149, %v2148
  %v2180 = vpack.c.b16 %v2151, %v2150
  %v2181 = vpack.c.b16 %v2153, %v2152
  %v2182 = vpack.c.b16 %v2155, %v2154
  %v2183 = vpack.c.b16 %v2157, %v2156
  %v2184 = vpack.c.b16 %v2159, %v2158
  %v2185 = vpack.c.b16 %v2161, %v2160
  %v2186 = vpack.c.b16 %v2163, %v2162
  %v2187 = vpack.c.b16 %v2165, %v2164
  %v2188 = vpack.c.b16 %v2167, %v2166
  %v2189 = vpack.c.b16 %v2169, %v2168
  %v2190 = vpack.c.b16 %v2171, %v2170
  %v2191 = vpack.c.b16 %v2173, %v2172
  %v2211 = vsel %vm1048, %v1989, 0
  %v2214 = vsel %vm1048, %v1990, 0
  %2216 = vmatprep.subr.bf16.mxu0 0
  %2217 = vmatpush1.bf16.msra.mxu0 %v2181
  %2218 = vmatprep.subr.bf16.mxu0 0
  %2219 = vmatpush1.bf16.msra.mxu0 %v2180
  %2220 = vmatprep.subr.bf16.mxu0 0
  %2221 = vmatpush1.bf16.msra.mxu0 %v2179
  %2222 = vmatprep.subr.bf16.mxu0 0
  %2223 = vmatpush1.bf16.msra.mxu0 %v2178
  %2224 = vmatprep.subr.bf16.mxu0 0
  %2225 = vmatpush1.bf16.msra.mxu0 %v2177
  %2226 = vmatprep.subr.bf16.mxu0 0
  %2227 = vmatpush1.bf16.msra.mxu0 %v2176
  %2228 = vmatprep.subr.bf16.mxu0 0
  %2229 = vmatpush1.bf16.msra.mxu0 %v2175
  %2230 = vmatprep.subr.bf16.mxu0 0
  %2231 = vmatpush1.bf16.msra.mxu0 %v2174
  %2232 = vmatprep.subr.bf16.mxu0 0
  %2233 = vmatpush2.bf16.msra.mxu0 %v2189
  %2234 = vmatprep.subr.bf16.mxu0 0
  %2235 = vmatpush2.bf16.msra.mxu0 %v2188
  %2236 = vmatprep.subr.bf16.mxu0 0
  %2237 = vmatpush2.bf16.msra.mxu0 %v2187
  %2238 = vmatprep.subr.bf16.mxu0 0
  %2239 = vmatpush2.bf16.msra.mxu0 %v2186
  %2240 = vmatprep.subr.bf16.mxu0 0
  %2241 = vmatpush2.bf16.msra.mxu0 %v2185
  %2242 = vmatprep.subr.bf16.mxu0 0
  %2243 = vmatpush2.bf16.msra.mxu0 %v2184
  %2244 = vmatprep.subr.bf16.mxu0 0
  %2245 = vmatpush2.bf16.msra.mxu0 %v2183
  %2246 = vmatprep.subr.bf16.mxu0 0
  %2247 = vmatpush2.bf16.msra.mxu0 %v2182
  %2248 = vmatprep.mubr.bf16.mxu0 %v2054
  %2249 = vmatmul.mubr.bf16.gmra.mxu0 %v2038
  %v2250 = vpop.f32.mrf.mxu0
  %v2251 = vadd.f32 %v2100, %v2250
  %v2252 = vpop.f32.mrf.mxu0
  %v2253 = vpop.f32.mrf.mxu0
  %v2254 = vadd.f32 %v2100, %v2253
  %v2255 = vpop.f32.mrf.mxu0
  %2256 = vmatprep.mubr.bf16.mxu0 %v2057
  %2257 = vmatmul.mubr.bf16.gmra.mxu0 %v2041
  %v2258 = vpop.f32.mrf.mxu0
  %v2259 = vadd.f32 %v2100, %v2258
  %v2260 = vpop.f32.mrf.mxu0
  %v2261 = vpop.f32.mrf.mxu0
  %v2262 = vadd.f32 %v2100, %v2261
  %v2263 = vpop.f32.mrf.mxu0
  %2264 = vdwg.mxu0
  %2265 = vmatprep.subr.bf16.mxu0 0
  %2266 = vmatpush1.bf16.msra.mxu0 0
  %2267 = vmatprep.subr.bf16.mxu0 0
  %2268 = vmatpush1.bf16.msra.mxu0 0
  %2269 = vmatprep.subr.bf16.mxu0 0
  %2270 = vmatpush1.bf16.msra.mxu0 0
  %2271 = vmatprep.subr.bf16.mxu0 0
  %2272 = vmatpush1.bf16.msra.mxu0 0
  %2273 = vmatprep.subr.bf16.mxu0 0
  %2274 = vmatpush1.bf16.msra.mxu0 0
  %2275 = vmatprep.subr.bf16.mxu0 0
  %2276 = vmatpush1.bf16.msra.mxu0 0
  %2277 = vmatprep.subr.bf16.mxu0 0
  %2278 = vmatpush1.bf16.msra.mxu0 %v2191
  %2279 = vmatprep.subr.bf16.mxu0 0
  %2280 = vmatpush1.bf16.msra.mxu0 %v2190
  %2281 = vmatprep.subr.bf16.mxu0 0
  %2282 = vmatpush2.bf16.msra.mxu0 0
  %2283 = vmatprep.subr.bf16.mxu0 0
  %2284 = vmatpush2.bf16.msra.mxu0 0
  %2285 = vmatprep.subr.bf16.mxu0 0
  %2286 = vmatpush2.bf16.msra.mxu0 0
  %2287 = vmatprep.subr.bf16.mxu0 0
  %2288 = vmatpush2.bf16.msra.mxu0 0
  %2289 = vmatprep.subr.bf16.mxu0 0
  %2290 = vmatpush2.bf16.msra.mxu0 0
  %2291 = vmatprep.subr.bf16.mxu0 0
  %2292 = vmatpush2.bf16.msra.mxu0 0
  %2293 = vmatprep.subr.bf16.mxu0 0
  %2294 = vmatpush2.bf16.msra.mxu0 0
  %2295 = vmatprep.subr.bf16.mxu0 0
  %2296 = vmatpush2.bf16.msra.mxu0 0
  %2297 = vmatprep.mubr.bf16.mxu0 0
  %2298 = vmatmul.mubr.bf16.gmra.mxu0 %v2211
  %v2299 = vpop.f32.mrf.mxu0
  %v2300 = vadd.f32 %v2251, %v2299
  %v2301 = vpop.f32.mrf.mxu0
  %v2302 = vpop.f32.mrf.mxu0
  %v2303 = vadd.f32 %v2254, %v2302
  %v2304 = vpop.f32.mrf.mxu0
  %2305 = vmatprep.mubr.bf16.mxu0 0
  %2306 = vmatmul.mubr.bf16.gmra.mxu0 %v2214
  %v2307 = vpop.f32.mrf.mxu0
  %v2308 = vadd.f32 %v2259, %v2307
  %v2309 = vpop.f32.mrf.mxu0
  %v2310 = vpop.f32.mrf.mxu0
  %v2311 = vadd.f32 %v2262, %v2310
  %v2312 = vpop.f32.mrf.mxu0
  %2313 = vdwg.mxu0
  %v2314 = vmax.f32 %v2300, 0.0
  %v2315 = vmax.f32 %v2303, 0.0
  %v2316 = vmax.f32 %v2308, 0.0
  %v2317 = vmax.f32 %v2311, 0.0
  %2322 = vrot.lane.b32.xlu0 %v1324, 96
  %v2323 = vpop.permute.xlu0 %2322
  %2324 = vrot.lane.b32.xlu0 %v1327, 96
  %v2325 = vpop.permute.xlu0 %2324
  %2326 = vrot.lane.b32.xlu0 %v1332, 96
  %v2327 = vpop.permute.xlu0 %2326
  %2328 = vrot.lane.b32.xlu0 %v1335, 96
  %v2329 = vpop.permute.xlu0 %2328
  %v2334 = vadd.f32 %v2314, %v2323
  %v2335 = vadd.f32 %v2315, %v2325
  %v2336 = vadd.f32 %v2316, %v2327
  %v2337 = vadd.f32 %v2317, %v2329
  %v2338 = vpack.c.bf16 %v2335, %v2334
  %v2339 = vpack.c.bf16 %v2337, %v2336
  %v2340 = vld [vmem:[%s9] sm:$0xf]
  %v2342 = vsel %vm1048, %v2340, 0
  %2344 = vmatprep.subr.bf16.mxu0 0
  %2345 = vmatpush1.bf16.msra.mxu0 0
  %2346 = vmatprep.subr.bf16.mxu0 0
  %2347 = vmatpush1.bf16.msra.mxu0 0
  %2348 = vmatprep.subr.bf16.mxu0 0
  %2349 = vmatpush1.bf16.msra.mxu0 0
  %2350 = vmatprep.subr.bf16.mxu0 0
  %2351 = vmatpush1.bf16.msra.mxu0 0
  %2352 = vmatprep.subr.bf16.mxu0 0
  %2353 = vmatpush1.bf16.msra.mxu0 0
  %2354 = vmatprep.subr.bf16.mxu0 0
  %2355 = vmatpush1.bf16.msra.mxu0 0
  %2356 = vmatprep.subr.bf16.mxu0 0
  %2357 = vmatpush1.bf16.msra.mxu0 %v2339
  %2358 = vmatprep.subr.bf16.mxu0 0
  %2359 = vmatpush1.bf16.msra.mxu0 %v2338
  %2360 = vmatprep.subr.bf16.mxu0 0
  %2361 = vmatpush2.bf16.msra.mxu0 0
  %2362 = vmatprep.subr.bf16.mxu0 0
  %2363 = vmatpush2.bf16.msra.mxu0 0
  %2364 = vmatprep.subr.bf16.mxu0 0
  %2365 = vmatpush2.bf16.msra.mxu0 0
  %2366 = vmatprep.subr.bf16.mxu0 0
  %2367 = vmatpush2.bf16.msra.mxu0 0
  %2368 = vmatprep.subr.bf16.mxu0 0
  %2369 = vmatpush2.bf16.msra.mxu0 0
  %2370 = vmatprep.subr.bf16.mxu0 0
  %2371 = vmatpush2.bf16.msra.mxu0 0
  %2372 = vmatprep.subr.bf16.mxu0 0
  %2373 = vmatpush2.bf16.msra.mxu0 0
  %2374 = vmatprep.subr.bf16.mxu0 0
  %2375 = vmatpush2.bf16.msra.mxu0 0
  %2376 = vmatprep.mubr.bf16.mxu0 0
  %2377 = vmatmul.mubr.bf16.gmra.mxu0 %v2342
  %v2378 = vpop.f32.mrf.mxu0
  %v2379 = vadd.f32 0.0, %v2378
  %v2380 = vpop.f32.mrf.mxu0
  %v2381 = vpop.f32.mrf.mxu0
  %v2382 = vpop.f32.mrf.mxu0
  %2383 = vdwg.mxu0
  %v2384 = vpack.c.bf16 %v2379, %v2379
  %s2385 = scalar_lea.vmem %s9, 4
  %v2386 = vld [vmem:[%s2385] sm:$0xf]
  %v2388 = vsel %vm1048, %v2386, 0
  %2390 = vmatprep.subr.bf16.mxu0 0
  %2391 = vmatpush1.bf16.msra.mxu0 0
  %2392 = vmatprep.subr.bf16.mxu0 0
  %2393 = vmatpush1.bf16.msra.mxu0 0
  %2394 = vmatprep.subr.bf16.mxu0 0
  %2395 = vmatpush1.bf16.msra.mxu0 0
  %2396 = vmatprep.subr.bf16.mxu0 0
  %2397 = vmatpush1.bf16.msra.mxu0 0
  %2398 = vmatprep.subr.bf16.mxu0 0
  %2399 = vmatpush1.bf16.msra.mxu0 0
  %2400 = vmatprep.subr.bf16.mxu0 0
  %2401 = vmatpush1.bf16.msra.mxu0 0
  %2402 = vmatprep.subr.bf16.mxu0 0
  %2403 = vmatpush1.bf16.msra.mxu0 %v2339
  %2404 = vmatprep.subr.bf16.mxu0 0
  %2405 = vmatpush1.bf16.msra.mxu0 %v2338
  %2406 = vmatprep.subr.bf16.mxu0 0
  %2407 = vmatpush2.bf16.msra.mxu0 0
  %2408 = vmatprep.subr.bf16.mxu0 0
  %2409 = vmatpush2.bf16.msra.mxu0 0
  %2410 = vmatprep.subr.bf16.mxu0 0
  %2411 = vmatpush2.bf16.msra.mxu0 0
  %2412 = vmatprep.subr.bf16.mxu0 0
  %2413 = vmatpush2.bf16.msra.mxu0 0
  %2414 = vmatprep.subr.bf16.mxu0 0
  %2415 = vmatpush2.bf16.msra.mxu0 0
  %2416 = vmatprep.subr.bf16.mxu0 0
  %2417 = vmatpush2.bf16.msra.mxu0 0
  %2418 = vmatprep.subr.bf16.mxu0 0
  %2419 = vmatpush2.bf16.msra.mxu0 0
  %2420 = vmatprep.subr.bf16.mxu0 0
  %2421 = vmatpush2.bf16.msra.mxu0 0
  %2422 = vmatprep.mubr.bf16.mxu0 0
  %2423 = vmatmul.mubr.bf16.gmra.mxu0 %v2388
  %v2424 = vpop.f32.mrf.mxu0
  %v2425 = vadd.f32 0.0, %v2424
  %v2426 = vpop.f32.mrf.mxu0
  %v2427 = vpop.f32.mrf.mxu0
  %v2428 = vpop.f32.mrf.mxu0
  %2429 = vdwg.mxu0
  %v2430 = vpack.c.bf16 %v2425, %v2425
  %s2431 = scalar_lea.vmem %s9, 8
  %v2432 = vld [vmem:[%s2431] sm:$0xf]
  %v2434 = vsel %vm1048, %v2432, 0
  %2436 = vmatprep.subr.bf16.mxu0 0
  %2437 = vmatpush1.bf16.msra.mxu0 0
  %2438 = vmatprep.subr.bf16.mxu0 0
  %2439 = vmatpush1.bf16.msra.mxu0 0
  %2440 = vmatprep.subr.bf16.mxu0 0
  %2441 = vmatpush1.bf16.msra.mxu0 0
  %2442 = vmatprep.subr.bf16.mxu0 0
  %2443 = vmatpush1.bf16.msra.mxu0 0
  %2444 = vmatprep.subr.bf16.mxu0 0
  %2445 = vmatpush1.bf16.msra.mxu0 0
  %2446 = vmatprep.subr.bf16.mxu0 0
  %2447 = vmatpush1.bf16.msra.mxu0 0
  %2448 = vmatprep.subr.bf16.mxu0 0
  %2449 = vmatpush1.bf16.msra.mxu0 %v2339
  %2450 = vmatprep.subr.bf16.mxu0 0
  %2451 = vmatpush1.bf16.msra.mxu0 %v2338
  %2452 = vmatprep.subr.bf16.mxu0 0
  %2453 = vmatpush2.bf16.msra.mxu0 0
  %2454 = vmatprep.subr.bf16.mxu0 0
  %2455 = vmatpush2.bf16.msra.mxu0 0
  %2456 = vmatprep.subr.bf16.mxu0 0
  %2457 = vmatpush2.bf16.msra.mxu0 0
  %2458 = vmatprep.subr.bf16.mxu0 0
  %2459 = vmatpush2.bf16.msra.mxu0 0
  %2460 = vmatprep.subr.bf16.mxu0 0
  %2461 = vmatpush2.bf16.msra.mxu0 0
  %2462 = vmatprep.subr.bf16.mxu0 0
  %2463 = vmatpush2.bf16.msra.mxu0 0
  %2464 = vmatprep.subr.bf16.mxu0 0
  %2465 = vmatpush2.bf16.msra.mxu0 0
  %2466 = vmatprep.subr.bf16.mxu0 0
  %2467 = vmatpush2.bf16.msra.mxu0 0
  %2468 = vmatprep.mubr.bf16.mxu0 0
  %2469 = vmatmul.mubr.bf16.gmra.mxu0 %v2434
  %v2470 = vpop.f32.mrf.mxu0
  %v2471 = vadd.f32 0.0, %v2470
  %v2472 = vpop.f32.mrf.mxu0
  %v2473 = vpop.f32.mrf.mxu0
  %v2474 = vpop.f32.mrf.mxu0
  %2475 = vdwg.mxu0
  %v2476 = vpack.c.bf16 %v2471, %v2471
  %s2477 = scalar_lea.vmem %s9, 12
  %v2478 = vld [vmem:[%s2477] sm:$0xf]
  %v2480 = vsel %vm1048, %v2478, 0
  %2482 = vmatprep.subr.bf16.mxu0 0
  %2483 = vmatpush1.bf16.msra.mxu0 0
  %2484 = vmatprep.subr.bf16.mxu0 0
  %2485 = vmatpush1.bf16.msra.mxu0 0
  %2486 = vmatprep.subr.bf16.mxu0 0
  %2487 = vmatpush1.bf16.msra.mxu0 0
  %2488 = vmatprep.subr.bf16.mxu0 0
  %2489 = vmatpush1.bf16.msra.mxu0 0
  %2490 = vmatprep.subr.bf16.mxu0 0
  %2491 = vmatpush1.bf16.msra.mxu0 0
  %2492 = vmatprep.subr.bf16.mxu0 0
  %2493 = vmatpush1.bf16.msra.mxu0 0
  %2494 = vmatprep.subr.bf16.mxu0 0
  %2495 = vmatpush1.bf16.msra.mxu0 %v2339
  %2496 = vmatprep.subr.bf16.mxu0 0
  %2497 = vmatpush1.bf16.msra.mxu0 %v2338
  %2498 = vmatprep.subr.bf16.mxu0 0
  %2499 = vmatpush2.bf16.msra.mxu0 0
  %2500 = vmatprep.subr.bf16.mxu0 0
  %2501 = vmatpush2.bf16.msra.mxu0 0
  %2502 = vmatprep.subr.bf16.mxu0 0
  %2503 = vmatpush2.bf16.msra.mxu0 0
  %2504 = vmatprep.subr.bf16.mxu0 0
  %2505 = vmatpush2.bf16.msra.mxu0 0
  %2506 = vmatprep.subr.bf16.mxu0 0
  %2507 = vmatpush2.bf16.msra.mxu0 0
  %2508 = vmatprep.subr.bf16.mxu0 0
  %2509 = vmatpush2.bf16.msra.mxu0 0
  %2510 = vmatprep.subr.bf16.mxu0 0
  %2511 = vmatpush2.bf16.msra.mxu0 0
  %2512 = vmatprep.subr.bf16.mxu0 0
  %2513 = vmatpush2.bf16.msra.mxu0 0
  %2514 = vmatprep.mubr.bf16.mxu0 0
  %2515 = vmatmul.mubr.bf16.gmra.mxu0 %v2480
  %v2516 = vpop.f32.mrf.mxu0
  %v2517 = vadd.f32 0.0, %v2516
  %v2518 = vpop.f32.mrf.mxu0
  %v2519 = vpop.f32.mrf.mxu0
  %v2520 = vpop.f32.mrf.mxu0
  %2521 = vdwg.mxu0
  %v2522 = vpack.c.bf16 %v2517, %v2517
  %s2523 = scalar_lea.vmem %s9, 16
  %v2524 = vld [vmem:[%s2523] sm:$0xf]
  %v2526 = vsel %vm1048, %v2524, 0
  %2528 = vmatprep.subr.bf16.mxu0 0
  %2529 = vmatpush1.bf16.msra.mxu0 0
  %2530 = vmatprep.subr.bf16.mxu0 0
  %2531 = vmatpush1.bf16.msra.mxu0 0
  %2532 = vmatprep.subr.bf16.mxu0 0
  %2533 = vmatpush1.bf16.msra.mxu0 0
  %2534 = vmatprep.subr.bf16.mxu0 0
  %2535 = vmatpush1.bf16.msra.mxu0 0
  %2536 = vmatprep.subr.bf16.mxu0 0
  %2537 = vmatpush1.bf16.msra.mxu0 0
  %2538 = vmatprep.subr.bf16.mxu0 0
  %2539 = vmatpush1.bf16.msra.mxu0 0
  %2540 = vmatprep.subr.bf16.mxu0 0
  %2541 = vmatpush1.bf16.msra.mxu0 %v2339
  %2542 = vmatprep.subr.bf16.mxu0 0
  %2543 = vmatpush1.bf16.msra.mxu0 %v2338
  %2544 = vmatprep.subr.bf16.mxu0 0
  %2545 = vmatpush2.bf16.msra.mxu0 0
  %2546 = vmatprep.subr.bf16.mxu0 0
  %2547 = vmatpush2.bf16.msra.mxu0 0
  %2548 = vmatprep.subr.bf16.mxu0 0
  %2549 = vmatpush2.bf16.msra.mxu0 0
  %2550 = vmatprep.subr.bf16.mxu0 0
  %2551 = vmatpush2.bf16.msra.mxu0 0
  %2552 = vmatprep.subr.bf16.mxu0 0
  %2553 = vmatpush2.bf16.msra.mxu0 0
  %2554 = vmatprep.subr.bf16.mxu0 0
  %2555 = vmatpush2.bf16.msra.mxu0 0
  %2556 = vmatprep.subr.bf16.mxu0 0
  %2557 = vmatpush2.bf16.msra.mxu0 0
  %2558 = vmatprep.subr.bf16.mxu0 0
  %2559 = vmatpush2.bf16.msra.mxu0 0
  %2560 = vmatprep.mubr.bf16.mxu0 0
  %2561 = vmatmul.mubr.bf16.gmra.mxu0 %v2526
  %v2562 = vpop.f32.mrf.mxu0
  %v2563 = vadd.f32 0.0, %v2562
  %v2564 = vpop.f32.mrf.mxu0
  %v2565 = vpop.f32.mrf.mxu0
  %v2566 = vpop.f32.mrf.mxu0
  %2567 = vdwg.mxu0
  %v2568 = vpack.c.bf16 %v2563, %v2563
  %s2569 = scalar_lea.vmem %s9, 20
  %v2570 = vld [vmem:[%s2569] sm:$0xf]
  %v2572 = vsel %vm1048, %v2570, 0
  %2574 = vmatprep.subr.bf16.mxu0 0
  %2575 = vmatpush1.bf16.msra.mxu0 0
  %2576 = vmatprep.subr.bf16.mxu0 0
  %2577 = vmatpush1.bf16.msra.mxu0 0
  %2578 = vmatprep.subr.bf16.mxu0 0
  %2579 = vmatpush1.bf16.msra.mxu0 0
  %2580 = vmatprep.subr.bf16.mxu0 0
  %2581 = vmatpush1.bf16.msra.mxu0 0
  %2582 = vmatprep.subr.bf16.mxu0 0
  %2583 = vmatpush1.bf16.msra.mxu0 0
  %2584 = vmatprep.subr.bf16.mxu0 0
  %2585 = vmatpush1.bf16.msra.mxu0 0
  %2586 = vmatprep.subr.bf16.mxu0 0
  %2587 = vmatpush1.bf16.msra.mxu0 %v2339
  %2588 = vmatprep.subr.bf16.mxu0 0
  %2589 = vmatpush1.bf16.msra.mxu0 %v2338
  %2590 = vmatprep.subr.bf16.mxu0 0
  %2591 = vmatpush2.bf16.msra.mxu0 0
  %2592 = vmatprep.subr.bf16.mxu0 0
  %2593 = vmatpush2.bf16.msra.mxu0 0
  %2594 = vmatprep.subr.bf16.mxu0 0
  %2595 = vmatpush2.bf16.msra.mxu0 0
  %2596 = vmatprep.subr.bf16.mxu0 0
  %2597 = vmatpush2.bf16.msra.mxu0 0
  %2598 = vmatprep.subr.bf16.mxu0 0
  %2599 = vmatpush2.bf16.msra.mxu0 0
  %2600 = vmatprep.subr.bf16.mxu0 0
  %2601 = vmatpush2.bf16.msra.mxu0 0
  %2602 = vmatprep.subr.bf16.mxu0 0
  %2603 = vmatpush2.bf16.msra.mxu0 0
  %2604 = vmatprep.subr.bf16.mxu0 0
  %2605 = vmatpush2.bf16.msra.mxu0 0
  %2606 = vmatprep.mubr.bf16.mxu0 0
  %2607 = vmatmul.mubr.bf16.gmra.mxu0 %v2572
  %v2608 = vpop.f32.mrf.mxu0
  %v2609 = vadd.f32 0.0, %v2608
  %v2610 = vpop.f32.mrf.mxu0
  %v2611 = vpop.f32.mrf.mxu0
  %v2612 = vpop.f32.mrf.mxu0
  %2613 = vdwg.mxu0
  %v2614 = vpack.c.bf16 %v2609, %v2609
  %s2615 = scalar_lea.vmem %s9, 24
  %v2616 = vld [vmem:[%s2615] sm:$0xf]
  %v2618 = vsel %vm1048, %v2616, 0
  %2620 = vmatprep.subr.bf16.mxu0 0
  %2621 = vmatpush1.bf16.msra.mxu0 0
  %2622 = vmatprep.subr.bf16.mxu0 0
  %2623 = vmatpush1.bf16.msra.mxu0 0
  %2624 = vmatprep.subr.bf16.mxu0 0
  %2625 = vmatpush1.bf16.msra.mxu0 0
  %2626 = vmatprep.subr.bf16.mxu0 0
  %2627 = vmatpush1.bf16.msra.mxu0 0
  %2628 = vmatprep.subr.bf16.mxu0 0
  %2629 = vmatpush1.bf16.msra.mxu0 0
  %2630 = vmatprep.subr.bf16.mxu0 0
  %2631 = vmatpush1.bf16.msra.mxu0 0
  %2632 = vmatprep.subr.bf16.mxu0 0
  %2633 = vmatpush1.bf16.msra.mxu0 %v2339
  %2634 = vmatprep.subr.bf16.mxu0 0
  %2635 = vmatpush1.bf16.msra.mxu0 %v2338
  %2636 = vmatprep.subr.bf16.mxu0 0
  %2637 = vmatpush2.bf16.msra.mxu0 0
  %2638 = vmatprep.subr.bf16.mxu0 0
  %2639 = vmatpush2.bf16.msra.mxu0 0
  %2640 = vmatprep.subr.bf16.mxu0 0
  %2641 = vmatpush2.bf16.msra.mxu0 0
  %2642 = vmatprep.subr.bf16.mxu0 0
  %2643 = vmatpush2.bf16.msra.mxu0 0
  %2644 = vmatprep.subr.bf16.mxu0 0
  %2645 = vmatpush2.bf16.msra.mxu0 0
  %2646 = vmatprep.subr.bf16.mxu0 0
  %2647 = vmatpush2.bf16.msra.mxu0 0
  %2648 = vmatprep.subr.bf16.mxu0 0
  %2649 = vmatpush2.bf16.msra.mxu0 0
  %2650 = vmatprep.subr.bf16.mxu0 0
  %2651 = vmatpush2.bf16.msra.mxu0 0
  %2652 = vmatprep.mubr.bf16.mxu0 0
  %2653 = vmatmul.mubr.bf16.gmra.mxu0 %v2618
  %v2654 = vpop.f32.mrf.mxu0
  %v2655 = vadd.f32 0.0, %v2654
  %v2656 = vpop.f32.mrf.mxu0
  %v2657 = vpop.f32.mrf.mxu0
  %v2658 = vpop.f32.mrf.mxu0
  %2659 = vdwg.mxu0
  %v2660 = vpack.c.bf16 %v2655, %v2655
  %s2661 = scalar_lea.vmem %s9, 28
  %v2662 = vld [vmem:[%s2661] sm:$0xf]
  %v2664 = vsel %vm1048, %v2662, 0
  %2666 = vmatprep.subr.bf16.mxu0 0
  %2667 = vmatpush1.bf16.msra.mxu0 0
  %2668 = vmatprep.subr.bf16.mxu0 0
  %2669 = vmatpush1.bf16.msra.mxu0 0
  %2670 = vmatprep.subr.bf16.mxu0 0
  %2671 = vmatpush1.bf16.msra.mxu0 0
  %2672 = vmatprep.subr.bf16.mxu0 0
  %2673 = vmatpush1.bf16.msra.mxu0 0
  %2674 = vmatprep.subr.bf16.mxu0 0
  %2675 = vmatpush1.bf16.msra.mxu0 0
  %2676 = vmatprep.subr.bf16.mxu0 0
  %2677 = vmatpush1.bf16.msra.mxu0 0
  %2678 = vmatprep.subr.bf16.mxu0 0
  %2679 = vmatpush1.bf16.msra.mxu0 %v2339
  %2680 = vmatprep.subr.bf16.mxu0 0
  %2681 = vmatpush1.bf16.msra.mxu0 %v2338
  %2682 = vmatprep.subr.bf16.mxu0 0
  %2683 = vmatpush2.bf16.msra.mxu0 0
  %2684 = vmatprep.subr.bf16.mxu0 0
  %2685 = vmatpush2.bf16.msra.mxu0 0
  %2686 = vmatprep.subr.bf16.mxu0 0
  %2687 = vmatpush2.bf16.msra.mxu0 0
  %2688 = vmatprep.subr.bf16.mxu0 0
  %2689 = vmatpush2.bf16.msra.mxu0 0
  %2690 = vmatprep.subr.bf16.mxu0 0
  %2691 = vmatpush2.bf16.msra.mxu0 0
  %2692 = vmatprep.subr.bf16.mxu0 0
  %2693 = vmatpush2.bf16.msra.mxu0 0
  %2694 = vmatprep.subr.bf16.mxu0 0
  %2695 = vmatpush2.bf16.msra.mxu0 0
  %2696 = vmatprep.subr.bf16.mxu0 0
  %2697 = vmatpush2.bf16.msra.mxu0 0
  %2698 = vmatprep.mubr.bf16.mxu0 0
  %2699 = vmatmul.mubr.bf16.gmra.mxu0 %v2664
  %v2700 = vpop.f32.mrf.mxu0
  %v2701 = vadd.f32 0.0, %v2700
  %v2702 = vpop.f32.mrf.mxu0
  %v2703 = vpop.f32.mrf.mxu0
  %v2704 = vpop.f32.mrf.mxu0
  %2705 = vdwg.mxu0
  %v2706 = vpack.c.bf16 %v2701, %v2701
  %s2707 = scalar_lea.vmem %s9, 32
  %v2708 = vld [vmem:[%s2707] sm:$0xf]
  %v2710 = vsel %vm1048, %v2708, 0
  %2712 = vmatprep.subr.bf16.mxu0 0
  %2713 = vmatpush1.bf16.msra.mxu0 0
  %2714 = vmatprep.subr.bf16.mxu0 0
  %2715 = vmatpush1.bf16.msra.mxu0 0
  %2716 = vmatprep.subr.bf16.mxu0 0
  %2717 = vmatpush1.bf16.msra.mxu0 0
  %2718 = vmatprep.subr.bf16.mxu0 0
  %2719 = vmatpush1.bf16.msra.mxu0 0
  %2720 = vmatprep.subr.bf16.mxu0 0
  %2721 = vmatpush1.bf16.msra.mxu0 0
  %2722 = vmatprep.subr.bf16.mxu0 0
  %2723 = vmatpush1.bf16.msra.mxu0 0
  %2724 = vmatprep.subr.bf16.mxu0 0
  %2725 = vmatpush1.bf16.msra.mxu0 %v2339
  %2726 = vmatprep.subr.bf16.mxu0 0
  %2727 = vmatpush1.bf16.msra.mxu0 %v2338
  %2728 = vmatprep.subr.bf16.mxu0 0
  %2729 = vmatpush2.bf16.msra.mxu0 0
  %2730 = vmatprep.subr.bf16.mxu0 0
  %2731 = vmatpush2.bf16.msra.mxu0 0
  %2732 = vmatprep.subr.bf16.mxu0 0
  %2733 = vmatpush2.bf16.msra.mxu0 0
  %2734 = vmatprep.subr.bf16.mxu0 0
  %2735 = vmatpush2.bf16.msra.mxu0 0
  %2736 = vmatprep.subr.bf16.mxu0 0
  %2737 = vmatpush2.bf16.msra.mxu0 0
  %2738 = vmatprep.subr.bf16.mxu0 0
  %2739 = vmatpush2.bf16.msra.mxu0 0
  %2740 = vmatprep.subr.bf16.mxu0 0
  %2741 = vmatpush2.bf16.msra.mxu0 0
  %2742 = vmatprep.subr.bf16.mxu0 0
  %2743 = vmatpush2.bf16.msra.mxu0 0
  %2744 = vmatprep.mubr.bf16.mxu0 0
  %2745 = vmatmul.mubr.bf16.gmra.mxu0 %v2710
  %v2746 = vpop.f32.mrf.mxu0
  %v2747 = vadd.f32 0.0, %v2746
  %v2748 = vpop.f32.mrf.mxu0
  %v2749 = vpop.f32.mrf.mxu0
  %v2750 = vpop.f32.mrf.mxu0
  %2751 = vdwg.mxu0
  %v2752 = vpack.c.bf16 %v2747, %v2747
  %2754 = vrot.lane.b32.xlu0 %v2430, 32
  %v2755 = vpop.permute.xlu0 %2754
  %2757 = vrot.lane.b32.xlu0 %v2476, 64
  %v2758 = vpop.permute.xlu0 %2757
  %2760 = vrot.lane.b32.xlu0 %v2522, 96
  %v2761 = vpop.permute.xlu0 %2760
  %2763 = vrot.lane.b32.xlu0 %v2614, 32
  %v2764 = vpop.permute.xlu0 %2763
  %2766 = vrot.lane.b32.xlu0 %v2660, 64
  %v2767 = vpop.permute.xlu0 %2766
  %2769 = vrot.lane.b32.xlu0 %v2706, 96
  %v2770 = vpop.permute.xlu0 %2769
  %v2773 = vsel %vm1048, %v2384, %v2755
  %v2775 = vsel %vm1055, %v2773, %v2758
  %v2777 = vsel %vm1060, %v2775, %v2761
  %v2781 = vsel %vm1048, %v2568, %v2764
  %v2783 = vsel %vm1055, %v2781, %v2767
  %v2785 = vsel %vm1060, %v2783, %v2770
  %v2787 = vld [vmem:[%s10] sm:$0xf]
  %v2788 = vld [vmem:[%s10 + $0x4] sm:$0xf]
  %v2789 = vld [vmem:[%s10 + $0x8] sm:$0xf]
  %v2790 = vld [vmem:[%s10 + $0xc] sm:$0xf]
  %v2791 = vld [vmem:[%s10 + $0x10] sm:$0xf]
  %v2792 = vld [vmem:[%s10 + $0x14] sm:$0xf]
  %v2793 = vld [vmem:[%s10 + $0x18] sm:$0xf]
  %v2794 = vld [vmem:[%s10 + $0x1c] sm:$0xf]
  %v2795 = vld [vmem:[%s10 + $0x20] sm:$0xf]
  %v2796 = vld [vmem:[%s10 + $0x24] sm:$0xf]
  %v2797 = vld [vmem:[%s10 + $0x28] sm:$0xf]
  %v2798 = vld [vmem:[%s10 + $0x2c] sm:$0xf]
  %v2799 = vld [vmem:[%s10 + $0x30] sm:$0xf]
  %v2800 = vld [vmem:[%s10 + $0x34] sm:$0xf]
  %v2801 = vld [vmem:[%s10 + $0x38] sm:$0xf]
  %v2802 = vld [vmem:[%s10 + $0x3c] sm:$0xf]
  %v2803 = vld [vmem:[%s10 + $0x40] sm:$0xf]
  %v2804 = vld [vmem:[%s10 + $0x44] sm:$0xf]
  %v2805 = vld [vmem:[%s10 + $0x48] sm:$0xf]
  %v2806 = vld [vmem:[%s10 + $0x4c] sm:$0xf]
  %v2807 = vld [vmem:[%s10 + $0x50] sm:$0xf]
  %v2808 = vld [vmem:[%s10 + $0x54] sm:$0xf]
  %v2809 = vld [vmem:[%s10 + $0x58] sm:$0xf]
  %v2810 = vld [vmem:[%s10 + $0x5c] sm:$0xf]
  %v2811 = vld [vmem:[%s10 + $0x60] sm:$0xf]
  %v2812 = vld [vmem:[%s10 + $0x64] sm:$0xf]
  %v2813 = vld [vmem:[%s10 + $0x68] sm:$0xf]
  %v2814 = vld [vmem:[%s10 + $0x6c] sm:$0xf]
  %v2815 = vld [vmem:[%s10 + $0x70] sm:$0xf]
  %v2816 = vld [vmem:[%s10 + $0x74] sm:$0xf]
  %v2817 = vld [vmem:[%s10 + $0x78] sm:$0xf]
  %v2818 = vld [vmem:[%s10 + $0x7c] sm:$0xf]
  %v2819 = vld [vmem:[%s10 + $0x80] sm:$0xf]
  %v2820 = vld [vmem:[%s10 + $0x84] sm:$0xf]
  %v2821 = vld [vmem:[%s10 + $0x88] sm:$0xf]
  %v2822 = vld [vmem:[%s10 + $0x8c] sm:$0xf]
  %v2823 = vld [vmem:[%s11] sm:$0x1]
  %v2825 = vlaneseq
  %v2826 = vshrl.u32 %v2825, 7
  %v2827 = vsub.s32 0, %v2826
  %v2828 = vrot.slane %v2823, %v2827
  %v2866 = vunpack.c.l.b16 %v2787
  %v2867 = vunpack.c.l.b16 %v2788
  %v2868 = vunpack.c.l.b16 %v2789
  %v2869 = vunpack.c.l.b16 %v2790
  %v2870 = vunpack.c.l.b16 %v2791
  %v2871 = vunpack.c.l.b16 %v2792
  %v2872 = vunpack.c.l.b16 %v2793
  %v2873 = vunpack.c.l.b16 %v2794
  %v2874 = vunpack.c.l.b16 %v2795
  %v2875 = vunpack.c.l.b16 %v2796
  %v2876 = vunpack.c.l.b16 %v2797
  %v2877 = vunpack.c.l.b16 %v2798
  %v2878 = vunpack.c.l.b16 %v2799
  %v2879 = vunpack.c.l.b16 %v2800
  %v2880 = vunpack.c.l.b16 %v2801
  %v2881 = vunpack.c.l.b16 %v2802
  %v2882 = vunpack.c.l.b16 %v2803
  %v2883 = vunpack.c.l.b16 %v2804
  %v2884 = vunpack.c.l.b16 %v2805
  %v2885 = vunpack.c.l.b16 %v2806
  %v2886 = vunpack.c.l.b16 %v2807
  %v2887 = vunpack.c.l.b16 %v2808
  %v2888 = vunpack.c.l.b16 %v2809
  %v2889 = vunpack.c.l.b16 %v2810
  %v2890 = vunpack.c.l.b16 %v2811
  %v2891 = vunpack.c.l.b16 %v2812
  %v2892 = vunpack.c.l.b16 %v2813
  %v2893 = vunpack.c.l.b16 %v2814
  %v2894 = vunpack.c.l.b16 %v2815
  %v2895 = vunpack.c.l.b16 %v2816
  %v2896 = vunpack.c.l.b16 %v2817
  %v2897 = vunpack.c.l.b16 %v2818
  %v2898 = vunpack.c.l.b16 %v2819
  %v2899 = vunpack.c.l.b16 %v2820
  %v2900 = vunpack.c.l.b16 %v2821
  %v2901 = vunpack.c.l.b16 %v2822
  %v2902 = vpack.c.b16 %v2867, %v2866
  %v2903 = vpack.c.b16 %v2869, %v2868
  %v2904 = vpack.c.b16 %v2871, %v2870
  %v2905 = vpack.c.b16 %v2873, %v2872
  %v2906 = vpack.c.b16 %v2875, %v2874
  %v2907 = vpack.c.b16 %v2877, %v2876
  %v2908 = vpack.c.b16 %v2879, %v2878
  %v2909 = vpack.c.b16 %v2881, %v2880
  %v2910 = vpack.c.b16 %v2883, %v2882
  %v2911 = vpack.c.b16 %v2885, %v2884
  %v2912 = vpack.c.b16 %v2887, %v2886
  %v2913 = vpack.c.b16 %v2889, %v2888
  %v2914 = vpack.c.b16 %v2891, %v2890
  %v2915 = vpack.c.b16 %v2893, %v2892
  %v2916 = vpack.c.b16 %v2895, %v2894
  %v2917 = vpack.c.b16 %v2897, %v2896
  %v2918 = vpack.c.b16 %v2899, %v2898
  %v2919 = vpack.c.b16 %v2901, %v2900
  %v2939 = vsel %vm1048, %v2752, 0
  %2941 = vmatprep.subr.bf16.mxu0 0
  %2942 = vmatpush1.bf16.msra.mxu0 %v2909
  %2943 = vmatprep.subr.bf16.mxu0 0
  %2944 = vmatpush1.bf16.msra.mxu0 %v2908
  %2945 = vmatprep.subr.bf16.mxu0 0
  %2946 = vmatpush1.bf16.msra.mxu0 %v2907
  %2947 = vmatprep.subr.bf16.mxu0 0
  %2948 = vmatpush1.bf16.msra.mxu0 %v2906
  %2949 = vmatprep.subr.bf16.mxu0 0
  %2950 = vmatpush1.bf16.msra.mxu0 %v2905
  %2951 = vmatprep.subr.bf16.mxu0 0
  %2952 = vmatpush1.bf16.msra.mxu0 %v2904
  %2953 = vmatprep.subr.bf16.mxu0 0
  %2954 = vmatpush1.bf16.msra.mxu0 %v2903
  %2955 = vmatprep.subr.bf16.mxu0 0
  %2956 = vmatpush1.bf16.msra.mxu0 %v2902
  %2957 = vmatprep.subr.bf16.mxu0 0
  %2958 = vmatpush2.bf16.msra.mxu0 %v2917
  %2959 = vmatprep.subr.bf16.mxu0 0
  %2960 = vmatpush2.bf16.msra.mxu0 %v2916
  %2961 = vmatprep.subr.bf16.mxu0 0
  %2962 = vmatpush2.bf16.msra.mxu0 %v2915
  %2963 = vmatprep.subr.bf16.mxu0 0
  %2964 = vmatpush2.bf16.msra.mxu0 %v2914
  %2965 = vmatprep.subr.bf16.mxu0 0
  %2966 = vmatpush2.bf16.msra.mxu0 %v2913
  %2967 = vmatprep.subr.bf16.mxu0 0
  %2968 = vmatpush2.bf16.msra.mxu0 %v2912
  %2969 = vmatprep.subr.bf16.mxu0 0
  %2970 = vmatpush2.bf16.msra.mxu0 %v2911
  %2971 = vmatprep.subr.bf16.mxu0 0
  %2972 = vmatpush2.bf16.msra.mxu0 %v2910
  %2973 = vmatprep.mubr.bf16.mxu0 %v2785
  %2974 = vmatmul.mubr.bf16.gmra.mxu0 %v2777
  %v2975 = vpop.f32.mrf.mxu0
  %v2976 = vadd.f32 %v2828, %v2975
  %v2977 = vpop.f32.mrf.mxu0
  %v2978 = vpop.f32.mrf.mxu0
  %v2979 = vpop.f32.mrf.mxu0
  %2980 = vdwg.mxu0
  %2981 = vmatprep.subr.bf16.mxu0 0
  %2982 = vmatpush1.bf16.msra.mxu0 0
  %2983 = vmatprep.subr.bf16.mxu0 0
  %2984 = vmatpush1.bf16.msra.mxu0 0
  %2985 = vmatprep.subr.bf16.mxu0 0
  %2986 = vmatpush1.bf16.msra.mxu0 0
  %2987 = vmatprep.subr.bf16.mxu0 0
  %2988 = vmatpush1.bf16.msra.mxu0 0
  %2989 = vmatprep.subr.bf16.mxu0 0
  %2990 = vmatpush1.bf16.msra.mxu0 0
  %2991 = vmatprep.subr.bf16.mxu0 0
  %2992 = vmatpush1.bf16.msra.mxu0 0
  %2993 = vmatprep.subr.bf16.mxu0 0
  %2994 = vmatpush1.bf16.msra.mxu0 %v2919
  %2995 = vmatprep.subr.bf16.mxu0 0
  %2996 = vmatpush1.bf16.msra.mxu0 %v2918
  %2997 = vmatprep.subr.bf16.mxu0 0
  %2998 = vmatpush2.bf16.msra.mxu0 0
  %2999 = vmatprep.subr.bf16.mxu0 0
  %3000 = vmatpush2.bf16.msra.mxu0 0
  %3001 = vmatprep.subr.bf16.mxu0 0
  %3002 = vmatpush2.bf16.msra.mxu0 0
  %3003 = vmatprep.subr.bf16.mxu0 0
  %3004 = vmatpush2.bf16.msra.mxu0 0
  %3005 = vmatprep.subr.bf16.mxu0 0
  %3006 = vmatpush2.bf16.msra.mxu0 0
  %3007 = vmatprep.subr.bf16.mxu0 0
  %3008 = vmatpush2.bf16.msra.mxu0 0
  %3009 = vmatprep.subr.bf16.mxu0 0
  %3010 = vmatpush2.bf16.msra.mxu0 0
  %3011 = vmatprep.subr.bf16.mxu0 0
  %3012 = vmatpush2.bf16.msra.mxu0 0
  %3013 = vmatprep.mubr.bf16.mxu0 0
  %3014 = vmatmul.mubr.bf16.gmra.mxu0 %v2939
  %v3015 = vpop.f32.mrf.mxu0
  %v3016 = vadd.f32 %v2976, %v3015
  %v3017 = vpop.f32.mrf.mxu0
  %v3018 = vpop.f32.mrf.mxu0
  %v3019 = vpop.f32.mrf.mxu0
  %3020 = vdwg.mxu0
  %v3021 = vmax.f32 %v3016, 0.0
  %v3022 = vpack.c.bf16 %v3021, %v3021
  %v3023 = vld [vmem:[%s12] sm:$0xf]
  %vm3024 = vcmask 64512
  %v3026 = vsel %vm3024, %v3023, 0
  %vm3028 = vcmask 1043456
  %v3030 = vsel %vm3028, %v3022, 0
  %3032 = vmatprep.subr.bf16.mxu0 0
  %3033 = vmatpush1.bf16.msra.mxu0 0
  %3034 = vmatprep.subr.bf16.mxu0 0
  %3035 = vmatpush1.bf16.msra.mxu0 0
  %3036 = vmatprep.subr.bf16.mxu0 0
  %3037 = vmatpush1.bf16.msra.mxu0 0
  %3038 = vmatprep.subr.bf16.mxu0 0
  %3039 = vmatpush1.bf16.msra.mxu0 0
  %3040 = vmatprep.subr.bf16.mxu0 0
  %3041 = vmatpush1.bf16.msra.mxu0 0
  %3042 = vmatprep.subr.bf16.mxu0 0
  %3043 = vmatpush1.bf16.msra.mxu0 0
  %3044 = vmatprep.subr.bf16.mxu0 0
  %3045 = vmatpush1.bf16.msra.mxu0 0
  %3046 = vmatprep.subr.bf16.mxu0 0
  %3047 = vmatpush1.bf16.msra.mxu0 %v3030
  %3048 = vmatprep.subr.bf16.mxu0 0
  %3049 = vmatpush2.bf16.msra.mxu0 0
  %3050 = vmatprep.subr.bf16.mxu0 0
  %3051 = vmatpush2.bf16.msra.mxu0 0
  %3052 = vmatprep.subr.bf16.mxu0 0
  %3053 = vmatpush2.bf16.msra.mxu0 0
  %3054 = vmatprep.subr.bf16.mxu0 0
  %3055 = vmatpush2.bf16.msra.mxu0 0
  %3056 = vmatprep.subr.bf16.mxu0 0
  %3057 = vmatpush2.bf16.msra.mxu0 0
  %3058 = vmatprep.subr.bf16.mxu0 0
  %3059 = vmatpush2.bf16.msra.mxu0 0
  %3060 = vmatprep.subr.bf16.mxu0 0
  %3061 = vmatpush2.bf16.msra.mxu0 0
  %3062 = vmatprep.subr.bf16.mxu0 0
  %3063 = vmatpush2.bf16.msra.mxu0 0
  %3064 = vmatprep.mubr.bf16.mxu0 0
  %3065 = vmatmul.mubr.bf16.gmra.mxu0 %v3026
  %v3066 = vpop.f32.mrf.mxu0
  %v3067 = vadd.f32 0.0, %v3066
  %v3068 = vpop.f32.mrf.mxu0
  %v3069 = vpop.f32.mrf.mxu0
  %v3070 = vpop.f32.mrf.mxu0
  %3071 = vdwg.mxu0
  %v3072 = vpack.c.bf16 %v3067, %v3067
  %s3073 = scalar_lea.vmem %s12, 4
  %v3074 = vld [vmem:[%s3073] sm:$0xf]
  %v3076 = vsel %vm3024, %v3074, 0
  %3078 = vmatprep.subr.bf16.mxu0 0
  %3079 = vmatpush1.bf16.msra.mxu0 0
  %3080 = vmatprep.subr.bf16.mxu0 0
  %3081 = vmatpush1.bf16.msra.mxu0 0
  %3082 = vmatprep.subr.bf16.mxu0 0
  %3083 = vmatpush1.bf16.msra.mxu0 0
  %3084 = vmatprep.subr.bf16.mxu0 0
  %3085 = vmatpush1.bf16.msra.mxu0 0
  %3086 = vmatprep.subr.bf16.mxu0 0
  %3087 = vmatpush1.bf16.msra.mxu0 0
  %3088 = vmatprep.subr.bf16.mxu0 0
  %3089 = vmatpush1.bf16.msra.mxu0 0
  %3090 = vmatprep.subr.bf16.mxu0 0
  %3091 = vmatpush1.bf16.msra.mxu0 0
  %3092 = vmatprep.subr.bf16.mxu0 0
  %3093 = vmatpush1.bf16.msra.mxu0 %v3030
  %3094 = vmatprep.subr.bf16.mxu0 0
  %3095 = vmatpush2.bf16.msra.mxu0 0
  %3096 = vmatprep.subr.bf16.mxu0 0
  %3097 = vmatpush2.bf16.msra.mxu0 0
  %3098 = vmatprep.subr.bf16.mxu0 0
  %3099 = vmatpush2.bf16.msra.mxu0 0
  %3100 = vmatprep.subr.bf16.mxu0 0
  %3101 = vmatpush2.bf16.msra.mxu0 0
  %3102 = vmatprep.subr.bf16.mxu0 0
  %3103 = vmatpush2.bf16.msra.mxu0 0
  %3104 = vmatprep.subr.bf16.mxu0 0
  %3105 = vmatpush2.bf16.msra.mxu0 0
  %3106 = vmatprep.subr.bf16.mxu0 0
  %3107 = vmatpush2.bf16.msra.mxu0 0
  %3108 = vmatprep.subr.bf16.mxu0 0
  %3109 = vmatpush2.bf16.msra.mxu0 0
  %3110 = vmatprep.mubr.bf16.mxu0 0
  %3111 = vmatmul.mubr.bf16.gmra.mxu0 %v3076
  %v3112 = vpop.f32.mrf.mxu0
  %v3113 = vadd.f32 0.0, %v3112
  %v3114 = vpop.f32.mrf.mxu0
  %v3115 = vpop.f32.mrf.mxu0
  %v3116 = vpop.f32.mrf.mxu0
  %3117 = vdwg.mxu0
  %v3118 = vpack.c.bf16 %v3113, %v3113
  %s3119 = scalar_lea.vmem %s12, 8
  %v3120 = vld [vmem:[%s3119] sm:$0xf]
  %v3122 = vsel %vm3024, %v3120, 0
  %3124 = vmatprep.subr.bf16.mxu0 0
  %3125 = vmatpush1.bf16.msra.mxu0 0
  %3126 = vmatprep.subr.bf16.mxu0 0
  %3127 = vmatpush1.bf16.msra.mxu0 0
  %3128 = vmatprep.subr.bf16.mxu0 0
  %3129 = vmatpush1.bf16.msra.mxu0 0
  %3130 = vmatprep.subr.bf16.mxu0 0
  %3131 = vmatpush1.bf16.msra.mxu0 0
  %3132 = vmatprep.subr.bf16.mxu0 0
  %3133 = vmatpush1.bf16.msra.mxu0 0
  %3134 = vmatprep.subr.bf16.mxu0 0
  %3135 = vmatpush1.bf16.msra.mxu0 0
  %3136 = vmatprep.subr.bf16.mxu0 0
  %3137 = vmatpush1.bf16.msra.mxu0 0
  %3138 = vmatprep.subr.bf16.mxu0 0
  %3139 = vmatpush1.bf16.msra.mxu0 %v3030
  %3140 = vmatprep.subr.bf16.mxu0 0
  %3141 = vmatpush2.bf16.msra.mxu0 0
  %3142 = vmatprep.subr.bf16.mxu0 0
  %3143 = vmatpush2.bf16.msra.mxu0 0
  %3144 = vmatprep.subr.bf16.mxu0 0
  %3145 = vmatpush2.bf16.msra.mxu0 0
  %3146 = vmatprep.subr.bf16.mxu0 0
  %3147 = vmatpush2.bf16.msra.mxu0 0
  %3148 = vmatprep.subr.bf16.mxu0 0
  %3149 = vmatpush2.bf16.msra.mxu0 0
  %3150 = vmatprep.subr.bf16.mxu0 0
  %3151 = vmatpush2.bf16.msra.mxu0 0
  %3152 = vmatprep.subr.bf16.mxu0 0
  %3153 = vmatpush2.bf16.msra.mxu0 0
  %3154 = vmatprep.subr.bf16.mxu0 0
  %3155 = vmatpush2.bf16.msra.mxu0 0
  %3156 = vmatprep.mubr.bf16.mxu0 0
  %3157 = vmatmul.mubr.bf16.gmra.mxu0 %v3122
  %v3158 = vpop.f32.mrf.mxu0
  %v3159 = vadd.f32 0.0, %v3158
  %v3160 = vpop.f32.mrf.mxu0
  %v3161 = vpop.f32.mrf.mxu0
  %v3162 = vpop.f32.mrf.mxu0
  %3163 = vdwg.mxu0
  %v3164 = vpack.c.bf16 %v3159, %v3159
  %s3165 = scalar_lea.vmem %s12, 12
  %v3166 = vld [vmem:[%s3165] sm:$0xf]
  %v3168 = vsel %vm3024, %v3166, 0
  %3170 = vmatprep.subr.bf16.mxu0 0
  %3171 = vmatpush1.bf16.msra.mxu0 0
  %3172 = vmatprep.subr.bf16.mxu0 0
  %3173 = vmatpush1.bf16.msra.mxu0 0
  %3174 = vmatprep.subr.bf16.mxu0 0
  %3175 = vmatpush1.bf16.msra.mxu0 0
  %3176 = vmatprep.subr.bf16.mxu0 0
  %3177 = vmatpush1.bf16.msra.mxu0 0
  %3178 = vmatprep.subr.bf16.mxu0 0
  %3179 = vmatpush1.bf16.msra.mxu0 0
  %3180 = vmatprep.subr.bf16.mxu0 0
  %3181 = vmatpush1.bf16.msra.mxu0 0
  %3182 = vmatprep.subr.bf16.mxu0 0
  %3183 = vmatpush1.bf16.msra.mxu0 0
  %3184 = vmatprep.subr.bf16.mxu0 0
  %3185 = vmatpush1.bf16.msra.mxu0 %v3030
  %3186 = vmatprep.subr.bf16.mxu0 0
  %3187 = vmatpush2.bf16.msra.mxu0 0
  %3188 = vmatprep.subr.bf16.mxu0 0
  %3189 = vmatpush2.bf16.msra.mxu0 0
  %3190 = vmatprep.subr.bf16.mxu0 0
  %3191 = vmatpush2.bf16.msra.mxu0 0
  %3192 = vmatprep.subr.bf16.mxu0 0
  %3193 = vmatpush2.bf16.msra.mxu0 0
  %3194 = vmatprep.subr.bf16.mxu0 0
  %3195 = vmatpush2.bf16.msra.mxu0 0
  %3196 = vmatprep.subr.bf16.mxu0 0
  %3197 = vmatpush2.bf16.msra.mxu0 0
  %3198 = vmatprep.subr.bf16.mxu0 0
  %3199 = vmatpush2.bf16.msra.mxu0 0
  %3200 = vmatprep.subr.bf16.mxu0 0
  %3201 = vmatpush2.bf16.msra.mxu0 0
  %3202 = vmatprep.mubr.bf16.mxu0 0
  %3203 = vmatmul.mubr.bf16.gmra.mxu0 %v3168
  %v3204 = vpop.f32.mrf.mxu0
  %v3205 = vadd.f32 0.0, %v3204
  %v3206 = vpop.f32.mrf.mxu0
  %v3207 = vpop.f32.mrf.mxu0
  %v3208 = vpop.f32.mrf.mxu0
  %3209 = vdwg.mxu0
  %v3210 = vpack.c.bf16 %v3205, %v3205
  %s3211 = scalar_lea.vmem %s12, 16
  %v3212 = vld [vmem:[%s3211] sm:$0xf]
  %v3214 = vsel %vm3024, %v3212, 0
  %3216 = vmatprep.subr.bf16.mxu0 0
  %3217 = vmatpush1.bf16.msra.mxu0 0
  %3218 = vmatprep.subr.bf16.mxu0 0
  %3219 = vmatpush1.bf16.msra.mxu0 0
  %3220 = vmatprep.subr.bf16.mxu0 0
  %3221 = vmatpush1.bf16.msra.mxu0 0
  %3222 = vmatprep.subr.bf16.mxu0 0
  %3223 = vmatpush1.bf16.msra.mxu0 0
  %3224 = vmatprep.subr.bf16.mxu0 0
  %3225 = vmatpush1.bf16.msra.mxu0 0
  %3226 = vmatprep.subr.bf16.mxu0 0
  %3227 = vmatpush1.bf16.msra.mxu0 0
  %3228 = vmatprep.subr.bf16.mxu0 0
  %3229 = vmatpush1.bf16.msra.mxu0 0
  %3230 = vmatprep.subr.bf16.mxu0 0
  %3231 = vmatpush1.bf16.msra.mxu0 %v3030
  %3232 = vmatprep.subr.bf16.mxu0 0
  %3233 = vmatpush2.bf16.msra.mxu0 0
  %3234 = vmatprep.subr.bf16.mxu0 0
  %3235 = vmatpush2.bf16.msra.mxu0 0
  %3236 = vmatprep.subr.bf16.mxu0 0
  %3237 = vmatpush2.bf16.msra.mxu0 0
  %3238 = vmatprep.subr.bf16.mxu0 0
  %3239 = vmatpush2.bf16.msra.mxu0 0
  %3240 = vmatprep.subr.bf16.mxu0 0
  %3241 = vmatpush2.bf16.msra.mxu0 0
  %3242 = vmatprep.subr.bf16.mxu0 0
  %3243 = vmatpush2.bf16.msra.mxu0 0
  %3244 = vmatprep.subr.bf16.mxu0 0
  %3245 = vmatpush2.bf16.msra.mxu0 0
  %3246 = vmatprep.subr.bf16.mxu0 0
  %3247 = vmatpush2.bf16.msra.mxu0 0
  %3248 = vmatprep.mubr.bf16.mxu0 0
  %3249 = vmatmul.mubr.bf16.gmra.mxu0 %v3214
  %v3250 = vpop.f32.mrf.mxu0
  %v3251 = vadd.f32 0.0, %v3250
  %v3252 = vpop.f32.mrf.mxu0
  %v3253 = vpop.f32.mrf.mxu0
  %v3254 = vpop.f32.mrf.mxu0
  %3255 = vdwg.mxu0
  %v3256 = vpack.c.bf16 %v3251, %v3251
  %s3257 = scalar_lea.vmem %s12, 20
  %v3258 = vld [vmem:[%s3257] sm:$0xf]
  %v3260 = vsel %vm3024, %v3258, 0
  %3262 = vmatprep.subr.bf16.mxu0 0
  %3263 = vmatpush1.bf16.msra.mxu0 0
  %3264 = vmatprep.subr.bf16.mxu0 0
  %3265 = vmatpush1.bf16.msra.mxu0 0
  %3266 = vmatprep.subr.bf16.mxu0 0
  %3267 = vmatpush1.bf16.msra.mxu0 0
  %3268 = vmatprep.subr.bf16.mxu0 0
  %3269 = vmatpush1.bf16.msra.mxu0 0
  %3270 = vmatprep.subr.bf16.mxu0 0
  %3271 = vmatpush1.bf16.msra.mxu0 0
  %3272 = vmatprep.subr.bf16.mxu0 0
  %3273 = vmatpush1.bf16.msra.mxu0 0
  %3274 = vmatprep.subr.bf16.mxu0 0
  %3275 = vmatpush1.bf16.msra.mxu0 0
  %3276 = vmatprep.subr.bf16.mxu0 0
  %3277 = vmatpush1.bf16.msra.mxu0 %v3030
  %3278 = vmatprep.subr.bf16.mxu0 0
  %3279 = vmatpush2.bf16.msra.mxu0 0
  %3280 = vmatprep.subr.bf16.mxu0 0
  %3281 = vmatpush2.bf16.msra.mxu0 0
  %3282 = vmatprep.subr.bf16.mxu0 0
  %3283 = vmatpush2.bf16.msra.mxu0 0
  %3284 = vmatprep.subr.bf16.mxu0 0
  %3285 = vmatpush2.bf16.msra.mxu0 0
  %3286 = vmatprep.subr.bf16.mxu0 0
  %3287 = vmatpush2.bf16.msra.mxu0 0
  %3288 = vmatprep.subr.bf16.mxu0 0
  %3289 = vmatpush2.bf16.msra.mxu0 0
  %3290 = vmatprep.subr.bf16.mxu0 0
  %3291 = vmatpush2.bf16.msra.mxu0 0
  %3292 = vmatprep.subr.bf16.mxu0 0
  %3293 = vmatpush2.bf16.msra.mxu0 0
  %3294 = vmatprep.mubr.bf16.mxu0 0
  %3295 = vmatmul.mubr.bf16.gmra.mxu0 %v3260
  %v3296 = vpop.f32.mrf.mxu0
  %v3297 = vadd.f32 0.0, %v3296
  %v3298 = vpop.f32.mrf.mxu0
  %v3299 = vpop.f32.mrf.mxu0
  %v3300 = vpop.f32.mrf.mxu0
  %3301 = vdwg.mxu0
  %v3302 = vpack.c.bf16 %v3297, %v3297
  %s3303 = scalar_lea.vmem %s12, 24
  %v3304 = vld [vmem:[%s3303] sm:$0xf]
  %v3306 = vsel %vm3024, %v3304, 0
  %3308 = vmatprep.subr.bf16.mxu0 0
  %3309 = vmatpush1.bf16.msra.mxu0 0
  %3310 = vmatprep.subr.bf16.mxu0 0
  %3311 = vmatpush1.bf16.msra.mxu0 0
  %3312 = vmatprep.subr.bf16.mxu0 0
  %3313 = vmatpush1.bf16.msra.mxu0 0
  %3314 = vmatprep.subr.bf16.mxu0 0
  %3315 = vmatpush1.bf16.msra.mxu0 0
  %3316 = vmatprep.subr.bf16.mxu0 0
  %3317 = vmatpush1.bf16.msra.mxu0 0
  %3318 = vmatprep.subr.bf16.mxu0 0
  %3319 = vmatpush1.bf16.msra.mxu0 0
  %3320 = vmatprep.subr.bf16.mxu0 0
  %3321 = vmatpush1.bf16.msra.mxu0 0
  %3322 = vmatprep.subr.bf16.mxu0 0
  %3323 = vmatpush1.bf16.msra.mxu0 %v3030
  %3324 = vmatprep.subr.bf16.mxu0 0
  %3325 = vmatpush2.bf16.msra.mxu0 0
  %3326 = vmatprep.subr.bf16.mxu0 0
  %3327 = vmatpush2.bf16.msra.mxu0 0
  %3328 = vmatprep.subr.bf16.mxu0 0
  %3329 = vmatpush2.bf16.msra.mxu0 0
  %3330 = vmatprep.subr.bf16.mxu0 0
  %3331 = vmatpush2.bf16.msra.mxu0 0
  %3332 = vmatprep.subr.bf16.mxu0 0
  %3333 = vmatpush2.bf16.msra.mxu0 0
  %3334 = vmatprep.subr.bf16.mxu0 0
  %3335 = vmatpush2.bf16.msra.mxu0 0
  %3336 = vmatprep.subr.bf16.mxu0 0
  %3337 = vmatpush2.bf16.msra.mxu0 0
  %3338 = vmatprep.subr.bf16.mxu0 0
  %3339 = vmatpush2.bf16.msra.mxu0 0
  %3340 = vmatprep.mubr.bf16.mxu0 0
  %3341 = vmatmul.mubr.bf16.gmra.mxu0 %v3306
  %v3342 = vpop.f32.mrf.mxu0
  %v3343 = vadd.f32 0.0, %v3342
  %v3344 = vpop.f32.mrf.mxu0
  %v3345 = vpop.f32.mrf.mxu0
  %v3346 = vpop.f32.mrf.mxu0
  %3347 = vdwg.mxu0
  %v3348 = vpack.c.bf16 %v3343, %v3343
  %s3349 = scalar_lea.vmem %s12, 28
  %v3350 = vld [vmem:[%s3349] sm:$0xf]
  %v3352 = vsel %vm3024, %v3350, 0
  %3354 = vmatprep.subr.bf16.mxu0 0
  %3355 = vmatpush1.bf16.msra.mxu0 0
  %3356 = vmatprep.subr.bf16.mxu0 0
  %3357 = vmatpush1.bf16.msra.mxu0 0
  %3358 = vmatprep.subr.bf16.mxu0 0
  %3359 = vmatpush1.bf16.msra.mxu0 0
  %3360 = vmatprep.subr.bf16.mxu0 0
  %3361 = vmatpush1.bf16.msra.mxu0 0
  %3362 = vmatprep.subr.bf16.mxu0 0
  %3363 = vmatpush1.bf16.msra.mxu0 0
  %3364 = vmatprep.subr.bf16.mxu0 0
  %3365 = vmatpush1.bf16.msra.mxu0 0
  %3366 = vmatprep.subr.bf16.mxu0 0
  %3367 = vmatpush1.bf16.msra.mxu0 0
  %3368 = vmatprep.subr.bf16.mxu0 0
  %3369 = vmatpush1.bf16.msra.mxu0 %v3030
  %3370 = vmatprep.subr.bf16.mxu0 0
  %3371 = vmatpush2.bf16.msra.mxu0 0
  %3372 = vmatprep.subr.bf16.mxu0 0
  %3373 = vmatpush2.bf16.msra.mxu0 0
  %3374 = vmatprep.subr.bf16.mxu0 0
  %3375 = vmatpush2.bf16.msra.mxu0 0
  %3376 = vmatprep.subr.bf16.mxu0 0
  %3377 = vmatpush2.bf16.msra.mxu0 0
  %3378 = vmatprep.subr.bf16.mxu0 0
  %3379 = vmatpush2.bf16.msra.mxu0 0
  %3380 = vmatprep.subr.bf16.mxu0 0
  %3381 = vmatpush2.bf16.msra.mxu0 0
  %3382 = vmatprep.subr.bf16.mxu0 0
  %3383 = vmatpush2.bf16.msra.mxu0 0
  %3384 = vmatprep.subr.bf16.mxu0 0
  %3385 = vmatpush2.bf16.msra.mxu0 0
  %3386 = vmatprep.mubr.bf16.mxu0 0
  %3387 = vmatmul.mubr.bf16.gmra.mxu0 %v3352
  %v3388 = vpop.f32.mrf.mxu0
  %v3389 = vadd.f32 0.0, %v3388
  %v3390 = vpop.f32.mrf.mxu0
  %v3391 = vpop.f32.mrf.mxu0
  %v3392 = vpop.f32.mrf.mxu0
  %3393 = vdwg.mxu0
  %v3394 = vpack.c.bf16 %v3389, %v3389
  %s3395 = scalar_lea.vmem %s12, 32
  %v3396 = vld [vmem:[%s3395] sm:$0xf]
  %v3398 = vsel %vm3024, %v3396, 0
  %3400 = vmatprep.subr.bf16.mxu0 0
  %3401 = vmatpush1.bf16.msra.mxu0 0
  %3402 = vmatprep.subr.bf16.mxu0 0
  %3403 = vmatpush1.bf16.msra.mxu0 0
  %3404 = vmatprep.subr.bf16.mxu0 0
  %3405 = vmatpush1.bf16.msra.mxu0 0
  %3406 = vmatprep.subr.bf16.mxu0 0
  %3407 = vmatpush1.bf16.msra.mxu0 0
  %3408 = vmatprep.subr.bf16.mxu0 0
  %3409 = vmatpush1.bf16.msra.mxu0 0
  %3410 = vmatprep.subr.bf16.mxu0 0
  %3411 = vmatpush1.bf16.msra.mxu0 0
  %3412 = vmatprep.subr.bf16.mxu0 0
  %3413 = vmatpush1.bf16.msra.mxu0 0
  %3414 = vmatprep.subr.bf16.mxu0 0
  %3415 = vmatpush1.bf16.msra.mxu0 %v3030
  %3416 = vmatprep.subr.bf16.mxu0 0
  %3417 = vmatpush2.bf16.msra.mxu0 0
  %3418 = vmatprep.subr.bf16.mxu0 0
  %3419 = vmatpush2.bf16.msra.mxu0 0
  %3420 = vmatprep.subr.bf16.mxu0 0
  %3421 = vmatpush2.bf16.msra.mxu0 0
  %3422 = vmatprep.subr.bf16.mxu0 0
  %3423 = vmatpush2.bf16.msra.mxu0 0
  %3424 = vmatprep.subr.bf16.mxu0 0
  %3425 = vmatpush2.bf16.msra.mxu0 0
  %3426 = vmatprep.subr.bf16.mxu0 0
  %3427 = vmatpush2.bf16.msra.mxu0 0
  %3428 = vmatprep.subr.bf16.mxu0 0
  %3429 = vmatpush2.bf16.msra.mxu0 0
  %3430 = vmatprep.subr.bf16.mxu0 0
  %3431 = vmatpush2.bf16.msra.mxu0 0
  %3432 = vmatprep.mubr.bf16.mxu0 0
  %3433 = vmatmul.mubr.bf16.gmra.mxu0 %v3398
  %v3434 = vpop.f32.mrf.mxu0
  %v3435 = vadd.f32 0.0, %v3434
  %v3436 = vpop.f32.mrf.mxu0
  %v3437 = vpop.f32.mrf.mxu0
  %v3438 = vpop.f32.mrf.mxu0
  %3439 = vdwg.mxu0
  %v3440 = vpack.c.bf16 %v3435, %v3435
  %3442 = vrot.lane.b32.xlu0 %v3118, 64
  %v3443 = vpop.permute.xlu0 %3442
  %3445 = vrot.lane.b32.xlu0 %v3210, 64
  %v3446 = vpop.permute.xlu0 %3445
  %3448 = vrot.lane.b32.xlu0 %v3302, 64
  %v3449 = vpop.permute.xlu0 %3448
  %3451 = vrot.lane.b32.xlu0 %v3394, 64
  %v3452 = vpop.permute.xlu0 %3451
  %v3455 = vsel %vm1055, %v3072, %v3443
  %v3459 = vsel %vm1055, %v3164, %v3446
  %v3463 = vsel %vm1055, %v3256, %v3449
  %v3467 = vsel %vm1055, %v3348, %v3452
  %v3469 = vld [vmem:[%s13] sm:$0xf]
  %v3470 = vld [vmem:[%s13 + $0x4] sm:$0xf]
  %v3471 = vld [vmem:[%s13 + $0x8] sm:$0xf]
  %v3472 = vld [vmem:[%s13 + $0xc] sm:$0xf]
  %v3473 = vld [vmem:[%s13 + $0x10] sm:$0xf]
  %v3474 = vld [vmem:[%s13 + $0x14] sm:$0xf]
  %v3475 = vld [vmem:[%s13 + $0x18] sm:$0xf]
  %v3476 = vld [vmem:[%s13 + $0x1c] sm:$0xf]
  %v3477 = vld [vmem:[%s13 + $0x20] sm:$0xf]
  %v3478 = vld [vmem:[%s13 + $0x24] sm:$0xf]
  %v3479 = vld [vmem:[%s13 + $0x28] sm:$0xf]
  %v3480 = vld [vmem:[%s13 + $0x2c] sm:$0xf]
  %v3481 = vld [vmem:[%s13 + $0x30] sm:$0xf]
  %v3482 = vld [vmem:[%s13 + $0x34] sm:$0xf]
  %v3483 = vld [vmem:[%s13 + $0x38] sm:$0xf]
  %v3484 = vld [vmem:[%s13 + $0x3c] sm:$0xf]
  %v3485 = vld [vmem:[%s13 + $0x40] sm:$0xf]
  %v3486 = vld [vmem:[%s13 + $0x44] sm:$0xf]
  %v3487 = vld [vmem:[%s13 + $0x48] sm:$0xf]
  %v3488 = vld [vmem:[%s13 + $0x4c] sm:$0xf]
  %v3489 = vld [vmem:[%s13 + $0x50] sm:$0xf]
  %v3490 = vld [vmem:[%s13 + $0x54] sm:$0xf]
  %v3491 = vld [vmem:[%s13 + $0x58] sm:$0xf]
  %v3492 = vld [vmem:[%s13 + $0x5c] sm:$0xf]
  %v3493 = vld [vmem:[%s13 + $0x60] sm:$0xf]
  %v3494 = vld [vmem:[%s13 + $0x64] sm:$0xf]
  %v3495 = vld [vmem:[%s13 + $0x68] sm:$0xf]
  %v3496 = vld [vmem:[%s13 + $0x6c] sm:$0xf]
  %v3497 = vld [vmem:[%s13 + $0x70] sm:$0xf]
  %v3498 = vld [vmem:[%s13 + $0x74] sm:$0xf]
  %v3499 = vld [vmem:[%s13 + $0x78] sm:$0xf]
  %v3500 = vld [vmem:[%s13 + $0x7c] sm:$0xf]
  %v3501 = vld [vmem:[%s13 + $0x80] sm:$0xf]
  %v3502 = vld [vmem:[%s13 + $0x84] sm:$0xf]
  %v3503 = vld [vmem:[%s13 + $0x88] sm:$0xf]
  %v3504 = vld [vmem:[%s13 + $0x8c] sm:$0xf]
  %v3505 = vld [vmem:[%s13 + $0x90] sm:$0xf]
  %v3506 = vld [vmem:[%s13 + $0x94] sm:$0xf]
  %v3507 = vld [vmem:[%s13 + $0x98] sm:$0xf]
  %v3508 = vld [vmem:[%s13 + $0x9c] sm:$0xf]
  %v3509 = vld [vmem:[%s13 + $0xa0] sm:$0xf]
  %v3510 = vld [vmem:[%s13 + $0xa4] sm:$0xf]
  %v3511 = vld [vmem:[%s13 + $0xa8] sm:$0xf]
  %v3512 = vld [vmem:[%s13 + $0xac] sm:$0xf]
  %v3513 = vld [vmem:[%s13 + $0xb0] sm:$0xf]
  %v3514 = vld [vmem:[%s13 + $0xb4] sm:$0xf]
  %v3515 = vld [vmem:[%s13 + $0xb8] sm:$0xf]
  %v3516 = vld [vmem:[%s13 + $0xbc] sm:$0xf]
  %v3517 = vld [vmem:[%s13 + $0xc0] sm:$0xf]
  %v3518 = vld [vmem:[%s13 + $0xc4] sm:$0xf]
  %v3519 = vld [vmem:[%s13 + $0xc8] sm:$0xf]
  %v3520 = vld [vmem:[%s13 + $0xcc] sm:$0xf]
  %v3521 = vld [vmem:[%s13 + $0xd0] sm:$0xf]
  %v3522 = vld [vmem:[%s13 + $0xd4] sm:$0xf]
  %v3523 = vld [vmem:[%s13 + $0xd8] sm:$0xf]
  %v3524 = vld [vmem:[%s13 + $0xdc] sm:$0xf]
  %v3525 = vld [vmem:[%s13 + $0xe0] sm:$0xf]
  %v3526 = vld [vmem:[%s13 + $0xe4] sm:$0xf]
  %v3527 = vld [vmem:[%s13 + $0xe8] sm:$0xf]
  %v3528 = vld [vmem:[%s13 + $0xec] sm:$0xf]
  %v3529 = vld [vmem:[%s13 + $0xf0] sm:$0xf]
  %v3530 = vld [vmem:[%s13 + $0xf4] sm:$0xf]
  %v3531 = vld [vmem:[%s13 + $0xf8] sm:$0xf]
  %v3532 = vld [vmem:[%s13 + $0xfc] sm:$0xf]
  %v3533 = vld [vmem:[%s13 + $0x100] sm:$0xf]
  %v3534 = vld [vmem:[%s13 + $0x104] sm:$0xf]
  %v3535 = vld [vmem:[%s13 + $0x108] sm:$0xf]
  %v3536 = vld [vmem:[%s13 + $0x10c] sm:$0xf]
  %v3537 = vld [vmem:[%s13 + $0x110] sm:$0xf]
  %v3538 = vld [vmem:[%s13 + $0x114] sm:$0xf]
  %v3539 = vld [vmem:[%s13 + $0x118] sm:$0xf]
  %v3540 = vld [vmem:[%s13 + $0x11c] sm:$0xf]
  %v3541 = vld [vmem:[%s14] sm:$0x1]
  %v3543 = vlaneseq
  %v3544 = vshrl.u32 %v3543, 7
  %v3545 = vsub.s32 0, %v3544
  %v3546 = vrot.slane %v3541, %v3545
  %v3620 = vunpack.c.l.b16 %v3469
  %v3621 = vunpack.c.l.b16 %v3470
  %v3622 = vunpack.c.l.b16 %v3471
  %v3623 = vunpack.c.l.b16 %v3472
  %v3624 = vunpack.c.l.b16 %v3473
  %v3625 = vunpack.c.l.b16 %v3474
  %v3626 = vunpack.c.l.b16 %v3475
  %v3627 = vunpack.c.l.b16 %v3476
  %v3628 = vunpack.c.l.b16 %v3477
  %v3629 = vunpack.c.l.b16 %v3478
  %v3630 = vunpack.c.l.b16 %v3479
  %v3631 = vunpack.c.l.b16 %v3480
  %v3632 = vunpack.c.l.b16 %v3481
  %v3633 = vunpack.c.l.b16 %v3482
  %v3634 = vunpack.c.l.b16 %v3483
  %v3635 = vunpack.c.l.b16 %v3484
  %v3636 = vunpack.c.l.b16 %v3485
  %v3637 = vunpack.c.l.b16 %v3486
  %v3638 = vunpack.c.l.b16 %v3487
  %v3639 = vunpack.c.l.b16 %v3488
  %v3640 = vunpack.c.l.b16 %v3489
  %v3641 = vunpack.c.l.b16 %v3490
  %v3642 = vunpack.c.l.b16 %v3491
  %v3643 = vunpack.c.l.b16 %v3492
  %v3644 = vunpack.c.l.b16 %v3493
  %v3645 = vunpack.c.l.b16 %v3494
  %v3646 = vunpack.c.l.b16 %v3495
  %v3647 = vunpack.c.l.b16 %v3496
  %v3648 = vunpack.c.l.b16 %v3497
  %v3649 = vunpack.c.l.b16 %v3498
  %v3650 = vunpack.c.l.b16 %v3499
  %v3651 = vunpack.c.l.b16 %v3500
  %v3652 = vunpack.c.l.b16 %v3501
  %v3653 = vunpack.c.l.b16 %v3502
  %v3654 = vunpack.c.l.b16 %v3503
  %v3655 = vunpack.c.l.b16 %v3504
  %v3656 = vunpack.c.l.b16 %v3505
  %v3657 = vunpack.c.l.b16 %v3506
  %v3658 = vunpack.c.l.b16 %v3507
  %v3659 = vunpack.c.l.b16 %v3508
  %v3660 = vunpack.c.l.b16 %v3509
  %v3661 = vunpack.c.l.b16 %v3510
  %v3662 = vunpack.c.l.b16 %v3511
  %v3663 = vunpack.c.l.b16 %v3512
  %v3664 = vunpack.c.l.b16 %v3513
  %v3665 = vunpack.c.l.b16 %v3514
  %v3666 = vunpack.c.l.b16 %v3515
  %v3667 = vunpack.c.l.b16 %v3516
  %v3668 = vunpack.c.l.b16 %v3517
  %v3669 = vunpack.c.l.b16 %v3518
  %v3670 = vunpack.c.l.b16 %v3519
  %v3671 = vunpack.c.l.b16 %v3520
  %v3672 = vunpack.c.l.b16 %v3521
  %v3673 = vunpack.c.l.b16 %v3522
  %v3674 = vunpack.c.l.b16 %v3523
  %v3675 = vunpack.c.l.b16 %v3524
  %v3676 = vunpack.c.l.b16 %v3525
  %v3677 = vunpack.c.l.b16 %v3526
  %v3678 = vunpack.c.l.b16 %v3527
  %v3679 = vunpack.c.l.b16 %v3528
  %v3680 = vunpack.c.l.b16 %v3529
  %v3681 = vunpack.c.l.b16 %v3530
  %v3682 = vunpack.c.l.b16 %v3531
  %v3683 = vunpack.c.l.b16 %v3532
  %v3684 = vunpack.c.l.b16 %v3533
  %v3685 = vunpack.c.l.b16 %v3534
  %v3686 = vunpack.c.l.b16 %v3535
  %v3687 = vunpack.c.l.b16 %v3536
  %v3688 = vunpack.c.l.b16 %v3537
  %v3689 = vunpack.c.l.b16 %v3538
  %v3690 = vunpack.c.l.b16 %v3539
  %v3691 = vunpack.c.l.b16 %v3540
  %v3692 = vpack.c.b16 %v3621, %v3620
  %v3693 = vpack.c.b16 %v3623, %v3622
  %v3694 = vpack.c.b16 %v3625, %v3624
  %v3695 = vpack.c.b16 %v3627, %v3626
  %v3696 = vpack.c.b16 %v3629, %v3628
  %v3697 = vpack.c.b16 %v3631, %v3630
  %v3698 = vpack.c.b16 %v3633, %v3632
  %v3699 = vpack.c.b16 %v3635, %v3634
  %v3700 = vpack.c.b16 %v3637, %v3636
  %v3701 = vpack.c.b16 %v3639, %v3638
  %v3702 = vpack.c.b16 %v3641, %v3640
  %v3703 = vpack.c.b16 %v3643, %v3642
  %v3704 = vpack.c.b16 %v3645, %v3644
  %v3705 = vpack.c.b16 %v3647, %v3646
  %v3706 = vpack.c.b16 %v3649, %v3648
  %v3707 = vpack.c.b16 %v3651, %v3650
  %v3708 = vpack.c.b16 %v3653, %v3652
  %v3709 = vpack.c.b16 %v3655, %v3654
  %v3710 = vpack.c.b16 %v3657, %v3656
  %v3711 = vpack.c.b16 %v3659, %v3658
  %v3712 = vpack.c.b16 %v3661, %v3660
  %v3713 = vpack.c.b16 %v3663, %v3662
  %v3714 = vpack.c.b16 %v3665, %v3664
  %v3715 = vpack.c.b16 %v3667, %v3666
  %v3716 = vpack.c.b16 %v3669, %v3668
  %v3717 = vpack.c.b16 %v3671, %v3670
  %v3718 = vpack.c.b16 %v3673, %v3672
  %v3719 = vpack.c.b16 %v3675, %v3674
  %v3720 = vpack.c.b16 %v3677, %v3676
  %v3721 = vpack.c.b16 %v3679, %v3678
  %v3722 = vpack.c.b16 %v3681, %v3680
  %v3723 = vpack.c.b16 %v3683, %v3682
  %v3724 = vpack.c.b16 %v3685, %v3684
  %v3725 = vpack.c.b16 %v3687, %v3686
  %v3726 = vpack.c.b16 %v3689, %v3688
  %v3727 = vpack.c.b16 %v3691, %v3690
  %v3765 = vsel %vm1055, %v3440, 0
  %3767 = vmatprep.subr.bf16.mxu0 0
  %3768 = vmatpush1.bf16.msra.mxu0 %v3699
  %3769 = vmatprep.subr.bf16.mxu0 0
  %3770 = vmatpush1.bf16.msra.mxu0 %v3698
  %3771 = vmatprep.subr.bf16.mxu0 0
  %3772 = vmatpush1.bf16.msra.mxu0 %v3697
  %3773 = vmatprep.subr.bf16.mxu0 0
  %3774 = vmatpush1.bf16.msra.mxu0 %v3696
  %3775 = vmatprep.subr.bf16.mxu0 0
  %3776 = vmatpush1.bf16.msra.mxu0 %v3695
  %3777 = vmatprep.subr.bf16.mxu0 0
  %3778 = vmatpush1.bf16.msra.mxu0 %v3694
  %3779 = vmatprep.subr.bf16.mxu0 0
  %3780 = vmatpush1.bf16.msra.mxu0 %v3693
  %3781 = vmatprep.subr.bf16.mxu0 0
  %3782 = vmatpush1.bf16.msra.mxu0 %v3692
  %3783 = vmatprep.subr.bf16.mxu0 0
  %3784 = vmatpush2.bf16.msra.mxu0 %v3707
  %3785 = vmatprep.subr.bf16.mxu0 0
  %3786 = vmatpush2.bf16.msra.mxu0 %v3706
  %3787 = vmatprep.subr.bf16.mxu0 0
  %3788 = vmatpush2.bf16.msra.mxu0 %v3705
  %3789 = vmatprep.subr.bf16.mxu0 0
  %3790 = vmatpush2.bf16.msra.mxu0 %v3704
  %3791 = vmatprep.subr.bf16.mxu0 0
  %3792 = vmatpush2.bf16.msra.mxu0 %v3703
  %3793 = vmatprep.subr.bf16.mxu0 0
  %3794 = vmatpush2.bf16.msra.mxu0 %v3702
  %3795 = vmatprep.subr.bf16.mxu0 0
  %3796 = vmatpush2.bf16.msra.mxu0 %v3701
  %3797 = vmatprep.subr.bf16.mxu0 0
  %3798 = vmatpush2.bf16.msra.mxu0 %v3700
  %3799 = vmatprep.mubr.bf16.mxu0 %v3459
  %3800 = vmatmul.mubr.bf16.gmra.mxu0 %v3455
  %v3801 = vpop.f32.mrf.mxu0
  %v3802 = vadd.f32 %v3546, %v3801
  %v3803 = vpop.f32.mrf.mxu0
  %v3804 = vpop.f32.mrf.mxu0
  %v3805 = vpop.f32.mrf.mxu0
  %3806 = vdwg.mxu0
  %3807 = vmatprep.subr.bf16.mxu0 0
  %3808 = vmatpush1.bf16.msra.mxu0 %v3715
  %3809 = vmatprep.subr.bf16.mxu0 0
  %3810 = vmatpush1.bf16.msra.mxu0 %v3714
  %3811 = vmatprep.subr.bf16.mxu0 0
  %3812 = vmatpush1.bf16.msra.mxu0 %v3713
  %3813 = vmatprep.subr.bf16.mxu0 0
  %3814 = vmatpush1.bf16.msra.mxu0 %v3712
  %3815 = vmatprep.subr.bf16.mxu0 0
  %3816 = vmatpush1.bf16.msra.mxu0 %v3711
  %3817 = vmatprep.subr.bf16.mxu0 0
  %3818 = vmatpush1.bf16.msra.mxu0 %v3710
  %3819 = vmatprep.subr.bf16.mxu0 0
  %3820 = vmatpush1.bf16.msra.mxu0 %v3709
  %3821 = vmatprep.subr.bf16.mxu0 0
  %3822 = vmatpush1.bf16.msra.mxu0 %v3708
  %3823 = vmatprep.subr.bf16.mxu0 0
  %3824 = vmatpush2.bf16.msra.mxu0 %v3723
  %3825 = vmatprep.subr.bf16.mxu0 0
  %3826 = vmatpush2.bf16.msra.mxu0 %v3722
  %3827 = vmatprep.subr.bf16.mxu0 0
  %3828 = vmatpush2.bf16.msra.mxu0 %v3721
  %3829 = vmatprep.subr.bf16.mxu0 0
  %3830 = vmatpush2.bf16.msra.mxu0 %v3720
  %3831 = vmatprep.subr.bf16.mxu0 0
  %3832 = vmatpush2.bf16.msra.mxu0 %v3719
  %3833 = vmatprep.subr.bf16.mxu0 0
  %3834 = vmatpush2.bf16.msra.mxu0 %v3718
  %3835 = vmatprep.subr.bf16.mxu0 0
  %3836 = vmatpush2.bf16.msra.mxu0 %v3717
  %3837 = vmatprep.subr.bf16.mxu0 0
  %3838 = vmatpush2.bf16.msra.mxu0 %v3716
  %3839 = vmatprep.mubr.bf16.mxu0 %v3467
  %3840 = vmatmul.mubr.bf16.gmra.mxu0 %v3463
  %v3841 = vpop.f32.mrf.mxu0
  %v3842 = vadd.f32 %v3802, %v3841
  %v3843 = vpop.f32.mrf.mxu0
  %v3844 = vpop.f32.mrf.mxu0
  %v3845 = vpop.f32.mrf.mxu0
  %3846 = vdwg.mxu0
  %3847 = vmatprep.subr.bf16.mxu0 0
  %3848 = vmatpush1.bf16.msra.mxu0 0
  %3849 = vmatprep.subr.bf16.mxu0 0
  %3850 = vmatpush1.bf16.msra.mxu0 0
  %3851 = vmatprep.subr.bf16.mxu0 0
  %3852 = vmatpush1.bf16.msra.mxu0 0
  %3853 = vmatprep.subr.bf16.mxu0 0
  %3854 = vmatpush1.bf16.msra.mxu0 0
  %3855 = vmatprep.subr.bf16.mxu0 0
  %3856 = vmatpush1.bf16.msra.mxu0 %v3727
  %3857 = vmatprep.subr.bf16.mxu0 0
  %3858 = vmatpush1.bf16.msra.mxu0 %v3726
  %3859 = vmatprep.subr.bf16.mxu0 0
  %3860 = vmatpush1.bf16.msra.mxu0 %v3725
  %3861 = vmatprep.subr.bf16.mxu0 0
  %3862 = vmatpush1.bf16.msra.mxu0 %v3724
  %3863 = vmatprep.subr.bf16.mxu0 0
  %3864 = vmatpush2.bf16.msra.mxu0 0
  %3865 = vmatprep.subr.bf16.mxu0 0
  %3866 = vmatpush2.bf16.msra.mxu0 0
  %3867 = vmatprep.subr.bf16.mxu0 0
  %3868 = vmatpush2.bf16.msra.mxu0 0
  %3869 = vmatprep.subr.bf16.mxu0 0
  %3870 = vmatpush2.bf16.msra.mxu0 0
  %3871 = vmatprep.subr.bf16.mxu0 0
  %3872 = vmatpush2.bf16.msra.mxu0 0
  %3873 = vmatprep.subr.bf16.mxu0 0
  %3874 = vmatpush2.bf16.msra.mxu0 0
  %3875 = vmatprep.subr.bf16.mxu0 0
  %3876 = vmatpush2.bf16.msra.mxu0 0
  %3877 = vmatprep.subr.bf16.mxu0 0
  %3878 = vmatpush2.bf16.msra.mxu0 0
  %3879 = vmatprep.mubr.bf16.mxu0 0
  %3880 = vmatmul.mubr.bf16.gmra.mxu0 %v3765
  %v3881 = vpop.f32.mrf.mxu0
  %v3882 = vadd.f32 %v3842, %v3881
  %v3883 = vpop.f32.mrf.mxu0
  %v3884 = vpop.f32.mrf.mxu0
  %v3885 = vpop.f32.mrf.mxu0
  %3886 = vdwg.mxu0
  %v3887 = vmax.f32 %v3882, 0.0
  %3889 = vrot.lane.b32.xlu0 %v3016, 64
  %v3890 = vpop.permute.xlu0 %3889
  %v3892 = vadd.f32 %v3887, %v3890
  %v3893 = vpack.c.bf16 %v3892, %v3892
  %v3894 = vld [vmem:[%s15] sm:$0x1]
  %v3896 = vsel %vm3024, %v3894, 0
  %v3899 = vsel %vm3028, %v3893, 0
  %3901 = vmatprep.subr.bf16.mxu0 0
  %3902 = vmatpush1.bf16.msra.mxu0 0
  %3903 = vmatprep.subr.bf16.mxu0 0
  %3904 = vmatpush1.bf16.msra.mxu0 0
  %3905 = vmatprep.subr.bf16.mxu0 0
  %3906 = vmatpush1.bf16.msra.mxu0 0
  %3907 = vmatprep.subr.bf16.mxu0 0
  %3908 = vmatpush1.bf16.msra.mxu0 0
  %3909 = vmatprep.subr.bf16.mxu0 0
  %3910 = vmatpush1.bf16.msra.mxu0 0
  %3911 = vmatprep.subr.bf16.mxu0 0
  %3912 = vmatpush1.bf16.msra.mxu0 0
  %3913 = vmatprep.subr.bf16.mxu0 0
  %3914 = vmatpush1.bf16.msra.mxu0 0
  %3915 = vmatprep.subr.bf16.mxu0 0
  %3916 = vmatpush1.bf16.msra.mxu0 %v3899
  %3917 = vmatprep.subr.bf16.mxu0 0
  %3918 = vmatpush2.bf16.msra.mxu0 0
  %3919 = vmatprep.subr.bf16.mxu0 0
  %3920 = vmatpush2.bf16.msra.mxu0 0
  %3921 = vmatprep.subr.bf16.mxu0 0
  %3922 = vmatpush2.bf16.msra.mxu0 0
  %3923 = vmatprep.subr.bf16.mxu0 0
  %3924 = vmatpush2.bf16.msra.mxu0 0
  %3925 = vmatprep.subr.bf16.mxu0 0
  %3926 = vmatpush2.bf16.msra.mxu0 0
  %3927 = vmatprep.subr.bf16.mxu0 0
  %3928 = vmatpush2.bf16.msra.mxu0 0
  %3929 = vmatprep.subr.bf16.mxu0 0
  %3930 = vmatpush2.bf16.msra.mxu0 0
  %3931 = vmatprep.subr.bf16.mxu0 0
  %3932 = vmatpush2.bf16.msra.mxu0 0
  %3933 = vmatprep.mubr.bf16.mxu0 0
  %3934 = vmatmul.mubr.bf16.gmra.mxu0 %v3896
  %v3935 = vpop.f32.mrf.mxu0
  %v3936 = vadd.f32 0.0, %v3935
  %v3937 = vpop.f32.mrf.mxu0
  %v3938 = vpop.f32.mrf.mxu0
  %v3939 = vpop.f32.mrf.mxu0
  %3940 = vdwg.mxu0
  %v3941 = vpack.c.bf16 %v3936, %v3936
  %s3942 = scalar_lea.vmem %s15, 1
  %v3943 = vld [vmem:[%s3942] sm:$0x1]
  %v3945 = vsel %vm3024, %v3943, 0
  %3947 = vmatprep.subr.bf16.mxu0 0
  %3948 = vmatpush1.bf16.msra.mxu0 0
  %3949 = vmatprep.subr.bf16.mxu0 0
  %3950 = vmatpush1.bf16.msra.mxu0 0
  %3951 = vmatprep.subr.bf16.mxu0 0
  %3952 = vmatpush1.bf16.msra.mxu0 0
  %3953 = vmatprep.subr.bf16.mxu0 0
  %3954 = vmatpush1.bf16.msra.mxu0 0
  %3955 = vmatprep.subr.bf16.mxu0 0
  %3956 = vmatpush1.bf16.msra.mxu0 0
  %3957 = vmatprep.subr.bf16.mxu0 0
  %3958 = vmatpush1.bf16.msra.mxu0 0
  %3959 = vmatprep.subr.bf16.mxu0 0
  %3960 = vmatpush1.bf16.msra.mxu0 0
  %3961 = vmatprep.subr.bf16.mxu0 0
  %3962 = vmatpush1.bf16.msra.mxu0 %v3899
  %3963 = vmatprep.subr.bf16.mxu0 0
  %3964 = vmatpush2.bf16.msra.mxu0 0
  %3965 = vmatprep.subr.bf16.mxu0 0
  %3966 = vmatpush2.bf16.msra.mxu0 0
  %3967 = vmatprep.subr.bf16.mxu0 0
  %3968 = vmatpush2.bf16.msra.mxu0 0
  %3969 = vmatprep.subr.bf16.mxu0 0
  %3970 = vmatpush2.bf16.msra.mxu0 0
  %3971 = vmatprep.subr.bf16.mxu0 0
  %3972 = vmatpush2.bf16.msra.mxu0 0
  %3973 = vmatprep.subr.bf16.mxu0 0
  %3974 = vmatpush2.bf16.msra.mxu0 0
  %3975 = vmatprep.subr.bf16.mxu0 0
  %3976 = vmatpush2.bf16.msra.mxu0 0
  %3977 = vmatprep.subr.bf16.mxu0 0
  %3978 = vmatpush2.bf16.msra.mxu0 0
  %3979 = vmatprep.mubr.bf16.mxu0 0
  %3980 = vmatmul.mubr.bf16.gmra.mxu0 %v3945
  %v3981 = vpop.f32.mrf.mxu0
  %v3982 = vadd.f32 0.0, %v3981
  %v3983 = vpop.f32.mrf.mxu0
  %v3984 = vpop.f32.mrf.mxu0
  %v3985 = vpop.f32.mrf.mxu0
  %3986 = vdwg.mxu0
  %v3987 = vpack.c.bf16 %v3982, %v3982
  %s3988 = scalar_lea.vmem %s15, 2
  %v3989 = vld [vmem:[%s3988] sm:$0x1]
  %v3991 = vsel %vm3024, %v3989, 0
  %3993 = vmatprep.subr.bf16.mxu0 0
  %3994 = vmatpush1.bf16.msra.mxu0 0
  %3995 = vmatprep.subr.bf16.mxu0 0
  %3996 = vmatpush1.bf16.msra.mxu0 0
  %3997 = vmatprep.subr.bf16.mxu0 0
  %3998 = vmatpush1.bf16.msra.mxu0 0
  %3999 = vmatprep.subr.bf16.mxu0 0
  %4000 = vmatpush1.bf16.msra.mxu0 0
  %4001 = vmatprep.subr.bf16.mxu0 0
  %4002 = vmatpush1.bf16.msra.mxu0 0
  %4003 = vmatprep.subr.bf16.mxu0 0
  %4004 = vmatpush1.bf16.msra.mxu0 0
  %4005 = vmatprep.subr.bf16.mxu0 0
  %4006 = vmatpush1.bf16.msra.mxu0 0
  %4007 = vmatprep.subr.bf16.mxu0 0
  %4008 = vmatpush1.bf16.msra.mxu0 %v3899
  %4009 = vmatprep.subr.bf16.mxu0 0
  %4010 = vmatpush2.bf16.msra.mxu0 0
  %4011 = vmatprep.subr.bf16.mxu0 0
  %4012 = vmatpush2.bf16.msra.mxu0 0
  %4013 = vmatprep.subr.bf16.mxu0 0
  %4014 = vmatpush2.bf16.msra.mxu0 0
  %4015 = vmatprep.subr.bf16.mxu0 0
  %4016 = vmatpush2.bf16.msra.mxu0 0
  %4017 = vmatprep.subr.bf16.mxu0 0
  %4018 = vmatpush2.bf16.msra.mxu0 0
  %4019 = vmatprep.subr.bf16.mxu0 0
  %4020 = vmatpush2.bf16.msra.mxu0 0
  %4021 = vmatprep.subr.bf16.mxu0 0
  %4022 = vmatpush2.bf16.msra.mxu0 0
  %4023 = vmatprep.subr.bf16.mxu0 0
  %4024 = vmatpush2.bf16.msra.mxu0 0
  %4025 = vmatprep.mubr.bf16.mxu0 0
  %4026 = vmatmul.mubr.bf16.gmra.mxu0 %v3991
  %v4027 = vpop.f32.mrf.mxu0
  %v4028 = vadd.f32 0.0, %v4027
  %v4029 = vpop.f32.mrf.mxu0
  %v4030 = vpop.f32.mrf.mxu0
  %v4031 = vpop.f32.mrf.mxu0
  %4032 = vdwg.mxu0
  %v4033 = vpack.c.bf16 %v4028, %v4028
  %s4034 = scalar_lea.vmem %s15, 3
  %v4035 = vld [vmem:[%s4034] sm:$0x1]
  %v4037 = vsel %vm3024, %v4035, 0
  %4039 = vmatprep.subr.bf16.mxu0 0
  %4040 = vmatpush1.bf16.msra.mxu0 0
  %4041 = vmatprep.subr.bf16.mxu0 0
  %4042 = vmatpush1.bf16.msra.mxu0 0
  %4043 = vmatprep.subr.bf16.mxu0 0
  %4044 = vmatpush1.bf16.msra.mxu0 0
  %4045 = vmatprep.subr.bf16.mxu0 0
  %4046 = vmatpush1.bf16.msra.mxu0 0
  %4047 = vmatprep.subr.bf16.mxu0 0
  %4048 = vmatpush1.bf16.msra.mxu0 0
  %4049 = vmatprep.subr.bf16.mxu0 0
  %4050 = vmatpush1.bf16.msra.mxu0 0
  %4051 = vmatprep.subr.bf16.mxu0 0
  %4052 = vmatpush1.bf16.msra.mxu0 0
  %4053 = vmatprep.subr.bf16.mxu0 0
  %4054 = vmatpush1.bf16.msra.mxu0 %v3899
  %4055 = vmatprep.subr.bf16.mxu0 0
  %4056 = vmatpush2.bf16.msra.mxu0 0
  %4057 = vmatprep.subr.bf16.mxu0 0
  %4058 = vmatpush2.bf16.msra.mxu0 0
  %4059 = vmatprep.subr.bf16.mxu0 0
  %4060 = vmatpush2.bf16.msra.mxu0 0
  %4061 = vmatprep.subr.bf16.mxu0 0
  %4062 = vmatpush2.bf16.msra.mxu0 0
  %4063 = vmatprep.subr.bf16.mxu0 0
  %4064 = vmatpush2.bf16.msra.mxu0 0
  %4065 = vmatprep.subr.bf16.mxu0 0
  %4066 = vmatpush2.bf16.msra.mxu0 0
  %4067 = vmatprep.subr.bf16.mxu0 0
  %4068 = vmatpush2.bf16.msra.mxu0 0
  %4069 = vmatprep.subr.bf16.mxu0 0
  %4070 = vmatpush2.bf16.msra.mxu0 0
  %4071 = vmatprep.mubr.bf16.mxu0 0
  %4072 = vmatmul.mubr.bf16.gmra.mxu0 %v4037
  %v4073 = vpop.f32.mrf.mxu0
  %v4074 = vadd.f32 0.0, %v4073
  %v4075 = vpop.f32.mrf.mxu0
  %v4076 = vpop.f32.mrf.mxu0
  %v4077 = vpop.f32.mrf.mxu0
  %4078 = vdwg.mxu0
  %v4079 = vpack.c.bf16 %v4074, %v4074
  %s4080 = scalar_lea.vmem %s15, 4
  %v4081 = vld [vmem:[%s4080] sm:$0x1]
  %v4083 = vsel %vm3024, %v4081, 0
  %4085 = vmatprep.subr.bf16.mxu0 0
  %4086 = vmatpush1.bf16.msra.mxu0 0
  %4087 = vmatprep.subr.bf16.mxu0 0
  %4088 = vmatpush1.bf16.msra.mxu0 0
  %4089 = vmatprep.subr.bf16.mxu0 0
  %4090 = vmatpush1.bf16.msra.mxu0 0
  %4091 = vmatprep.subr.bf16.mxu0 0
  %4092 = vmatpush1.bf16.msra.mxu0 0
  %4093 = vmatprep.subr.bf16.mxu0 0
  %4094 = vmatpush1.bf16.msra.mxu0 0
  %4095 = vmatprep.subr.bf16.mxu0 0
  %4096 = vmatpush1.bf16.msra.mxu0 0
  %4097 = vmatprep.subr.bf16.mxu0 0
  %4098 = vmatpush1.bf16.msra.mxu0 0
  %4099 = vmatprep.subr.bf16.mxu0 0
  %4100 = vmatpush1.bf16.msra.mxu0 %v3899
  %4101 = vmatprep.subr.bf16.mxu0 0
  %4102 = vmatpush2.bf16.msra.mxu0 0
  %4103 = vmatprep.subr.bf16.mxu0 0
  %4104 = vmatpush2.bf16.msra.mxu0 0
  %4105 = vmatprep.subr.bf16.mxu0 0
  %4106 = vmatpush2.bf16.msra.mxu0 0
  %4107 = vmatprep.subr.bf16.mxu0 0
  %4108 = vmatpush2.bf16.msra.mxu0 0
  %4109 = vmatprep.subr.bf16.mxu0 0
  %4110 = vmatpush2.bf16.msra.mxu0 0
  %4111 = vmatprep.subr.bf16.mxu0 0
  %4112 = vmatpush2.bf16.msra.mxu0 0
  %4113 = vmatprep.subr.bf16.mxu0 0
  %4114 = vmatpush2.bf16.msra.mxu0 0
  %4115 = vmatprep.subr.bf16.mxu0 0
  %4116 = vmatpush2.bf16.msra.mxu0 0
  %4117 = vmatprep.mubr.bf16.mxu0 0
  %4118 = vmatmul.mubr.bf16.gmra.mxu0 %v4083
  %v4119 = vpop.f32.mrf.mxu0
  %v4120 = vadd.f32 0.0, %v4119
  %v4121 = vpop.f32.mrf.mxu0
  %v4122 = vpop.f32.mrf.mxu0
  %v4123 = vpop.f32.mrf.mxu0
  %4124 = vdwg.mxu0
  %v4125 = vpack.c.bf16 %v4120, %v4120
  %s4126 = scalar_lea.vmem %s15, 5
  %v4127 = vld [vmem:[%s4126] sm:$0x1]
  %v4129 = vsel %vm3024, %v4127, 0
  %4131 = vmatprep.subr.bf16.mxu0 0
  %4132 = vmatpush1.bf16.msra.mxu0 0
  %4133 = vmatprep.subr.bf16.mxu0 0
  %4134 = vmatpush1.bf16.msra.mxu0 0
  %4135 = vmatprep.subr.bf16.mxu0 0
  %4136 = vmatpush1.bf16.msra.mxu0 0
  %4137 = vmatprep.subr.bf16.mxu0 0
  %4138 = vmatpush1.bf16.msra.mxu0 0
  %4139 = vmatprep.subr.bf16.mxu0 0
  %4140 = vmatpush1.bf16.msra.mxu0 0
  %4141 = vmatprep.subr.bf16.mxu0 0
  %4142 = vmatpush1.bf16.msra.mxu0 0
  %4143 = vmatprep.subr.bf16.mxu0 0
  %4144 = vmatpush1.bf16.msra.mxu0 0
  %4145 = vmatprep.subr.bf16.mxu0 0
  %4146 = vmatpush1.bf16.msra.mxu0 %v3899
  %4147 = vmatprep.subr.bf16.mxu0 0
  %4148 = vmatpush2.bf16.msra.mxu0 0
  %4149 = vmatprep.subr.bf16.mxu0 0
  %4150 = vmatpush2.bf16.msra.mxu0 0
  %4151 = vmatprep.subr.bf16.mxu0 0
  %4152 = vmatpush2.bf16.msra.mxu0 0
  %4153 = vmatprep.subr.bf16.mxu0 0
  %4154 = vmatpush2.bf16.msra.mxu0 0
  %4155 = vmatprep.subr.bf16.mxu0 0
  %4156 = vmatpush2.bf16.msra.mxu0 0
  %4157 = vmatprep.subr.bf16.mxu0 0
  %4158 = vmatpush2.bf16.msra.mxu0 0
  %4159 = vmatprep.subr.bf16.mxu0 0
  %4160 = vmatpush2.bf16.msra.mxu0 0
  %4161 = vmatprep.subr.bf16.mxu0 0
  %4162 = vmatpush2.bf16.msra.mxu0 0
  %4163 = vmatprep.mubr.bf16.mxu0 0
  %4164 = vmatmul.mubr.bf16.gmra.mxu0 %v4129
  %v4165 = vpop.f32.mrf.mxu0
  %v4166 = vadd.f32 0.0, %v4165
  %v4167 = vpop.f32.mrf.mxu0
  %v4168 = vpop.f32.mrf.mxu0
  %v4169 = vpop.f32.mrf.mxu0
  %4170 = vdwg.mxu0
  %v4171 = vpack.c.bf16 %v4166, %v4166
  %s4172 = scalar_lea.vmem %s15, 6
  %v4173 = vld [vmem:[%s4172] sm:$0x1]
  %v4175 = vsel %vm3024, %v4173, 0
  %4177 = vmatprep.subr.bf16.mxu0 0
  %4178 = vmatpush1.bf16.msra.mxu0 0
  %4179 = vmatprep.subr.bf16.mxu0 0
  %4180 = vmatpush1.bf16.msra.mxu0 0
  %4181 = vmatprep.subr.bf16.mxu0 0
  %4182 = vmatpush1.bf16.msra.mxu0 0
  %4183 = vmatprep.subr.bf16.mxu0 0
  %4184 = vmatpush1.bf16.msra.mxu0 0
  %4185 = vmatprep.subr.bf16.mxu0 0
  %4186 = vmatpush1.bf16.msra.mxu0 0
  %4187 = vmatprep.subr.bf16.mxu0 0
  %4188 = vmatpush1.bf16.msra.mxu0 0
  %4189 = vmatprep.subr.bf16.mxu0 0
  %4190 = vmatpush1.bf16.msra.mxu0 0
  %4191 = vmatprep.subr.bf16.mxu0 0
  %4192 = vmatpush1.bf16.msra.mxu0 %v3899
  %4193 = vmatprep.subr.bf16.mxu0 0
  %4194 = vmatpush2.bf16.msra.mxu0 0
  %4195 = vmatprep.subr.bf16.mxu0 0
  %4196 = vmatpush2.bf16.msra.mxu0 0
  %4197 = vmatprep.subr.bf16.mxu0 0
  %4198 = vmatpush2.bf16.msra.mxu0 0
  %4199 = vmatprep.subr.bf16.mxu0 0
  %4200 = vmatpush2.bf16.msra.mxu0 0
  %4201 = vmatprep.subr.bf16.mxu0 0
  %4202 = vmatpush2.bf16.msra.mxu0 0
  %4203 = vmatprep.subr.bf16.mxu0 0
  %4204 = vmatpush2.bf16.msra.mxu0 0
  %4205 = vmatprep.subr.bf16.mxu0 0
  %4206 = vmatpush2.bf16.msra.mxu0 0
  %4207 = vmatprep.subr.bf16.mxu0 0
  %4208 = vmatpush2.bf16.msra.mxu0 0
  %4209 = vmatprep.mubr.bf16.mxu0 0
  %4210 = vmatmul.mubr.bf16.gmra.mxu0 %v4175
  %v4211 = vpop.f32.mrf.mxu0
  %v4212 = vadd.f32 0.0, %v4211
  %v4213 = vpop.f32.mrf.mxu0
  %v4214 = vpop.f32.mrf.mxu0
  %v4215 = vpop.f32.mrf.mxu0
  %4216 = vdwg.mxu0
  %v4217 = vpack.c.bf16 %v4212, %v4212
  %s4218 = scalar_lea.vmem %s15, 7
  %v4219 = vld [vmem:[%s4218] sm:$0x1]
  %v4221 = vsel %vm3024, %v4219, 0
  %4223 = vmatprep.subr.bf16.mxu0 0
  %4224 = vmatpush1.bf16.msra.mxu0 0
  %4225 = vmatprep.subr.bf16.mxu0 0
  %4226 = vmatpush1.bf16.msra.mxu0 0
  %4227 = vmatprep.subr.bf16.mxu0 0
  %4228 = vmatpush1.bf16.msra.mxu0 0
  %4229 = vmatprep.subr.bf16.mxu0 0
  %4230 = vmatpush1.bf16.msra.mxu0 0
  %4231 = vmatprep.subr.bf16.mxu0 0
  %4232 = vmatpush1.bf16.msra.mxu0 0
  %4233 = vmatprep.subr.bf16.mxu0 0
  %4234 = vmatpush1.bf16.msra.mxu0 0
  %4235 = vmatprep.subr.bf16.mxu0 0
  %4236 = vmatpush1.bf16.msra.mxu0 0
  %4237 = vmatprep.subr.bf16.mxu0 0
  %4238 = vmatpush1.bf16.msra.mxu0 %v3899
  %4239 = vmatprep.subr.bf16.mxu0 0
  %4240 = vmatpush2.bf16.msra.mxu0 0
  %4241 = vmatprep.subr.bf16.mxu0 0
  %4242 = vmatpush2.bf16.msra.mxu0 0
  %4243 = vmatprep.subr.bf16.mxu0 0
  %4244 = vmatpush2.bf16.msra.mxu0 0
  %4245 = vmatprep.subr.bf16.mxu0 0
  %4246 = vmatpush2.bf16.msra.mxu0 0
  %4247 = vmatprep.subr.bf16.mxu0 0
  %4248 = vmatpush2.bf16.msra.mxu0 0
  %4249 = vmatprep.subr.bf16.mxu0 0
  %4250 = vmatpush2.bf16.msra.mxu0 0
  %4251 = vmatprep.subr.bf16.mxu0 0
  %4252 = vmatpush2.bf16.msra.mxu0 0
  %4253 = vmatprep.subr.bf16.mxu0 0
  %4254 = vmatpush2.bf16.msra.mxu0 0
  %4255 = vmatprep.mubr.bf16.mxu0 0
  %4256 = vmatmul.mubr.bf16.gmra.mxu0 %v4221
  %v4257 = vpop.f32.mrf.mxu0
  %v4258 = vadd.f32 0.0, %v4257
  %v4259 = vpop.f32.mrf.mxu0
  %v4260 = vpop.f32.mrf.mxu0
  %v4261 = vpop.f32.mrf.mxu0
  %4262 = vdwg.mxu0
  %v4263 = vpack.c.bf16 %v4258, %v4258
  %s4264 = scalar_lea.vmem %s15, 8
  %v4265 = vld [vmem:[%s4264] sm:$0x1]
  %v4267 = vsel %vm3024, %v4265, 0
  %4269 = vmatprep.subr.bf16.mxu0 0
  %4270 = vmatpush1.bf16.msra.mxu0 0
  %4271 = vmatprep.subr.bf16.mxu0 0
  %4272 = vmatpush1.bf16.msra.mxu0 0
  %4273 = vmatprep.subr.bf16.mxu0 0
  %4274 = vmatpush1.bf16.msra.mxu0 0
  %4275 = vmatprep.subr.bf16.mxu0 0
  %4276 = vmatpush1.bf16.msra.mxu0 0
  %4277 = vmatprep.subr.bf16.mxu0 0
  %4278 = vmatpush1.bf16.msra.mxu0 0
  %4279 = vmatprep.subr.bf16.mxu0 0
  %4280 = vmatpush1.bf16.msra.mxu0 0
  %4281 = vmatprep.subr.bf16.mxu0 0
  %4282 = vmatpush1.bf16.msra.mxu0 0
  %4283 = vmatprep.subr.bf16.mxu0 0
  %4284 = vmatpush1.bf16.msra.mxu0 %v3899
  %4285 = vmatprep.subr.bf16.mxu0 0
  %4286 = vmatpush2.bf16.msra.mxu0 0
  %4287 = vmatprep.subr.bf16.mxu0 0
  %4288 = vmatpush2.bf16.msra.mxu0 0
  %4289 = vmatprep.subr.bf16.mxu0 0
  %4290 = vmatpush2.bf16.msra.mxu0 0
  %4291 = vmatprep.subr.bf16.mxu0 0
  %4292 = vmatpush2.bf16.msra.mxu0 0
  %4293 = vmatprep.subr.bf16.mxu0 0
  %4294 = vmatpush2.bf16.msra.mxu0 0
  %4295 = vmatprep.subr.bf16.mxu0 0
  %4296 = vmatpush2.bf16.msra.mxu0 0
  %4297 = vmatprep.subr.bf16.mxu0 0
  %4298 = vmatpush2.bf16.msra.mxu0 0
  %4299 = vmatprep.subr.bf16.mxu0 0
  %4300 = vmatpush2.bf16.msra.mxu0 0
  %4301 = vmatprep.mubr.bf16.mxu0 0
  %4302 = vmatmul.mubr.bf16.gmra.mxu0 %v4267
  %v4303 = vpop.f32.mrf.mxu0
  %v4304 = vadd.f32 0.0, %v4303
  %v4305 = vpop.f32.mrf.mxu0
  %v4306 = vpop.f32.mrf.mxu0
  %v4307 = vpop.f32.mrf.mxu0
  %4308 = vdwg.mxu0
  %v4309 = vpack.c.bf16 %v4304, %v4304
  %4311 = vrot.lane.b32.xlu0 %v3987, 64
  %v4312 = vpop.permute.xlu0 %4311
  %4314 = vrot.lane.b32.xlu0 %v4079, 64
  %v4315 = vpop.permute.xlu0 %4314
  %4317 = vrot.lane.b32.xlu0 %v4171, 64
  %v4318 = vpop.permute.xlu0 %4317
  %4320 = vrot.lane.b32.xlu0 %v4263, 64
  %v4321 = vpop.permute.xlu0 %4320
  %v4324 = vsel %vm1055, %v3941, %v4312
  %v4328 = vsel %vm1055, %v4033, %v4315
  %v4332 = vsel %vm1055, %v4125, %v4318
  %v4336 = vsel %vm1055, %v4217, %v4321
  %v4338 = vld [vmem:[%s16] sm:$0xff]
  %v4339 = vld [vmem:[%s16 + $0x8] sm:$0xff]
  %v4340 = vld [vmem:[%s16 + $0x10] sm:$0xff]
  %v4341 = vld [vmem:[%s16 + $0x18] sm:$0xff]
  %v4342 = vld [vmem:[%s16 + $0x20] sm:$0xff]
  %v4343 = vld [vmem:[%s16 + $0x28] sm:$0xff]
  %v4344 = vld [vmem:[%s16 + $0x30] sm:$0xff]
  %v4345 = vld [vmem:[%s16 + $0x38] sm:$0xff]
  %v4346 = vld [vmem:[%s16 + $0x40] sm:$0xff]
  %v4347 = vld [vmem:[%s16 + $0x48] sm:$0xff]
  %v4348 = vld [vmem:[%s16 + $0x50] sm:$0xff]
  %v4349 = vld [vmem:[%s16 + $0x58] sm:$0xff]
  %v4350 = vld [vmem:[%s16 + $0x60] sm:$0xff]
  %v4351 = vld [vmem:[%s16 + $0x68] sm:$0xff]
  %v4352 = vld [vmem:[%s16 + $0x70] sm:$0xff]
  %v4353 = vld [vmem:[%s16 + $0x78] sm:$0xff]
  %v4354 = vld [vmem:[%s16 + $0x80] sm:$0xff]
  %v4355 = vld [vmem:[%s16 + $0x88] sm:$0xff]
  %v4356 = vld [vmem:[%s16 + $0x90] sm:$0xff]
  %v4357 = vld [vmem:[%s16 + $0x98] sm:$0xff]
  %v4358 = vld [vmem:[%s16 + $0xa0] sm:$0xff]
  %v4359 = vld [vmem:[%s16 + $0xa8] sm:$0xff]
  %v4360 = vld [vmem:[%s16 + $0xb0] sm:$0xff]
  %v4361 = vld [vmem:[%s16 + $0xb8] sm:$0xff]
  %v4362 = vld [vmem:[%s16 + $0xc0] sm:$0xff]
  %v4363 = vld [vmem:[%s16 + $0xc8] sm:$0xff]
  %v4364 = vld [vmem:[%s16 + $0xd0] sm:$0xff]
  %v4365 = vld [vmem:[%s16 + $0xd8] sm:$0xff]
  %v4366 = vld [vmem:[%s16 + $0xe0] sm:$0xff]
  %v4367 = vld [vmem:[%s16 + $0xe8] sm:$0xff]
  %v4368 = vld [vmem:[%s16 + $0xf0] sm:$0xff]
  %v4369 = vld [vmem:[%s16 + $0xf8] sm:$0xff]
  %v4370 = vld [vmem:[%s16 + $0x100] sm:$0xff]
  %v4371 = vld [vmem:[%s16 + $0x108] sm:$0xff]
  %v4372 = vld [vmem:[%s16 + $0x110] sm:$0xff]
  %v4373 = vld [vmem:[%s16 + $0x118] sm:$0xff]
  %v4374 = vld [vmem:[%s16 + $0x120] sm:$0xff]
  %v4375 = vld [vmem:[%s16 + $0x128] sm:$0xff]
  %v4376 = vld [vmem:[%s16 + $0x130] sm:$0xff]
  %v4377 = vld [vmem:[%s16 + $0x138] sm:$0xff]
  %v4378 = vld [vmem:[%s16 + $0x140] sm:$0xff]
  %v4379 = vld [vmem:[%s16 + $0x148] sm:$0xff]
  %v4380 = vld [vmem:[%s16 + $0x150] sm:$0xff]
  %v4381 = vld [vmem:[%s16 + $0x158] sm:$0xff]
  %v4382 = vld [vmem:[%s16 + $0x160] sm:$0xff]
  %v4383 = vld [vmem:[%s16 + $0x168] sm:$0xff]
  %v4384 = vld [vmem:[%s16 + $0x170] sm:$0xff]
  %v4385 = vld [vmem:[%s16 + $0x178] sm:$0xff]
  %v4386 = vld [vmem:[%s16 + $0x180] sm:$0xff]
  %v4387 = vld [vmem:[%s16 + $0x188] sm:$0xff]
  %v4388 = vld [vmem:[%s16 + $0x190] sm:$0xff]
  %v4389 = vld [vmem:[%s16 + $0x198] sm:$0xff]
  %v4390 = vld [vmem:[%s16 + $0x1a0] sm:$0xff]
  %v4391 = vld [vmem:[%s16 + $0x1a8] sm:$0xff]
  %v4392 = vld [vmem:[%s16 + $0x1b0] sm:$0xff]
  %v4393 = vld [vmem:[%s16 + $0x1b8] sm:$0xff]
  %v4394 = vld [vmem:[%s16 + $0x1c0] sm:$0xff]
  %v4395 = vld [vmem:[%s16 + $0x1c8] sm:$0xff]
  %v4396 = vld [vmem:[%s16 + $0x1d0] sm:$0xff]
  %v4397 = vld [vmem:[%s16 + $0x1d8] sm:$0xff]
  %v4398 = vld [vmem:[%s16 + $0x1e0] sm:$0xff]
  %v4399 = vld [vmem:[%s16 + $0x1e8] sm:$0xff]
  %v4400 = vld [vmem:[%s16 + $0x1f0] sm:$0xff]
  %v4401 = vld [vmem:[%s16 + $0x1f8] sm:$0xff]
  %v4402 = vld [vmem:[%s16 + $0x200] sm:$0xff]
  %v4403 = vld [vmem:[%s16 + $0x208] sm:$0xff]
  %v4404 = vld [vmem:[%s16 + $0x210] sm:$0xff]
  %v4405 = vld [vmem:[%s16 + $0x218] sm:$0xff]
  %v4406 = vld [vmem:[%s16 + $0x220] sm:$0xff]
  %v4407 = vld [vmem:[%s16 + $0x228] sm:$0xff]
  %v4408 = vld [vmem:[%s16 + $0x230] sm:$0xff]
  %v4409 = vld [vmem:[%s16 + $0x238] sm:$0xff]
  %v4410 = vld [vmem:[%s17] sm:$0x3]
  %v4412 = vlaneseq
  %v4413 = vshrl.u32 %v4412, 7
  %v4414 = vsub.s32 0, %v4413
  %v4415 = vrot.slane %v4410, %v4414
  %v4416 = vlaneseq
  %v4417 = vshrl.u32 %v4416, 7
  %v4418 = vsub.s32 1, %v4417
  %v4419 = vrot.slane %v4410, %v4418
  %v4494 = vunpack.c.l.b16 %v4338
  %v4495 = vunpack.c.h.b16 %v4338
  %v4496 = vunpack.c.l.b16 %v4339
  %v4497 = vunpack.c.h.b16 %v4339
  %v4498 = vunpack.c.l.b16 %v4340
  %v4499 = vunpack.c.h.b16 %v4340
  %v4500 = vunpack.c.l.b16 %v4341
  %v4501 = vunpack.c.h.b16 %v4341
  %v4502 = vunpack.c.l.b16 %v4342
  %v4503 = vunpack.c.h.b16 %v4342
  %v4504 = vunpack.c.l.b16 %v4343
  %v4505 = vunpack.c.h.b16 %v4343
  %v4506 = vunpack.c.l.b16 %v4344
  %v4507 = vunpack.c.h.b16 %v4344
  %v4508 = vunpack.c.l.b16 %v4345
  %v4509 = vunpack.c.h.b16 %v4345
  %v4510 = vunpack.c.l.b16 %v4346
  %v4511 = vunpack.c.h.b16 %v4346
  %v4512 = vunpack.c.l.b16 %v4347
  %v4513 = vunpack.c.h.b16 %v4347
  %v4514 = vunpack.c.l.b16 %v4348
  %v4515 = vunpack.c.h.b16 %v4348
  %v4516 = vunpack.c.l.b16 %v4349
  %v4517 = vunpack.c.h.b16 %v4349
  %v4518 = vunpack.c.l.b16 %v4350
  %v4519 = vunpack.c.h.b16 %v4350
  %v4520 = vunpack.c.l.b16 %v4351
  %v4521 = vunpack.c.h.b16 %v4351
  %v4522 = vunpack.c.l.b16 %v4352
  %v4523 = vunpack.c.h.b16 %v4352
  %v4524 = vunpack.c.l.b16 %v4353
  %v4525 = vunpack.c.h.b16 %v4353
  %v4526 = vunpack.c.l.b16 %v4354
  %v4527 = vunpack.c.h.b16 %v4354
  %v4528 = vunpack.c.l.b16 %v4355
  %v4529 = vunpack.c.h.b16 %v4355
  %v4530 = vunpack.c.l.b16 %v4356
  %v4531 = vunpack.c.h.b16 %v4356
  %v4532 = vunpack.c.l.b16 %v4357
  %v4533 = vunpack.c.h.b16 %v4357
  %v4534 = vunpack.c.l.b16 %v4358
  %v4535 = vunpack.c.h.b16 %v4358
  %v4536 = vunpack.c.l.b16 %v4359
  %v4537 = vunpack.c.h.b16 %v4359
  %v4538 = vunpack.c.l.b16 %v4360
  %v4539 = vunpack.c.h.b16 %v4360
  %v4540 = vunpack.c.l.b16 %v4361
  %v4541 = vunpack.c.h.b16 %v4361
  %v4542 = vunpack.c.l.b16 %v4362
  %v4543 = vunpack.c.h.b16 %v4362
  %v4544 = vunpack.c.l.b16 %v4363
  %v4545 = vunpack.c.h.b16 %v4363
  %v4546 = vunpack.c.l.b16 %v4364
  %v4547 = vunpack.c.h.b16 %v4364
  %v4548 = vunpack.c.l.b16 %v4365
  %v4549 = vunpack.c.h.b16 %v4365
  %v4550 = vunpack.c.l.b16 %v4366
  %v4551 = vunpack.c.h.b16 %v4366
  %v4552 = vunpack.c.l.b16 %v4367
  %v4553 = vunpack.c.h.b16 %v4367
  %v4554 = vunpack.c.l.b16 %v4368
  %v4555 = vunpack.c.h.b16 %v4368
  %v4556 = vunpack.c.l.b16 %v4369
  %v4557 = vunpack.c.h.b16 %v4369
  %v4558 = vunpack.c.l.b16 %v4370
  %v4559 = vunpack.c.h.b16 %v4370
  %v4560 = vunpack.c.l.b16 %v4371
  %v4561 = vunpack.c.h.b16 %v4371
  %v4562 = vunpack.c.l.b16 %v4372
  %v4563 = vunpack.c.h.b16 %v4372
  %v4564 = vunpack.c.l.b16 %v4373
  %v4565 = vunpack.c.h.b16 %v4373
  %v4566 = vunpack.c.l.b16 %v4374
  %v4567 = vunpack.c.h.b16 %v4374
  %v4568 = vunpack.c.l.b16 %v4375
  %v4569 = vunpack.c.h.b16 %v4375
  %v4570 = vunpack.c.l.b16 %v4376
  %v4571 = vunpack.c.h.b16 %v4376
  %v4572 = vunpack.c.l.b16 %v4377
  %v4573 = vunpack.c.h.b16 %v4377
  %v4574 = vunpack.c.l.b16 %v4378
  %v4575 = vunpack.c.h.b16 %v4378
  %v4576 = vunpack.c.l.b16 %v4379
  %v4577 = vunpack.c.h.b16 %v4379
  %v4578 = vunpack.c.l.b16 %v4380
  %v4579 = vunpack.c.h.b16 %v4380
  %v4580 = vunpack.c.l.b16 %v4381
  %v4581 = vunpack.c.h.b16 %v4381
  %v4582 = vunpack.c.l.b16 %v4382
  %v4583 = vunpack.c.h.b16 %v4382
  %v4584 = vunpack.c.l.b16 %v4383
  %v4585 = vunpack.c.h.b16 %v4383
  %v4586 = vunpack.c.l.b16 %v4384
  %v4587 = vunpack.c.h.b16 %v4384
  %v4588 = vunpack.c.l.b16 %v4385
  %v4589 = vunpack.c.h.b16 %v4385
  %v4590 = vunpack.c.l.b16 %v4386
  %v4591 = vunpack.c.h.b16 %v4386
  %v4592 = vunpack.c.l.b16 %v4387
  %v4593 = vunpack.c.h.b16 %v4387
  %v4594 = vunpack.c.l.b16 %v4388
  %v4595 = vunpack.c.h.b16 %v4388
  %v4596 = vunpack.c.l.b16 %v4389
  %v4597 = vunpack.c.h.b16 %v4389
  %v4598 = vunpack.c.l.b16 %v4390
  %v4599 = vunpack.c.h.b16 %v4390
  %v4600 = vunpack.c.l.b16 %v4391
  %v4601 = vunpack.c.h.b16 %v4391
  %v4602 = vunpack.c.l.b16 %v4392
  %v4603 = vunpack.c.h.b16 %v4392
  %v4604 = vunpack.c.l.b16 %v4393
  %v4605 = vunpack.c.h.b16 %v4393
  %v4606 = vunpack.c.l.b16 %v4394
  %v4607 = vunpack.c.h.b16 %v4394
  %v4608 = vunpack.c.l.b16 %v4395
  %v4609 = vunpack.c.h.b16 %v4395
  %v4610 = vunpack.c.l.b16 %v4396
  %v4611 = vunpack.c.h.b16 %v4396
  %v4612 = vunpack.c.l.b16 %v4397
  %v4613 = vunpack.c.h.b16 %v4397
  %v4614 = vunpack.c.l.b16 %v4398
  %v4615 = vunpack.c.h.b16 %v4398
  %v4616 = vunpack.c.l.b16 %v4399
  %v4617 = vunpack.c.h.b16 %v4399
  %v4618 = vunpack.c.l.b16 %v4400
  %v4619 = vunpack.c.h.b16 %v4400
  %v4620 = vunpack.c.l.b16 %v4401
  %v4621 = vunpack.c.h.b16 %v4401
  %v4622 = vunpack.c.l.b16 %v4402
  %v4623 = vunpack.c.h.b16 %v4402
  %v4624 = vunpack.c.l.b16 %v4403
  %v4625 = vunpack.c.h.b16 %v4403
  %v4626 = vunpack.c.l.b16 %v4404
  %v4627 = vunpack.c.h.b16 %v4404
  %v4628 = vunpack.c.l.b16 %v4405
  %v4629 = vunpack.c.h.b16 %v4405
  %v4630 = vunpack.c.l.b16 %v4406
  %v4631 = vunpack.c.h.b16 %v4406
  %v4632 = vunpack.c.l.b16 %v4407
  %v4633 = vunpack.c.h.b16 %v4407
  %v4634 = vunpack.c.l.b16 %v4408
  %v4635 = vunpack.c.h.b16 %v4408
  %v4636 = vunpack.c.l.b16 %v4409
  %v4637 = vunpack.c.h.b16 %v4409
  %v4638 = vpack.c.b16 %v4496, %v4494
  %v4639 = vpack.c.b16 %v4497, %v4495
  %v4640 = vpack.c.b16 %v4500, %v4498
  %v4641 = vpack.c.b16 %v4501, %v4499
  %v4642 = vpack.c.b16 %v4504, %v4502
  %v4643 = vpack.c.b16 %v4505, %v4503
  %v4644 = vpack.c.b16 %v4508, %v4506
  %v4645 = vpack.c.b16 %v4509, %v4507
  %v4646 = vpack.c.b16 %v4512, %v4510
  %v4647 = vpack.c.b16 %v4513, %v4511
  %v4648 = vpack.c.b16 %v4516, %v4514
  %v4649 = vpack.c.b16 %v4517, %v4515
  %v4650 = vpack.c.b16 %v4520, %v4518
  %v4651 = vpack.c.b16 %v4521, %v4519
  %v4652 = vpack.c.b16 %v4524, %v4522
  %v4653 = vpack.c.b16 %v4525, %v4523
  %v4654 = vpack.c.b16 %v4528, %v4526
  %v4655 = vpack.c.b16 %v4529, %v4527
  %v4656 = vpack.c.b16 %v4532, %v4530
  %v4657 = vpack.c.b16 %v4533, %v4531
  %v4658 = vpack.c.b16 %v4536, %v4534
  %v4659 = vpack.c.b16 %v4537, %v4535
  %v4660 = vpack.c.b16 %v4540, %v4538
  %v4661 = vpack.c.b16 %v4541, %v4539
  %v4662 = vpack.c.b16 %v4544, %v4542
  %v4663 = vpack.c.b16 %v4545, %v4543
  %v4664 = vpack.c.b16 %v4548, %v4546
  %v4665 = vpack.c.b16 %v4549, %v4547
  %v4666 = vpack.c.b16 %v4552, %v4550
  %v4667 = vpack.c.b16 %v4553, %v4551
  %v4668 = vpack.c.b16 %v4556, %v4554
  %v4669 = vpack.c.b16 %v4557, %v4555
  %v4670 = vpack.c.b16 %v4560, %v4558
  %v4671 = vpack.c.b16 %v4561, %v4559
  %v4672 = vpack.c.b16 %v4564, %v4562
  %v4673 = vpack.c.b16 %v4565, %v4563
  %v4674 = vpack.c.b16 %v4568, %v4566
  %v4675 = vpack.c.b16 %v4569, %v4567
  %v4676 = vpack.c.b16 %v4572, %v4570
  %v4677 = vpack.c.b16 %v4573, %v4571
  %v4678 = vpack.c.b16 %v4576, %v4574
  %v4679 = vpack.c.b16 %v4577, %v4575
  %v4680 = vpack.c.b16 %v4580, %v4578
  %v4681 = vpack.c.b16 %v4581, %v4579
  %v4682 = vpack.c.b16 %v4584, %v4582
  %v4683 = vpack.c.b16 %v4585, %v4583
  %v4684 = vpack.c.b16 %v4588, %v4586
  %v4685 = vpack.c.b16 %v4589, %v4587
  %v4686 = vpack.c.b16 %v4592, %v4590
  %v4687 = vpack.c.b16 %v4593, %v4591
  %v4688 = vpack.c.b16 %v4596, %v4594
  %v4689 = vpack.c.b16 %v4597, %v4595
  %v4690 = vpack.c.b16 %v4600, %v4598
  %v4691 = vpack.c.b16 %v4601, %v4599
  %v4692 = vpack.c.b16 %v4604, %v4602
  %v4693 = vpack.c.b16 %v4605, %v4603
  %v4694 = vpack.c.b16 %v4608, %v4606
  %v4695 = vpack.c.b16 %v4609, %v4607
  %v4696 = vpack.c.b16 %v4612, %v4610
  %v4697 = vpack.c.b16 %v4613, %v4611
  %v4698 = vpack.c.b16 %v4616, %v4614
  %v4699 = vpack.c.b16 %v4617, %v4615
  %v4700 = vpack.c.b16 %v4620, %v4618
  %v4701 = vpack.c.b16 %v4621, %v4619
  %v4702 = vpack.c.b16 %v4624, %v4622
  %v4703 = vpack.c.b16 %v4625, %v4623
  %v4704 = vpack.c.b16 %v4628, %v4626
  %v4705 = vpack.c.b16 %v4629, %v4627
  %v4706 = vpack.c.b16 %v4632, %v4630
  %v4707 = vpack.c.b16 %v4633, %v4631
  %v4708 = vpack.c.b16 %v4636, %v4634
  %v4709 = vpack.c.b16 %v4637, %v4635
  %v4783 = vsel %vm1055, %v4309, 0
  %4785 = vmatprep.subr.bf16.mxu0 %v4653
  %4786 = vmatpush1.bf16.msra.mxu0 %v4652
  %4787 = vmatprep.subr.bf16.mxu0 %v4651
  %4788 = vmatpush1.bf16.msra.mxu0 %v4650
  %4789 = vmatprep.subr.bf16.mxu0 %v4649
  %4790 = vmatpush1.bf16.msra.mxu0 %v4648
  %4791 = vmatprep.subr.bf16.mxu0 %v4647
  %4792 = vmatpush1.bf16.msra.mxu0 %v4646
  %4793 = vmatprep.subr.bf16.mxu0 %v4645
  %4794 = vmatpush1.bf16.msra.mxu0 %v4644
  %4795 = vmatprep.subr.bf16.mxu0 %v4643
  %4796 = vmatpush1.bf16.msra.mxu0 %v4642
  %4797 = vmatprep.subr.bf16.mxu0 %v4641
  %4798 = vmatpush1.bf16.msra.mxu0 %v4640
  %4799 = vmatprep.subr.bf16.mxu0 %v4639
  %4800 = vmatpush1.bf16.msra.mxu0 %v4638
  %4801 = vmatprep.subr.bf16.mxu0 %v4669
  %4802 = vmatpush2.bf16.msra.mxu0 %v4668
  %4803 = vmatprep.subr.bf16.mxu0 %v4667
  %4804 = vmatpush2.bf16.msra.mxu0 %v4666
  %4805 = vmatprep.subr.bf16.mxu0 %v4665
  %4806 = vmatpush2.bf16.msra.mxu0 %v4664
  %4807 = vmatprep.subr.bf16.mxu0 %v4663
  %4808 = vmatpush2.bf16.msra.mxu0 %v4662
  %4809 = vmatprep.subr.bf16.mxu0 %v4661
  %4810 = vmatpush2.bf16.msra.mxu0 %v4660
  %4811 = vmatprep.subr.bf16.mxu0 %v4659
  %4812 = vmatpush2.bf16.msra.mxu0 %v4658
  %4813 = vmatprep.subr.bf16.mxu0 %v4657
  %4814 = vmatpush2.bf16.msra.mxu0 %v4656
  %4815 = vmatprep.subr.bf16.mxu0 %v4655
  %4816 = vmatpush2.bf16.msra.mxu0 %v4654
  %4817 = vmatprep.mubr.bf16.mxu0 %v4328
  %4818 = vmatmul.mubr.bf16.gmra.mxu0 %v4324
  %v4819 = vpop.f32.mrf.mxu0
  %v4820 = vadd.f32 %v4415, %v4819
  %v4821 = vpop.f32.mrf.mxu0
  %v4822 = vadd.f32 %v4419, %v4821
  %v4823 = vpop.f32.mrf.mxu0
  %v4824 = vpop.f32.mrf.mxu0
  %4825 = vdwg.mxu0
  %4826 = vmatprep.subr.bf16.mxu0 %v4685
  %4827 = vmatpush1.bf16.msra.mxu0 %v4684
  %4828 = vmatprep.subr.bf16.mxu0 %v4683
  %4829 = vmatpush1.bf16.msra.mxu0 %v4682
  %4830 = vmatprep.subr.bf16.mxu0 %v4681
  %4831 = vmatpush1.bf16.msra.mxu0 %v4680
  %4832 = vmatprep.subr.bf16.mxu0 %v4679
  %4833 = vmatpush1.bf16.msra.mxu0 %v4678
  %4834 = vmatprep.subr.bf16.mxu0 %v4677
  %4835 = vmatpush1.bf16.msra.mxu0 %v4676
  %4836 = vmatprep.subr.bf16.mxu0 %v4675
  %4837 = vmatpush1.bf16.msra.mxu0 %v4674
  %4838 = vmatprep.subr.bf16.mxu0 %v4673
  %4839 = vmatpush1.bf16.msra.mxu0 %v4672
  %4840 = vmatprep.subr.bf16.mxu0 %v4671
  %4841 = vmatpush1.bf16.msra.mxu0 %v4670
  %4842 = vmatprep.subr.bf16.mxu0 %v4701
  %4843 = vmatpush2.bf16.msra.mxu0 %v4700
  %4844 = vmatprep.subr.bf16.mxu0 %v4699
  %4845 = vmatpush2.bf16.msra.mxu0 %v4698
  %4846 = vmatprep.subr.bf16.mxu0 %v4697
  %4847 = vmatpush2.bf16.msra.mxu0 %v4696
  %4848 = vmatprep.subr.bf16.mxu0 %v4695
  %4849 = vmatpush2.bf16.msra.mxu0 %v4694
  %4850 = vmatprep.subr.bf16.mxu0 %v4693
  %4851 = vmatpush2.bf16.msra.mxu0 %v4692
  %4852 = vmatprep.subr.bf16.mxu0 %v4691
  %4853 = vmatpush2.bf16.msra.mxu0 %v4690
  %4854 = vmatprep.subr.bf16.mxu0 %v4689
  %4855 = vmatpush2.bf16.msra.mxu0 %v4688
  %4856 = vmatprep.subr.bf16.mxu0 %v4687
  %4857 = vmatpush2.bf16.msra.mxu0 %v4686
  %4858 = vmatprep.mubr.bf16.mxu0 %v4336
  %4859 = vmatmul.mubr.bf16.gmra.mxu0 %v4332
  %v4860 = vpop.f32.mrf.mxu0
  %v4861 = vadd.f32 %v4820, %v4860
  %v4862 = vpop.f32.mrf.mxu0
  %v4863 = vadd.f32 %v4822, %v4862
  %v4864 = vpop.f32.mrf.mxu0
  %v4865 = vpop.f32.mrf.mxu0
  %4866 = vdwg.mxu0
  %4867 = vmatprep.subr.bf16.mxu0 0
  %4868 = vmatpush1.bf16.msra.mxu0 0
  %4869 = vmatprep.subr.bf16.mxu0 0
  %4870 = vmatpush1.bf16.msra.mxu0 0
  %4871 = vmatprep.subr.bf16.mxu0 0
  %4872 = vmatpush1.bf16.msra.mxu0 0
  %4873 = vmatprep.subr.bf16.mxu0 0
  %4874 = vmatpush1.bf16.msra.mxu0 0
  %4875 = vmatprep.subr.bf16.mxu0 %v4709
  %4876 = vmatpush1.bf16.msra.mxu0 %v4708
  %4877 = vmatprep.subr.bf16.mxu0 %v4707
  %4878 = vmatpush1.bf16.msra.mxu0 %v4706
  %4879 = vmatprep.subr.bf16.mxu0 %v4705
  %4880 = vmatpush1.bf16.msra.mxu0 %v4704
  %4881 = vmatprep.subr.bf16.mxu0 %v4703
  %4882 = vmatpush1.bf16.msra.mxu0 %v4702
  %4883 = vmatprep.subr.bf16.mxu0 0
  %4884 = vmatpush2.bf16.msra.mxu0 0
  %4885 = vmatprep.subr.bf16.mxu0 0
  %4886 = vmatpush2.bf16.msra.mxu0 0
  %4887 = vmatprep.subr.bf16.mxu0 0
  %4888 = vmatpush2.bf16.msra.mxu0 0
  %4889 = vmatprep.subr.bf16.mxu0 0
  %4890 = vmatpush2.bf16.msra.mxu0 0
  %4891 = vmatprep.subr.bf16.mxu0 0
  %4892 = vmatpush2.bf16.msra.mxu0 0
  %4893 = vmatprep.subr.bf16.mxu0 0
  %4894 = vmatpush2.bf16.msra.mxu0 0
  %4895 = vmatprep.subr.bf16.mxu0 0
  %4896 = vmatpush2.bf16.msra.mxu0 0
  %4897 = vmatprep.subr.bf16.mxu0 0
  %4898 = vmatpush2.bf16.msra.mxu0 0
  %4899 = vmatprep.mubr.bf16.mxu0 0
  %4900 = vmatmul.mubr.bf16.gmra.mxu0 %v4783
  %v4901 = vpop.f32.mrf.mxu0
  %v4902 = vadd.f32 %v4861, %v4901
  %v4903 = vpop.f32.mrf.mxu0
  %v4904 = vadd.f32 %v4863, %v4903
  %v4905 = vpop.f32.mrf.mxu0
  %v4906 = vpop.f32.mrf.mxu0
  %4907 = vdwg.mxu0
  %v4908 = vmax.f32 %v4902, 0.0
  %v4909 = vpack.c.bf16 %v4908, %v4908
  %v4910 = vld [vmem:[%s18] sm:$0x1]
  %vm4911 = vcmask 15360
  %v4913 = vsel %vm4911, %v4910, 0
  %v4916 = vsel %vm273, %v4909, 0
  %4918 = vmatprep.subr.bf16.mxu0 0
  %4919 = vmatpush1.bf16.msra.mxu0 0
  %4920 = vmatprep.subr.bf16.mxu0 0
  %4921 = vmatpush1.bf16.msra.mxu0 0
  %4922 = vmatprep.subr.bf16.mxu0 0
  %4923 = vmatpush1.bf16.msra.mxu0 0
  %4924 = vmatprep.subr.bf16.mxu0 0
  %4925 = vmatpush1.bf16.msra.mxu0 0
  %4926 = vmatprep.subr.bf16.mxu0 0
  %4927 = vmatpush1.bf16.msra.mxu0 0
  %4928 = vmatprep.subr.bf16.mxu0 0
  %4929 = vmatpush1.bf16.msra.mxu0 0
  %4930 = vmatprep.subr.bf16.mxu0 0
  %4931 = vmatpush1.bf16.msra.mxu0 0
  %4932 = vmatprep.subr.bf16.mxu0 0
  %4933 = vmatpush1.bf16.msra.mxu0 %v4916
  %4934 = vmatprep.subr.bf16.mxu0 0
  %4935 = vmatpush2.bf16.msra.mxu0 0
  %4936 = vmatprep.subr.bf16.mxu0 0
  %4937 = vmatpush2.bf16.msra.mxu0 0
  %4938 = vmatprep.subr.bf16.mxu0 0
  %4939 = vmatpush2.bf16.msra.mxu0 0
  %4940 = vmatprep.subr.bf16.mxu0 0
  %4941 = vmatpush2.bf16.msra.mxu0 0
  %4942 = vmatprep.subr.bf16.mxu0 0
  %4943 = vmatpush2.bf16.msra.mxu0 0
  %4944 = vmatprep.subr.bf16.mxu0 0
  %4945 = vmatpush2.bf16.msra.mxu0 0
  %4946 = vmatprep.subr.bf16.mxu0 0
  %4947 = vmatpush2.bf16.msra.mxu0 0
  %4948 = vmatprep.subr.bf16.mxu0 0
  %4949 = vmatpush2.bf16.msra.mxu0 0
  %4950 = vmatprep.mubr.bf16.mxu0 0
  %4951 = vmatmul.mubr.bf16.gmra.mxu0 %v4913
  %v4952 = vpop.f32.mrf.mxu0
  %v4953 = vadd.f32 0.0, %v4952
  %v4954 = vpop.f32.mrf.mxu0
  %v4955 = vpop.f32.mrf.mxu0
  %v4956 = vpop.f32.mrf.mxu0
  %4957 = vdwg.mxu0
  %v4958 = vpack.c.bf16 %v4953, %v4953
  %s4959 = scalar_lea.vmem %s18, 1
  %v4960 = vld [vmem:[%s4959] sm:$0x1]
  %v4962 = vsel %vm4911, %v4960, 0
  %4964 = vmatprep.subr.bf16.mxu0 0
  %4965 = vmatpush1.bf16.msra.mxu0 0
  %4966 = vmatprep.subr.bf16.mxu0 0
  %4967 = vmatpush1.bf16.msra.mxu0 0
  %4968 = vmatprep.subr.bf16.mxu0 0
  %4969 = vmatpush1.bf16.msra.mxu0 0
  %4970 = vmatprep.subr.bf16.mxu0 0
  %4971 = vmatpush1.bf16.msra.mxu0 0
  %4972 = vmatprep.subr.bf16.mxu0 0
  %4973 = vmatpush1.bf16.msra.mxu0 0
  %4974 = vmatprep.subr.bf16.mxu0 0
  %4975 = vmatpush1.bf16.msra.mxu0 0
  %4976 = vmatprep.subr.bf16.mxu0 0
  %4977 = vmatpush1.bf16.msra.mxu0 0
  %4978 = vmatprep.subr.bf16.mxu0 0
  %4979 = vmatpush1.bf16.msra.mxu0 %v4916
  %4980 = vmatprep.subr.bf16.mxu0 0
  %4981 = vmatpush2.bf16.msra.mxu0 0
  %4982 = vmatprep.subr.bf16.mxu0 0
  %4983 = vmatpush2.bf16.msra.mxu0 0
  %4984 = vmatprep.subr.bf16.mxu0 0
  %4985 = vmatpush2.bf16.msra.mxu0 0
  %4986 = vmatprep.subr.bf16.mxu0 0
  %4987 = vmatpush2.bf16.msra.mxu0 0
  %4988 = vmatprep.subr.bf16.mxu0 0
  %4989 = vmatpush2.bf16.msra.mxu0 0
  %4990 = vmatprep.subr.bf16.mxu0 0
  %4991 = vmatpush2.bf16.msra.mxu0 0
  %4992 = vmatprep.subr.bf16.mxu0 0
  %4993 = vmatpush2.bf16.msra.mxu0 0
  %4994 = vmatprep.subr.bf16.mxu0 0
  %4995 = vmatpush2.bf16.msra.mxu0 0
  %4996 = vmatprep.mubr.bf16.mxu0 0
  %4997 = vmatmul.mubr.bf16.gmra.mxu0 %v4962
  %v4998 = vpop.f32.mrf.mxu0
  %v4999 = vadd.f32 0.0, %v4998
  %v5000 = vpop.f32.mrf.mxu0
  %v5001 = vpop.f32.mrf.mxu0
  %v5002 = vpop.f32.mrf.mxu0
  %5003 = vdwg.mxu0
  %v5004 = vpack.c.bf16 %v4999, %v4999
  %s5005 = scalar_lea.vmem %s18, 2
  %v5006 = vld [vmem:[%s5005] sm:$0x1]
  %v5008 = vsel %vm4911, %v5006, 0
  %5010 = vmatprep.subr.bf16.mxu0 0
  %5011 = vmatpush1.bf16.msra.mxu0 0
  %5012 = vmatprep.subr.bf16.mxu0 0
  %5013 = vmatpush1.bf16.msra.mxu0 0
  %5014 = vmatprep.subr.bf16.mxu0 0
  %5015 = vmatpush1.bf16.msra.mxu0 0
  %5016 = vmatprep.subr.bf16.mxu0 0
  %5017 = vmatpush1.bf16.msra.mxu0 0
  %5018 = vmatprep.subr.bf16.mxu0 0
  %5019 = vmatpush1.bf16.msra.mxu0 0
  %5020 = vmatprep.subr.bf16.mxu0 0
  %5021 = vmatpush1.bf16.msra.mxu0 0
  %5022 = vmatprep.subr.bf16.mxu0 0
  %5023 = vmatpush1.bf16.msra.mxu0 0
  %5024 = vmatprep.subr.bf16.mxu0 0
  %5025 = vmatpush1.bf16.msra.mxu0 %v4916
  %5026 = vmatprep.subr.bf16.mxu0 0
  %5027 = vmatpush2.bf16.msra.mxu0 0
  %5028 = vmatprep.subr.bf16.mxu0 0
  %5029 = vmatpush2.bf16.msra.mxu0 0
  %5030 = vmatprep.subr.bf16.mxu0 0
  %5031 = vmatpush2.bf16.msra.mxu0 0
  %5032 = vmatprep.subr.bf16.mxu0 0
  %5033 = vmatpush2.bf16.msra.mxu0 0
  %5034 = vmatprep.subr.bf16.mxu0 0
  %5035 = vmatpush2.bf16.msra.mxu0 0
  %5036 = vmatprep.subr.bf16.mxu0 0
  %5037 = vmatpush2.bf16.msra.mxu0 0
  %5038 = vmatprep.subr.bf16.mxu0 0
  %5039 = vmatpush2.bf16.msra.mxu0 0
  %5040 = vmatprep.subr.bf16.mxu0 0
  %5041 = vmatpush2.bf16.msra.mxu0 0
  %5042 = vmatprep.mubr.bf16.mxu0 0
  %5043 = vmatmul.mubr.bf16.gmra.mxu0 %v5008
  %v5044 = vpop.f32.mrf.mxu0
  %v5045 = vadd.f32 0.0, %v5044
  %v5046 = vpop.f32.mrf.mxu0
  %v5047 = vpop.f32.mrf.mxu0
  %v5048 = vpop.f32.mrf.mxu0
  %5049 = vdwg.mxu0
  %v5050 = vpack.c.bf16 %v5045, %v5045
  %s5051 = scalar_lea.vmem %s18, 3
  %v5052 = vld [vmem:[%s5051] sm:$0x1]
  %v5054 = vsel %vm4911, %v5052, 0
  %5056 = vmatprep.subr.bf16.mxu0 0
  %5057 = vmatpush1.bf16.msra.mxu0 0
  %5058 = vmatprep.subr.bf16.mxu0 0
  %5059 = vmatpush1.bf16.msra.mxu0 0
  %5060 = vmatprep.subr.bf16.mxu0 0
  %5061 = vmatpush1.bf16.msra.mxu0 0
  %5062 = vmatprep.subr.bf16.mxu0 0
  %5063 = vmatpush1.bf16.msra.mxu0 0
  %5064 = vmatprep.subr.bf16.mxu0 0
  %5065 = vmatpush1.bf16.msra.mxu0 0
  %5066 = vmatprep.subr.bf16.mxu0 0
  %5067 = vmatpush1.bf16.msra.mxu0 0
  %5068 = vmatprep.subr.bf16.mxu0 0
  %5069 = vmatpush1.bf16.msra.mxu0 0
  %5070 = vmatprep.subr.bf16.mxu0 0
  %5071 = vmatpush1.bf16.msra.mxu0 %v4916
  %5072 = vmatprep.subr.bf16.mxu0 0
  %5073 = vmatpush2.bf16.msra.mxu0 0
  %5074 = vmatprep.subr.bf16.mxu0 0
  %5075 = vmatpush2.bf16.msra.mxu0 0
  %5076 = vmatprep.subr.bf16.mxu0 0
  %5077 = vmatpush2.bf16.msra.mxu0 0
  %5078 = vmatprep.subr.bf16.mxu0 0
  %5079 = vmatpush2.bf16.msra.mxu0 0
  %5080 = vmatprep.subr.bf16.mxu0 0
  %5081 = vmatpush2.bf16.msra.mxu0 0
  %5082 = vmatprep.subr.bf16.mxu0 0
  %5083 = vmatpush2.bf16.msra.mxu0 0
  %5084 = vmatprep.subr.bf16.mxu0 0
  %5085 = vmatpush2.bf16.msra.mxu0 0
  %5086 = vmatprep.subr.bf16.mxu0 0
  %5087 = vmatpush2.bf16.msra.mxu0 0
  %5088 = vmatprep.mubr.bf16.mxu0 0
  %5089 = vmatmul.mubr.bf16.gmra.mxu0 %v5054
  %v5090 = vpop.f32.mrf.mxu0
  %v5091 = vadd.f32 0.0, %v5090
  %v5092 = vpop.f32.mrf.mxu0
  %v5093 = vpop.f32.mrf.mxu0
  %v5094 = vpop.f32.mrf.mxu0
  %5095 = vdwg.mxu0
  %v5096 = vpack.c.bf16 %v5091, %v5091
  %s5097 = scalar_lea.vmem %s18, 4
  %v5098 = vld [vmem:[%s5097] sm:$0x1]
  %v5100 = vsel %vm4911, %v5098, 0
  %5102 = vmatprep.subr.bf16.mxu0 0
  %5103 = vmatpush1.bf16.msra.mxu0 0
  %5104 = vmatprep.subr.bf16.mxu0 0
  %5105 = vmatpush1.bf16.msra.mxu0 0
  %5106 = vmatprep.subr.bf16.mxu0 0
  %5107 = vmatpush1.bf16.msra.mxu0 0
  %5108 = vmatprep.subr.bf16.mxu0 0
  %5109 = vmatpush1.bf16.msra.mxu0 0
  %5110 = vmatprep.subr.bf16.mxu0 0
  %5111 = vmatpush1.bf16.msra.mxu0 0
  %5112 = vmatprep.subr.bf16.mxu0 0
  %5113 = vmatpush1.bf16.msra.mxu0 0
  %5114 = vmatprep.subr.bf16.mxu0 0
  %5115 = vmatpush1.bf16.msra.mxu0 0
  %5116 = vmatprep.subr.bf16.mxu0 0
  %5117 = vmatpush1.bf16.msra.mxu0 %v4916
  %5118 = vmatprep.subr.bf16.mxu0 0
  %5119 = vmatpush2.bf16.msra.mxu0 0
  %5120 = vmatprep.subr.bf16.mxu0 0
  %5121 = vmatpush2.bf16.msra.mxu0 0
  %5122 = vmatprep.subr.bf16.mxu0 0
  %5123 = vmatpush2.bf16.msra.mxu0 0
  %5124 = vmatprep.subr.bf16.mxu0 0
  %5125 = vmatpush2.bf16.msra.mxu0 0
  %5126 = vmatprep.subr.bf16.mxu0 0
  %5127 = vmatpush2.bf16.msra.mxu0 0
  %5128 = vmatprep.subr.bf16.mxu0 0
  %5129 = vmatpush2.bf16.msra.mxu0 0
  %5130 = vmatprep.subr.bf16.mxu0 0
  %5131 = vmatpush2.bf16.msra.mxu0 0
  %5132 = vmatprep.subr.bf16.mxu0 0
  %5133 = vmatpush2.bf16.msra.mxu0 0
  %5134 = vmatprep.mubr.bf16.mxu0 0
  %5135 = vmatmul.mubr.bf16.gmra.mxu0 %v5100
  %v5136 = vpop.f32.mrf.mxu0
  %v5137 = vadd.f32 0.0, %v5136
  %v5138 = vpop.f32.mrf.mxu0
  %v5139 = vpop.f32.mrf.mxu0
  %v5140 = vpop.f32.mrf.mxu0
  %5141 = vdwg.mxu0
  %v5142 = vpack.c.bf16 %v5137, %v5137
  %s5143 = scalar_lea.vmem %s18, 5
  %v5144 = vld [vmem:[%s5143] sm:$0x1]
  %v5146 = vsel %vm4911, %v5144, 0
  %5148 = vmatprep.subr.bf16.mxu0 0
  %5149 = vmatpush1.bf16.msra.mxu0 0
  %5150 = vmatprep.subr.bf16.mxu0 0
  %5151 = vmatpush1.bf16.msra.mxu0 0
  %5152 = vmatprep.subr.bf16.mxu0 0
  %5153 = vmatpush1.bf16.msra.mxu0 0
  %5154 = vmatprep.subr.bf16.mxu0 0
  %5155 = vmatpush1.bf16.msra.mxu0 0
  %5156 = vmatprep.subr.bf16.mxu0 0
  %5157 = vmatpush1.bf16.msra.mxu0 0
  %5158 = vmatprep.subr.bf16.mxu0 0
  %5159 = vmatpush1.bf16.msra.mxu0 0
  %5160 = vmatprep.subr.bf16.mxu0 0
  %5161 = vmatpush1.bf16.msra.mxu0 0
  %5162 = vmatprep.subr.bf16.mxu0 0
  %5163 = vmatpush1.bf16.msra.mxu0 %v4916
  %5164 = vmatprep.subr.bf16.mxu0 0
  %5165 = vmatpush2.bf16.msra.mxu0 0
  %5166 = vmatprep.subr.bf16.mxu0 0
  %5167 = vmatpush2.bf16.msra.mxu0 0
  %5168 = vmatprep.subr.bf16.mxu0 0
  %5169 = vmatpush2.bf16.msra.mxu0 0
  %5170 = vmatprep.subr.bf16.mxu0 0
  %5171 = vmatpush2.bf16.msra.mxu0 0
  %5172 = vmatprep.subr.bf16.mxu0 0
  %5173 = vmatpush2.bf16.msra.mxu0 0
  %5174 = vmatprep.subr.bf16.mxu0 0
  %5175 = vmatpush2.bf16.msra.mxu0 0
  %5176 = vmatprep.subr.bf16.mxu0 0
  %5177 = vmatpush2.bf16.msra.mxu0 0
  %5178 = vmatprep.subr.bf16.mxu0 0
  %5179 = vmatpush2.bf16.msra.mxu0 0
  %5180 = vmatprep.mubr.bf16.mxu0 0
  %5181 = vmatmul.mubr.bf16.gmra.mxu0 %v5146
  %v5182 = vpop.f32.mrf.mxu0
  %v5183 = vadd.f32 0.0, %v5182
  %v5184 = vpop.f32.mrf.mxu0
  %v5185 = vpop.f32.mrf.mxu0
  %v5186 = vpop.f32.mrf.mxu0
  %5187 = vdwg.mxu0
  %v5188 = vpack.c.bf16 %v5183, %v5183
  %s5189 = scalar_lea.vmem %s18, 6
  %v5190 = vld [vmem:[%s5189] sm:$0x1]
  %v5192 = vsel %vm4911, %v5190, 0
  %5194 = vmatprep.subr.bf16.mxu0 0
  %5195 = vmatpush1.bf16.msra.mxu0 0
  %5196 = vmatprep.subr.bf16.mxu0 0
  %5197 = vmatpush1.bf16.msra.mxu0 0
  %5198 = vmatprep.subr.bf16.mxu0 0
  %5199 = vmatpush1.bf16.msra.mxu0 0
  %5200 = vmatprep.subr.bf16.mxu0 0
  %5201 = vmatpush1.bf16.msra.mxu0 0
  %5202 = vmatprep.subr.bf16.mxu0 0
  %5203 = vmatpush1.bf16.msra.mxu0 0
  %5204 = vmatprep.subr.bf16.mxu0 0
  %5205 = vmatpush1.bf16.msra.mxu0 0
  %5206 = vmatprep.subr.bf16.mxu0 0
  %5207 = vmatpush1.bf16.msra.mxu0 0
  %5208 = vmatprep.subr.bf16.mxu0 0
  %5209 = vmatpush1.bf16.msra.mxu0 %v4916
  %5210 = vmatprep.subr.bf16.mxu0 0
  %5211 = vmatpush2.bf16.msra.mxu0 0
  %5212 = vmatprep.subr.bf16.mxu0 0
  %5213 = vmatpush2.bf16.msra.mxu0 0
  %5214 = vmatprep.subr.bf16.mxu0 0
  %5215 = vmatpush2.bf16.msra.mxu0 0
  %5216 = vmatprep.subr.bf16.mxu0 0
  %5217 = vmatpush2.bf16.msra.mxu0 0
  %5218 = vmatprep.subr.bf16.mxu0 0
  %5219 = vmatpush2.bf16.msra.mxu0 0
  %5220 = vmatprep.subr.bf16.mxu0 0
  %5221 = vmatpush2.bf16.msra.mxu0 0
  %5222 = vmatprep.subr.bf16.mxu0 0
  %5223 = vmatpush2.bf16.msra.mxu0 0
  %5224 = vmatprep.subr.bf16.mxu0 0
  %5225 = vmatpush2.bf16.msra.mxu0 0
  %5226 = vmatprep.mubr.bf16.mxu0 0
  %5227 = vmatmul.mubr.bf16.gmra.mxu0 %v5192
  %v5228 = vpop.f32.mrf.mxu0
  %v5229 = vadd.f32 0.0, %v5228
  %v5230 = vpop.f32.mrf.mxu0
  %v5231 = vpop.f32.mrf.mxu0
  %v5232 = vpop.f32.mrf.mxu0
  %5233 = vdwg.mxu0
  %v5234 = vpack.c.bf16 %v5229, %v5229
  %s5235 = scalar_lea.vmem %s18, 7
  %v5236 = vld [vmem:[%s5235] sm:$0x1]
  %v5238 = vsel %vm4911, %v5236, 0
  %5240 = vmatprep.subr.bf16.mxu0 0
  %5241 = vmatpush1.bf16.msra.mxu0 0
  %5242 = vmatprep.subr.bf16.mxu0 0
  %5243 = vmatpush1.bf16.msra.mxu0 0
  %5244 = vmatprep.subr.bf16.mxu0 0
  %5245 = vmatpush1.bf16.msra.mxu0 0
  %5246 = vmatprep.subr.bf16.mxu0 0
  %5247 = vmatpush1.bf16.msra.mxu0 0
  %5248 = vmatprep.subr.bf16.mxu0 0
  %5249 = vmatpush1.bf16.msra.mxu0 0
  %5250 = vmatprep.subr.bf16.mxu0 0
  %5251 = vmatpush1.bf16.msra.mxu0 0
  %5252 = vmatprep.subr.bf16.mxu0 0
  %5253 = vmatpush1.bf16.msra.mxu0 0
  %5254 = vmatprep.subr.bf16.mxu0 0
  %5255 = vmatpush1.bf16.msra.mxu0 %v4916
  %5256 = vmatprep.subr.bf16.mxu0 0
  %5257 = vmatpush2.bf16.msra.mxu0 0
  %5258 = vmatprep.subr.bf16.mxu0 0
  %5259 = vmatpush2.bf16.msra.mxu0 0
  %5260 = vmatprep.subr.bf16.mxu0 0
  %5261 = vmatpush2.bf16.msra.mxu0 0
  %5262 = vmatprep.subr.bf16.mxu0 0
  %5263 = vmatpush2.bf16.msra.mxu0 0
  %5264 = vmatprep.subr.bf16.mxu0 0
  %5265 = vmatpush2.bf16.msra.mxu0 0
  %5266 = vmatprep.subr.bf16.mxu0 0
  %5267 = vmatpush2.bf16.msra.mxu0 0
  %5268 = vmatprep.subr.bf16.mxu0 0
  %5269 = vmatpush2.bf16.msra.mxu0 0
  %5270 = vmatprep.subr.bf16.mxu0 0
  %5271 = vmatpush2.bf16.msra.mxu0 0
  %5272 = vmatprep.mubr.bf16.mxu0 0
  %5273 = vmatmul.mubr.bf16.gmra.mxu0 %v5238
  %v5274 = vpop.f32.mrf.mxu0
  %v5275 = vadd.f32 0.0, %v5274
  %v5276 = vpop.f32.mrf.mxu0
  %v5277 = vpop.f32.mrf.mxu0
  %v5278 = vpop.f32.mrf.mxu0
  %5279 = vdwg.mxu0
  %v5280 = vpack.c.bf16 %v5275, %v5275
  %s5281 = scalar_lea.vmem %s18, 8
  %v5282 = vld [vmem:[%s5281] sm:$0x1]
  %v5284 = vsel %vm4911, %v5282, 0
  %5286 = vmatprep.subr.bf16.mxu0 0
  %5287 = vmatpush1.bf16.msra.mxu0 0
  %5288 = vmatprep.subr.bf16.mxu0 0
  %5289 = vmatpush1.bf16.msra.mxu0 0
  %5290 = vmatprep.subr.bf16.mxu0 0
  %5291 = vmatpush1.bf16.msra.mxu0 0
  %5292 = vmatprep.subr.bf16.mxu0 0
  %5293 = vmatpush1.bf16.msra.mxu0 0
  %5294 = vmatprep.subr.bf16.mxu0 0
  %5295 = vmatpush1.bf16.msra.mxu0 0
  %5296 = vmatprep.subr.bf16.mxu0 0
  %5297 = vmatpush1.bf16.msra.mxu0 0
  %5298 = vmatprep.subr.bf16.mxu0 0
  %5299 = vmatpush1.bf16.msra.mxu0 0
  %5300 = vmatprep.subr.bf16.mxu0 0
  %5301 = vmatpush1.bf16.msra.mxu0 %v4916
  %5302 = vmatprep.subr.bf16.mxu0 0
  %5303 = vmatpush2.bf16.msra.mxu0 0
  %5304 = vmatprep.subr.bf16.mxu0 0
  %5305 = vmatpush2.bf16.msra.mxu0 0
  %5306 = vmatprep.subr.bf16.mxu0 0
  %5307 = vmatpush2.bf16.msra.mxu0 0
  %5308 = vmatprep.subr.bf16.mxu0 0
  %5309 = vmatpush2.bf16.msra.mxu0 0
  %5310 = vmatprep.subr.bf16.mxu0 0
  %5311 = vmatpush2.bf16.msra.mxu0 0
  %5312 = vmatprep.subr.bf16.mxu0 0
  %5313 = vmatpush2.bf16.msra.mxu0 0
  %5314 = vmatprep.subr.bf16.mxu0 0
  %5315 = vmatpush2.bf16.msra.mxu0 0
  %5316 = vmatprep.subr.bf16.mxu0 0
  %5317 = vmatpush2.bf16.msra.mxu0 0
  %5318 = vmatprep.mubr.bf16.mxu0 0
  %5319 = vmatmul.mubr.bf16.gmra.mxu0 %v5284
  %v5320 = vpop.f32.mrf.mxu0
  %v5321 = vadd.f32 0.0, %v5320
  %v5322 = vpop.f32.mrf.mxu0
  %v5323 = vpop.f32.mrf.mxu0
  %v5324 = vpop.f32.mrf.mxu0
  %5325 = vdwg.mxu0
  %v5326 = vpack.c.bf16 %v5321, %v5321
  %v5327 = vld [vmem:[%s19] sm:$0xf]
  %v5328 = vld [vmem:[%s19 + $0x4] sm:$0xf]
  %v5329 = vld [vmem:[%s19 + $0x8] sm:$0xf]
  %v5330 = vld [vmem:[%s19 + $0xc] sm:$0xf]
  %v5331 = vld [vmem:[%s19 + $0x10] sm:$0xf]
  %v5332 = vld [vmem:[%s19 + $0x14] sm:$0xf]
  %v5333 = vld [vmem:[%s19 + $0x18] sm:$0xf]
  %v5334 = vld [vmem:[%s19 + $0x1c] sm:$0xf]
  %v5335 = vld [vmem:[%s19 + $0x20] sm:$0xf]
  %v5336 = vld [vmem:[%s19 + $0x24] sm:$0xf]
  %v5337 = vld [vmem:[%s19 + $0x28] sm:$0xf]
  %v5338 = vld [vmem:[%s19 + $0x2c] sm:$0xf]
  %v5339 = vld [vmem:[%s19 + $0x30] sm:$0xf]
  %v5340 = vld [vmem:[%s19 + $0x34] sm:$0xf]
  %v5341 = vld [vmem:[%s19 + $0x38] sm:$0xf]
  %v5342 = vld [vmem:[%s19 + $0x3c] sm:$0xf]
  %v5343 = vld [vmem:[%s19 + $0x40] sm:$0xf]
  %v5344 = vld [vmem:[%s19 + $0x44] sm:$0xf]
  %v5345 = vld [vmem:[%s19 + $0x48] sm:$0xf]
  %v5346 = vld [vmem:[%s19 + $0x4c] sm:$0xf]
  %v5347 = vld [vmem:[%s19 + $0x50] sm:$0xf]
  %v5348 = vld [vmem:[%s19 + $0x54] sm:$0xf]
  %v5349 = vld [vmem:[%s19 + $0x58] sm:$0xf]
  %v5350 = vld [vmem:[%s19 + $0x5c] sm:$0xf]
  %v5351 = vld [vmem:[%s19 + $0x60] sm:$0xf]
  %v5352 = vld [vmem:[%s19 + $0x64] sm:$0xf]
  %v5353 = vld [vmem:[%s19 + $0x68] sm:$0xf]
  %v5354 = vld [vmem:[%s19 + $0x6c] sm:$0xf]
  %v5355 = vld [vmem:[%s19 + $0x70] sm:$0xf]
  %v5356 = vld [vmem:[%s19 + $0x74] sm:$0xf]
  %v5357 = vld [vmem:[%s19 + $0x78] sm:$0xf]
  %v5358 = vld [vmem:[%s19 + $0x7c] sm:$0xf]
  %v5359 = vld [vmem:[%s19 + $0x80] sm:$0xf]
  %v5360 = vld [vmem:[%s19 + $0x84] sm:$0xf]
  %v5361 = vld [vmem:[%s19 + $0x88] sm:$0xf]
  %v5362 = vld [vmem:[%s19 + $0x8c] sm:$0xf]
  %v5363 = vld [vmem:[%s19 + $0x90] sm:$0xf]
  %v5364 = vld [vmem:[%s19 + $0x94] sm:$0xf]
  %v5365 = vld [vmem:[%s19 + $0x98] sm:$0xf]
  %v5366 = vld [vmem:[%s19 + $0x9c] sm:$0xf]
  %v5367 = vld [vmem:[%s19 + $0xa0] sm:$0xf]
  %v5368 = vld [vmem:[%s19 + $0xa4] sm:$0xf]
  %v5369 = vld [vmem:[%s19 + $0xa8] sm:$0xf]
  %v5370 = vld [vmem:[%s19 + $0xac] sm:$0xf]
  %v5371 = vld [vmem:[%s19 + $0xb0] sm:$0xf]
  %v5372 = vld [vmem:[%s19 + $0xb4] sm:$0xf]
  %v5373 = vld [vmem:[%s19 + $0xb8] sm:$0xf]
  %v5374 = vld [vmem:[%s19 + $0xbc] sm:$0xf]
  %v5375 = vld [vmem:[%s19 + $0xc0] sm:$0xf]
  %v5376 = vld [vmem:[%s19 + $0xc4] sm:$0xf]
  %v5377 = vld [vmem:[%s19 + $0xc8] sm:$0xf]
  %v5378 = vld [vmem:[%s19 + $0xcc] sm:$0xf]
  %v5379 = vld [vmem:[%s19 + $0xd0] sm:$0xf]
  %v5380 = vld [vmem:[%s19 + $0xd4] sm:$0xf]
  %v5381 = vld [vmem:[%s19 + $0xd8] sm:$0xf]
  %v5382 = vld [vmem:[%s19 + $0xdc] sm:$0xf]
  %v5383 = vld [vmem:[%s19 + $0xe0] sm:$0xf]
  %v5384 = vld [vmem:[%s19 + $0xe4] sm:$0xf]
  %v5385 = vld [vmem:[%s19 + $0xe8] sm:$0xf]
  %v5386 = vld [vmem:[%s19 + $0xec] sm:$0xf]
  %v5387 = vld [vmem:[%s19 + $0xf0] sm:$0xf]
  %v5388 = vld [vmem:[%s19 + $0xf4] sm:$0xf]
  %v5389 = vld [vmem:[%s19 + $0xf8] sm:$0xf]
  %v5390 = vld [vmem:[%s19 + $0xfc] sm:$0xf]
  %v5391 = vld [vmem:[%s19 + $0x100] sm:$0xf]
  %v5392 = vld [vmem:[%s19 + $0x104] sm:$0xf]
  %v5393 = vld [vmem:[%s19 + $0x108] sm:$0xf]
  %v5394 = vld [vmem:[%s19 + $0x10c] sm:$0xf]
  %v5395 = vld [vmem:[%s19 + $0x110] sm:$0xf]
  %v5396 = vld [vmem:[%s19 + $0x114] sm:$0xf]
  %v5397 = vld [vmem:[%s19 + $0x118] sm:$0xf]
  %v5398 = vld [vmem:[%s19 + $0x11c] sm:$0xf]
  %v5399 = vld [vmem:[%s19 + $0x120] sm:$0xf]
  %v5400 = vld [vmem:[%s19 + $0x124] sm:$0xf]
  %v5401 = vld [vmem:[%s19 + $0x128] sm:$0xf]
  %v5402 = vld [vmem:[%s19 + $0x12c] sm:$0xf]
  %v5403 = vld [vmem:[%s19 + $0x130] sm:$0xf]
  %v5404 = vld [vmem:[%s19 + $0x134] sm:$0xf]
  %v5405 = vld [vmem:[%s19 + $0x138] sm:$0xf]
  %v5406 = vld [vmem:[%s19 + $0x13c] sm:$0xf]
  %v5407 = vld [vmem:[%s19 + $0x140] sm:$0xf]
  %v5408 = vld [vmem:[%s19 + $0x144] sm:$0xf]
  %v5409 = vld [vmem:[%s19 + $0x148] sm:$0xf]
  %v5410 = vld [vmem:[%s19 + $0x14c] sm:$0xf]
  %v5411 = vld [vmem:[%s19 + $0x150] sm:$0xf]
  %v5412 = vld [vmem:[%s19 + $0x154] sm:$0xf]
  %v5413 = vld [vmem:[%s19 + $0x158] sm:$0xf]
  %v5414 = vld [vmem:[%s19 + $0x15c] sm:$0xf]
  %v5415 = vld [vmem:[%s19 + $0x160] sm:$0xf]
  %v5416 = vld [vmem:[%s19 + $0x164] sm:$0xf]
  %v5417 = vld [vmem:[%s19 + $0x168] sm:$0xf]
  %v5418 = vld [vmem:[%s19 + $0x16c] sm:$0xf]
  %v5419 = vld [vmem:[%s19 + $0x170] sm:$0xf]
  %v5420 = vld [vmem:[%s19 + $0x174] sm:$0xf]
  %v5421 = vld [vmem:[%s19 + $0x178] sm:$0xf]
  %v5422 = vld [vmem:[%s19 + $0x17c] sm:$0xf]
  %v5423 = vld [vmem:[%s19 + $0x180] sm:$0xf]
  %v5424 = vld [vmem:[%s19 + $0x184] sm:$0xf]
  %v5425 = vld [vmem:[%s19 + $0x188] sm:$0xf]
  %v5426 = vld [vmem:[%s19 + $0x18c] sm:$0xf]
  %v5427 = vld [vmem:[%s19 + $0x190] sm:$0xf]
  %v5428 = vld [vmem:[%s19 + $0x194] sm:$0xf]
  %v5429 = vld [vmem:[%s19 + $0x198] sm:$0xf]
  %v5430 = vld [vmem:[%s19 + $0x19c] sm:$0xf]
  %v5431 = vld [vmem:[%s19 + $0x1a0] sm:$0xf]
  %v5432 = vld [vmem:[%s19 + $0x1a4] sm:$0xf]
  %v5433 = vld [vmem:[%s19 + $0x1a8] sm:$0xf]
  %v5434 = vld [vmem:[%s19 + $0x1ac] sm:$0xf]
  %v5435 = vld [vmem:[%s19 + $0x1b0] sm:$0xf]
  %v5436 = vld [vmem:[%s19 + $0x1b4] sm:$0xf]
  %v5437 = vld [vmem:[%s19 + $0x1b8] sm:$0xf]
  %v5438 = vld [vmem:[%s19 + $0x1bc] sm:$0xf]
  %v5439 = vld [vmem:[%s19 + $0x1c0] sm:$0xf]
  %v5440 = vld [vmem:[%s19 + $0x1c4] sm:$0xf]
  %v5441 = vld [vmem:[%s19 + $0x1c8] sm:$0xf]
  %v5442 = vld [vmem:[%s19 + $0x1cc] sm:$0xf]
  %v5443 = vld [vmem:[%s19 + $0x1d0] sm:$0xf]
  %v5444 = vld [vmem:[%s19 + $0x1d4] sm:$0xf]
  %v5445 = vld [vmem:[%s19 + $0x1d8] sm:$0xf]
  %v5446 = vld [vmem:[%s19 + $0x1dc] sm:$0xf]
  %v5447 = vld [vmem:[%s19 + $0x1e0] sm:$0xf]
  %v5448 = vld [vmem:[%s19 + $0x1e4] sm:$0xf]
  %v5449 = vld [vmem:[%s19 + $0x1e8] sm:$0xf]
  %v5450 = vld [vmem:[%s19 + $0x1ec] sm:$0xf]
  %v5451 = vld [vmem:[%s19 + $0x1f0] sm:$0xf]
  %v5452 = vld [vmem:[%s19 + $0x1f4] sm:$0xf]
  %v5453 = vld [vmem:[%s19 + $0x1f8] sm:$0xf]
  %v5454 = vld [vmem:[%s19 + $0x1fc] sm:$0xf]
  %v5455 = vld [vmem:[%s19 + $0x200] sm:$0xf]
  %v5456 = vld [vmem:[%s19 + $0x204] sm:$0xf]
  %v5457 = vld [vmem:[%s19 + $0x208] sm:$0xf]
  %v5458 = vld [vmem:[%s19 + $0x20c] sm:$0xf]
  %v5459 = vld [vmem:[%s19 + $0x210] sm:$0xf]
  %v5460 = vld [vmem:[%s19 + $0x214] sm:$0xf]
  %v5461 = vld [vmem:[%s19 + $0x218] sm:$0xf]
  %v5462 = vld [vmem:[%s19 + $0x21c] sm:$0xf]
  %v5463 = vld [vmem:[%s19 + $0x220] sm:$0xf]
  %v5464 = vld [vmem:[%s19 + $0x224] sm:$0xf]
  %v5465 = vld [vmem:[%s19 + $0x228] sm:$0xf]
  %v5466 = vld [vmem:[%s19 + $0x22c] sm:$0xf]
  %v5467 = vld [vmem:[%s19 + $0x230] sm:$0xf]
  %v5468 = vld [vmem:[%s19 + $0x234] sm:$0xf]
  %v5469 = vld [vmem:[%s19 + $0x238] sm:$0xf]
  %v5470 = vld [vmem:[%s19 + $0x23c] sm:$0xf]
  %v5471 = vld [vmem:[%s20] sm:$0x1]
  %v5473 = vlaneseq
  %v5474 = vshrl.u32 %v5473, 7
  %v5475 = vsub.s32 0, %v5474
  %v5476 = vrot.slane %v5471, %v5475
  %v5622 = vunpack.c.l.b16 %v5327
  %v5623 = vunpack.c.l.b16 %v5328
  %v5624 = vunpack.c.l.b16 %v5329
  %v5625 = vunpack.c.l.b16 %v5330
  %v5626 = vunpack.c.l.b16 %v5331
  %v5627 = vunpack.c.l.b16 %v5332
  %v5628 = vunpack.c.l.b16 %v5333
  %v5629 = vunpack.c.l.b16 %v5334
  %v5630 = vunpack.c.l.b16 %v5335
  %v5631 = vunpack.c.l.b16 %v5336
  %v5632 = vunpack.c.l.b16 %v5337
  %v5633 = vunpack.c.l.b16 %v5338
  %v5634 = vunpack.c.l.b16 %v5339
  %v5635 = vunpack.c.l.b16 %v5340
  %v5636 = vunpack.c.l.b16 %v5341
  %v5637 = vunpack.c.l.b16 %v5342
  %v5638 = vunpack.c.l.b16 %v5343
  %v5639 = vunpack.c.l.b16 %v5344
  %v5640 = vunpack.c.l.b16 %v5345
  %v5641 = vunpack.c.l.b16 %v5346
  %v5642 = vunpack.c.l.b16 %v5347
  %v5643 = vunpack.c.l.b16 %v5348
  %v5644 = vunpack.c.l.b16 %v5349
  %v5645 = vunpack.c.l.b16 %v5350
  %v5646 = vunpack.c.l.b16 %v5351
  %v5647 = vunpack.c.l.b16 %v5352
  %v5648 = vunpack.c.l.b16 %v5353
  %v5649 = vunpack.c.l.b16 %v5354
  %v5650 = vunpack.c.l.b16 %v5355
  %v5651 = vunpack.c.l.b16 %v5356
  %v5652 = vunpack.c.l.b16 %v5357
  %v5653 = vunpack.c.l.b16 %v5358
  %v5654 = vunpack.c.l.b16 %v5359
  %v5655 = vunpack.c.l.b16 %v5360
  %v5656 = vunpack.c.l.b16 %v5361
  %v5657 = vunpack.c.l.b16 %v5362
  %v5658 = vunpack.c.l.b16 %v5363
  %v5659 = vunpack.c.l.b16 %v5364
  %v5660 = vunpack.c.l.b16 %v5365
  %v5661 = vunpack.c.l.b16 %v5366
  %v5662 = vunpack.c.l.b16 %v5367
  %v5663 = vunpack.c.l.b16 %v5368
  %v5664 = vunpack.c.l.b16 %v5369
  %v5665 = vunpack.c.l.b16 %v5370
  %v5666 = vunpack.c.l.b16 %v5371
  %v5667 = vunpack.c.l.b16 %v5372
  %v5668 = vunpack.c.l.b16 %v5373
  %v5669 = vunpack.c.l.b16 %v5374
  %v5670 = vunpack.c.l.b16 %v5375
  %v5671 = vunpack.c.l.b16 %v5376
  %v5672 = vunpack.c.l.b16 %v5377
  %v5673 = vunpack.c.l.b16 %v5378
  %v5674 = vunpack.c.l.b16 %v5379
  %v5675 = vunpack.c.l.b16 %v5380
  %v5676 = vunpack.c.l.b16 %v5381
  %v5677 = vunpack.c.l.b16 %v5382
  %v5678 = vunpack.c.l.b16 %v5383
  %v5679 = vunpack.c.l.b16 %v5384
  %v5680 = vunpack.c.l.b16 %v5385
  %v5681 = vunpack.c.l.b16 %v5386
  %v5682 = vunpack.c.l.b16 %v5387
  %v5683 = vunpack.c.l.b16 %v5388
  %v5684 = vunpack.c.l.b16 %v5389
  %v5685 = vunpack.c.l.b16 %v5390
  %v5686 = vunpack.c.l.b16 %v5391
  %v5687 = vunpack.c.l.b16 %v5392
  %v5688 = vunpack.c.l.b16 %v5393
  %v5689 = vunpack.c.l.b16 %v5394
  %v5690 = vunpack.c.l.b16 %v5395
  %v5691 = vunpack.c.l.b16 %v5396
  %v5692 = vunpack.c.l.b16 %v5397
  %v5693 = vunpack.c.l.b16 %v5398
  %v5694 = vunpack.c.l.b16 %v5399
  %v5695 = vunpack.c.l.b16 %v5400
  %v5696 = vunpack.c.l.b16 %v5401
  %v5697 = vunpack.c.l.b16 %v5402
  %v5698 = vunpack.c.l.b16 %v5403
  %v5699 = vunpack.c.l.b16 %v5404
  %v5700 = vunpack.c.l.b16 %v5405
  %v5701 = vunpack.c.l.b16 %v5406
  %v5702 = vunpack.c.l.b16 %v5407
  %v5703 = vunpack.c.l.b16 %v5408
  %v5704 = vunpack.c.l.b16 %v5409
  %v5705 = vunpack.c.l.b16 %v5410
  %v5706 = vunpack.c.l.b16 %v5411
  %v5707 = vunpack.c.l.b16 %v5412
  %v5708 = vunpack.c.l.b16 %v5413
  %v5709 = vunpack.c.l.b16 %v5414
  %v5710 = vunpack.c.l.b16 %v5415
  %v5711 = vunpack.c.l.b16 %v5416
  %v5712 = vunpack.c.l.b16 %v5417
  %v5713 = vunpack.c.l.b16 %v5418
  %v5714 = vunpack.c.l.b16 %v5419
  %v5715 = vunpack.c.l.b16 %v5420
  %v5716 = vunpack.c.l.b16 %v5421
  %v5717 = vunpack.c.l.b16 %v5422
  %v5718 = vunpack.c.l.b16 %v5423
  %v5719 = vunpack.c.l.b16 %v5424
  %v5720 = vunpack.c.l.b16 %v5425
  %v5721 = vunpack.c.l.b16 %v5426
  %v5722 = vunpack.c.l.b16 %v5427
  %v5723 = vunpack.c.l.b16 %v5428
  %v5724 = vunpack.c.l.b16 %v5429
  %v5725 = vunpack.c.l.b16 %v5430
  %v5726 = vunpack.c.l.b16 %v5431
  %v5727 = vunpack.c.l.b16 %v5432
  %v5728 = vunpack.c.l.b16 %v5433
  %v5729 = vunpack.c.l.b16 %v5434
  %v5730 = vunpack.c.l.b16 %v5435
  %v5731 = vunpack.c.l.b16 %v5436
  %v5732 = vunpack.c.l.b16 %v5437
  %v5733 = vunpack.c.l.b16 %v5438
  %v5734 = vunpack.c.l.b16 %v5439
  %v5735 = vunpack.c.l.b16 %v5440
  %v5736 = vunpack.c.l.b16 %v5441
  %v5737 = vunpack.c.l.b16 %v5442
  %v5738 = vunpack.c.l.b16 %v5443
  %v5739 = vunpack.c.l.b16 %v5444
  %v5740 = vunpack.c.l.b16 %v5445
  %v5741 = vunpack.c.l.b16 %v5446
  %v5742 = vunpack.c.l.b16 %v5447
  %v5743 = vunpack.c.l.b16 %v5448
  %v5744 = vunpack.c.l.b16 %v5449
  %v5745 = vunpack.c.l.b16 %v5450
  %v5746 = vunpack.c.l.b16 %v5451
  %v5747 = vunpack.c.l.b16 %v5452
  %v5748 = vunpack.c.l.b16 %v5453
  %v5749 = vunpack.c.l.b16 %v5454
  %v5750 = vunpack.c.l.b16 %v5455
  %v5751 = vunpack.c.l.b16 %v5456
  %v5752 = vunpack.c.l.b16 %v5457
  %v5753 = vunpack.c.l.b16 %v5458
  %v5754 = vunpack.c.l.b16 %v5459
  %v5755 = vunpack.c.l.b16 %v5460
  %v5756 = vunpack.c.l.b16 %v5461
  %v5757 = vunpack.c.l.b16 %v5462
  %v5758 = vunpack.c.l.b16 %v5463
  %v5759 = vunpack.c.l.b16 %v5464
  %v5760 = vunpack.c.l.b16 %v5465
  %v5761 = vunpack.c.l.b16 %v5466
  %v5762 = vunpack.c.l.b16 %v5467
  %v5763 = vunpack.c.l.b16 %v5468
  %v5764 = vunpack.c.l.b16 %v5469
  %v5765 = vunpack.c.l.b16 %v5470
  %v5766 = vpack.c.b16 %v5623, %v5622
  %v5767 = vpack.c.b16 %v5625, %v5624
  %v5768 = vpack.c.b16 %v5627, %v5626
  %v5769 = vpack.c.b16 %v5629, %v5628
  %v5770 = vpack.c.b16 %v5631, %v5630
  %v5771 = vpack.c.b16 %v5633, %v5632
  %v5772 = vpack.c.b16 %v5635, %v5634
  %v5773 = vpack.c.b16 %v5637, %v5636
  %v5774 = vpack.c.b16 %v5639, %v5638
  %v5775 = vpack.c.b16 %v5641, %v5640
  %v5776 = vpack.c.b16 %v5643, %v5642
  %v5777 = vpack.c.b16 %v5645, %v5644
  %v5778 = vpack.c.b16 %v5647, %v5646
  %v5779 = vpack.c.b16 %v5649, %v5648
  %v5780 = vpack.c.b16 %v5651, %v5650
  %v5781 = vpack.c.b16 %v5653, %v5652
  %v5782 = vpack.c.b16 %v5655, %v5654
  %v5783 = vpack.c.b16 %v5657, %v5656
  %v5784 = vpack.c.b16 %v5659, %v5658
  %v5785 = vpack.c.b16 %v5661, %v5660
  %v5786 = vpack.c.b16 %v5663, %v5662
  %v5787 = vpack.c.b16 %v5665, %v5664
  %v5788 = vpack.c.b16 %v5667, %v5666
  %v5789 = vpack.c.b16 %v5669, %v5668
  %v5790 = vpack.c.b16 %v5671, %v5670
  %v5791 = vpack.c.b16 %v5673, %v5672
  %v5792 = vpack.c.b16 %v5675, %v5674
  %v5793 = vpack.c.b16 %v5677, %v5676
  %v5794 = vpack.c.b16 %v5679, %v5678
  %v5795 = vpack.c.b16 %v5681, %v5680
  %v5796 = vpack.c.b16 %v5683, %v5682
  %v5797 = vpack.c.b16 %v5685, %v5684
  %v5798 = vpack.c.b16 %v5687, %v5686
  %v5799 = vpack.c.b16 %v5689, %v5688
  %v5800 = vpack.c.b16 %v5691, %v5690
  %v5801 = vpack.c.b16 %v5693, %v5692
  %v5802 = vpack.c.b16 %v5695, %v5694
  %v5803 = vpack.c.b16 %v5697, %v5696
  %v5804 = vpack.c.b16 %v5699, %v5698
  %v5805 = vpack.c.b16 %v5701, %v5700
  %v5806 = vpack.c.b16 %v5703, %v5702
  %v5807 = vpack.c.b16 %v5705, %v5704
  %v5808 = vpack.c.b16 %v5707, %v5706
  %v5809 = vpack.c.b16 %v5709, %v5708
  %v5810 = vpack.c.b16 %v5711, %v5710
  %v5811 = vpack.c.b16 %v5713, %v5712
  %v5812 = vpack.c.b16 %v5715, %v5714
  %v5813 = vpack.c.b16 %v5717, %v5716
  %v5814 = vpack.c.b16 %v5719, %v5718
  %v5815 = vpack.c.b16 %v5721, %v5720
  %v5816 = vpack.c.b16 %v5723, %v5722
  %v5817 = vpack.c.b16 %v5725, %v5724
  %v5818 = vpack.c.b16 %v5727, %v5726
  %v5819 = vpack.c.b16 %v5729, %v5728
  %v5820 = vpack.c.b16 %v5731, %v5730
  %v5821 = vpack.c.b16 %v5733, %v5732
  %v5822 = vpack.c.b16 %v5735, %v5734
  %v5823 = vpack.c.b16 %v5737, %v5736
  %v5824 = vpack.c.b16 %v5739, %v5738
  %v5825 = vpack.c.b16 %v5741, %v5740
  %v5826 = vpack.c.b16 %v5743, %v5742
  %v5827 = vpack.c.b16 %v5745, %v5744
  %v5828 = vpack.c.b16 %v5747, %v5746
  %v5829 = vpack.c.b16 %v5749, %v5748
  %v5830 = vpack.c.b16 %v5751, %v5750
  %v5831 = vpack.c.b16 %v5753, %v5752
  %v5832 = vpack.c.b16 %v5755, %v5754
  %v5833 = vpack.c.b16 %v5757, %v5756
  %v5834 = vpack.c.b16 %v5759, %v5758
  %v5835 = vpack.c.b16 %v5761, %v5760
  %v5836 = vpack.c.b16 %v5763, %v5762
  %v5837 = vpack.c.b16 %v5765, %v5764
  %5910 = vmatprep.subr.bf16.mxu0 0
  %5911 = vmatpush1.bf16.msra.mxu0 %v5773
  %5912 = vmatprep.subr.bf16.mxu0 0
  %5913 = vmatpush1.bf16.msra.mxu0 %v5772
  %5914 = vmatprep.subr.bf16.mxu0 0
  %5915 = vmatpush1.bf16.msra.mxu0 %v5771
  %5916 = vmatprep.subr.bf16.mxu0 0
  %5917 = vmatpush1.bf16.msra.mxu0 %v5770
  %5918 = vmatprep.subr.bf16.mxu0 0
  %5919 = vmatpush1.bf16.msra.mxu0 %v5769
  %5920 = vmatprep.subr.bf16.mxu0 0
  %5921 = vmatpush1.bf16.msra.mxu0 %v5768
  %5922 = vmatprep.subr.bf16.mxu0 0
  %5923 = vmatpush1.bf16.msra.mxu0 %v5767
  %5924 = vmatprep.subr.bf16.mxu0 0
  %5925 = vmatpush1.bf16.msra.mxu0 %v5766
  %5926 = vmatprep.subr.bf16.mxu0 0
  %5927 = vmatpush2.bf16.msra.mxu0 %v5781
  %5928 = vmatprep.subr.bf16.mxu0 0
  %5929 = vmatpush2.bf16.msra.mxu0 %v5780
  %5930 = vmatprep.subr.bf16.mxu0 0
  %5931 = vmatpush2.bf16.msra.mxu0 %v5779
  %5932 = vmatprep.subr.bf16.mxu0 0
  %5933 = vmatpush2.bf16.msra.mxu0 %v5778
  %5934 = vmatprep.subr.bf16.mxu0 0
  %5935 = vmatpush2.bf16.msra.mxu0 %v5777
  %5936 = vmatprep.subr.bf16.mxu0 0
  %5937 = vmatpush2.bf16.msra.mxu0 %v5776
  %5938 = vmatprep.subr.bf16.mxu0 0
  %5939 = vmatpush2.bf16.msra.mxu0 %v5775
  %5940 = vmatprep.subr.bf16.mxu0 0
  %5941 = vmatpush2.bf16.msra.mxu0 %v5774
  %5942 = vmatprep.mubr.bf16.mxu0 %v5004
  %5943 = vmatmul.mubr.bf16.gmra.mxu0 %v4958
  %v5944 = vpop.f32.mrf.mxu0
  %v5945 = vadd.f32 %v5476, %v5944
  %v5946 = vpop.f32.mrf.mxu0
  %v5947 = vpop.f32.mrf.mxu0
  %v5948 = vpop.f32.mrf.mxu0
  %5949 = vdwg.mxu0
  %5950 = vmatprep.subr.bf16.mxu0 0
  %5951 = vmatpush1.bf16.msra.mxu0 %v5789
  %5952 = vmatprep.subr.bf16.mxu0 0
  %5953 = vmatpush1.bf16.msra.mxu0 %v5788
  %5954 = vmatprep.subr.bf16.mxu0 0
  %5955 = vmatpush1.bf16.msra.mxu0 %v5787
  %5956 = vmatprep.subr.bf16.mxu0 0
  %5957 = vmatpush1.bf16.msra.mxu0 %v5786
  %5958 = vmatprep.subr.bf16.mxu0 0
  %5959 = vmatpush1.bf16.msra.mxu0 %v5785
  %5960 = vmatprep.subr.bf16.mxu0 0
  %5961 = vmatpush1.bf16.msra.mxu0 %v5784
  %5962 = vmatprep.subr.bf16.mxu0 0
  %5963 = vmatpush1.bf16.msra.mxu0 %v5783
  %5964 = vmatprep.subr.bf16.mxu0 0
  %5965 = vmatpush1.bf16.msra.mxu0 %v5782
  %5966 = vmatprep.subr.bf16.mxu0 0
  %5967 = vmatpush2.bf16.msra.mxu0 %v5797
  %5968 = vmatprep.subr.bf16.mxu0 0
  %5969 = vmatpush2.bf16.msra.mxu0 %v5796
  %5970 = vmatprep.subr.bf16.mxu0 0
  %5971 = vmatpush2.bf16.msra.mxu0 %v5795
  %5972 = vmatprep.subr.bf16.mxu0 0
  %5973 = vmatpush2.bf16.msra.mxu0 %v5794
  %5974 = vmatprep.subr.bf16.mxu0 0
  %5975 = vmatpush2.bf16.msra.mxu0 %v5793
  %5976 = vmatprep.subr.bf16.mxu0 0
  %5977 = vmatpush2.bf16.msra.mxu0 %v5792
  %5978 = vmatprep.subr.bf16.mxu0 0
  %5979 = vmatpush2.bf16.msra.mxu0 %v5791
  %5980 = vmatprep.subr.bf16.mxu0 0
  %5981 = vmatpush2.bf16.msra.mxu0 %v5790
  %5982 = vmatprep.mubr.bf16.mxu0 %v5096
  %5983 = vmatmul.mubr.bf16.gmra.mxu0 %v5050
  %v5984 = vpop.f32.mrf.mxu0
  %v5985 = vadd.f32 %v5945, %v5984
  %v5986 = vpop.f32.mrf.mxu0
  %v5987 = vpop.f32.mrf.mxu0
  %v5988 = vpop.f32.mrf.mxu0
  %5989 = vdwg.mxu0
  %5990 = vmatprep.subr.bf16.mxu0 0
  %5991 = vmatpush1.bf16.msra.mxu0 %v5805
  %5992 = vmatprep.subr.bf16.mxu0 0
  %5993 = vmatpush1.bf16.msra.mxu0 %v5804
  %5994 = vmatprep.subr.bf16.mxu0 0
  %5995 = vmatpush1.bf16.msra.mxu0 %v5803
  %5996 = vmatprep.subr.bf16.mxu0 0
  %5997 = vmatpush1.bf16.msra.mxu0 %v5802
  %5998 = vmatprep.subr.bf16.mxu0 0
  %5999 = vmatpush1.bf16.msra.mxu0 %v5801
  %6000 = vmatprep.subr.bf16.mxu0 0
  %6001 = vmatpush1.bf16.msra.mxu0 %v5800
  %6002 = vmatprep.subr.bf16.mxu0 0
  %6003 = vmatpush1.bf16.msra.mxu0 %v5799
  %6004 = vmatprep.subr.bf16.mxu0 0
  %6005 = vmatpush1.bf16.msra.mxu0 %v5798
  %6006 = vmatprep.subr.bf16.mxu0 0
  %6007 = vmatpush2.bf16.msra.mxu0 %v5813
  %6008 = vmatprep.subr.bf16.mxu0 0
  %6009 = vmatpush2.bf16.msra.mxu0 %v5812
  %6010 = vmatprep.subr.bf16.mxu0 0
  %6011 = vmatpush2.bf16.msra.mxu0 %v5811
  %6012 = vmatprep.subr.bf16.mxu0 0
  %6013 = vmatpush2.bf16.msra.mxu0 %v5810
  %6014 = vmatprep.subr.bf16.mxu0 0
  %6015 = vmatpush2.bf16.msra.mxu0 %v5809
  %6016 = vmatprep.subr.bf16.mxu0 0
  %6017 = vmatpush2.bf16.msra.mxu0 %v5808
  %6018 = vmatprep.subr.bf16.mxu0 0
  %6019 = vmatpush2.bf16.msra.mxu0 %v5807
  %6020 = vmatprep.subr.bf16.mxu0 0
  %6021 = vmatpush2.bf16.msra.mxu0 %v5806
  %6022 = vmatprep.mubr.bf16.mxu0 %v5188
  %6023 = vmatmul.mubr.bf16.gmra.mxu0 %v5142
  %v6024 = vpop.f32.mrf.mxu0
  %v6025 = vadd.f32 %v5985, %v6024
  %v6026 = vpop.f32.mrf.mxu0
  %v6027 = vpop.f32.mrf.mxu0
  %v6028 = vpop.f32.mrf.mxu0
  %6029 = vdwg.mxu0
  %6030 = vmatprep.subr.bf16.mxu0 0
  %6031 = vmatpush1.bf16.msra.mxu0 %v5821
  %6032 = vmatprep.subr.bf16.mxu0 0
  %6033 = vmatpush1.bf16.msra.mxu0 %v5820
  %6034 = vmatprep.subr.bf16.mxu0 0
  %6035 = vmatpush1.bf16.msra.mxu0 %v5819
  %6036 = vmatprep.subr.bf16.mxu0 0
  %6037 = vmatpush1.bf16.msra.mxu0 %v5818
  %6038 = vmatprep.subr.bf16.mxu0 0
  %6039 = vmatpush1.bf16.msra.mxu0 %v5817
  %6040 = vmatprep.subr.bf16.mxu0 0
  %6041 = vmatpush1.bf16.msra.mxu0 %v5816
  %6042 = vmatprep.subr.bf16.mxu0 0
  %6043 = vmatpush1.bf16.msra.mxu0 %v5815
  %6044 = vmatprep.subr.bf16.mxu0 0
  %6045 = vmatpush1.bf16.msra.mxu0 %v5814
  %6046 = vmatprep.subr.bf16.mxu0 0
  %6047 = vmatpush2.bf16.msra.mxu0 %v5829
  %6048 = vmatprep.subr.bf16.mxu0 0
  %6049 = vmatpush2.bf16.msra.mxu0 %v5828
  %6050 = vmatprep.subr.bf16.mxu0 0
  %6051 = vmatpush2.bf16.msra.mxu0 %v5827
  %6052 = vmatprep.subr.bf16.mxu0 0
  %6053 = vmatpush2.bf16.msra.mxu0 %v5826
  %6054 = vmatprep.subr.bf16.mxu0 0
  %6055 = vmatpush2.bf16.msra.mxu0 %v5825
  %6056 = vmatprep.subr.bf16.mxu0 0
  %6057 = vmatpush2.bf16.msra.mxu0 %v5824
  %6058 = vmatprep.subr.bf16.mxu0 0
  %6059 = vmatpush2.bf16.msra.mxu0 %v5823
  %6060 = vmatprep.subr.bf16.mxu0 0
  %6061 = vmatpush2.bf16.msra.mxu0 %v5822
  %6062 = vmatprep.mubr.bf16.mxu0 %v5280
  %6063 = vmatmul.mubr.bf16.gmra.mxu0 %v5234
  %v6064 = vpop.f32.mrf.mxu0
  %v6065 = vadd.f32 %v6025, %v6064
  %v6066 = vpop.f32.mrf.mxu0
  %v6067 = vpop.f32.mrf.mxu0
  %v6068 = vpop.f32.mrf.mxu0
  %6069 = vdwg.mxu0
  %6070 = vmatprep.subr.bf16.mxu0 0
  %6071 = vmatpush1.bf16.msra.mxu0 %v5837
  %6072 = vmatprep.subr.bf16.mxu0 0
  %6073 = vmatpush1.bf16.msra.mxu0 %v5836
  %6074 = vmatprep.subr.bf16.mxu0 0
  %6075 = vmatpush1.bf16.msra.mxu0 %v5835
  %6076 = vmatprep.subr.bf16.mxu0 0
  %6077 = vmatpush1.bf16.msra.mxu0 %v5834
  %6078 = vmatprep.subr.bf16.mxu0 0
  %6079 = vmatpush1.bf16.msra.mxu0 %v5833
  %6080 = vmatprep.subr.bf16.mxu0 0
  %6081 = vmatpush1.bf16.msra.mxu0 %v5832
  %6082 = vmatprep.subr.bf16.mxu0 0
  %6083 = vmatpush1.bf16.msra.mxu0 %v5831
  %6084 = vmatprep.subr.bf16.mxu0 0
  %6085 = vmatpush1.bf16.msra.mxu0 %v5830
  %6086 = vmatprep.subr.bf16.mxu0 0
  %6087 = vmatpush2.bf16.msra.mxu0 0
  %6088 = vmatprep.subr.bf16.mxu0 0
  %6089 = vmatpush2.bf16.msra.mxu0 0
  %6090 = vmatprep.subr.bf16.mxu0 0
  %6091 = vmatpush2.bf16.msra.mxu0 0
  %6092 = vmatprep.subr.bf16.mxu0 0
  %6093 = vmatpush2.bf16.msra.mxu0 0
  %6094 = vmatprep.subr.bf16.mxu0 0
  %6095 = vmatpush2.bf16.msra.mxu0 0
  %6096 = vmatprep.subr.bf16.mxu0 0
  %6097 = vmatpush2.bf16.msra.mxu0 0
  %6098 = vmatprep.subr.bf16.mxu0 0
  %6099 = vmatpush2.bf16.msra.mxu0 0
  %6100 = vmatprep.subr.bf16.mxu0 0
  %6101 = vmatpush2.bf16.msra.mxu0 0
  %6102 = vmatprep.mubr.bf16.mxu0 0
  %6103 = vmatmul.mubr.bf16.gmra.mxu0 %v5326
  %v6104 = vpop.f32.mrf.mxu0
  %v6105 = vadd.f32 %v6065, %v6104
  %v6106 = vpop.f32.mrf.mxu0
  %v6107 = vpop.f32.mrf.mxu0
  %v6108 = vpop.f32.mrf.mxu0
  %6109 = vdwg.mxu0
  %v6110 = vmax.f32 %v6105, 0.0
  %v6111 = vadd.f32 %v6110, %v4904
  %v6112 = vld [vmem:[%s21] sm:$0x1]
  %v6114 = vlaneseq
  %v6115 = vshrl.u32 %v6114, 7
  %v6116 = vsub.s32 0, %v6115
  %v6117 = vrot.slane %v6112, %v6116
  %v6119 = vmul.f32 %v6111, %v6117
  %v6120 = vsel %vm274, %v6119, 0.0
  %6121 = vadd.xlane.f32.xlu0 %v6120
  %v6122 = vpop.xlane.xlu0 %6121
  %v6123 = vld [vmem:[#allocation2] sm:$0x1]
  %v6125 = vlaneseq
  %v6126 = vshrl.u32 %v6125, 7
  %v6127 = vsub.s32 0, %v6126
  %v6128 = vrot.slane %v6123, %v6127
  %v6130 = vadd.f32 %v6122, %v6128
  %vm6131 = vcmask 1024
  %6132 = vst.msk [vmem:[%s23] sm:$0x3] %vm6131, %v6130
  // Predicated region
  $region94: #{convnet_forward.1} parent=0 // pred_check
    _
  $region95: #{convnet_forward.1} parent=0 // pred_check_branch
    %6134 = sbr.rel (0) target = $region97
  $region96: #{convnet_forward.1} parent=0 // pred_region
    _
  $region97: #{convnet_forward.1} parent=0 // pred_fallthru
    _
  // Predicated region
  $region98: #{convnet_forward.1} parent=0 // pred_check
    _
  $region99: #{convnet_forward.1} parent=0 // pred_check_branch
    %6136 = sbr.rel (0) target = $region101
  $region100: #{convnet_forward.1} parent=0 // pred_region
    _
  $region101: #{convnet_forward.1} parent=0 // pred_fallthru
    _

</llo_original>
